<compile_context>
chip_gen: v6e
topology: v6e:2x2x1
jax: 0.10.0
libtpu: 0.0.40
codegen_flags: <defaults>
</compile_context>

<pallas_src>
import functools

import jax
import jax.numpy as jnp
from jax.experimental import pallas as pl
from jax.experimental.pallas import tpu as pltpu

# ----------------------------- config ---------------------------------------
VOCAB = 100
HIDDEN = 256          # stands in for 768 (multiple of 128 -> lane-dense)
HEADS = 2
HEAD_DIM = HIDDEN // HEADS   # 128 -> MXU contraction width, 128-aligned head slices
LAYERS = 2
INTER = 1024          # stands in for 3072 (multiple of 128)
MAX_POS = 16          # TODO(synk): real BERT config needs 512 here
PROJ_DIM = 128        # stands in for proj_dim=128
LN_EPS = 1e-12        # BERT LayerNorm eps

VMEM_LIMIT = 32 * 1024 * 1024   # <= scoped default on every generation; tiles here are tiny


# ------------------------------ tiling --------------------------------------
def _pick_tile(dim, cap, align):
    """Largest divisor of `dim` that is <= cap and a multiple of `align` (or dim itself)."""
    if dim <= cap:
        return dim
    t = (cap // align) * align
    while t > align and dim % t:
        t -= align
    assert dim % t == 0
    return t


def _gelu_tanh(x):
    """tanh-approx GELU in f32 (HF 'gelu_new')."""
    c = jnp.float32(0.7978845608028654)   # sqrt(2/pi)
    return 0.5 * x * (1.0 + jnp.tanh(c * (x + 0.044715 * x * x * x)))


def _layernorm_f32(y, gamma, beta):
    mu = jnp.mean(y, axis=-1, keepdims=True)
    var = jnp.mean((y - mu) ** 2, axis=-1, keepdims=True)
    return (y - mu) * jax.lax.rsqrt(var + LN_EPS) * gamma + beta


# --------------------------- Pallas kernels ---------------------------------
def _emb_ln_kernel(we_ref, pe_ref, te_ref, g_ref, b_ref, o_ref):
    """o = LayerNorm(word_emb + pos_emb + token_type_emb); sum fused (no HBM round-trip)."""
    x = we_ref[0].astype(jnp.float32) + pe_ref[...].astype(jnp.float32) + te_ref[...]
    o_ref[0] = _layernorm_f32(x, g_ref[...], b_ref[...]).astype(o_ref.dtype)


def _attn_block_kernel(x_ref, bias_ref, qkvw_ref, qkvb_ref, ow_ref, ob_ref,
                       g_ref, beta_ref, o_ref):
    """Per-batch-item: QKV projection + MHA + output projection + residual + LayerNorm.

    x_ref: (1,S,H) bf16 | bias_ref: (1,1,S) f32 | qkvw_ref: (H,3H) bf16 | qkvb: (1,3H) f32
    ow_ref: (H,H) bf16  | ob/g/beta: (1,H) f32  | o_ref: (1,S,H) bf16
    Heads are split via 128-aligned lane slices; each head's context is accumulated
    directly into the O-projection (no concat, no relayout).
    """
    x = x_ref[0]                                              # (S, H) bf16
    S = x.shape[0]

    # fused QKV projection (f32 accumulate, weights VMEM-resident)
    qkv = jnp.dot(x, qkvw_ref[...], preferred_element_type=jnp.float32) + qkvb_ref[...]

    # hoisted mask-bias broadcast: (1,S) -> (S,S), done once for all heads
    bias2d = jnp.broadcast_to(bias_ref[0], (S, S))
    scale = jnp.float32(1.0 / (HEAD_DIM ** 0.5))

    attn = jnp.zeros((S, HIDDEN), jnp.float32)
    # TODO(synk): at real HEADS=12 / S=512 switch to a grid/fori loop with flash-style
    #             KV tiling; at HEADS=2, S=8 a tiny static unroll is cheapest.
    for h in range(HEADS):
        lo = h * HEAD_DIM
        q = qkv[:, lo:lo + HEAD_DIM].astype(jnp.bfloat16)
        k = qkv[:, HIDDEN + lo:HIDDEN + lo + HEAD_DIM].astype(jnp.bfloat16)
        v = qkv[:, 2 * HIDDEN + lo:2 * HIDDEN + lo + HEAD_DIM].astype(jnp.bfloat16)
        # scores = q @ k^T (contract HEAD_DIM=128 on the MXU), f32 accumulate
        s = jax.lax.dot_general(q, k, (((1,), (1,)), ((), ())),
                                preferred_element_type=jnp.float32)
        s = s * scale + bias2d
        m = jnp.max(s, axis=-1, keepdims=True)
        p = jnp.exp(s - m)
        p = p * pl.reciprocal(jnp.sum(p, axis=-1, keepdims=True), approx=True)
        ctx = jnp.dot(p.astype(jnp.bfloat16), v, preferred_element_type=jnp.float32)
        # accumulate head context straight into the output projection
        attn = attn + jnp.dot(ctx.astype(jnp.bfloat16), ow_ref[lo:lo + HEAD_DIM, :],
                              preferred_element_type=jnp.float32)

    y = attn + ob_ref[...] + x.astype(jnp.float32)
    o_ref[0] = _layernorm_f32(y, g_ref[...], beta_ref[...]).astype(o_ref.dtype)


def _ffn_block_kernel(x_ref, iw_ref, ib_ref, fw_ref, fb_ref, g_ref, beta_ref, o_ref):
    """Fused FFN: o = LayerNorm(gelu(x @ Wi + bi) @ Wf + bf + x).

    The (TM, INTER) intermediate stays on-chip (never written to HBM).
    """
    x = x_ref[...]                                            # (TM, H) bf16
    h = jnp.dot(x, iw_ref[...], preferred_element_type=jnp.float32) + ib_ref[...]
    h = _gelu_tanh(h)
    y = jnp.dot(h.astype(fw_ref.dtype), fw_ref[...],
                preferred_element_type=jnp.float32)
    y = y + fb_ref[...] + x.astype(jnp.float32)
    o_ref[...] = _layernorm_f32(y, g_ref[...], beta_ref[...]).astype(o_ref.dtype)


def _pool_align_kernel(cls_ref, wp_ref, bp_ref, wa_ref, feat_ref, out_ref):
    """feature = tanh(cls @ W_pool + b) ; output = feature @ W_align  (fused)."""
    feat = jnp.tanh(jnp.dot(cls_ref[...], wp_ref[...],
                            preferred_element_type=jnp.float32) + bp_ref[...])
    feat_ref[...] = feat
    out_ref[...] = jnp.dot(feat.astype(wa_ref.dtype), wa_ref[...],
                           preferred_element_type=jnp.float32)


# --------------------------- kernel wrappers ---------------------------------
def embed_layernorm(we, pe, te, gamma, beta):
    B, S, H = we.shape
    return pl.pallas_call(
        _emb_ln_kernel,
        out_shape=jax.ShapeDtypeStruct((B, S, H), jnp.bfloat16),
        grid=(B,),
        in_specs=[
            pl.BlockSpec((1, S, H), lambda b: (b, 0, 0)),
            pl.BlockSpec((S, H), lambda b: (0, 0)),
            pl.BlockSpec((1, H), lambda b: (0, 0)),
            pl.BlockSpec((1, H), lambda b: (0, 0)),
            pl.BlockSpec((1, H), lambda b: (0, 0)),
        ],
        out_specs=pl.BlockSpec((1, S, H), lambda b: (b, 0, 0)),
        compiler_params=pltpu.CompilerParams(
            dimension_semantics=("parallel",),
            vmem_limit_bytes=VMEM_LIMIT),
    )(we, pe, te, gamma, beta)


def attention_block(x, bias, qkv_w, qkv_b, o_w, o_b, ln_g, ln_b):
    B, S, H = x.shape
    cost = pl.CostEstimate(
        flops=int(2 * B * S * H * 3 * H          # QKV projection
                  + 2 * B * HEADS * S * S * HEAD_DIM * 2   # scores + context
                  + 2 * B * S * H * H),          # output projection
        transcendentals=int(B * HEADS * S * S),  # exp
        bytes_accessed=int(x.size * 2 + bias.size * 4
                           + qkv_w.size * 2 + o_w.size * 2
                           + (qkv_b.size + o_b.size + ln_g.size + ln_b.size) * 4
                           + B * S * H * 2))
    return pl.pallas_call(
        _attn_block_kernel,
        out_shape=jax.ShapeDtypeStruct((B, S, H), jnp.bfloat16),
        grid=(B,),
        in_specs=[
            pl.BlockSpec((1, S, H), lambda b: (b, 0, 0)),
            pl.BlockSpec((1, 1, S), lambda b: (b, 0, 0)),
            pl.BlockSpec((H, 3 * H), lambda b: (0, 0)),   # weights stay VMEM-resident
            pl.BlockSpec((1, 3 * H), lambda b: (0, 0)),
            pl.BlockSpec((H, H), lambda b: (0, 0)),
            pl.BlockSpec((1, H), lambda b: (0, 0)),
            pl.BlockSpec((1, H), lambda b: (0, 0)),
            pl.BlockSpec((1, H), lambda b: (0, 0)),
        ],
        out_specs=pl.BlockSpec((1, S, H), lambda b: (b, 0, 0)),
        compiler_params=pltpu.CompilerParams(
            dimension_semantics=("parallel",),
            vmem_limit_bytes=VMEM_LIMIT),
        cost_estimate=cost,
    )(x, bias, qkv_w, qkv_b, o_w, o_b, ln_g, ln_b)


def ffn_block(x, i_w, i_b, f_w, f_b, gamma, beta):
    M, H = x.shape
    N = i_w.shape[1]
    TM = _pick_tile(M, 256, 8)     # 256-row tiles fill the 2x256^2 MXU at real sizes
    grid = (M // TM,)
    cost = pl.CostEstimate(
        flops=int(4 * M * H * N),
        transcendentals=int(M * N),
        bytes_accessed=int(x.size * 2 + i_w.size * 2 + f_w.size * 2
                           + (i_b.size + f_b.size + gamma.size + beta.size) * 4
                           + M * H * 2))
    return pl.pallas_call(
        _ffn_block_kernel,
        out_shape=jax.ShapeDtypeStruct((M, H), jnp.bfloat16),
        grid=grid,
        in_specs=[
            pl.BlockSpec((TM, H), lambda i: (i, 0)),
            pl.BlockSpec((H, N), lambda i: (0, 0)),       # full contraction, no K-tiling
            pl.BlockSpec((1, N), lambda i: (0, 0)),
            pl.BlockSpec((N, H), lambda i: (0, 0)),
            pl.BlockSpec((1, H), lambda i: (0, 0)),
            pl.BlockSpec((1, H), lambda i: (0, 0)),
            pl.BlockSpec((1, H), lambda i: (0, 0)),
        ],
        out_specs=pl.BlockSpec((TM, H), lambda i: (i, 0)),
        compiler_params=pltpu.CompilerParams(
            dimension_semantics=("parallel",),
            vmem_limit_bytes=VMEM_LIMIT),
        cost_estimate=cost,
    )(x, i_w, i_b, f_w, f_b, gamma, beta)


def pool_align(cls_tok, pooler_w, pooler_b, align_w):
    B, H = cls_tok.shape
    P = align_w.shape[1]
    return pl.pallas_call(
        _pool_align_kernel,
        out_shape=(jax.ShapeDtypeStruct((B, H), jnp.float32),
                   jax.ShapeDtypeStruct((B, P), jnp.float32)),
        in_specs=[
            pl.BlockSpec((B, H), lambda: (0, 0)),
            pl.BlockSpec((H, H), lambda: (0, 0)),
            pl.BlockSpec((1, H), lambda: (0, 0)),
            pl.BlockSpec((H, P), lambda: (0, 0)),
        ],
        out_specs=(pl.BlockSpec((B, H), lambda: (0, 0)),
                   pl.BlockSpec((B, P), lambda: (0, 0))),
        compiler_params=pltpu.CompilerParams(vmem_limit_bytes=VMEM_LIMIT),
    )(cls_tok, pooler_w, pooler_b, align_w)


# --------------------------- parameters -------------------------------------
def init_params(key):
    keys = iter(jax.random.split(key, 64))

    def wmat(shape):  # matmul weights in bf16 (MXU inputs)
        return (jax.random.normal(next(keys), shape, jnp.float32) * 0.02).astype(jnp.bfloat16)

    def femb(shape):  # embeddings kept f32
        return jax.random.normal(next(keys), shape, jnp.float32) * 0.02

    ones_h = jnp.ones((1, HIDDEN), jnp.float32)
    zeros_h = jnp.zeros((1, HIDDEN), jnp.float32)

    params = {
        "word_emb": femb((VOCAB, HIDDEN)),
        "pos_emb": femb((MAX_POS, HIDDEN)),
        "tok_emb": femb((2, HIDDEN)),
        "emb_ln_g": ones_h, "emb_ln_b": zeros_h,
        "layers": [],
        "pooler_w": wmat((HIDDEN, HIDDEN)),
        "pooler_b": zeros_h,
        "align_w": wmat((HIDDEN, PROJ_DIM)),   # Linear(hidden, proj_dim, bias=False)
    }
    for _ in range(LAYERS):
        params["layers"].append({
            "qkv_w": wmat((HIDDEN, 3 * HIDDEN)),           # fused Q|K|V projection
            "qkv_b": jnp.zeros((1, 3 * HIDDEN), jnp.float32),
            "o_w": wmat((HIDDEN, HIDDEN)), "o_b": zeros_h,
            "ln1_g": ones_h, "ln1_b": zeros_h,
            "i_w": wmat((HIDDEN, INTER)),
            "i_b": jnp.zeros((1, INTER), jnp.float32),
            "f_w": wmat((INTER, HIDDEN)), "f_b": zeros_h,
            "ln2_g": ones_h, "ln2_b": zeros_h,
        })
    return params


# ----------------------------- forward --------------------------------------
def encoder_layer(p, x, bias):
    B, S, H = x.shape
    # 1) fused QKV + attention + output projection + residual + LN1 (one kernel / layer)
    y = attention_block(x, bias, p["qkv_w"], p["qkv_b"],
                        p["o_w"], p["o_b"], p["ln1_g"], p["ln1_b"])
    # 2) fused FFN: intermediate GELU + output proj + residual + LN2 (one kernel / layer)
    out = ffn_block(y.reshape(B * S, H), p["i_w"], p["i_b"],
                    p["f_w"], p["f_b"], p["ln2_g"], p["ln2_b"])
    return out.reshape(B, S, H)


def text_encoder_forward(params, input_ids, attention_mask):
    B, S = input_ids.shape

    # --- embeddings: gather in XLA (glue), sum + LayerNorm fused in one kernel ---
    # TODO(synk): id gather could move in-kernel via PrefetchScalarGridSpec + pl.Element.
    we = params["word_emb"][input_ids]                 # (B,S,H) f32
    pe = params["pos_emb"][:S]                         # (S,H)   f32
    te = params["tok_emb"][0:1]                        # (1,H)   f32, token_type_ids = 0
    x = embed_layernorm(we, pe, te, params["emb_ln_g"], params["emb_ln_b"])  # (B,S,H) bf16

    # --- extended attention mask bias (B, 1, S), kept in f32 ---
    bias = ((1.0 - attention_mask.astype(jnp.float32)) * -10000.0)[:, None, :]

    # --- transformer layers ---
    for lp in params["layers"]:
        x = encoder_layer(lp, x, bias)

    # --- fused pooler (tanh, f32) + text_aligner (bias-free linear); dropout p=0 -> identity ---
    cls_tok = x[:, 0, :]                               # (B,H) bf16
    feature, output = pool_align(cls_tok, params["pooler_w"],
                                 params["pooler_b"], params["align_w"])
    return feature, output


# ------------------------------- main ---------------------------------------
if __name__ == "__main__":
    key = jax.random.PRNGKey(0)
    k_param, k_ids = jax.random.split(key)

    params = init_params(k_param)

    B, S = 2, 8
    input_ids = jax.random.randint(k_ids, (B, S), 0, VOCAB, dtype=jnp.int32)
    attention_mask = jnp.array([[1, 1, 1, 1, 1, 1, 1, 1],
                                [1, 1, 1, 1, 1, 1, 0, 0]], dtype=jnp.int32)

    fwd = jax.jit(text_encoder_forward)
    feature, output = fwd(params, input_ids, attention_mask)
    feature, output = jax.block_until_ready((feature, output))

    assert feature.shape == (B, HIDDEN) and output.shape == (B, PROJ_DIM)
    assert bool(jnp.all(jnp.isfinite(feature))) and bool(jnp.all(jnp.isfinite(output)))
    print("KERNEL_OK")
</pallas_src>

<mosaic_0001>
module attributes {stable_mosaic.version = 11 : i64} {
  func.func @_emb_ln_kernel(%arg0: i32, %arg1: memref<1x8x256xf32, #tpu.memory_space<vmem>>, %arg2: memref<8x256xf32, #tpu.memory_space<vmem>>, %arg3: memref<1x256xf32, #tpu.memory_space<vmem>>, %arg4: memref<1x256xf32, #tpu.memory_space<vmem>>, %arg5: memref<1x256xf32, #tpu.memory_space<vmem>>, %arg6: memref<1x8x256xbf16, #tpu.memory_space<vmem>>) attributes {dimension_semantics = [#tpu.dimension_semantics<parallel>], iteration_bounds = array<i64: 2>, scalar_prefetch = 0 : i64, scratch_operands = 0 : i64, tpu.core_type = #tpu.core_type<tc>, window_params = [{transform_indices = @transform_0, window_bounds = array<i64: 1, 8, 256>}, {pipeline_mode = #tpu.pipeline_mode<synchronous>, transform_indices = @transform_1, window_bounds = array<i64: 8, 256>}, {pipeline_mode = #tpu.pipeline_mode<synchronous>, transform_indices = @transform_2, window_bounds = array<i64: 1, 256>}, {pipeline_mode = #tpu.pipeline_mode<synchronous>, transform_indices = @transform_3, window_bounds = array<i64: 1, 256>}, {pipeline_mode = #tpu.pipeline_mode<synchronous>, transform_indices = @transform_4, window_bounds = array<i64: 1, 256>}, {transform_indices = @transform_5, window_bounds = array<i64: 1, 8, 256>}]} {
    %c0 = arith.constant 0 : index
    %c0_0 = arith.constant 0 : index
    %c0_1 = arith.constant 0 : index
    %0 = vector.load %arg1[%c0, %c0_0, %c0_1] : memref<1x8x256xf32, #tpu.memory_space<vmem>>, vector<1x8x256xf32>
    %1 = vector.shape_cast %0 : vector<1x8x256xf32> to vector<8x256xf32>
    %c0_2 = arith.constant 0 : index
    %c0_3 = arith.constant 0 : index
    %2 = vector.load %arg2[%c0_2, %c0_3] : memref<8x256xf32, #tpu.memory_space<vmem>>, vector<8x256xf32>
    %3 = arith.addf %1, %2 : vector<8x256xf32>
    %c0_4 = arith.constant 0 : index
    %c0_5 = arith.constant 0 : index
    %4 = vector.load %arg3[%c0_4, %c0_5] : memref<1x256xf32, #tpu.memory_space<vmem>>, vector<1x256xf32>
    %5 = vector.broadcast %4 : vector<1x256xf32> to vector<8x256xf32>
    %6 = arith.addf %3, %5 : vector<8x256xf32>
    %c0_6 = arith.constant 0 : index
    %c0_7 = arith.constant 0 : index
    %7 = vector.load %arg4[%c0_6, %c0_7] : memref<1x256xf32, #tpu.memory_space<vmem>>, vector<1x256xf32>
    %c0_8 = arith.constant 0 : index
    %c0_9 = arith.constant 0 : index
    %8 = vector.load %arg5[%c0_8, %c0_9] : memref<1x256xf32, #tpu.memory_space<vmem>>, vector<1x256xf32>
    %cst = arith.constant dense<0.000000e+00> : vector<8xf32>
    %9 = vector.multi_reduction <add>, %6, %cst [1] : vector<8x256xf32> to vector<8xf32>
    %10 = vector.shape_cast %9 : vector<8xf32> to vector<8x1xf32>
    %cst_10 = arith.constant 2.560000e+02 : f32
    %11 = vector.broadcast %cst_10 : f32 to vector<8x1xf32>
    %12 = arith.divf %10, %11 : vector<8x1xf32>
    %13 = vector.broadcast %12 : vector<8x1xf32> to vector<8x256xf32>
    %14 = arith.subf %6, %13 : vector<8x256xf32>
    %15 = arith.mulf %14, %14 : vector<8x256xf32>
    %cst_11 = arith.constant dense<0.000000e+00> : vector<8xf32>
    %16 = vector.multi_reduction <add>, %15, %cst_11 [1] : vector<8x256xf32> to vector<8xf32>
    %17 = vector.shape_cast %16 : vector<8xf32> to vector<8x1xf32>
    %cst_12 = arith.constant 2.560000e+02 : f32
    %18 = vector.broadcast %cst_12 : f32 to vector<8x1xf32>
    %19 = arith.divf %17, %18 : vector<8x1xf32>
    %20 = vector.broadcast %12 : vector<8x1xf32> to vector<8x256xf32>
    %21 = arith.subf %6, %20 : vector<8x256xf32>
    %cst_13 = arith.constant 9.99999996E-13 : f32
    %22 = vector.broadcast %cst_13 : f32 to vector<8x1xf32>
    %23 = arith.addf %19, %22 : vector<8x1xf32>
    %24 = math.rsqrt %23 : vector<8x1xf32>
    %25 = vector.broadcast %24 : vector<8x1xf32> to vector<8x256xf32>
    %26 = arith.mulf %21, %25 : vector<8x256xf32>
    %27 = vector.broadcast %7 : vector<1x256xf32> to vector<8x256xf32>
    %28 = arith.mulf %26, %27 : vector<8x256xf32>
    %29 = vector.broadcast %8 : vector<1x256xf32> to vector<8x256xf32>
    %30 = arith.addf %28, %29 : vector<8x256xf32>
    %31 = arith.truncf %30 : vector<8x256xf32> to vector<8x256xbf16>
    %c0_14 = arith.constant 0 : index
    %c0_15 = arith.constant 0 : index
    %c0_16 = arith.constant 0 : index
    %32 = vector.load %arg6[%c0_14, %c0_15, %c0_16] : memref<1x8x256xbf16, #tpu.memory_space<vmem>>, vector<1x8x256xbf16>
    %33 = vector.shape_cast %32 : vector<1x8x256xbf16> to vector<8x256xbf16>
    %34 = vector.shape_cast %31 : vector<8x256xbf16> to vector<1x8x256xbf16>
    tpu.vector_store %arg6[%c0_14, %c0_15, %c0_16], %34 {strides = array<i32>} : memref<1x8x256xbf16, #tpu.memory_space<vmem>>, vector<1x8x256xbf16>,
    return
  }
  func.func @transform_0(%arg0: i32) -> (i32, i32, i32) {
    %c0_i32 = arith.constant 0 : i32
    %c0_i32_0 = arith.constant 0 : i32
    %c0_i32_1 = arith.constant 0 : i32
    return %arg0, %c0_i32, %c0_i32_0 : i32, i32, i32
  }
  func.func @transform_1(%arg0: i32) -> (i32, i32) {
    %c0_i32 = arith.constant 0 : i32
    %c0_i32_0 = arith.constant 0 : i32
    %c0_i32_1 = arith.constant 0 : i32
    return %c0_i32, %c0_i32_0 : i32, i32
  }
  func.func @transform_2(%arg0: i32) -> (i32, i32) {
    %c0_i32 = arith.constant 0 : i32
    %c0_i32_0 = arith.constant 0 : i32
    %c0_i32_1 = arith.constant 0 : i32
    return %c0_i32, %c0_i32_0 : i32, i32
  }
  func.func @transform_3(%arg0: i32) -> (i32, i32) {
    %c0_i32 = arith.constant 0 : i32
    %c0_i32_0 = arith.constant 0 : i32
    %c0_i32_1 = arith.constant 0 : i32
    return %c0_i32, %c0_i32_0 : i32, i32
  }
  func.func @transform_4(%arg0: i32) -> (i32, i32) {
    %c0_i32 = arith.constant 0 : i32
    %c0_i32_0 = arith.constant 0 : i32
    %c0_i32_1 = arith.constant 0 : i32
    return %c0_i32, %c0_i32_0 : i32, i32
  }
  func.func @transform_5(%arg0: i32) -> (i32, i32, i32) {
    %c0_i32 = arith.constant 0 : i32
    %c0_i32_0 = arith.constant 0 : i32
    %c0_i32_1 = arith.constant 0 : i32
    return %arg0, %c0_i32, %c0_i32_0 : i32, i32, i32
  }
}

module attributes {stable_mosaic.version = 11 : i64} {
  func.func @_ffn_block_kernel(%arg0: i32, %arg1: memref<16x256xbf16, #tpu.memory_space<vmem>>, %arg2: memref<256x1024xbf16, #tpu.memory_space<vmem>>, %arg3: memref<1x1024xf32, #tpu.memory_space<vmem>>, %arg4: memref<1024x256xbf16, #tpu.memory_space<vmem>>, %arg5: memref<1x256xf32, #tpu.memory_space<vmem>>, %arg6: memref<1x256xf32, #tpu.memory_space<vmem>>, %arg7: memref<1x256xf32, #tpu.memory_space<vmem>>, %arg8: memref<16x256xbf16, #tpu.memory_space<vmem>>) attributes {dimension_semantics = [#tpu.dimension_semantics<parallel>], iteration_bounds = array<i64: 1>, scalar_prefetch = 0 : i64, scratch_operands = 0 : i64, tpu.core_type = #tpu.core_type<tc>, window_params = [{transform_indices = @transform_0, window_bounds = array<i64: 16, 256>}, {pipeline_mode = #tpu.pipeline_mode<synchronous>, transform_indices = @transform_1, window_bounds = array<i64: 256, 1024>}, {pipeline_mode = #tpu.pipeline_mode<synchronous>, transform_indices = @transform_2, window_bounds = array<i64: 1, 1024>}, {pipeline_mode = #tpu.pipeline_mode<synchronous>, transform_indices = @transform_3, window_bounds = array<i64: 1024, 256>}, {pipeline_mode = #tpu.pipeline_mode<synchronous>, transform_indices = @transform_4, window_bounds = array<i64: 1, 256>}, {pipeline_mode = #tpu.pipeline_mode<synchronous>, transform_indices = @transform_5, window_bounds = array<i64: 1, 256>}, {pipeline_mode = #tpu.pipeline_mode<synchronous>, transform_indices = @transform_6, window_bounds = array<i64: 1, 256>}, {transform_indices = @transform_7, window_bounds = array<i64: 16, 256>}]} {
    %c0 = arith.constant 0 : index
    %c0_0 = arith.constant 0 : index
    %0 = vector.load %arg1[%c0, %c0_0] : memref<16x256xbf16, #tpu.memory_space<vmem>>, vector<16x256xbf16>
    %c0_1 = arith.constant 0 : index
    %c0_2 = arith.constant 0 : index
    %1 = vector.load %arg2[%c0_1, %c0_2] : memref<256x1024xbf16, #tpu.memory_space<vmem>>, vector<256x1024xbf16>
    %cst = arith.constant dense<0.000000e+00> : vector<16x1024xf32>
    %2 = tpu.matmul %0, %1, %cst {dimension_numbers = #tpu.dot_dimension_numbers<[1], [0], [0], [1], [0, 0, 1, 1], [], []>} : vector<16x256xbf16>, vector<256x1024xbf16>, vector<16x1024xf32> -> vector<16x1024xf32>
    %c0_3 = arith.constant 0 : index
    %c0_4 = arith.constant 0 : index
    %3 = vector.load %arg3[%c0_3, %c0_4] : memref<1x1024xf32, #tpu.memory_space<vmem>>, vector<1x1024xf32>
    %4 = vector.broadcast %3 : vector<1x1024xf32> to vector<16x1024xf32>
    %5 = arith.addf %2, %4 : vector<16x1024xf32>
    %cst_5 = arith.constant 5.000000e-01 : f32
    %6 = vector.broadcast %cst_5 : f32 to vector<16x1024xf32>
    %7 = arith.mulf %6, %5 : vector<16x1024xf32>
    %cst_6 = arith.constant 4.471500e-02 : f32
    %8 = vector.broadcast %cst_6 : f32 to vector<16x1024xf32>
    %9 = arith.mulf %8, %5 : vector<16x1024xf32>
    %10 = arith.mulf %9, %5 : vector<16x1024xf32>
    %11 = arith.mulf %10, %5 : vector<16x1024xf32>
    %12 = arith.addf %5, %11 : vector<16x1024xf32>
    %cst_7 = arith.constant 0.797884583 : f32
    %13 = vector.broadcast %cst_7 : f32 to vector<16x1024xf32>
    %14 = arith.mulf %13, %12 : vector<16x1024xf32>
    %15 = math.tanh %14 : vector<16x1024xf32>
    %cst_8 = arith.constant 1.000000e+00 : f32
    %16 = vector.broadcast %cst_8 : f32 to vector<16x1024xf32>
    %17 = arith.addf %16, %15 : vector<16x1024xf32>
    %18 = arith.mulf %7, %17 : vector<16x1024xf32>
    %19 = arith.truncf %18 : vector<16x1024xf32> to vector<16x1024xbf16>
    %c0_9 = arith.constant 0 : index
    %c0_10 = arith.constant 0 : index
    %20 = vector.load %arg4[%c0_9, %c0_10] : memref<1024x256xbf16, #tpu.memory_space<vmem>>, vector<1024x256xbf16>
    %cst_11 = arith.constant dense<0.000000e+00> : vector<16x256xf32>
    %21 = tpu.matmul %19, %20, %cst_11 {dimension_numbers = #tpu.dot_dimension_numbers<[1], [0], [0], [1], [0, 0, 1, 1], [], []>} : vector<16x1024xbf16>, vector<1024x256xbf16>, vector<16x256xf32> -> vector<16x256xf32>
    %c0_12 = arith.constant 0 : index
    %c0_13 = arith.constant 0 : index
    %22 = vector.load %arg5[%c0_12, %c0_13] : memref<1x256xf32, #tpu.memory_space<vmem>>, vector<1x256xf32>
    %23 = vector.broadcast %22 : vector<1x256xf32> to vector<16x256xf32>
    %24 = arith.addf %21, %23 : vector<16x256xf32>
    %25 = arith.extf %0 : vector<16x256xbf16> to vector<16x256xf32>
    %26 = arith.addf %24, %25 : vector<16x256xf32>
    %c0_14 = arith.constant 0 : index
    %c0_15 = arith.constant 0 : index
    %27 = vector.load %arg6[%c0_14, %c0_15] : memref<1x256xf32, #tpu.memory_space<vmem>>, vector<1x256xf32>
    %c0_16 = arith.constant 0 : index
    %c0_17 = arith.constant 0 : index
    %28 = vector.load %arg7[%c0_16, %c0_17] : memref<1x256xf32, #tpu.memory_space<vmem>>, vector<1x256xf32>
    %cst_18 = arith.constant dense<0.000000e+00> : vector<16xf32>
    %29 = vector.multi_reduction <add>, %26, %cst_18 [1] : vector<16x256xf32> to vector<16xf32>
    %30 = vector.shape_cast %29 : vector<16xf32> to vector<16x1xf32>
    %cst_19 = arith.constant 2.560000e+02 : f32
    %31 = vector.broadcast %cst_19 : f32 to vector<16x1xf32>
    %32 = arith.divf %30, %31 : vector<16x1xf32>
    %33 = vector.broadcast %32 : vector<16x1xf32> to vector<16x256xf32>
    %34 = arith.subf %26, %33 : vector<16x256xf32>
    %35 = arith.mulf %34, %34 : vector<16x256xf32>
    %cst_20 = arith.constant dense<0.000000e+00> : vector<16xf32>
    %36 = vector.multi_reduction <add>, %35, %cst_20 [1] : vector<16x256xf32> to vector<16xf32>
    %37 = vector.shape_cast %36 : vector<16xf32> to vector<16x1xf32>
    %cst_21 = arith.constant 2.560000e+02 : f32
    %38 = vector.broadcast %cst_21 : f32 to vector<16x1xf32>
    %39 = arith.divf %37, %38 : vector<16x1xf32>
    %40 = vector.broadcast %32 : vector<16x1xf32> to vector<16x256xf32>
    %41 = arith.subf %26, %40 : vector<16x256xf32>
    %cst_22 = arith.constant 9.99999996E-13 : f32
    %42 = vector.broadcast %cst_22 : f32 to vector<16x1xf32>
    %43 = arith.addf %39, %42 : vector<16x1xf32>
    %44 = math.rsqrt %43 : vector<16x1xf32>
    %45 = vector.broadcast %44 : vector<16x1xf32> to vector<16x256xf32>
    %46 = arith.mulf %41, %45 : vector<16x256xf32>
    %47 = vector.broadcast %27 : vector<1x256xf32> to vector<16x256xf32>
    %48 = arith.mulf %46, %47 : vector<16x256xf32>
    %49 = vector.broadcast %28 : vector<1x256xf32> to vector<16x256xf32>
    %50 = arith.addf %48, %49 : vector<16x256xf32>
    %51 = arith.truncf %50 : vector<16x256xf32> to vector<16x256xbf16>
    %c0_23 = arith.constant 0 : index
    %c0_24 = arith.constant 0 : index
    %52 = vector.load %arg8[%c0_23, %c0_24] : memref<16x256xbf16, #tpu.memory_space<vmem>>, vector<16x256xbf16>
    tpu.vector_store %arg8[%c0_23, %c0_24], %51 {strides = array<i32>} : memref<16x256xbf16, #tpu.memory_space<vmem>>, vector<16x256xbf16>,
    return
  }
  func.func @transform_0(%arg0: i32) -> (i32, i32) {
    %c0_i32 = arith.constant 0 : i32
    %c0_i32_0 = arith.constant 0 : i32
    return %arg0, %c0_i32 : i32, i32
  }
  func.func @transform_1(%arg0: i32) -> (i32, i32) {
    %c0_i32 = arith.constant 0 : i32
    %c0_i32_0 = arith.constant 0 : i32
    %c0_i32_1 = arith.constant 0 : i32
    return %c0_i32, %c0_i32_0 : i32, i32
  }
  func.func @transform_2(%arg0: i32) -> (i32, i32) {
    %c0_i32 = arith.constant 0 : i32
    %c0_i32_0 = arith.constant 0 : i32
    %c0_i32_1 = arith.constant 0 : i32
    return %c0_i32, %c0_i32_0 : i32, i32
  }
  func.func @transform_3(%arg0: i32) -> (i32, i32) {
    %c0_i32 = arith.constant 0 : i32
    %c0_i32_0 = arith.constant 0 : i32
    %c0_i32_1 = arith.constant 0 : i32
    return %c0_i32, %c0_i32_0 : i32, i32
  }
  func.func @transform_4(%arg0: i32) -> (i32, i32) {
    %c0_i32 = arith.constant 0 : i32
    %c0_i32_0 = arith.constant 0 : i32
    %c0_i32_1 = arith.constant 0 : i32
    return %c0_i32, %c0_i32_0 : i32, i32
  }
  func.func @transform_5(%arg0: i32) -> (i32, i32) {
    %c0_i32 = arith.constant 0 : i32
    %c0_i32_0 = arith.constant 0 : i32
    %c0_i32_1 = arith.constant 0 : i32
    return %c0_i32, %c0_i32_0 : i32, i32
  }
  func.func @transform_6(%arg0: i32) -> (i32, i32) {
    %c0_i32 = arith.constant 0 : i32
    %c0_i32_0 = arith.constant 0 : i32
    %c0_i32_1 = arith.constant 0 : i32
    return %c0_i32, %c0_i32_0 : i32, i32
  }
  func.func @transform_7(%arg0: i32) -> (i32, i32) {
    %c0_i32 = arith.constant 0 : i32
    %c0_i32_0 = arith.constant 0 : i32
    return %arg0, %c0_i32 : i32, i32
  }
}

module attributes {stable_mosaic.version = 11 : i64} {
  func.func @_attn_block_kernel(%arg0: i32, %arg1: memref<1x8x256xbf16, #tpu.memory_space<vmem>>, %arg2: memref<1x1x8xf32, #tpu.memory_space<vmem>>, %arg3: memref<256x768xbf16, #tpu.memory_space<vmem>>, %arg4: memref<1x768xf32, #tpu.memory_space<vmem>>, %arg5: memref<256x256xbf16, #tpu.memory_space<vmem>>, %arg6: memref<1x256xf32, #tpu.memory_space<vmem>>, %arg7: memref<1x256xf32, #tpu.memory_space<vmem>>, %arg8: memref<1x256xf32, #tpu.memory_space<vmem>>, %arg9: memref<1x8x256xbf16, #tpu.memory_space<vmem>>) attributes {dimension_semantics = [#tpu.dimension_semantics<parallel>], iteration_bounds = array<i64: 2>, scalar_prefetch = 0 : i64, scratch_operands = 0 : i64, tpu.core_type = #tpu.core_type<tc>, window_params = [{transform_indices = @transform_0, window_bounds = array<i64: 1, 8, 256>}, {transform_indices = @transform_1, window_bounds = array<i64: 1, 1, 8>}, {pipeline_mode = #tpu.pipeline_mode<synchronous>, transform_indices = @transform_2, window_bounds = array<i64: 256, 768>}, {pipeline_mode = #tpu.pipeline_mode<synchronous>, transform_indices = @transform_3, window_bounds = array<i64: 1, 768>}, {pipeline_mode = #tpu.pipeline_mode<synchronous>, transform_indices = @transform_4, window_bounds = array<i64: 256, 256>}, {pipeline_mode = #tpu.pipeline_mode<synchronous>, transform_indices = @transform_5, window_bounds = array<i64: 1, 256>}, {pipeline_mode = #tpu.pipeline_mode<synchronous>, transform_indices = @transform_6, window_bounds = array<i64: 1, 256>}, {pipeline_mode = #tpu.pipeline_mode<synchronous>, transform_indices = @transform_7, window_bounds = array<i64: 1, 256>}, {transform_indices = @transform_8, window_bounds = array<i64: 1, 8, 256>}]} {
    %c0 = arith.constant 0 : index
    %c0_0 = arith.constant 0 : index
    %c0_1 = arith.constant 0 : index
    %0 = vector.load %arg1[%c0, %c0_0, %c0_1] : memref<1x8x256xbf16, #tpu.memory_space<vmem>>, vector<1x8x256xbf16>
    %1 = vector.shape_cast %0 : vector<1x8x256xbf16> to vector<8x256xbf16>
    %c0_2 = arith.constant 0 : index
    %c0_3 = arith.constant 0 : index
    %2 = vector.load %arg3[%c0_2, %c0_3] : memref<256x768xbf16, #tpu.memory_space<vmem>>, vector<256x768xbf16>
    %cst = arith.constant dense<0.000000e+00> : vector<8x768xf32>
    %3 = tpu.matmul %1, %2, %cst {dimension_numbers = #tpu.dot_dimension_numbers<[1], [0], [0], [1], [0, 0, 1, 1], [], []>} : vector<8x256xbf16>, vector<256x768xbf16>, vector<8x768xf32> -> vector<8x768xf32>
    %c0_4 = arith.constant 0 : index
    %c0_5 = arith.constant 0 : index
    %4 = vector.load %arg4[%c0_4, %c0_5] : memref<1x768xf32, #tpu.memory_space<vmem>>, vector<1x768xf32>
    %5 = vector.broadcast %4 : vector<1x768xf32> to vector<8x768xf32>
    %6 = arith.addf %3, %5 : vector<8x768xf32>
    %c0_6 = arith.constant 0 : index
    %c0_7 = arith.constant 0 : index
    %c0_8 = arith.constant 0 : index
    %7 = vector.load %arg2[%c0_6, %c0_7, %c0_8] : memref<1x1x8xf32, #tpu.memory_space<vmem>>, vector<1x1x8xf32>
    %8 = vector.shape_cast %7 : vector<1x1x8xf32> to vector<1x8xf32>
    %9 = vector.shape_cast %8 : vector<1x8xf32> to vector<1x8xf32>
    %10 = vector.broadcast %9 : vector<1x8xf32> to vector<8x8xf32>
    %cst_9 = arith.constant 0.000000e+00 : f32
    %11 = vector.broadcast %cst_9 : f32 to vector<8x256xf32>
    %12 = vector.extract_strided_slice %6 {offsets = [0, 0], sizes = [8, 128], strides = [1, 1]} : vector<8x768xf32> to vector<8x128xf32>
    %13 = arith.truncf %12 : vector<8x128xf32> to vector<8x128xbf16>
    %14 = vector.extract_strided_slice %6 {offsets = [0, 256], sizes = [8, 128], strides = [1, 1]} : vector<8x768xf32> to vector<8x128xf32>
    %15 = arith.truncf %14 : vector<8x128xf32> to vector<8x128xbf16>
    %16 = vector.extract_strided_slice %6 {offsets = [0, 512], sizes = [8, 128], strides = [1, 1]} : vector<8x768xf32> to vector<8x128xf32>
    %17 = arith.truncf %16 : vector<8x128xf32> to vector<8x128xbf16>
    %cst_10 = arith.constant dense<0.000000e+00> : vector<8x8xf32>
    %18 = tpu.matmul %13, %15, %cst_10 {dimension_numbers = #tpu.dot_dimension_numbers<[1], [1], [0], [0], [0, 0, 1, 0], [], []>} : vector<8x128xbf16>, vector<8x128xbf16>, vector<8x8xf32> -> vector<8x8xf32>
    %cst_11 = arith.constant 0.0883883461 : f32
    %19 = vector.broadcast %cst_11 : f32 to vector<8x8xf32>
    %20 = arith.mulf %18, %19 : vector<8x8xf32>
    %21 = arith.addf %20, %10 : vector<8x8xf32>
    %cst_12 = arith.constant dense<0xFF800000> : vector<8xf32>
    %22 = vector.multi_reduction <maximumf>, %21, %cst_12 [1] : vector<8x8xf32> to vector<8xf32>
    %23 = vector.shape_cast %22 : vector<8xf32> to vector<8x1xf32>
    %24 = vector.broadcast %23 : vector<8x1xf32> to vector<8x8xf32>
    %25 = arith.subf %21, %24 : vector<8x8xf32>
    %26 = math.exp %25 : vector<8x8xf32>
    %cst_13 = arith.constant dense<0.000000e+00> : vector<8xf32>
    %27 = vector.multi_reduction <add>, %26, %cst_13 [1] : vector<8x8xf32> to vector<8xf32>
    %28 = vector.shape_cast %27 : vector<8xf32> to vector<8x1xf32>
    %29 = tpu.reciprocal %28 {approx = true} : vector<8x1xf32> -> vector<8x1xf32>
    %30 = vector.broadcast %29 : vector<8x1xf32> to vector<8x8xf32>
    %31 = arith.mulf %26, %30 : vector<8x8xf32>
    %32 = arith.truncf %31 : vector<8x8xf32> to vector<8x8xbf16>
    %cst_14 = arith.constant dense<0.000000e+00> : vector<8x128xf32>
    %33 = tpu.matmul %32, %17, %cst_14 {dimension_numbers = #tpu.dot_dimension_numbers<[1], [0], [0], [1], [0, 0, 1, 1], [], []>} : vector<8x8xbf16>, vector<8x128xbf16>, vector<8x128xf32> -> vector<8x128xf32>
    %34 = arith.truncf %33 : vector<8x128xf32> to vector<8x128xbf16>
    %c0_15 = arith.constant 0 : index
    %c0_16 = arith.constant 0 : index
    %35 = vector.load %arg5[%c0_15, %c0_16] : memref<256x256xbf16, #tpu.memory_space<vmem>>, vector<128x256xbf16>
    %cst_17 = arith.constant dense<0.000000e+00> : vector<8x256xf32>
    %36 = tpu.matmul %34, %35, %cst_17 {dimension_numbers = #tpu.dot_dimension_numbers<[1], [0], [0], [1], [0, 0, 1, 1], [], []>} : vector<8x128xbf16>, vector<128x256xbf16>, vector<8x256xf32> -> vector<8x256xf32>
    %37 = arith.addf %11, %36 : vector<8x256xf32>
    %38 = vector.extract_strided_slice %6 {offsets = [0, 128], sizes = [8, 128], strides = [1, 1]} : vector<8x768xf32> to vector<8x128xf32>
    %39 = arith.truncf %38 : vector<8x128xf32> to vector<8x128xbf16>
    %40 = vector.extract_strided_slice %6 {offsets = [0, 384], sizes = [8, 128], strides = [1, 1]} : vector<8x768xf32> to vector<8x128xf32>
    %41 = arith.truncf %40 : vector<8x128xf32> to vector<8x128xbf16>
    %42 = vector.extract_strided_slice %6 {offsets = [0, 640], sizes = [8, 128], strides = [1, 1]} : vector<8x768xf32> to vector<8x128xf32>
    %43 = arith.truncf %42 : vector<8x128xf32> to vector<8x128xbf16>
    %cst_18 = arith.constant dense<0.000000e+00> : vector<8x8xf32>
    %44 = tpu.matmul %39, %41, %cst_18 {dimension_numbers = #tpu.dot_dimension_numbers<[1], [1], [0], [0], [0, 0, 1, 0], [], []>} : vector<8x128xbf16>, vector<8x128xbf16>, vector<8x8xf32> -> vector<8x8xf32>
    %cst_19 = arith.constant 0.0883883461 : f32
    %45 = vector.broadcast %cst_19 : f32 to vector<8x8xf32>
    %46 = arith.mulf %44, %45 : vector<8x8xf32>
    %47 = arith.addf %46, %10 : vector<8x8xf32>
    %cst_20 = arith.constant dense<0xFF800000> : vector<8xf32>
    %48 = vector.multi_reduction <maximumf>, %47, %cst_20 [1] : vector<8x8xf32> to vector<8xf32>
    %49 = vector.shape_cast %48 : vector<8xf32> to vector<8x1xf32>
    %50 = vector.broadcast %49 : vector<8x1xf32> to vector<8x8xf32>
    %51 = arith.subf %47, %50 : vector<8x8xf32>
    %52 = math.exp %51 : vector<8x8xf32>
    %cst_21 = arith.constant dense<0.000000e+00> : vector<8xf32>
    %53 = vector.multi_reduction <add>, %52, %cst_21 [1] : vector<8x8xf32> to vector<8xf32>
    %54 = vector.shape_cast %53 : vector<8xf32> to vector<8x1xf32>
    %55 = tpu.reciprocal %54 {approx = true} : vector<8x1xf32> -> vector<8x1xf32>
    %56 = vector.broadcast %55 : vector<8x1xf32> to vector<8x8xf32>
    %57 = arith.mulf %52, %56 : vector<8x8xf32>
    %58 = arith.truncf %57 : vector<8x8xf32> to vector<8x8xbf16>
    %cst_22 = arith.constant dense<0.000000e+00> : vector<8x128xf32>
    %59 = tpu.matmul %58, %43, %cst_22 {dimension_numbers = #tpu.dot_dimension_numbers<[1], [0], [0], [1], [0, 0, 1, 1], [], []>} : vector<8x8xbf16>, vector<8x128xbf16>, vector<8x128xf32> -> vector<8x128xf32>
    %60 = arith.truncf %59 : vector<8x128xf32> to vector<8x128xbf16>
    %c128 = arith.constant 128 : index
    %c0_23 = arith.constant 0 : index
    %61 = vector.load %arg5[%c128, %c0_23] : memref<256x256xbf16, #tpu.memory_space<vmem>>, vector<128x256xbf16>
    %cst_24 = arith.constant dense<0.000000e+00> : vector<8x256xf32>
    %62 = tpu.matmul %60, %61, %cst_24 {dimension_numbers = #tpu.dot_dimension_numbers<[1], [0], [0], [1], [0, 0, 1, 1], [], []>} : vector<8x128xbf16>, vector<128x256xbf16>, vector<8x256xf32> -> vector<8x256xf32>
    %63 = arith.addf %37, %62 : vector<8x256xf32>
    %c0_25 = arith.constant 0 : index
    %c0_26 = arith.constant 0 : index
    %64 = vector.load %arg6[%c0_25, %c0_26] : memref<1x256xf32, #tpu.memory_space<vmem>>, vector<1x256xf32>
    %65 = vector.broadcast %64 : vector<1x256xf32> to vector<8x256xf32>
    %66 = arith.addf %63, %65 : vector<8x256xf32>
    %67 = arith.extf %1 : vector<8x256xbf16> to vector<8x256xf32>
    %68 = arith.addf %66, %67 : vector<8x256xf32>
    %c0_27 = arith.constant 0 : index
    %c0_28 = arith.constant 0 : index
    %69 = vector.load %arg7[%c0_27, %c0_28] : memref<1x256xf32, #tpu.memory_space<vmem>>, vector<1x256xf32>
    %c0_29 = arith.constant 0 : index
    %c0_30 = arith.constant 0 : index
    %70 = vector.load %arg8[%c0_29, %c0_30] : memref<1x256xf32, #tpu.memory_space<vmem>>, vector<1x256xf32>
    %cst_31 = arith.constant dense<0.000000e+00> : vector<8xf32>
    %71 = vector.multi_reduction <add>, %68, %cst_31 [1] : vector<8x256xf32> to vector<8xf32>
    %72 = vector.shape_cast %71 : vector<8xf32> to vector<8x1xf32>
    %cst_32 = arith.constant 2.560000e+02 : f32
    %73 = vector.broadcast %cst_32 : f32 to vector<8x1xf32>
    %74 = arith.divf %72, %73 : vector<8x1xf32>
    %75 = vector.broadcast %74 : vector<8x1xf32> to vector<8x256xf32>
    %76 = arith.subf %68, %75 : vector<8x256xf32>
    %77 = arith.mulf %76, %76 : vector<8x256xf32>
    %cst_33 = arith.constant dense<0.000000e+00> : vector<8xf32>
    %78 = vector.multi_reduction <add>, %77, %cst_33 [1] : vector<8x256xf32> to vector<8xf32>
    %79 = vector.shape_cast %78 : vector<8xf32> to vector<8x1xf32>
    %cst_34 = arith.constant 2.560000e+02 : f32
    %80 = vector.broadcast %cst_34 : f32 to vector<8x1xf32>
    %81 = arith.divf %79, %80 : vector<8x1xf32>
    %82 = vector.broadcast %74 : vector<8x1xf32> to vector<8x256xf32>
    %83 = arith.subf %68, %82 : vector<8x256xf32>
    %cst_35 = arith.constant 9.99999996E-13 : f32
    %84 = vector.broadcast %cst_35 : f32 to vector<8x1xf32>
    %85 = arith.addf %81, %84 : vector<8x1xf32>
    %86 = math.rsqrt %85 : vector<8x1xf32>
    %87 = vector.broadcast %86 : vector<8x1xf32> to vector<8x256xf32>
    %88 = arith.mulf %83, %87 : vector<8x256xf32>
    %89 = vector.broadcast %69 : vector<1x256xf32> to vector<8x256xf32>
    %90 = arith.mulf %88, %89 : vector<8x256xf32>
    %91 = vector.broadcast %70 : vector<1x256xf32> to vector<8x256xf32>
    %92 = arith.addf %90, %91 : vector<8x256xf32>
    %93 = arith.truncf %92 : vector<8x256xf32> to vector<8x256xbf16>
    %c0_36 = arith.constant 0 : index
    %c0_37 = arith.constant 0 : index
    %c0_38 = arith.constant 0 : index
    %94 = vector.load %arg9[%c0_36, %c0_37, %c0_38] : memref<1x8x256xbf16, #tpu.memory_space<vmem>>, vector<1x8x256xbf16>
    %95 = vector.shape_cast %94 : vector<1x8x256xbf16> to vector<8x256xbf16>
    %96 = vector.shape_cast %93 : vector<8x256xbf16> to vector<1x8x256xbf16>
    tpu.vector_store %arg9[%c0_36, %c0_37, %c0_38], %96 {strides = array<i32>} : memref<1x8x256xbf16, #tpu.memory_space<vmem>>, vector<1x8x256xbf16>,
    return
  }
  func.func @transform_0(%arg0: i32) -> (i32, i32, i32) {
    %c0_i32 = arith.constant 0 : i32
    %c0_i32_0 = arith.constant 0 : i32
    %c0_i32_1 = arith.constant 0 : i32
    return %arg0, %c0_i32, %c0_i32_0 : i32, i32, i32
  }
  func.func @transform_1(%arg0: i32) -> (i32, i32, i32) {
    %c0_i32 = arith.constant 0 : i32
    %c0_i32_0 = arith.constant 0 : i32
    %c0_i32_1 = arith.constant 0 : i32
    return %arg0, %c0_i32, %c0_i32_0 : i32, i32, i32
  }
  func.func @transform_2(%arg0: i32) -> (i32, i32) {
    %c0_i32 = arith.constant 0 : i32
    %c0_i32_0 = arith.constant 0 : i32
    %c0_i32_1 = arith.constant 0 : i32
    return %c0_i32, %c0_i32_0 : i32, i32
  }
  func.func @transform_3(%arg0: i32) -> (i32, i32) {
    %c0_i32 = arith.constant 0 : i32
    %c0_i32_0 = arith.constant 0 : i32
    %c0_i32_1 = arith.constant 0 : i32
    return %c0_i32, %c0_i32_0 : i32, i32
  }
  func.func @transform_4(%arg0: i32) -> (i32, i32) {
    %c0_i32 = arith.constant 0 : i32
    %c0_i32_0 = arith.constant 0 : i32
    %c0_i32_1 = arith.constant 0 : i32
    return %c0_i32, %c0_i32_0 : i32, i32
  }
  func.func @transform_5(%arg0: i32) -> (i32, i32) {
    %c0_i32 = arith.constant 0 : i32
    %c0_i32_0 = arith.constant 0 : i32
    %c0_i32_1 = arith.constant 0 : i32
    return %c0_i32, %c0_i32_0 : i32, i32
  }
  func.func @transform_6(%arg0: i32) -> (i32, i32) {
    %c0_i32 = arith.constant 0 : i32
    %c0_i32_0 = arith.constant 0 : i32
    %c0_i32_1 = arith.constant 0 : i32
    return %c0_i32, %c0_i32_0 : i32, i32
  }
  func.func @transform_7(%arg0: i32) -> (i32, i32) {
    %c0_i32 = arith.constant 0 : i32
    %c0_i32_0 = arith.constant 0 : i32
    %c0_i32_1 = arith.constant 0 : i32
    return %c0_i32, %c0_i32_0 : i32, i32
  }
  func.func @transform_8(%arg0: i32) -> (i32, i32, i32) {
    %c0_i32 = arith.constant 0 : i32
    %c0_i32_0 = arith.constant 0 : i32
    %c0_i32_1 = arith.constant 0 : i32
    return %arg0, %c0_i32, %c0_i32_0 : i32, i32, i32
  }
}

module attributes {stable_mosaic.version = 11 : i64} {
  func.func @_attn_block_kernel(%arg0: i32, %arg1: memref<1x8x256xbf16, #tpu.memory_space<vmem>>, %arg2: memref<1x1x8xf32, #tpu.memory_space<vmem>>, %arg3: memref<256x768xbf16, #tpu.memory_space<vmem>>, %arg4: memref<1x768xf32, #tpu.memory_space<vmem>>, %arg5: memref<256x256xbf16, #tpu.memory_space<vmem>>, %arg6: memref<1x256xf32, #tpu.memory_space<vmem>>, %arg7: memref<1x256xf32, #tpu.memory_space<vmem>>, %arg8: memref<1x256xf32, #tpu.memory_space<vmem>>, %arg9: memref<1x8x256xbf16, #tpu.memory_space<vmem>>) attributes {dimension_semantics = [#tpu.dimension_semantics<parallel>], iteration_bounds = array<i64: 2>, scalar_prefetch = 0 : i64, scratch_operands = 0 : i64, tpu.core_type = #tpu.core_type<tc>, window_params = [{transform_indices = @transform_0, window_bounds = array<i64: 1, 8, 256>}, {transform_indices = @transform_1, window_bounds = array<i64: 1, 1, 8>}, {pipeline_mode = #tpu.pipeline_mode<synchronous>, transform_indices = @transform_2, window_bounds = array<i64: 256, 768>}, {pipeline_mode = #tpu.pipeline_mode<synchronous>, transform_indices = @transform_3, window_bounds = array<i64: 1, 768>}, {pipeline_mode = #tpu.pipeline_mode<synchronous>, transform_indices = @transform_4, window_bounds = array<i64: 256, 256>}, {pipeline_mode = #tpu.pipeline_mode<synchronous>, transform_indices = @transform_5, window_bounds = array<i64: 1, 256>}, {pipeline_mode = #tpu.pipeline_mode<synchronous>, transform_indices = @transform_6, window_bounds = array<i64: 1, 256>}, {pipeline_mode = #tpu.pipeline_mode<synchronous>, transform_indices = @transform_7, window_bounds = array<i64: 1, 256>}, {transform_indices = @transform_8, window_bounds = array<i64: 1, 8, 256>}]} {
    %c0 = arith.constant 0 : index
    %c0_0 = arith.constant 0 : index
    %c0_1 = arith.constant 0 : index
    %0 = vector.load %arg1[%c0, %c0_0, %c0_1] : memref<1x8x256xbf16, #tpu.memory_space<vmem>>, vector<1x8x256xbf16>
    %1 = vector.shape_cast %0 : vector<1x8x256xbf16> to vector<8x256xbf16>
    %c0_2 = arith.constant 0 : index
    %c0_3 = arith.constant 0 : index
    %2 = vector.load %arg3[%c0_2, %c0_3] : memref<256x768xbf16, #tpu.memory_space<vmem>>, vector<256x768xbf16>
    %cst = arith.constant dense<0.000000e+00> : vector<8x768xf32>
    %3 = tpu.matmul %1, %2, %cst {dimension_numbers = #tpu.dot_dimension_numbers<[1], [0], [0], [1], [0, 0, 1, 1], [], []>} : vector<8x256xbf16>, vector<256x768xbf16>, vector<8x768xf32> -> vector<8x768xf32>
    %c0_4 = arith.constant 0 : index
    %c0_5 = arith.constant 0 : index
    %4 = vector.load %arg4[%c0_4, %c0_5] : memref<1x768xf32, #tpu.memory_space<vmem>>, vector<1x768xf32>
    %5 = vector.broadcast %4 : vector<1x768xf32> to vector<8x768xf32>
    %6 = arith.addf %3, %5 : vector<8x768xf32>
    %c0_6 = arith.constant 0 : index
    %c0_7 = arith.constant 0 : index
    %c0_8 = arith.constant 0 : index
    %7 = vector.load %arg2[%c0_6, %c0_7, %c0_8] : memref<1x1x8xf32, #tpu.memory_space<vmem>>, vector<1x1x8xf32>
    %8 = vector.shape_cast %7 : vector<1x1x8xf32> to vector<1x8xf32>
    %9 = vector.shape_cast %8 : vector<1x8xf32> to vector<1x8xf32>
    %10 = vector.broadcast %9 : vector<1x8xf32> to vector<8x8xf32>
    %cst_9 = arith.constant 0.000000e+00 : f32
    %11 = vector.broadcast %cst_9 : f32 to vector<8x256xf32>
    %12 = vector.extract_strided_slice %6 {offsets = [0, 0], sizes = [8, 128], strides = [1, 1]} : vector<8x768xf32> to vector<8x128xf32>
    %13 = arith.truncf %12 : vector<8x128xf32> to vector<8x128xbf16>
    %14 = vector.extract_strided_slice %6 {offsets = [0, 256], sizes = [8, 128], strides = [1, 1]} : vector<8x768xf32> to vector<8x128xf32>
    %15 = arith.truncf %14 : vector<8x128xf32> to vector<8x128xbf16>
    %16 = vector.extract_strided_slice %6 {offsets = [0, 512], sizes = [8, 128], strides = [1, 1]} : vector<8x768xf32> to vector<8x128xf32>
    %17 = arith.truncf %16 : vector<8x128xf32> to vector<8x128xbf16>
    %cst_10 = arith.constant dense<0.000000e+00> : vector<8x8xf32>
    %18 = tpu.matmul %13, %15, %cst_10 {dimension_numbers = #tpu.dot_dimension_numbers<[1], [1], [0], [0], [0, 0, 1, 0], [], []>} : vector<8x128xbf16>, vector<8x128xbf16>, vector<8x8xf32> -> vector<8x8xf32>
    %cst_11 = arith.constant 0.0883883461 : f32
    %19 = vector.broadcast %cst_11 : f32 to vector<8x8xf32>
    %20 = arith.mulf %18, %19 : vector<8x8xf32>
    %21 = arith.addf %20, %10 : vector<8x8xf32>
    %cst_12 = arith.constant dense<0xFF800000> : vector<8xf32>
    %22 = vector.multi_reduction <maximumf>, %21, %cst_12 [1] : vector<8x8xf32> to vector<8xf32>
    %23 = vector.shape_cast %22 : vector<8xf32> to vector<8x1xf32>
    %24 = vector.broadcast %23 : vector<8x1xf32> to vector<8x8xf32>
    %25 = arith.subf %21, %24 : vector<8x8xf32>
    %26 = math.exp %25 : vector<8x8xf32>
    %cst_13 = arith.constant dense<0.000000e+00> : vector<8xf32>
    %27 = vector.multi_reduction <add>, %26, %cst_13 [1] : vector<8x8xf32> to vector<8xf32>
    %28 = vector.shape_cast %27 : vector<8xf32> to vector<8x1xf32>
    %29 = tpu.reciprocal %28 {approx = true} : vector<8x1xf32> -> vector<8x1xf32>
    %30 = vector.broadcast %29 : vector<8x1xf32> to vector<8x8xf32>
    %31 = arith.mulf %26, %30 : vector<8x8xf32>
    %32 = arith.truncf %31 : vector<8x8xf32> to vector<8x8xbf16>
    %cst_14 = arith.constant dense<0.000000e+00> : vector<8x128xf32>
    %33 = tpu.matmul %32, %17, %cst_14 {dimension_numbers = #tpu.dot_dimension_numbers<[1], [0], [0], [1], [0, 0, 1, 1], [], []>} : vector<8x8xbf16>, vector<8x128xbf16>, vector<8x128xf32> -> vector<8x128xf32>
    %34 = arith.truncf %33 : vector<8x128xf32> to vector<8x128xbf16>
    %c0_15 = arith.constant 0 : index
    %c0_16 = arith.constant 0 : index
    %35 = vector.load %arg5[%c0_15, %c0_16] : memref<256x256xbf16, #tpu.memory_space<vmem>>, vector<128x256xbf16>
    %cst_17 = arith.constant dense<0.000000e+00> : vector<8x256xf32>
    %36 = tpu.matmul %34, %35, %cst_17 {dimension_numbers = #tpu.dot_dimension_numbers<[1], [0], [0], [1], [0, 0, 1, 1], [], []>} : vector<8x128xbf16>, vector<128x256xbf16>, vector<8x256xf32> -> vector<8x256xf32>
    %37 = arith.addf %11, %36 : vector<8x256xf32>
    %38 = vector.extract_strided_slice %6 {offsets = [0, 128], sizes = [8, 128], strides = [1, 1]} : vector<8x768xf32> to vector<8x128xf32>
    %39 = arith.truncf %38 : vector<8x128xf32> to vector<8x128xbf16>
    %40 = vector.extract_strided_slice %6 {offsets = [0, 384], sizes = [8, 128], strides = [1, 1]} : vector<8x768xf32> to vector<8x128xf32>
    %41 = arith.truncf %40 : vector<8x128xf32> to vector<8x128xbf16>
    %42 = vector.extract_strided_slice %6 {offsets = [0, 640], sizes = [8, 128], strides = [1, 1]} : vector<8x768xf32> to vector<8x128xf32>
    %43 = arith.truncf %42 : vector<8x128xf32> to vector<8x128xbf16>
    %cst_18 = arith.constant dense<0.000000e+00> : vector<8x8xf32>
    %44 = tpu.matmul %39, %41, %cst_18 {dimension_numbers = #tpu.dot_dimension_numbers<[1], [1], [0], [0], [0, 0, 1, 0], [], []>} : vector<8x128xbf16>, vector<8x128xbf16>, vector<8x8xf32> -> vector<8x8xf32>
    %cst_19 = arith.constant 0.0883883461 : f32
    %45 = vector.broadcast %cst_19 : f32 to vector<8x8xf32>
    %46 = arith.mulf %44, %45 : vector<8x8xf32>
    %47 = arith.addf %46, %10 : vector<8x8xf32>
    %cst_20 = arith.constant dense<0xFF800000> : vector<8xf32>
    %48 = vector.multi_reduction <maximumf>, %47, %cst_20 [1] : vector<8x8xf32> to vector<8xf32>
    %49 = vector.shape_cast %48 : vector<8xf32> to vector<8x1xf32>
    %50 = vector.broadcast %49 : vector<8x1xf32> to vector<8x8xf32>
    %51 = arith.subf %47, %50 : vector<8x8xf32>
    %52 = math.exp %51 : vector<8x8xf32>
    %cst_21 = arith.constant dense<0.000000e+00> : vector<8xf32>
    %53 = vector.multi_reduction <add>, %52, %cst_21 [1] : vector<8x8xf32> to vector<8xf32>
    %54 = vector.shape_cast %53 : vector<8xf32> to vector<8x1xf32>
    %55 = tpu.reciprocal %54 {approx = true} : vector<8x1xf32> -> vector<8x1xf32>
    %56 = vector.broadcast %55 : vector<8x1xf32> to vector<8x8xf32>
    %57 = arith.mulf %52, %56 : vector<8x8xf32>
    %58 = arith.truncf %57 : vector<8x8xf32> to vector<8x8xbf16>
    %cst_22 = arith.constant dense<0.000000e+00> : vector<8x128xf32>
    %59 = tpu.matmul %58, %43, %cst_22 {dimension_numbers = #tpu.dot_dimension_numbers<[1], [0], [0], [1], [0, 0, 1, 1], [], []>} : vector<8x8xbf16>, vector<8x128xbf16>, vector<8x128xf32> -> vector<8x128xf32>
    %60 = arith.truncf %59 : vector<8x128xf32> to vector<8x128xbf16>
    %c128 = arith.constant 128 : index
    %c0_23 = arith.constant 0 : index
    %61 = vector.load %arg5[%c128, %c0_23] : memref<256x256xbf16, #tpu.memory_space<vmem>>, vector<128x256xbf16>
    %cst_24 = arith.constant dense<0.000000e+00> : vector<8x256xf32>
    %62 = tpu.matmul %60, %61, %cst_24 {dimension_numbers = #tpu.dot_dimension_numbers<[1], [0], [0], [1], [0, 0, 1, 1], [], []>} : vector<8x128xbf16>, vector<128x256xbf16>, vector<8x256xf32> -> vector<8x256xf32>
    %63 = arith.addf %37, %62 : vector<8x256xf32>
    %c0_25 = arith.constant 0 : index
    %c0_26 = arith.constant 0 : index
    %64 = vector.load %arg6[%c0_25, %c0_26] : memref<1x256xf32, #tpu.memory_space<vmem>>, vector<1x256xf32>
    %65 = vector.broadcast %64 : vector<1x256xf32> to vector<8x256xf32>
    %66 = arith.addf %63, %65 : vector<8x256xf32>
    %67 = arith.extf %1 : vector<8x256xbf16> to vector<8x256xf32>
    %68 = arith.addf %66, %67 : vector<8x256xf32>
    %c0_27 = arith.constant 0 : index
    %c0_28 = arith.constant 0 : index
    %69 = vector.load %arg7[%c0_27, %c0_28] : memref<1x256xf32, #tpu.memory_space<vmem>>, vector<1x256xf32>
    %c0_29 = arith.constant 0 : index
    %c0_30 = arith.constant 0 : index
    %70 = vector.load %arg8[%c0_29, %c0_30] : memref<1x256xf32, #tpu.memory_space<vmem>>, vector<1x256xf32>
    %cst_31 = arith.constant dense<0.000000e+00> : vector<8xf32>
    %71 = vector.multi_reduction <add>, %68, %cst_31 [1] : vector<8x256xf32> to vector<8xf32>
    %72 = vector.shape_cast %71 : vector<8xf32> to vector<8x1xf32>
    %cst_32 = arith.constant 2.560000e+02 : f32
    %73 = vector.broadcast %cst_32 : f32 to vector<8x1xf32>
    %74 = arith.divf %72, %73 : vector<8x1xf32>
    %75 = vector.broadcast %74 : vector<8x1xf32> to vector<8x256xf32>
    %76 = arith.subf %68, %75 : vector<8x256xf32>
    %77 = arith.mulf %76, %76 : vector<8x256xf32>
    %cst_33 = arith.constant dense<0.000000e+00> : vector<8xf32>
    %78 = vector.multi_reduction <add>, %77, %cst_33 [1] : vector<8x256xf32> to vector<8xf32>
    %79 = vector.shape_cast %78 : vector<8xf32> to vector<8x1xf32>
    %cst_34 = arith.constant 2.560000e+02 : f32
    %80 = vector.broadcast %cst_34 : f32 to vector<8x1xf32>
    %81 = arith.divf %79, %80 : vector<8x1xf32>
    %82 = vector.broadcast %74 : vector<8x1xf32> to vector<8x256xf32>
    %83 = arith.subf %68, %82 : vector<8x256xf32>
    %cst_35 = arith.constant 9.99999996E-13 : f32
    %84 = vector.broadcast %cst_35 : f32 to vector<8x1xf32>
    %85 = arith.addf %81, %84 : vector<8x1xf32>
    %86 = math.rsqrt %85 : vector<8x1xf32>
    %87 = vector.broadcast %86 : vector<8x1xf32> to vector<8x256xf32>
    %88 = arith.mulf %83, %87 : vector<8x256xf32>
    %89 = vector.broadcast %69 : vector<1x256xf32> to vector<8x256xf32>
    %90 = arith.mulf %88, %89 : vector<8x256xf32>
    %91 = vector.broadcast %70 : vector<1x256xf32> to vector<8x256xf32>
    %92 = arith.addf %90, %91 : vector<8x256xf32>
    %93 = arith.truncf %92 : vector<8x256xf32> to vector<8x256xbf16>
    %c0_36 = arith.constant 0 : index
    %c0_37 = arith.constant 0 : index
    %c0_38 = arith.constant 0 : index
    %94 = vector.load %arg9[%c0_36, %c0_37, %c0_38] : memref<1x8x256xbf16, #tpu.memory_space<vmem>>, vector<1x8x256xbf16>
    %95 = vector.shape_cast %94 : vector<1x8x256xbf16> to vector<8x256xbf16>
    %96 = vector.shape_cast %93 : vector<8x256xbf16> to vector<1x8x256xbf16>
    tpu.vector_store %arg9[%c0_36, %c0_37, %c0_38], %96 {strides = array<i32>} : memref<1x8x256xbf16, #tpu.memory_space<vmem>>, vector<1x8x256xbf16>,
    return
  }
  func.func @transform_0(%arg0: i32) -> (i32, i32, i32) {
    %c0_i32 = arith.constant 0 : i32
    %c0_i32_0 = arith.constant 0 : i32
    %c0_i32_1 = arith.constant 0 : i32
    return %arg0, %c0_i32, %c0_i32_0 : i32, i32, i32
  }
  func.func @transform_1(%arg0: i32) -> (i32, i32, i32) {
    %c0_i32 = arith.constant 0 : i32
    %c0_i32_0 = arith.constant 0 : i32
    %c0_i32_1 = arith.constant 0 : i32
    return %arg0, %c0_i32, %c0_i32_0 : i32, i32, i32
  }
  func.func @transform_2(%arg0: i32) -> (i32, i32) {
    %c0_i32 = arith.constant 0 : i32
    %c0_i32_0 = arith.constant 0 : i32
    %c0_i32_1 = arith.constant 0 : i32
    return %c0_i32, %c0_i32_0 : i32, i32
  }
  func.func @transform_3(%arg0: i32) -> (i32, i32) {
    %c0_i32 = arith.constant 0 : i32
    %c0_i32_0 = arith.constant 0 : i32
    %c0_i32_1 = arith.constant 0 : i32
    return %c0_i32, %c0_i32_0 : i32, i32
  }
  func.func @transform_4(%arg0: i32) -> (i32, i32) {
    %c0_i32 = arith.constant 0 : i32
    %c0_i32_0 = arith.constant 0 : i32
    %c0_i32_1 = arith.constant 0 : i32
    return %c0_i32, %c0_i32_0 : i32, i32
  }
  func.func @transform_5(%arg0: i32) -> (i32, i32) {
    %c0_i32 = arith.constant 0 : i32
    %c0_i32_0 = arith.constant 0 : i32
    %c0_i32_1 = arith.constant 0 : i32
    return %c0_i32, %c0_i32_0 : i32, i32
  }
  func.func @transform_6(%arg0: i32) -> (i32, i32) {
    %c0_i32 = arith.constant 0 : i32
    %c0_i32_0 = arith.constant 0 : i32
    %c0_i32_1 = arith.constant 0 : i32
    return %c0_i32, %c0_i32_0 : i32, i32
  }
  func.func @transform_7(%arg0: i32) -> (i32, i32) {
    %c0_i32 = arith.constant 0 : i32
    %c0_i32_0 = arith.constant 0 : i32
    %c0_i32_1 = arith.constant 0 : i32
    return %c0_i32, %c0_i32_0 : i32, i32
  }
  func.func @transform_8(%arg0: i32) -> (i32, i32, i32) {
    %c0_i32 = arith.constant 0 : i32
    %c0_i32_0 = arith.constant 0 : i32
    %c0_i32_1 = arith.constant 0 : i32
    return %arg0, %c0_i32, %c0_i32_0 : i32, i32, i32
  }
}

module attributes {stable_mosaic.version = 11 : i64} {
  func.func @_ffn_block_kernel(%arg0: i32, %arg1: memref<16x256xbf16, #tpu.memory_space<vmem>>, %arg2: memref<256x1024xbf16, #tpu.memory_space<vmem>>, %arg3: memref<1x1024xf32, #tpu.memory_space<vmem>>, %arg4: memref<1024x256xbf16, #tpu.memory_space<vmem>>, %arg5: memref<1x256xf32, #tpu.memory_space<vmem>>, %arg6: memref<1x256xf32, #tpu.memory_space<vmem>>, %arg7: memref<1x256xf32, #tpu.memory_space<vmem>>, %arg8: memref<16x256xbf16, #tpu.memory_space<vmem>>) attributes {dimension_semantics = [#tpu.dimension_semantics<parallel>], iteration_bounds = array<i64: 1>, scalar_prefetch = 0 : i64, scratch_operands = 0 : i64, tpu.core_type = #tpu.core_type<tc>, window_params = [{transform_indices = @transform_0, window_bounds = array<i64: 16, 256>}, {pipeline_mode = #tpu.pipeline_mode<synchronous>, transform_indices = @transform_1, window_bounds = array<i64: 256, 1024>}, {pipeline_mode = #tpu.pipeline_mode<synchronous>, transform_indices = @transform_2, window_bounds = array<i64: 1, 1024>}, {pipeline_mode = #tpu.pipeline_mode<synchronous>, transform_indices = @transform_3, window_bounds = array<i64: 1024, 256>}, {pipeline_mode = #tpu.pipeline_mode<synchronous>, transform_indices = @transform_4, window_bounds = array<i64: 1, 256>}, {pipeline_mode = #tpu.pipeline_mode<synchronous>, transform_indices = @transform_5, window_bounds = array<i64: 1, 256>}, {pipeline_mode = #tpu.pipeline_mode<synchronous>, transform_indices = @transform_6, window_bounds = array<i64: 1, 256>}, {transform_indices = @transform_7, window_bounds = array<i64: 16, 256>}]} {
    %c0 = arith.constant 0 : index
    %c0_0 = arith.constant 0 : index
    %0 = vector.load %arg1[%c0, %c0_0] : memref<16x256xbf16, #tpu.memory_space<vmem>>, vector<16x256xbf16>
    %c0_1 = arith.constant 0 : index
    %c0_2 = arith.constant 0 : index
    %1 = vector.load %arg2[%c0_1, %c0_2] : memref<256x1024xbf16, #tpu.memory_space<vmem>>, vector<256x1024xbf16>
    %cst = arith.constant dense<0.000000e+00> : vector<16x1024xf32>
    %2 = tpu.matmul %0, %1, %cst {dimension_numbers = #tpu.dot_dimension_numbers<[1], [0], [0], [1], [0, 0, 1, 1], [], []>} : vector<16x256xbf16>, vector<256x1024xbf16>, vector<16x1024xf32> -> vector<16x1024xf32>
    %c0_3 = arith.constant 0 : index
    %c0_4 = arith.constant 0 : index
    %3 = vector.load %arg3[%c0_3, %c0_4] : memref<1x1024xf32, #tpu.memory_space<vmem>>, vector<1x1024xf32>
    %4 = vector.broadcast %3 : vector<1x1024xf32> to vector<16x1024xf32>
    %5 = arith.addf %2, %4 : vector<16x1024xf32>
    %cst_5 = arith.constant 5.000000e-01 : f32
    %6 = vector.broadcast %cst_5 : f32 to vector<16x1024xf32>
    %7 = arith.mulf %6, %5 : vector<16x1024xf32>
    %cst_6 = arith.constant 4.471500e-02 : f32
    %8 = vector.broadcast %cst_6 : f32 to vector<16x1024xf32>
    %9 = arith.mulf %8, %5 : vector<16x1024xf32>
    %10 = arith.mulf %9, %5 : vector<16x1024xf32>
    %11 = arith.mulf %10, %5 : vector<16x1024xf32>
    %12 = arith.addf %5, %11 : vector<16x1024xf32>
    %cst_7 = arith.constant 0.797884583 : f32
    %13 = vector.broadcast %cst_7 : f32 to vector<16x1024xf32>
    %14 = arith.mulf %13, %12 : vector<16x1024xf32>
    %15 = math.tanh %14 : vector<16x1024xf32>
    %cst_8 = arith.constant 1.000000e+00 : f32
    %16 = vector.broadcast %cst_8 : f32 to vector<16x1024xf32>
    %17 = arith.addf %16, %15 : vector<16x1024xf32>
    %18 = arith.mulf %7, %17 : vector<16x1024xf32>
    %19 = arith.truncf %18 : vector<16x1024xf32> to vector<16x1024xbf16>
    %c0_9 = arith.constant 0 : index
    %c0_10 = arith.constant 0 : index
    %20 = vector.load %arg4[%c0_9, %c0_10] : memref<1024x256xbf16, #tpu.memory_space<vmem>>, vector<1024x256xbf16>
    %cst_11 = arith.constant dense<0.000000e+00> : vector<16x256xf32>
    %21 = tpu.matmul %19, %20, %cst_11 {dimension_numbers = #tpu.dot_dimension_numbers<[1], [0], [0], [1], [0, 0, 1, 1], [], []>} : vector<16x1024xbf16>, vector<1024x256xbf16>, vector<16x256xf32> -> vector<16x256xf32>
    %c0_12 = arith.constant 0 : index
    %c0_13 = arith.constant 0 : index
    %22 = vector.load %arg5[%c0_12, %c0_13] : memref<1x256xf32, #tpu.memory_space<vmem>>, vector<1x256xf32>
    %23 = vector.broadcast %22 : vector<1x256xf32> to vector<16x256xf32>
    %24 = arith.addf %21, %23 : vector<16x256xf32>
    %25 = arith.extf %0 : vector<16x256xbf16> to vector<16x256xf32>
    %26 = arith.addf %24, %25 : vector<16x256xf32>
    %c0_14 = arith.constant 0 : index
    %c0_15 = arith.constant 0 : index
    %27 = vector.load %arg6[%c0_14, %c0_15] : memref<1x256xf32, #tpu.memory_space<vmem>>, vector<1x256xf32>
    %c0_16 = arith.constant 0 : index
    %c0_17 = arith.constant 0 : index
    %28 = vector.load %arg7[%c0_16, %c0_17] : memref<1x256xf32, #tpu.memory_space<vmem>>, vector<1x256xf32>
    %cst_18 = arith.constant dense<0.000000e+00> : vector<16xf32>
    %29 = vector.multi_reduction <add>, %26, %cst_18 [1] : vector<16x256xf32> to vector<16xf32>
    %30 = vector.shape_cast %29 : vector<16xf32> to vector<16x1xf32>
    %cst_19 = arith.constant 2.560000e+02 : f32
    %31 = vector.broadcast %cst_19 : f32 to vector<16x1xf32>
    %32 = arith.divf %30, %31 : vector<16x1xf32>
    %33 = vector.broadcast %32 : vector<16x1xf32> to vector<16x256xf32>
    %34 = arith.subf %26, %33 : vector<16x256xf32>
    %35 = arith.mulf %34, %34 : vector<16x256xf32>
    %cst_20 = arith.constant dense<0.000000e+00> : vector<16xf32>
    %36 = vector.multi_reduction <add>, %35, %cst_20 [1] : vector<16x256xf32> to vector<16xf32>
    %37 = vector.shape_cast %36 : vector<16xf32> to vector<16x1xf32>
    %cst_21 = arith.constant 2.560000e+02 : f32
    %38 = vector.broadcast %cst_21 : f32 to vector<16x1xf32>
    %39 = arith.divf %37, %38 : vector<16x1xf32>
    %40 = vector.broadcast %32 : vector<16x1xf32> to vector<16x256xf32>
    %41 = arith.subf %26, %40 : vector<16x256xf32>
    %cst_22 = arith.constant 9.99999996E-13 : f32
    %42 = vector.broadcast %cst_22 : f32 to vector<16x1xf32>
    %43 = arith.addf %39, %42 : vector<16x1xf32>
    %44 = math.rsqrt %43 : vector<16x1xf32>
    %45 = vector.broadcast %44 : vector<16x1xf32> to vector<16x256xf32>
    %46 = arith.mulf %41, %45 : vector<16x256xf32>
    %47 = vector.broadcast %27 : vector<1x256xf32> to vector<16x256xf32>
    %48 = arith.mulf %46, %47 : vector<16x256xf32>
    %49 = vector.broadcast %28 : vector<1x256xf32> to vector<16x256xf32>
    %50 = arith.addf %48, %49 : vector<16x256xf32>
    %51 = arith.truncf %50 : vector<16x256xf32> to vector<16x256xbf16>
    %c0_23 = arith.constant 0 : index
    %c0_24 = arith.constant 0 : index
    %52 = vector.load %arg8[%c0_23, %c0_24] : memref<16x256xbf16, #tpu.memory_space<vmem>>, vector<16x256xbf16>
    tpu.vector_store %arg8[%c0_23, %c0_24], %51 {strides = array<i32>} : memref<16x256xbf16, #tpu.memory_space<vmem>>, vector<16x256xbf16>,
    return
  }
  func.func @transform_0(%arg0: i32) -> (i32, i32) {
    %c0_i32 = arith.constant 0 : i32
    %c0_i32_0 = arith.constant 0 : i32
    return %arg0, %c0_i32 : i32, i32
  }
  func.func @transform_1(%arg0: i32) -> (i32, i32) {
    %c0_i32 = arith.constant 0 : i32
    %c0_i32_0 = arith.constant 0 : i32
    %c0_i32_1 = arith.constant 0 : i32
    return %c0_i32, %c0_i32_0 : i32, i32
  }
  func.func @transform_2(%arg0: i32) -> (i32, i32) {
    %c0_i32 = arith.constant 0 : i32
    %c0_i32_0 = arith.constant 0 : i32
    %c0_i32_1 = arith.constant 0 : i32
    return %c0_i32, %c0_i32_0 : i32, i32
  }
  func.func @transform_3(%arg0: i32) -> (i32, i32) {
    %c0_i32 = arith.constant 0 : i32
    %c0_i32_0 = arith.constant 0 : i32
    %c0_i32_1 = arith.constant 0 : i32
    return %c0_i32, %c0_i32_0 : i32, i32
  }
  func.func @transform_4(%arg0: i32) -> (i32, i32) {
    %c0_i32 = arith.constant 0 : i32
    %c0_i32_0 = arith.constant 0 : i32
    %c0_i32_1 = arith.constant 0 : i32
    return %c0_i32, %c0_i32_0 : i32, i32
  }
  func.func @transform_5(%arg0: i32) -> (i32, i32) {
    %c0_i32 = arith.constant 0 : i32
    %c0_i32_0 = arith.constant 0 : i32
    %c0_i32_1 = arith.constant 0 : i32
    return %c0_i32, %c0_i32_0 : i32, i32
  }
  func.func @transform_6(%arg0: i32) -> (i32, i32) {
    %c0_i32 = arith.constant 0 : i32
    %c0_i32_0 = arith.constant 0 : i32
    %c0_i32_1 = arith.constant 0 : i32
    return %c0_i32, %c0_i32_0 : i32, i32
  }
  func.func @transform_7(%arg0: i32) -> (i32, i32) {
    %c0_i32 = arith.constant 0 : i32
    %c0_i32_0 = arith.constant 0 : i32
    return %arg0, %c0_i32 : i32, i32
  }
}

module attributes {stable_mosaic.version = 11 : i64} {
  func.func @_pool_align_kernel(%arg0: memref<2x256xbf16, #tpu.memory_space<vmem>>, %arg1: memref<256x256xbf16, #tpu.memory_space<vmem>>, %arg2: memref<1x256xf32, #tpu.memory_space<vmem>>, %arg3: memref<256x128xbf16, #tpu.memory_space<vmem>>, %arg4: memref<2x256xf32, #tpu.memory_space<vmem>>, %arg5: memref<2x128xf32, #tpu.memory_space<vmem>>) attributes {dimension_semantics = [], scalar_prefetch = 0 : i64, scratch_operands = 0 : i64, tpu.core_type = #tpu.core_type<tc>} {
    %c0 = arith.constant 0 : index
    %c0_0 = arith.constant 0 : index
    %0 = vector.load %arg0[%c0, %c0_0] : memref<2x256xbf16, #tpu.memory_space<vmem>>, vector<2x256xbf16>
    %c0_1 = arith.constant 0 : index
    %c0_2 = arith.constant 0 : index
    %1 = vector.load %arg1[%c0_1, %c0_2] : memref<256x256xbf16, #tpu.memory_space<vmem>>, vector<256x256xbf16>
    %cst = arith.constant dense<0.000000e+00> : vector<2x256xf32>
    %2 = tpu.matmul %0, %1, %cst {dimension_numbers = #tpu.dot_dimension_numbers<[1], [0], [0], [1], [0, 0, 1, 1], [], []>} : vector<2x256xbf16>, vector<256x256xbf16>, vector<2x256xf32> -> vector<2x256xf32>
    %c0_3 = arith.constant 0 : index
    %c0_4 = arith.constant 0 : index
    %3 = vector.load %arg2[%c0_3, %c0_4] : memref<1x256xf32, #tpu.memory_space<vmem>>, vector<1x256xf32>
    %4 = vector.broadcast %3 : vector<1x256xf32> to vector<2x256xf32>
    %5 = arith.addf %2, %4 : vector<2x256xf32>
    %6 = math.tanh %5 : vector<2x256xf32>
    %c0_5 = arith.constant 0 : index
    %c0_6 = arith.constant 0 : index
    %7 = vector.load %arg4[%c0_5, %c0_6] : memref<2x256xf32, #tpu.memory_space<vmem>>, vector<2x256xf32>
    tpu.vector_store %arg4[%c0_5, %c0_6], %6 {strides = array<i32>} : memref<2x256xf32, #tpu.memory_space<vmem>>, vector<2x256xf32>,
    %8 = arith.truncf %6 : vector<2x256xf32> to vector<2x256xbf16>
    %c0_7 = arith.constant 0 : index
    %c0_8 = arith.constant 0 : index
    %9 = vector.load %arg3[%c0_7, %c0_8] : memref<256x128xbf16, #tpu.memory_space<vmem>>, vector<256x128xbf16>
    %cst_9 = arith.constant dense<0.000000e+00> : vector<2x128xf32>
    %10 = tpu.matmul %8, %9, %cst_9 {dimension_numbers = #tpu.dot_dimension_numbers<[1], [0], [0], [1], [0, 0, 1, 1], [], []>} : vector<2x256xbf16>, vector<256x128xbf16>, vector<2x128xf32> -> vector<2x128xf32>
    %c0_10 = arith.constant 0 : index
    %c0_11 = arith.constant 0 : index
    %11 = vector.load %arg5[%c0_10, %c0_11] : memref<2x128xf32, #tpu.memory_space<vmem>>, vector<2x128xf32>
    tpu.vector_store %arg5[%c0_10, %c0_11], %10 {strides = array<i32>} : memref<2x128xf32, #tpu.memory_space<vmem>>, vector<2x128xf32>,
    return
  }
}

</mosaic_0001>

<llo_original>
// kernel: text_encoder_forward.6
$region0: #{text_encoder_forward.6}
  #allocation0 [shape = 'u32[]', space=smem, size = 0x4, offset = 0x4, fixed_abs, tag = 'smem constant byte address 0x4 - core index']
  #allocation1 [shape = 'u32[144,128]{1,0:T(1,128)}', space=vmem, size = 0x12000, scoped, tag = 'internal scratch']
  %s0 = inlined_call_operand.vmem [shape: f32[2,8,256], index: 0, kind: input, shape index: {}]
  %s1 = inlined_call_operand.vmem [shape: f32[8,256], index: 1, kind: input, shape index: {}]
  %s2 = inlined_call_operand.vmem [shape: f32[1,256], index: 2, kind: input, shape index: {}]
  %s3 = inlined_call_operand.vmem [shape: f32[1,256], index: 3, kind: input, shape index: {}]
  %s4 = inlined_call_operand.vmem [shape: f32[1,256], index: 4, kind: input, shape index: {}]
  %s5 = inlined_call_operand.vmem [shape: bf16[2,8,256], index: 5, kind: output, shape index: {}]
  %s6 = sld [smem:[#allocation0]]
  $region53: #{text_encoder_forward.6} parent=0
    _
  %s8 = ssub.s32 1, %s6
  %s9 = scalar_select 0, %s8, %s6
  loop: start=0, step=1, limit=4
  $region2: #{text_encoder_forward.6} parent=0 // loop_pre_header
    _
  $region3: #{text_encoder_forward.6} parent=0 // loop_header
    %s11 = sphi 0, %s15
    %p12 = scmp.ge.s32.totalorder %s11, 4
    %s21 = sphi 0, %s23
    %s24 = sphi 0, %s21
    %s25 = sphi 0, %s24
    %s41 = sphi 0, %s25
    %s45 = sphi 0, %s45
    %s47 = sphi 0, %s45
    %s48 = sphi 0, %s47
    %s62 = sphi 0, %s48
    %s66 = sphi 0, %s66
    %s68 = sphi 0, %s66
    %s69 = sphi 0, %s68
    %s83 = sphi 0, %s69
    %s87 = sphi 0, %s87
    %s89 = sphi 0, %s87
    %s90 = sphi 0, %s89
    %s104 = sphi 0, %s90
    %s108 = sphi 0, %s108
    %s110 = sphi 0, %s108
    %s111 = sphi 0, %s110
    %s125 = sphi 0, %s111
    %s131 = sphi 0, %s133
    %s134 = sphi 0, %s131
    %s135 = sphi 0, %s134
    %s151 = sphi 0, %s135
  $region4: #{text_encoder_forward.6} parent=0 // loop_header_branch
    %14 = sbr.rel (%p12) target = $region8
  $region5: #{text_encoder_forward.6} parent=0 // loop_body
    %s16 = ssub.s32 %s11, 1
    %s17 = ssub.s32 %s11, 2
    %s18 = sadd.s32 %s11, 1
    %s19 = ssub.s32 %s11, %s18
    %p20 = scmp.eq.s32.totalorder %s19, 0
    %s22 = sadd.s32 %s21, 1
    %s23 = scalar_select %p20, %s21, %s22
    %p26 = pneg %p20
    %p27 = scmp.eq.s32.totalorder %s11, 1
    %p28 = por %p26, %p27
    %p29 = scmp.ne.s32.totalorder %s21, %s24
    %p30 = scmp.eq.s32.totalorder %s11, 0
    %p31 = por %p29, %p30
    %p32 = scmp.ne.s32.totalorder %s21, %s24
    %p33 = scmp.eq.s32.totalorder %s16, 1
    %p34 = por %p32, %p33
    %p35 = scmp.ne.s32.totalorder %s24, %s25
    %p36 = scmp.eq.s32.totalorder %s16, 0
    %p37 = por %p35, %p36
    %p38 = scmp.ne.s32.totalorder %s24, %s25
    %p39 = scmp.eq.s32.totalorder %s17, 1
    %p40 = por %p38, %p39
    %p42 = scmp.ne.s32.totalorder %s25, %s41
    %p43 = scmp.eq.s32.totalorder %s17, 0
    %p44 = por %p42, %p43
    %s46 = sadd.s32 %s45, 1
    %p49 = scmp.eq.s32.totalorder %s11, 1
    %p50 = scmp.ne.s32.totalorder %s45, %s47
    %p51 = scmp.eq.s32.totalorder %s11, 0
    %p52 = por %p50, %p51
    %p53 = scmp.ne.s32.totalorder %s45, %s47
    %p54 = scmp.eq.s32.totalorder %s16, 1
    %p55 = por %p53, %p54
    %p56 = scmp.ne.s32.totalorder %s47, %s48
    %p57 = scmp.eq.s32.totalorder %s16, 0
    %p58 = por %p56, %p57
    %p59 = scmp.ne.s32.totalorder %s47, %s48
    %p60 = scmp.eq.s32.totalorder %s17, 1
    %p61 = por %p59, %p60
    %p63 = scmp.ne.s32.totalorder %s48, %s62
    %p64 = scmp.eq.s32.totalorder %s17, 0
    %p65 = por %p63, %p64
    %s67 = sadd.s32 %s66, 1
    %p70 = scmp.eq.s32.totalorder %s11, 1
    %p71 = scmp.ne.s32.totalorder %s66, %s68
    %p72 = scmp.eq.s32.totalorder %s11, 0
    %p73 = por %p71, %p72
    %p74 = scmp.ne.s32.totalorder %s66, %s68
    %p75 = scmp.eq.s32.totalorder %s16, 1
    %p76 = por %p74, %p75
    %p77 = scmp.ne.s32.totalorder %s68, %s69
    %p78 = scmp.eq.s32.totalorder %s16, 0
    %p79 = por %p77, %p78
    %p80 = scmp.ne.s32.totalorder %s68, %s69
    %p81 = scmp.eq.s32.totalorder %s17, 1
    %p82 = por %p80, %p81
    %p84 = scmp.ne.s32.totalorder %s69, %s83
    %p85 = scmp.eq.s32.totalorder %s17, 0
    %p86 = por %p84, %p85
    %s88 = sadd.s32 %s87, 1
    %p91 = scmp.eq.s32.totalorder %s11, 1
    %p92 = scmp.ne.s32.totalorder %s87, %s89
    %p93 = scmp.eq.s32.totalorder %s11, 0
    %p94 = por %p92, %p93
    %p95 = scmp.ne.s32.totalorder %s87, %s89
    %p96 = scmp.eq.s32.totalorder %s16, 1
    %p97 = por %p95, %p96
    %p98 = scmp.ne.s32.totalorder %s89, %s90
    %p99 = scmp.eq.s32.totalorder %s16, 0
    %p100 = por %p98, %p99
    %p101 = scmp.ne.s32.totalorder %s89, %s90
    %p102 = scmp.eq.s32.totalorder %s17, 1
    %p103 = por %p101, %p102
    %p105 = scmp.ne.s32.totalorder %s90, %s104
    %p106 = scmp.eq.s32.totalorder %s17, 0
    %p107 = por %p105, %p106
    %s109 = sadd.s32 %s108, 1
    %p112 = scmp.eq.s32.totalorder %s11, 1
    %p113 = scmp.ne.s32.totalorder %s108, %s110
    %p114 = scmp.eq.s32.totalorder %s11, 0
    %p115 = por %p113, %p114
    %p116 = scmp.ne.s32.totalorder %s108, %s110
    %p117 = scmp.eq.s32.totalorder %s16, 1
    %p118 = por %p116, %p117
    %p119 = scmp.ne.s32.totalorder %s110, %s111
    %p120 = scmp.eq.s32.totalorder %s16, 0
    %p121 = por %p119, %p120
    %p122 = scmp.ne.s32.totalorder %s110, %s111
    %p123 = scmp.eq.s32.totalorder %s17, 1
    %p124 = por %p122, %p123
    %p126 = scmp.ne.s32.totalorder %s111, %s125
    %p127 = scmp.eq.s32.totalorder %s17, 0
    %p128 = por %p126, %p127
    %s129 = ssub.s32 %s11, %s18
    %p130 = scmp.eq.s32.totalorder %s129, 0
    %s132 = sadd.s32 %s131, 1
    %s133 = scalar_select %p130, %s131, %s132
    %p136 = pneg %p130
    %p137 = scmp.eq.s32.totalorder %s11, 1
    %p138 = por %p136, %p137
    %p139 = scmp.ne.s32.totalorder %s131, %s134
    %p140 = scmp.eq.s32.totalorder %s11, 0
    %p141 = por %p139, %p140
    %p142 = scmp.ne.s32.totalorder %s131, %s134
    %p143 = scmp.eq.s32.totalorder %s16, 1
    %p144 = por %p142, %p143
    %p145 = scmp.ne.s32.totalorder %s134, %s135
    %p146 = scmp.eq.s32.totalorder %s16, 0
    %p147 = por %p145, %p146
    %p148 = scmp.ne.s32.totalorder %s134, %s135
    %p149 = scmp.eq.s32.totalorder %s17, 1
    %p150 = por %p148, %p149
    %p152 = scmp.ne.s32.totalorder %s135, %s151
    %p153 = scmp.eq.s32.totalorder %s17, 0
    %p154 = por %p152, %p153
    %p155 = scmp.le.s32.totalorder 1, %s11
    %p156 = scmp.lt.s32.totalorder %s11, 3
    %p157 = pnand %p155, %p156
    %p158 = pneg %p157
    // Predicated region
    $region9: #{text_encoder_forward.6} parent=5 // pred_check
      _
    $region10: #{text_encoder_forward.6} parent=5 // pred_check_branch
      %160 = sbr.rel (%p157) target = $region12
    $region11: #{text_encoder_forward.6} parent=5 // pred_region
      %s161 = ssub.s32 %s11, 1
      // Predicated region
      $region13: #{text_encoder_forward.6} parent=11 // pred_check
        %p162 = pneg %p58
      $region14: #{text_encoder_forward.6} parent=11 // pred_check_branch
        %164 = sbr.rel (%p162) target = $region16
      $region15: #{text_encoder_forward.6} parent=11 // pred_region
        _
      $region16: #{text_encoder_forward.6} parent=11 // pred_fallthru
        _
      // Predicated region
      $region17: #{text_encoder_forward.6} parent=11 // pred_check
        %p165 = pneg %p79
      $region18: #{text_encoder_forward.6} parent=11 // pred_check_branch
        %167 = sbr.rel (%p165) target = $region20
      $region19: #{text_encoder_forward.6} parent=11 // pred_region
        _
      $region20: #{text_encoder_forward.6} parent=11 // pred_fallthru
        _
      // Predicated region
      $region21: #{text_encoder_forward.6} parent=11 // pred_check
        %p168 = pneg %p100
      $region22: #{text_encoder_forward.6} parent=11 // pred_check_branch
        %170 = sbr.rel (%p168) target = $region24
      $region23: #{text_encoder_forward.6} parent=11 // pred_region
        _
      $region24: #{text_encoder_forward.6} parent=11 // pred_fallthru
        _
      // Predicated region
      $region25: #{text_encoder_forward.6} parent=11 // pred_check
        %p171 = pneg %p121
      $region26: #{text_encoder_forward.6} parent=11 // pred_check_branch
        %173 = sbr.rel (%p171) target = $region28
      $region27: #{text_encoder_forward.6} parent=11 // pred_region
        _
      $region28: #{text_encoder_forward.6} parent=11 // pred_fallthru
        _
    $region12: #{text_encoder_forward.6} parent=5 // pred_fallthru
      _
    %p174 = scmp.lt.s32.totalorder %s11, 2
    // Predicated region
    $region29: #{text_encoder_forward.6} parent=5 // pred_check
      %p175 = pneg %p174
    $region30: #{text_encoder_forward.6} parent=5 // pred_check_branch
      %177 = sbr.rel (%p175) target = $region32
    $region31: #{text_encoder_forward.6} parent=5 // pred_region
      // Predicated region
      $region33: #{text_encoder_forward.6} parent=31 // pred_check
        %p178 = pneg %p31
      $region34: #{text_encoder_forward.6} parent=31 // pred_check_branch
        %180 = sbr.rel (%p178) target = $region36
      $region35: #{text_encoder_forward.6} parent=31 // pred_region
        %p181 = scmp.lt.s32.totalorder %s11, 1
        %s182 = scalar_select %p181, %s11, 1
        %s183 = smul.addr %s182, 2
        %s184 = smul.addr %s183, 8
        %s185 = scalar_lea.vmem %s0, %s184
      $region36: #{text_encoder_forward.6} parent=31 // pred_fallthru
        _
    $region32: #{text_encoder_forward.6} parent=5 // pred_fallthru
      _
    %p186 = scmp.le.s32.totalorder 1, %s11
    %p187 = scmp.lt.s32.totalorder %s11, 3
    %p188 = pnand %p186, %p187
    %p189 = pneg %p188
    // Predicated region
    $region37: #{text_encoder_forward.6} parent=5 // pred_check
      _
    $region38: #{text_encoder_forward.6} parent=5 // pred_check_branch
      %191 = sbr.rel (%p188) target = $region40
    $region39: #{text_encoder_forward.6} parent=5 // pred_region
      %s192 = ssub.s32 %s11, 1
      %p193 = scmp.lt.s32.totalorder %s16, 1
      %s194 = scalar_select %p193, %s16, 1
      %s195 = smul.addr %s194, 2
      %s196 = smul.addr %s195, 8
      %s197 = scalar_lea.vmem %s0, %s196
      %p198 = pneg %p37
      %p199 = pneg %p34
      %p200 = pneg %p58
      %p201 = pneg %p55
      %p202 = pneg %p79
      %p203 = pneg %p76
      %p204 = pneg %p100
      %p205 = pneg %p97
      %p206 = pneg %p121
      %p207 = pneg %p118
      %p208 = pneg %p147
      %p209 = pneg %p144
      %p210 = scmp.lt.s32.totalorder %s16, 1
      %s211 = scalar_select %p210, %s16, 1
      %s212 = smul.addr %s211, 2
      %s213 = smul.addr %s212, 4
      %s214 = scalar_lea.vmem %s5, %s213
      %p215 = scmp.lt.s32.totalorder %s16, 1
      %s216 = scalar_select %p215, %s16, 1
      %s217 = smul.addr %s216, 2
      %s218 = smul.addr %s217, 8
      %s219 = scalar_lea.vmem %s0, %s218
      %p220 = scmp.lt.s32.totalorder %s16, 1
      %s221 = scalar_select %p220, %s16, 1
      %s222 = smul.addr %s221, 2
      %s223 = smul.addr %s222, 4
      %s224 = scalar_lea.vmem %s5, %s223
      %v225 = vld [vmem:[%s219] sm:$0xff]
      %v226 = vld [vmem:[%s219 + $0x8] sm:$0xff]
      %v227 = vld [vmem:[%s1] sm:$0xff]
      %v228 = vld [vmem:[%s1 + $0x8] sm:$0xff]
      %v229 = vadd.f32 %v225, %v227
      %v230 = vadd.f32 %v226, %v228
      %v231 = vld [vmem:[%s2] sm:$0x3]
      %v233 = vlaneseq
      %v234 = vshrl.u32 %v233, 7
      %v235 = vsub.s32 0, %v234
      %v236 = vrot.slane %v231, %v235
      %v237 = vlaneseq
      %v238 = vshrl.u32 %v237, 7
      %v239 = vsub.s32 1, %v238
      %v240 = vrot.slane %v231, %v239
      %v243 = vadd.f32 %v229, %v236
      %v244 = vadd.f32 %v230, %v240
      %v245 = vld [vmem:[%s3] sm:$0x3]
      %v246 = vld [vmem:[%s4] sm:$0x3]
      %v247 = vadd.f32 %v243, %v244
      %248 = vadd.xlane.f32.xlu0 %v247
      %v249 = vpop.xlane.xlu0 %248
      %v250 = vrcp.pop 256.0
      %v251 = vmul.f32 %v249, %v250
      %v252 = vsub.f32 %v243, %v251
      %v253 = vsub.f32 %v244, %v251
      %v254 = vmul.f32 %v252, %v252
      %v255 = vmul.f32 %v253, %v253
      %v256 = vadd.f32 %v254, %v255
      %257 = vadd.xlane.f32.xlu0 %v256
      %v258 = vpop.xlane.xlu0 %257
      %v259 = vmul.f32 %v258, %v250
      %v260 = vadd.f32 %v259, 1e-12
      %v261 = vrsqrt.pop %v260
      %v262 = vmul.f32 %v252, %v261
      %v263 = vmul.f32 %v253, %v261
      %v265 = vlaneseq
      %v266 = vshrl.u32 %v265, 7
      %v267 = vsub.s32 0, %v266
      %v268 = vrot.slane %v245, %v267
      %v269 = vlaneseq
      %v270 = vshrl.u32 %v269, 7
      %v271 = vsub.s32 1, %v270
      %v272 = vrot.slane %v245, %v271
      %v275 = vmul.f32 %v262, %v268
      %v276 = vmul.f32 %v263, %v272
      %v278 = vlaneseq
      %v279 = vshrl.u32 %v278, 7
      %v280 = vsub.s32 0, %v279
      %v281 = vrot.slane %v246, %v280
      %v282 = vlaneseq
      %v283 = vshrl.u32 %v282, 7
      %v284 = vsub.s32 1, %v283
      %v285 = vrot.slane %v246, %v284
      %v288 = vadd.f32 %v275, %v281
      %v289 = vadd.f32 %v276, %v285
      %v290 = vpack.c.bf16 %v288, %v288
      %v291 = vpack.c.bf16 %v289, %v289
      %v294 = vunpack.c.l.b16 %v290
      %v295 = vunpack.c.l.b16 %v291
      %v296 = vpack.c.b16 %v295, %v294
      %298 = vst [vmem:[%s224] sm:$0xff] %v296
      %p299 = scmp.lt.s32.totalorder %s16, 1
      %s300 = scalar_select %p299, %s16, 1
      %s301 = smul.addr %s300, 2
      %s302 = smul.addr %s301, 4
      %s303 = scalar_lea.vmem %s5, %s302
      // Predicated region
      $region41: #{text_encoder_forward.6} parent=39 // pred_check
        %p304 = pneg %p144
      $region42: #{text_encoder_forward.6} parent=39 // pred_check_branch
        %306 = sbr.rel (%p304) target = $region44
      $region43: #{text_encoder_forward.6} parent=39 // pred_region
        _
      $region44: #{text_encoder_forward.6} parent=39 // pred_fallthru
        _
    $region40: #{text_encoder_forward.6} parent=5 // pred_fallthru
      _
    %p307 = scmp.le.s32.totalorder 2, %s11
    // Predicated region
    $region45: #{text_encoder_forward.6} parent=5 // pred_check
      %p308 = pneg %p307
    $region46: #{text_encoder_forward.6} parent=5 // pred_check_branch
      %310 = sbr.rel (%p308) target = $region48
    $region47: #{text_encoder_forward.6} parent=5 // pred_region
      %s311 = ssub.s32 %s11, 2
      // Predicated region
      $region49: #{text_encoder_forward.6} parent=47 // pred_check
        %p312 = pneg %p150
      $region50: #{text_encoder_forward.6} parent=47 // pred_check_branch
        %314 = sbr.rel (%p312) target = $region52
      $region51: #{text_encoder_forward.6} parent=47 // pred_region
        %p315 = scmp.lt.s32.totalorder %s17, 1
        %s316 = scalar_select %p315, %s17, 1
        %s317 = smul.addr %s316, 2
        %s318 = smul.addr %s317, 4
        %s319 = scalar_lea.vmem %s5, %s318
      $region52: #{text_encoder_forward.6} parent=47 // pred_fallthru
        _
    $region48: #{text_encoder_forward.6} parent=5 // pred_fallthru
      _
  $region6: #{text_encoder_forward.6} parent=0 // loop_footer
    %s15 = sadd.s32 1, %s11
  $region7: #{text_encoder_forward.6} parent=0 // loop_footer_branch
    %10 = sbr.rel target = $region3
  $region8: #{text_encoder_forward.6} parent=0 // loop_exit
    _

// kernel: text_encoder_forward.9
$region0: #{text_encoder_forward.9}
  #allocation0 [shape = 'u32[]', space=smem, size = 0x4, offset = 0x4, fixed_abs, tag = 'smem constant byte address 0x4 - core index']
  #allocation1 [shape = 'u32[144,128]{1,0:T(1,128)}', space=vmem, size = 0x12000, scoped, tag = 'internal scratch']
  %s0 = inlined_call_operand.vmem [shape: bf16[2,8,256], index: 0, kind: input, shape index: {}]
  %s1 = inlined_call_operand.vmem [shape: f32[2,1,8], index: 1, kind: input, shape index: {}]
  %s2 = inlined_call_operand.vmem [shape: bf16[256,768], index: 2, kind: input, shape index: {}]
  %s3 = inlined_call_operand.vmem [shape: f32[1,768], index: 3, kind: input, shape index: {}]
  %s4 = inlined_call_operand.vmem [shape: bf16[256,256], index: 4, kind: input, shape index: {}]
  %s5 = inlined_call_operand.vmem [shape: f32[1,256], index: 5, kind: input, shape index: {}]
  %s6 = inlined_call_operand.vmem [shape: f32[1,256], index: 6, kind: input, shape index: {}]
  %s7 = inlined_call_operand.vmem [shape: f32[1,256], index: 7, kind: input, shape index: {}]
  %s8 = inlined_call_operand.vmem [shape: bf16[2,8,256], index: 8, kind: output, shape index: {}]
  %s9 = sld [smem:[#allocation0]]
  $region65: #{text_encoder_forward.9} parent=0
    _
  %s11 = ssub.s32 1, %s9
  %s12 = scalar_select 0, %s11, %s9
  loop: start=0, step=1, limit=4
  $region2: #{text_encoder_forward.9} parent=0 // loop_pre_header
    _
  $region3: #{text_encoder_forward.9} parent=0 // loop_header
    %s14 = sphi 0, %s18
    %p15 = scmp.ge.s32.totalorder %s14, 4
    %s24 = sphi 0, %s26
    %s27 = sphi 0, %s24
    %s28 = sphi 0, %s27
    %s44 = sphi 0, %s28
    %s50 = sphi 0, %s52
    %s53 = sphi 0, %s50
    %s54 = sphi 0, %s53
    %s70 = sphi 0, %s54
    %s74 = sphi 0, %s74
    %s76 = sphi 0, %s74
    %s77 = sphi 0, %s76
    %s91 = sphi 0, %s77
    %s95 = sphi 0, %s95
    %s97 = sphi 0, %s95
    %s98 = sphi 0, %s97
    %s112 = sphi 0, %s98
    %s116 = sphi 0, %s116
    %s118 = sphi 0, %s116
    %s119 = sphi 0, %s118
    %s133 = sphi 0, %s119
    %s137 = sphi 0, %s137
    %s139 = sphi 0, %s137
    %s140 = sphi 0, %s139
    %s154 = sphi 0, %s140
    %s158 = sphi 0, %s158
    %s160 = sphi 0, %s158
    %s161 = sphi 0, %s160
    %s175 = sphi 0, %s161
    %s179 = sphi 0, %s179
    %s181 = sphi 0, %s179
    %s182 = sphi 0, %s181
    %s196 = sphi 0, %s182
    %s202 = sphi 0, %s204
    %s205 = sphi 0, %s202
    %s206 = sphi 0, %s205
    %s222 = sphi 0, %s206
  $region4: #{text_encoder_forward.9} parent=0 // loop_header_branch
    %17 = sbr.rel (%p15) target = $region8
  $region5: #{text_encoder_forward.9} parent=0 // loop_body
    %s19 = ssub.s32 %s14, 1
    %s20 = ssub.s32 %s14, 2
    %s21 = sadd.s32 %s14, 1
    %s22 = ssub.s32 %s14, %s21
    %p23 = scmp.eq.s32.totalorder %s22, 0
    %s25 = sadd.s32 %s24, 1
    %s26 = scalar_select %p23, %s24, %s25
    %p29 = pneg %p23
    %p30 = scmp.eq.s32.totalorder %s14, 1
    %p31 = por %p29, %p30
    %p32 = scmp.ne.s32.totalorder %s24, %s27
    %p33 = scmp.eq.s32.totalorder %s14, 0
    %p34 = por %p32, %p33
    %p35 = scmp.ne.s32.totalorder %s24, %s27
    %p36 = scmp.eq.s32.totalorder %s19, 1
    %p37 = por %p35, %p36
    %p38 = scmp.ne.s32.totalorder %s27, %s28
    %p39 = scmp.eq.s32.totalorder %s19, 0
    %p40 = por %p38, %p39
    %p41 = scmp.ne.s32.totalorder %s27, %s28
    %p42 = scmp.eq.s32.totalorder %s20, 1
    %p43 = por %p41, %p42
    %p45 = scmp.ne.s32.totalorder %s28, %s44
    %p46 = scmp.eq.s32.totalorder %s20, 0
    %p47 = por %p45, %p46
    %s48 = ssub.s32 %s14, %s21
    %p49 = scmp.eq.s32.totalorder %s48, 0
    %s51 = sadd.s32 %s50, 1
    %s52 = scalar_select %p49, %s50, %s51
    %p55 = pneg %p49
    %p56 = scmp.eq.s32.totalorder %s14, 1
    %p57 = por %p55, %p56
    %p58 = scmp.ne.s32.totalorder %s50, %s53
    %p59 = scmp.eq.s32.totalorder %s14, 0
    %p60 = por %p58, %p59
    %p61 = scmp.ne.s32.totalorder %s50, %s53
    %p62 = scmp.eq.s32.totalorder %s19, 1
    %p63 = por %p61, %p62
    %p64 = scmp.ne.s32.totalorder %s53, %s54
    %p65 = scmp.eq.s32.totalorder %s19, 0
    %p66 = por %p64, %p65
    %p67 = scmp.ne.s32.totalorder %s53, %s54
    %p68 = scmp.eq.s32.totalorder %s20, 1
    %p69 = por %p67, %p68
    %p71 = scmp.ne.s32.totalorder %s54, %s70
    %p72 = scmp.eq.s32.totalorder %s20, 0
    %p73 = por %p71, %p72
    %s75 = sadd.s32 %s74, 1
    %p78 = scmp.eq.s32.totalorder %s14, 1
    %p79 = scmp.ne.s32.totalorder %s74, %s76
    %p80 = scmp.eq.s32.totalorder %s14, 0
    %p81 = por %p79, %p80
    %p82 = scmp.ne.s32.totalorder %s74, %s76
    %p83 = scmp.eq.s32.totalorder %s19, 1
    %p84 = por %p82, %p83
    %p85 = scmp.ne.s32.totalorder %s76, %s77
    %p86 = scmp.eq.s32.totalorder %s19, 0
    %p87 = por %p85, %p86
    %p88 = scmp.ne.s32.totalorder %s76, %s77
    %p89 = scmp.eq.s32.totalorder %s20, 1
    %p90 = por %p88, %p89
    %p92 = scmp.ne.s32.totalorder %s77, %s91
    %p93 = scmp.eq.s32.totalorder %s20, 0
    %p94 = por %p92, %p93
    %s96 = sadd.s32 %s95, 1
    %p99 = scmp.eq.s32.totalorder %s14, 1
    %p100 = scmp.ne.s32.totalorder %s95, %s97
    %p101 = scmp.eq.s32.totalorder %s14, 0
    %p102 = por %p100, %p101
    %p103 = scmp.ne.s32.totalorder %s95, %s97
    %p104 = scmp.eq.s32.totalorder %s19, 1
    %p105 = por %p103, %p104
    %p106 = scmp.ne.s32.totalorder %s97, %s98
    %p107 = scmp.eq.s32.totalorder %s19, 0
    %p108 = por %p106, %p107
    %p109 = scmp.ne.s32.totalorder %s97, %s98
    %p110 = scmp.eq.s32.totalorder %s20, 1
    %p111 = por %p109, %p110
    %p113 = scmp.ne.s32.totalorder %s98, %s112
    %p114 = scmp.eq.s32.totalorder %s20, 0
    %p115 = por %p113, %p114
    %s117 = sadd.s32 %s116, 1
    %p120 = scmp.eq.s32.totalorder %s14, 1
    %p121 = scmp.ne.s32.totalorder %s116, %s118
    %p122 = scmp.eq.s32.totalorder %s14, 0
    %p123 = por %p121, %p122
    %p124 = scmp.ne.s32.totalorder %s116, %s118
    %p125 = scmp.eq.s32.totalorder %s19, 1
    %p126 = por %p124, %p125
    %p127 = scmp.ne.s32.totalorder %s118, %s119
    %p128 = scmp.eq.s32.totalorder %s19, 0
    %p129 = por %p127, %p128
    %p130 = scmp.ne.s32.totalorder %s118, %s119
    %p131 = scmp.eq.s32.totalorder %s20, 1
    %p132 = por %p130, %p131
    %p134 = scmp.ne.s32.totalorder %s119, %s133
    %p135 = scmp.eq.s32.totalorder %s20, 0
    %p136 = por %p134, %p135
    %s138 = sadd.s32 %s137, 1
    %p141 = scmp.eq.s32.totalorder %s14, 1
    %p142 = scmp.ne.s32.totalorder %s137, %s139
    %p143 = scmp.eq.s32.totalorder %s14, 0
    %p144 = por %p142, %p143
    %p145 = scmp.ne.s32.totalorder %s137, %s139
    %p146 = scmp.eq.s32.totalorder %s19, 1
    %p147 = por %p145, %p146
    %p148 = scmp.ne.s32.totalorder %s139, %s140
    %p149 = scmp.eq.s32.totalorder %s19, 0
    %p150 = por %p148, %p149
    %p151 = scmp.ne.s32.totalorder %s139, %s140
    %p152 = scmp.eq.s32.totalorder %s20, 1
    %p153 = por %p151, %p152
    %p155 = scmp.ne.s32.totalorder %s140, %s154
    %p156 = scmp.eq.s32.totalorder %s20, 0
    %p157 = por %p155, %p156
    %s159 = sadd.s32 %s158, 1
    %p162 = scmp.eq.s32.totalorder %s14, 1
    %p163 = scmp.ne.s32.totalorder %s158, %s160
    %p164 = scmp.eq.s32.totalorder %s14, 0
    %p165 = por %p163, %p164
    %p166 = scmp.ne.s32.totalorder %s158, %s160
    %p167 = scmp.eq.s32.totalorder %s19, 1
    %p168 = por %p166, %p167
    %p169 = scmp.ne.s32.totalorder %s160, %s161
    %p170 = scmp.eq.s32.totalorder %s19, 0
    %p171 = por %p169, %p170
    %p172 = scmp.ne.s32.totalorder %s160, %s161
    %p173 = scmp.eq.s32.totalorder %s20, 1
    %p174 = por %p172, %p173
    %p176 = scmp.ne.s32.totalorder %s161, %s175
    %p177 = scmp.eq.s32.totalorder %s20, 0
    %p178 = por %p176, %p177
    %s180 = sadd.s32 %s179, 1
    %p183 = scmp.eq.s32.totalorder %s14, 1
    %p184 = scmp.ne.s32.totalorder %s179, %s181
    %p185 = scmp.eq.s32.totalorder %s14, 0
    %p186 = por %p184, %p185
    %p187 = scmp.ne.s32.totalorder %s179, %s181
    %p188 = scmp.eq.s32.totalorder %s19, 1
    %p189 = por %p187, %p188
    %p190 = scmp.ne.s32.totalorder %s181, %s182
    %p191 = scmp.eq.s32.totalorder %s19, 0
    %p192 = por %p190, %p191
    %p193 = scmp.ne.s32.totalorder %s181, %s182
    %p194 = scmp.eq.s32.totalorder %s20, 1
    %p195 = por %p193, %p194
    %p197 = scmp.ne.s32.totalorder %s182, %s196
    %p198 = scmp.eq.s32.totalorder %s20, 0
    %p199 = por %p197, %p198
    %s200 = ssub.s32 %s14, %s21
    %p201 = scmp.eq.s32.totalorder %s200, 0
    %s203 = sadd.s32 %s202, 1
    %s204 = scalar_select %p201, %s202, %s203
    %p207 = pneg %p201
    %p208 = scmp.eq.s32.totalorder %s14, 1
    %p209 = por %p207, %p208
    %p210 = scmp.ne.s32.totalorder %s202, %s205
    %p211 = scmp.eq.s32.totalorder %s14, 0
    %p212 = por %p210, %p211
    %p213 = scmp.ne.s32.totalorder %s202, %s205
    %p214 = scmp.eq.s32.totalorder %s19, 1
    %p215 = por %p213, %p214
    %p216 = scmp.ne.s32.totalorder %s205, %s206
    %p217 = scmp.eq.s32.totalorder %s19, 0
    %p218 = por %p216, %p217
    %p219 = scmp.ne.s32.totalorder %s205, %s206
    %p220 = scmp.eq.s32.totalorder %s20, 1
    %p221 = por %p219, %p220
    %p223 = scmp.ne.s32.totalorder %s206, %s222
    %p224 = scmp.eq.s32.totalorder %s20, 0
    %p225 = por %p223, %p224
    %p226 = scmp.le.s32.totalorder 1, %s14
    %p227 = scmp.lt.s32.totalorder %s14, 3
    %p228 = pnand %p226, %p227
    %p229 = pneg %p228
    // Predicated region
    $region9: #{text_encoder_forward.9} parent=5 // pred_check
      _
    $region10: #{text_encoder_forward.9} parent=5 // pred_check_branch
      %231 = sbr.rel (%p228) target = $region12
    $region11: #{text_encoder_forward.9} parent=5 // pred_region
      %s232 = ssub.s32 %s14, 1
      // Predicated region
      $region13: #{text_encoder_forward.9} parent=11 // pred_check
        %p233 = pneg %p87
      $region14: #{text_encoder_forward.9} parent=11 // pred_check_branch
        %235 = sbr.rel (%p233) target = $region16
      $region15: #{text_encoder_forward.9} parent=11 // pred_region
        _
      $region16: #{text_encoder_forward.9} parent=11 // pred_fallthru
        _
      // Predicated region
      $region17: #{text_encoder_forward.9} parent=11 // pred_check
        %p236 = pneg %p108
      $region18: #{text_encoder_forward.9} parent=11 // pred_check_branch
        %238 = sbr.rel (%p236) target = $region20
      $region19: #{text_encoder_forward.9} parent=11 // pred_region
        _
      $region20: #{text_encoder_forward.9} parent=11 // pred_fallthru
        _
      // Predicated region
      $region21: #{text_encoder_forward.9} parent=11 // pred_check
        %p239 = pneg %p129
      $region22: #{text_encoder_forward.9} parent=11 // pred_check_branch
        %241 = sbr.rel (%p239) target = $region24
      $region23: #{text_encoder_forward.9} parent=11 // pred_region
        _
      $region24: #{text_encoder_forward.9} parent=11 // pred_fallthru
        _
      // Predicated region
      $region25: #{text_encoder_forward.9} parent=11 // pred_check
        %p242 = pneg %p150
      $region26: #{text_encoder_forward.9} parent=11 // pred_check_branch
        %244 = sbr.rel (%p242) target = $region28
      $region27: #{text_encoder_forward.9} parent=11 // pred_region
        _
      $region28: #{text_encoder_forward.9} parent=11 // pred_fallthru
        _
      // Predicated region
      $region29: #{text_encoder_forward.9} parent=11 // pred_check
        %p245 = pneg %p171
      $region30: #{text_encoder_forward.9} parent=11 // pred_check_branch
        %247 = sbr.rel (%p245) target = $region32
      $region31: #{text_encoder_forward.9} parent=11 // pred_region
        _
      $region32: #{text_encoder_forward.9} parent=11 // pred_fallthru
        _
      // Predicated region
      $region33: #{text_encoder_forward.9} parent=11 // pred_check
        %p248 = pneg %p192
      $region34: #{text_encoder_forward.9} parent=11 // pred_check_branch
        %250 = sbr.rel (%p248) target = $region36
      $region35: #{text_encoder_forward.9} parent=11 // pred_region
        _
      $region36: #{text_encoder_forward.9} parent=11 // pred_fallthru
        _
    $region12: #{text_encoder_forward.9} parent=5 // pred_fallthru
      _
    %p251 = scmp.lt.s32.totalorder %s14, 2
    // Predicated region
    $region37: #{text_encoder_forward.9} parent=5 // pred_check
      %p252 = pneg %p251
    $region38: #{text_encoder_forward.9} parent=5 // pred_check_branch
      %254 = sbr.rel (%p252) target = $region40
    $region39: #{text_encoder_forward.9} parent=5 // pred_region
      // Predicated region
      $region41: #{text_encoder_forward.9} parent=39 // pred_check
        %p255 = pneg %p34
      $region42: #{text_encoder_forward.9} parent=39 // pred_check_branch
        %257 = sbr.rel (%p255) target = $region44
      $region43: #{text_encoder_forward.9} parent=39 // pred_region
        %p258 = scmp.lt.s32.totalorder %s14, 1
        %s259 = scalar_select %p258, %s14, 1
        %s260 = smul.addr %s259, 2
        %s261 = smul.addr %s260, 4
        %s262 = scalar_lea.vmem %s0, %s261
      $region44: #{text_encoder_forward.9} parent=39 // pred_fallthru
        _
      // Predicated region
      $region45: #{text_encoder_forward.9} parent=39 // pred_check
        %p263 = pneg %p60
      $region46: #{text_encoder_forward.9} parent=39 // pred_check_branch
        %265 = sbr.rel (%p263) target = $region48
      $region47: #{text_encoder_forward.9} parent=39 // pred_region
        %p266 = scmp.lt.s32.totalorder %s14, 1
        %s267 = scalar_select %p266, %s14, 1
        %s268 = scalar_lea.vmem %s1, %s267
      $region48: #{text_encoder_forward.9} parent=39 // pred_fallthru
        _
    $region40: #{text_encoder_forward.9} parent=5 // pred_fallthru
      _
    %p269 = scmp.le.s32.totalorder 1, %s14
    %p270 = scmp.lt.s32.totalorder %s14, 3
    %p271 = pnand %p269, %p270
    %p272 = pneg %p271
    // Predicated region
    $region49: #{text_encoder_forward.9} parent=5 // pred_check
      _
    $region50: #{text_encoder_forward.9} parent=5 // pred_check_branch
      %274 = sbr.rel (%p271) target = $region52
    $region51: #{text_encoder_forward.9} parent=5 // pred_region
      %s275 = ssub.s32 %s14, 1
      %p276 = scmp.lt.s32.totalorder %s19, 1
      %s277 = scalar_select %p276, %s19, 1
      %s278 = smul.addr %s277, 2
      %s279 = smul.addr %s278, 4
      %s280 = scalar_lea.vmem %s0, %s279
      %p281 = pneg %p40
      %p282 = pneg %p37
      %p283 = scmp.lt.s32.totalorder %s19, 1
      %s284 = scalar_select %p283, %s19, 1
      %s285 = scalar_lea.vmem %s1, %s284
      %p286 = pneg %p66
      %p287 = pneg %p63
      %p288 = pneg %p87
      %p289 = pneg %p84
      %p290 = pneg %p108
      %p291 = pneg %p105
      %p292 = pneg %p129
      %p293 = pneg %p126
      %p294 = pneg %p150
      %p295 = pneg %p147
      %p296 = pneg %p171
      %p297 = pneg %p168
      %p298 = pneg %p192
      %p299 = pneg %p189
      %p300 = pneg %p218
      %p301 = pneg %p215
      %p302 = scmp.lt.s32.totalorder %s19, 1
      %s303 = scalar_select %p302, %s19, 1
      %s304 = smul.addr %s303, 2
      %s305 = smul.addr %s304, 4
      %s306 = scalar_lea.vmem %s8, %s305
      %p307 = scmp.lt.s32.totalorder %s19, 1
      %s308 = scalar_select %p307, %s19, 1
      %s309 = smul.addr %s308, 2
      %s310 = smul.addr %s309, 4
      %s311 = scalar_lea.vmem %s0, %s310
      %p312 = scmp.lt.s32.totalorder %s19, 1
      %s313 = scalar_select %p312, %s19, 1
      %s314 = scalar_lea.vmem %s1, %s313
      %p315 = scmp.lt.s32.totalorder %s19, 1
      %s316 = scalar_select %p315, %s19, 1
      %s317 = smul.addr %s316, 2
      %s318 = smul.addr %s317, 4
      %s319 = scalar_lea.vmem %s8, %s318
      %v321 = vld [vmem:[%s311] sm:$0xff]
      %v322 = vld [vmem:[%s2] sm:$0xff]
      %v323 = vld [vmem:[%s2 + $0x8] sm:$0xff]
      %v324 = vld [vmem:[%s2 + $0x10] sm:$0xff]
      %v325 = vld [vmem:[%s2 + $0x18] sm:$0xff]
      %v326 = vld [vmem:[%s2 + $0x20] sm:$0xff]
      %v327 = vld [vmem:[%s2 + $0x28] sm:$0xff]
      %v328 = vld [vmem:[%s2 + $0x30] sm:$0xff]
      %v329 = vld [vmem:[%s2 + $0x38] sm:$0xff]
      %v330 = vld [vmem:[%s2 + $0x40] sm:$0xff]
      %v331 = vld [vmem:[%s2 + $0x48] sm:$0xff]
      %v332 = vld [vmem:[%s2 + $0x50] sm:$0xff]
      %v333 = vld [vmem:[%s2 + $0x58] sm:$0xff]
      %v334 = vld [vmem:[%s2 + $0x60] sm:$0xff]
      %v335 = vld [vmem:[%s2 + $0x68] sm:$0xff]
      %v336 = vld [vmem:[%s2 + $0x70] sm:$0xff]
      %v337 = vld [vmem:[%s2 + $0x78] sm:$0xff]
      %v338 = vld [vmem:[%s2 + $0x80] sm:$0xff]
      %v339 = vld [vmem:[%s2 + $0x88] sm:$0xff]
      %v340 = vld [vmem:[%s2 + $0x90] sm:$0xff]
      %v341 = vld [vmem:[%s2 + $0x98] sm:$0xff]
      %v342 = vld [vmem:[%s2 + $0xa0] sm:$0xff]
      %v343 = vld [vmem:[%s2 + $0xa8] sm:$0xff]
      %v344 = vld [vmem:[%s2 + $0xb0] sm:$0xff]
      %v345 = vld [vmem:[%s2 + $0xb8] sm:$0xff]
      %v346 = vld [vmem:[%s2 + $0xc0] sm:$0xff]
      %v347 = vld [vmem:[%s2 + $0xc8] sm:$0xff]
      %v348 = vld [vmem:[%s2 + $0xd0] sm:$0xff]
      %v349 = vld [vmem:[%s2 + $0xd8] sm:$0xff]
      %v350 = vld [vmem:[%s2 + $0xe0] sm:$0xff]
      %v351 = vld [vmem:[%s2 + $0xe8] sm:$0xff]
      %v352 = vld [vmem:[%s2 + $0xf0] sm:$0xff]
      %v353 = vld [vmem:[%s2 + $0xf8] sm:$0xff]
      %v354 = vld [vmem:[%s2 + $0x100] sm:$0xff]
      %v355 = vld [vmem:[%s2 + $0x108] sm:$0xff]
      %v356 = vld [vmem:[%s2 + $0x110] sm:$0xff]
      %v357 = vld [vmem:[%s2 + $0x118] sm:$0xff]
      %v358 = vld [vmem:[%s2 + $0x120] sm:$0xff]
      %v359 = vld [vmem:[%s2 + $0x128] sm:$0xff]
      %v360 = vld [vmem:[%s2 + $0x130] sm:$0xff]
      %v361 = vld [vmem:[%s2 + $0x138] sm:$0xff]
      %v362 = vld [vmem:[%s2 + $0x140] sm:$0xff]
      %v363 = vld [vmem:[%s2 + $0x148] sm:$0xff]
      %v364 = vld [vmem:[%s2 + $0x150] sm:$0xff]
      %v365 = vld [vmem:[%s2 + $0x158] sm:$0xff]
      %v366 = vld [vmem:[%s2 + $0x160] sm:$0xff]
      %v367 = vld [vmem:[%s2 + $0x168] sm:$0xff]
      %v368 = vld [vmem:[%s2 + $0x170] sm:$0xff]
      %v369 = vld [vmem:[%s2 + $0x178] sm:$0xff]
      %v370 = vld [vmem:[%s2 + $0x180] sm:$0xff]
      %v371 = vld [vmem:[%s2 + $0x188] sm:$0xff]
      %v372 = vld [vmem:[%s2 + $0x190] sm:$0xff]
      %v373 = vld [vmem:[%s2 + $0x198] sm:$0xff]
      %v374 = vld [vmem:[%s2 + $0x1a0] sm:$0xff]
      %v375 = vld [vmem:[%s2 + $0x1a8] sm:$0xff]
      %v376 = vld [vmem:[%s2 + $0x1b0] sm:$0xff]
      %v377 = vld [vmem:[%s2 + $0x1b8] sm:$0xff]
      %v378 = vld [vmem:[%s2 + $0x1c0] sm:$0xff]
      %v379 = vld [vmem:[%s2 + $0x1c8] sm:$0xff]
      %v380 = vld [vmem:[%s2 + $0x1d0] sm:$0xff]
      %v381 = vld [vmem:[%s2 + $0x1d8] sm:$0xff]
      %v382 = vld [vmem:[%s2 + $0x1e0] sm:$0xff]
      %v383 = vld [vmem:[%s2 + $0x1e8] sm:$0xff]
      %v384 = vld [vmem:[%s2 + $0x1f0] sm:$0xff]
      %v385 = vld [vmem:[%s2 + $0x1f8] sm:$0xff]
      %v386 = vld [vmem:[%s2 + $0x200] sm:$0xff]
      %v387 = vld [vmem:[%s2 + $0x208] sm:$0xff]
      %v388 = vld [vmem:[%s2 + $0x210] sm:$0xff]
      %v389 = vld [vmem:[%s2 + $0x218] sm:$0xff]
      %v390 = vld [vmem:[%s2 + $0x220] sm:$0xff]
      %v391 = vld [vmem:[%s2 + $0x228] sm:$0xff]
      %v392 = vld [vmem:[%s2 + $0x230] sm:$0xff]
      %v393 = vld [vmem:[%s2 + $0x238] sm:$0xff]
      %v394 = vld [vmem:[%s2 + $0x240] sm:$0xff]
      %v395 = vld [vmem:[%s2 + $0x248] sm:$0xff]
      %v396 = vld [vmem:[%s2 + $0x250] sm:$0xff]
      %v397 = vld [vmem:[%s2 + $0x258] sm:$0xff]
      %v398 = vld [vmem:[%s2 + $0x260] sm:$0xff]
      %v399 = vld [vmem:[%s2 + $0x268] sm:$0xff]
      %v400 = vld [vmem:[%s2 + $0x270] sm:$0xff]
      %v401 = vld [vmem:[%s2 + $0x278] sm:$0xff]
      %v402 = vld [vmem:[%s2 + $0x280] sm:$0xff]
      %v403 = vld [vmem:[%s2 + $0x288] sm:$0xff]
      %v404 = vld [vmem:[%s2 + $0x290] sm:$0xff]
      %v405 = vld [vmem:[%s2 + $0x298] sm:$0xff]
      %v406 = vld [vmem:[%s2 + $0x2a0] sm:$0xff]
      %v407 = vld [vmem:[%s2 + $0x2a8] sm:$0xff]
      %v408 = vld [vmem:[%s2 + $0x2b0] sm:$0xff]
      %v409 = vld [vmem:[%s2 + $0x2b8] sm:$0xff]
      %v410 = vld [vmem:[%s2 + $0x2c0] sm:$0xff]
      %v411 = vld [vmem:[%s2 + $0x2c8] sm:$0xff]
      %v412 = vld [vmem:[%s2 + $0x2d0] sm:$0xff]
      %v413 = vld [vmem:[%s2 + $0x2d8] sm:$0xff]
      %v414 = vld [vmem:[%s2 + $0x2e0] sm:$0xff]
      %v415 = vld [vmem:[%s2 + $0x2e8] sm:$0xff]
      %v416 = vld [vmem:[%s2 + $0x2f0] sm:$0xff]
      %v417 = vld [vmem:[%s2 + $0x2f8] sm:$0xff]
      %v418 = vld [vmem:[%s3] sm:$0x3f]
      %v420 = vlaneseq
      %v421 = vshrl.u32 %v420, 7
      %v422 = vsub.s32 0, %v421
      %v423 = vrot.slane %v418, %v422
      %v424 = vlaneseq
      %v425 = vshrl.u32 %v424, 7
      %v426 = vsub.s32 1, %v425
      %v427 = vrot.slane %v418, %v426
      %v428 = vlaneseq
      %v429 = vshrl.u32 %v428, 7
      %v430 = vsub.s32 2, %v429
      %v431 = vrot.slane %v418, %v430
      %v432 = vlaneseq
      %v433 = vshrl.u32 %v432, 7
      %v434 = vsub.s32 3, %v433
      %v435 = vrot.slane %v418, %v434
      %v436 = vlaneseq
      %v437 = vshrl.u32 %v436, 7
      %v438 = vsub.s32 4, %v437
      %v439 = vrot.slane %v418, %v438
      %v440 = vlaneseq
      %v441 = vshrl.u32 %v440, 7
      %v442 = vsub.s32 5, %v441
      %v443 = vrot.slane %v418, %v442
      %v451 = vunpack.c.l.b16 %v321
      %v452 = vunpack.c.h.b16 %v321
      %v453 = vpack.c.b16 %v451, %v451
      %v454 = vpack.c.b16 %v452, %v452
      %v553 = vunpack.c.l.b16 %v322
      %v554 = vunpack.c.h.b16 %v322
      %v555 = vunpack.c.l.b16 %v323
      %v556 = vunpack.c.h.b16 %v323
      %v557 = vunpack.c.l.b16 %v324
      %v558 = vunpack.c.h.b16 %v324
      %v559 = vunpack.c.l.b16 %v325
      %v560 = vunpack.c.h.b16 %v325
      %v561 = vunpack.c.l.b16 %v326
      %v562 = vunpack.c.h.b16 %v326
      %v563 = vunpack.c.l.b16 %v327
      %v564 = vunpack.c.h.b16 %v327
      %v565 = vunpack.c.l.b16 %v328
      %v566 = vunpack.c.h.b16 %v328
      %v567 = vunpack.c.l.b16 %v329
      %v568 = vunpack.c.h.b16 %v329
      %v569 = vunpack.c.l.b16 %v330
      %v570 = vunpack.c.h.b16 %v330
      %v571 = vunpack.c.l.b16 %v331
      %v572 = vunpack.c.h.b16 %v331
      %v573 = vunpack.c.l.b16 %v332
      %v574 = vunpack.c.h.b16 %v332
      %v575 = vunpack.c.l.b16 %v333
      %v576 = vunpack.c.h.b16 %v333
      %v577 = vunpack.c.l.b16 %v334
      %v578 = vunpack.c.h.b16 %v334
      %v579 = vunpack.c.l.b16 %v335
      %v580 = vunpack.c.h.b16 %v335
      %v581 = vunpack.c.l.b16 %v336
      %v582 = vunpack.c.h.b16 %v336
      %v583 = vunpack.c.l.b16 %v337
      %v584 = vunpack.c.h.b16 %v337
      %v585 = vunpack.c.l.b16 %v338
      %v586 = vunpack.c.h.b16 %v338
      %v587 = vunpack.c.l.b16 %v339
      %v588 = vunpack.c.h.b16 %v339
      %v589 = vunpack.c.l.b16 %v340
      %v590 = vunpack.c.h.b16 %v340
      %v591 = vunpack.c.l.b16 %v341
      %v592 = vunpack.c.h.b16 %v341
      %v593 = vunpack.c.l.b16 %v342
      %v594 = vunpack.c.h.b16 %v342
      %v595 = vunpack.c.l.b16 %v343
      %v596 = vunpack.c.h.b16 %v343
      %v597 = vunpack.c.l.b16 %v344
      %v598 = vunpack.c.h.b16 %v344
      %v599 = vunpack.c.l.b16 %v345
      %v600 = vunpack.c.h.b16 %v345
      %v601 = vunpack.c.l.b16 %v346
      %v602 = vunpack.c.h.b16 %v346
      %v603 = vunpack.c.l.b16 %v347
      %v604 = vunpack.c.h.b16 %v347
      %v605 = vunpack.c.l.b16 %v348
      %v606 = vunpack.c.h.b16 %v348
      %v607 = vunpack.c.l.b16 %v349
      %v608 = vunpack.c.h.b16 %v349
      %v609 = vunpack.c.l.b16 %v350
      %v610 = vunpack.c.h.b16 %v350
      %v611 = vunpack.c.l.b16 %v351
      %v612 = vunpack.c.h.b16 %v351
      %v613 = vunpack.c.l.b16 %v352
      %v614 = vunpack.c.h.b16 %v352
      %v615 = vunpack.c.l.b16 %v353
      %v616 = vunpack.c.h.b16 %v353
      %v617 = vunpack.c.l.b16 %v354
      %v618 = vunpack.c.h.b16 %v354
      %v619 = vunpack.c.l.b16 %v355
      %v620 = vunpack.c.h.b16 %v355
      %v621 = vunpack.c.l.b16 %v356
      %v622 = vunpack.c.h.b16 %v356
      %v623 = vunpack.c.l.b16 %v357
      %v624 = vunpack.c.h.b16 %v357
      %v625 = vunpack.c.l.b16 %v358
      %v626 = vunpack.c.h.b16 %v358
      %v627 = vunpack.c.l.b16 %v359
      %v628 = vunpack.c.h.b16 %v359
      %v629 = vunpack.c.l.b16 %v360
      %v630 = vunpack.c.h.b16 %v360
      %v631 = vunpack.c.l.b16 %v361
      %v632 = vunpack.c.h.b16 %v361
      %v633 = vunpack.c.l.b16 %v362
      %v634 = vunpack.c.h.b16 %v362
      %v635 = vunpack.c.l.b16 %v363
      %v636 = vunpack.c.h.b16 %v363
      %v637 = vunpack.c.l.b16 %v364
      %v638 = vunpack.c.h.b16 %v364
      %v639 = vunpack.c.l.b16 %v365
      %v640 = vunpack.c.h.b16 %v365
      %v641 = vunpack.c.l.b16 %v366
      %v642 = vunpack.c.h.b16 %v366
      %v643 = vunpack.c.l.b16 %v367
      %v644 = vunpack.c.h.b16 %v367
      %v645 = vunpack.c.l.b16 %v368
      %v646 = vunpack.c.h.b16 %v368
      %v647 = vunpack.c.l.b16 %v369
      %v648 = vunpack.c.h.b16 %v369
      %v649 = vunpack.c.l.b16 %v370
      %v650 = vunpack.c.h.b16 %v370
      %v651 = vunpack.c.l.b16 %v371
      %v652 = vunpack.c.h.b16 %v371
      %v653 = vunpack.c.l.b16 %v372
      %v654 = vunpack.c.h.b16 %v372
      %v655 = vunpack.c.l.b16 %v373
      %v656 = vunpack.c.h.b16 %v373
      %v657 = vunpack.c.l.b16 %v374
      %v658 = vunpack.c.h.b16 %v374
      %v659 = vunpack.c.l.b16 %v375
      %v660 = vunpack.c.h.b16 %v375
      %v661 = vunpack.c.l.b16 %v376
      %v662 = vunpack.c.h.b16 %v376
      %v663 = vunpack.c.l.b16 %v377
      %v664 = vunpack.c.h.b16 %v377
      %v665 = vunpack.c.l.b16 %v378
      %v666 = vunpack.c.h.b16 %v378
      %v667 = vunpack.c.l.b16 %v379
      %v668 = vunpack.c.h.b16 %v379
      %v669 = vunpack.c.l.b16 %v380
      %v670 = vunpack.c.h.b16 %v380
      %v671 = vunpack.c.l.b16 %v381
      %v672 = vunpack.c.h.b16 %v381
      %v673 = vunpack.c.l.b16 %v382
      %v674 = vunpack.c.h.b16 %v382
      %v675 = vunpack.c.l.b16 %v383
      %v676 = vunpack.c.h.b16 %v383
      %v677 = vunpack.c.l.b16 %v384
      %v678 = vunpack.c.h.b16 %v384
      %v679 = vunpack.c.l.b16 %v385
      %v680 = vunpack.c.h.b16 %v385
      %v681 = vunpack.c.l.b16 %v386
      %v682 = vunpack.c.h.b16 %v386
      %v683 = vunpack.c.l.b16 %v387
      %v684 = vunpack.c.h.b16 %v387
      %v685 = vunpack.c.l.b16 %v388
      %v686 = vunpack.c.h.b16 %v388
      %v687 = vunpack.c.l.b16 %v389
      %v688 = vunpack.c.h.b16 %v389
      %v689 = vunpack.c.l.b16 %v390
      %v690 = vunpack.c.h.b16 %v390
      %v691 = vunpack.c.l.b16 %v391
      %v692 = vunpack.c.h.b16 %v391
      %v693 = vunpack.c.l.b16 %v392
      %v694 = vunpack.c.h.b16 %v392
      %v695 = vunpack.c.l.b16 %v393
      %v696 = vunpack.c.h.b16 %v393
      %v697 = vunpack.c.l.b16 %v394
      %v698 = vunpack.c.h.b16 %v394
      %v699 = vunpack.c.l.b16 %v395
      %v700 = vunpack.c.h.b16 %v395
      %v701 = vunpack.c.l.b16 %v396
      %v702 = vunpack.c.h.b16 %v396
      %v703 = vunpack.c.l.b16 %v397
      %v704 = vunpack.c.h.b16 %v397
      %v705 = vunpack.c.l.b16 %v398
      %v706 = vunpack.c.h.b16 %v398
      %v707 = vunpack.c.l.b16 %v399
      %v708 = vunpack.c.h.b16 %v399
      %v709 = vunpack.c.l.b16 %v400
      %v710 = vunpack.c.h.b16 %v400
      %v711 = vunpack.c.l.b16 %v401
      %v712 = vunpack.c.h.b16 %v401
      %v713 = vunpack.c.l.b16 %v402
      %v714 = vunpack.c.h.b16 %v402
      %v715 = vunpack.c.l.b16 %v403
      %v716 = vunpack.c.h.b16 %v403
      %v717 = vunpack.c.l.b16 %v404
      %v718 = vunpack.c.h.b16 %v404
      %v719 = vunpack.c.l.b16 %v405
      %v720 = vunpack.c.h.b16 %v405
      %v721 = vunpack.c.l.b16 %v406
      %v722 = vunpack.c.h.b16 %v406
      %v723 = vunpack.c.l.b16 %v407
      %v724 = vunpack.c.h.b16 %v407
      %v725 = vunpack.c.l.b16 %v408
      %v726 = vunpack.c.h.b16 %v408
      %v727 = vunpack.c.l.b16 %v409
      %v728 = vunpack.c.h.b16 %v409
      %v729 = vunpack.c.l.b16 %v410
      %v730 = vunpack.c.h.b16 %v410
      %v731 = vunpack.c.l.b16 %v411
      %v732 = vunpack.c.h.b16 %v411
      %v733 = vunpack.c.l.b16 %v412
      %v734 = vunpack.c.h.b16 %v412
      %v735 = vunpack.c.l.b16 %v413
      %v736 = vunpack.c.h.b16 %v413
      %v737 = vunpack.c.l.b16 %v414
      %v738 = vunpack.c.h.b16 %v414
      %v739 = vunpack.c.l.b16 %v415
      %v740 = vunpack.c.h.b16 %v415
      %v741 = vunpack.c.l.b16 %v416
      %v742 = vunpack.c.h.b16 %v416
      %v743 = vunpack.c.l.b16 %v417
      %v744 = vunpack.c.h.b16 %v417
      %v745 = vpack.c.b16 %v559, %v553
      %v746 = vpack.c.b16 %v560, %v554
      %v747 = vpack.c.b16 %v561, %v555
      %v748 = vpack.c.b16 %v562, %v556
      %v749 = vpack.c.b16 %v563, %v557
      %v750 = vpack.c.b16 %v564, %v558
      %v751 = vpack.c.b16 %v571, %v565
      %v752 = vpack.c.b16 %v572, %v566
      %v753 = vpack.c.b16 %v573, %v567
      %v754 = vpack.c.b16 %v574, %v568
      %v755 = vpack.c.b16 %v575, %v569
      %v756 = vpack.c.b16 %v576, %v570
      %v757 = vpack.c.b16 %v583, %v577
      %v758 = vpack.c.b16 %v584, %v578
      %v759 = vpack.c.b16 %v585, %v579
      %v760 = vpack.c.b16 %v586, %v580
      %v761 = vpack.c.b16 %v587, %v581
      %v762 = vpack.c.b16 %v588, %v582
      %v763 = vpack.c.b16 %v595, %v589
      %v764 = vpack.c.b16 %v596, %v590
      %v765 = vpack.c.b16 %v597, %v591
      %v766 = vpack.c.b16 %v598, %v592
      %v767 = vpack.c.b16 %v599, %v593
      %v768 = vpack.c.b16 %v600, %v594
      %v769 = vpack.c.b16 %v607, %v601
      %v770 = vpack.c.b16 %v608, %v602
      %v771 = vpack.c.b16 %v609, %v603
      %v772 = vpack.c.b16 %v610, %v604
      %v773 = vpack.c.b16 %v611, %v605
      %v774 = vpack.c.b16 %v612, %v606
      %v775 = vpack.c.b16 %v619, %v613
      %v776 = vpack.c.b16 %v620, %v614
      %v777 = vpack.c.b16 %v621, %v615
      %v778 = vpack.c.b16 %v622, %v616
      %v779 = vpack.c.b16 %v623, %v617
      %v780 = vpack.c.b16 %v624, %v618
      %v781 = vpack.c.b16 %v631, %v625
      %v782 = vpack.c.b16 %v632, %v626
      %v783 = vpack.c.b16 %v633, %v627
      %v784 = vpack.c.b16 %v634, %v628
      %v785 = vpack.c.b16 %v635, %v629
      %v786 = vpack.c.b16 %v636, %v630
      %v787 = vpack.c.b16 %v643, %v637
      %v788 = vpack.c.b16 %v644, %v638
      %v789 = vpack.c.b16 %v645, %v639
      %v790 = vpack.c.b16 %v646, %v640
      %v791 = vpack.c.b16 %v647, %v641
      %v792 = vpack.c.b16 %v648, %v642
      %v793 = vpack.c.b16 %v655, %v649
      %v794 = vpack.c.b16 %v656, %v650
      %v795 = vpack.c.b16 %v657, %v651
      %v796 = vpack.c.b16 %v658, %v652
      %v797 = vpack.c.b16 %v659, %v653
      %v798 = vpack.c.b16 %v660, %v654
      %v799 = vpack.c.b16 %v667, %v661
      %v800 = vpack.c.b16 %v668, %v662
      %v801 = vpack.c.b16 %v669, %v663
      %v802 = vpack.c.b16 %v670, %v664
      %v803 = vpack.c.b16 %v671, %v665
      %v804 = vpack.c.b16 %v672, %v666
      %v805 = vpack.c.b16 %v679, %v673
      %v806 = vpack.c.b16 %v680, %v674
      %v807 = vpack.c.b16 %v681, %v675
      %v808 = vpack.c.b16 %v682, %v676
      %v809 = vpack.c.b16 %v683, %v677
      %v810 = vpack.c.b16 %v684, %v678
      %v811 = vpack.c.b16 %v691, %v685
      %v812 = vpack.c.b16 %v692, %v686
      %v813 = vpack.c.b16 %v693, %v687
      %v814 = vpack.c.b16 %v694, %v688
      %v815 = vpack.c.b16 %v695, %v689
      %v816 = vpack.c.b16 %v696, %v690
      %v817 = vpack.c.b16 %v703, %v697
      %v818 = vpack.c.b16 %v704, %v698
      %v819 = vpack.c.b16 %v705, %v699
      %v820 = vpack.c.b16 %v706, %v700
      %v821 = vpack.c.b16 %v707, %v701
      %v822 = vpack.c.b16 %v708, %v702
      %v823 = vpack.c.b16 %v715, %v709
      %v824 = vpack.c.b16 %v716, %v710
      %v825 = vpack.c.b16 %v717, %v711
      %v826 = vpack.c.b16 %v718, %v712
      %v827 = vpack.c.b16 %v719, %v713
      %v828 = vpack.c.b16 %v720, %v714
      %v829 = vpack.c.b16 %v727, %v721
      %v830 = vpack.c.b16 %v728, %v722
      %v831 = vpack.c.b16 %v729, %v723
      %v832 = vpack.c.b16 %v730, %v724
      %v833 = vpack.c.b16 %v731, %v725
      %v834 = vpack.c.b16 %v732, %v726
      %v835 = vpack.c.b16 %v739, %v733
      %v836 = vpack.c.b16 %v740, %v734
      %v837 = vpack.c.b16 %v741, %v735
      %v838 = vpack.c.b16 %v742, %v736
      %v839 = vpack.c.b16 %v743, %v737
      %v840 = vpack.c.b16 %v744, %v738
      %937 = vmatprep.subr.bf16.mxu0 %v788
      %938 = vmatpush1.bf16.msra.mxu0 %v787
      %939 = vmatprep.subr.bf16.mxu0 %v782
      %940 = vmatpush1.bf16.msra.mxu0 %v781
      %941 = vmatprep.subr.bf16.mxu0 %v776
      %942 = vmatpush1.bf16.msra.mxu0 %v775
      %943 = vmatprep.subr.bf16.mxu0 %v770
      %944 = vmatpush1.bf16.msra.mxu0 %v769
      %945 = vmatprep.subr.bf16.mxu0 %v764
      %946 = vmatpush1.bf16.msra.mxu0 %v763
      %947 = vmatprep.subr.bf16.mxu0 %v758
      %948 = vmatpush1.bf16.msra.mxu0 %v757
      %949 = vmatprep.subr.bf16.mxu0 %v752
      %950 = vmatpush1.bf16.msra.mxu0 %v751
      %951 = vmatprep.subr.bf16.mxu0 %v746
      %952 = vmatpush1.bf16.msra.mxu0 %v745
      %953 = vmatprep.subr.bf16.mxu0 %v836
      %954 = vmatpush2.bf16.msra.mxu0 %v835
      %955 = vmatprep.subr.bf16.mxu0 %v830
      %956 = vmatpush2.bf16.msra.mxu0 %v829
      %957 = vmatprep.subr.bf16.mxu0 %v824
      %958 = vmatpush2.bf16.msra.mxu0 %v823
      %959 = vmatprep.subr.bf16.mxu0 %v818
      %960 = vmatpush2.bf16.msra.mxu0 %v817
      %961 = vmatprep.subr.bf16.mxu0 %v812
      %962 = vmatpush2.bf16.msra.mxu0 %v811
      %963 = vmatprep.subr.bf16.mxu0 %v806
      %964 = vmatpush2.bf16.msra.mxu0 %v805
      %965 = vmatprep.subr.bf16.mxu0 %v800
      %966 = vmatpush2.bf16.msra.mxu0 %v799
      %967 = vmatprep.subr.bf16.mxu0 %v794
      %968 = vmatpush2.bf16.msra.mxu0 %v793
      %969 = vmatprep.mubr.bf16.mxu0 %v454
      %970 = vmatmul.mubr.bf16.gmra.mxu0 %v453
      %v971 = vpop.f32.mrf.mxu0
      %v972 = vadd.f32 %v423, %v971
      %v973 = vpop.f32.mrf.mxu0
      %v974 = vadd.f32 %v427, %v973
      %v975 = vpop.f32.mrf.mxu0
      %v976 = vpop.f32.mrf.mxu0
      %977 = vdwg.mxu0
      %978 = vmatprep.subr.bf16.mxu0 %v790
      %979 = vmatpush1.bf16.msra.mxu0 %v789
      %980 = vmatprep.subr.bf16.mxu0 %v784
      %981 = vmatpush1.bf16.msra.mxu0 %v783
      %982 = vmatprep.subr.bf16.mxu0 %v778
      %983 = vmatpush1.bf16.msra.mxu0 %v777
      %984 = vmatprep.subr.bf16.mxu0 %v772
      %985 = vmatpush1.bf16.msra.mxu0 %v771
      %986 = vmatprep.subr.bf16.mxu0 %v766
      %987 = vmatpush1.bf16.msra.mxu0 %v765
      %988 = vmatprep.subr.bf16.mxu0 %v760
      %989 = vmatpush1.bf16.msra.mxu0 %v759
      %990 = vmatprep.subr.bf16.mxu0 %v754
      %991 = vmatpush1.bf16.msra.mxu0 %v753
      %992 = vmatprep.subr.bf16.mxu0 %v748
      %993 = vmatpush1.bf16.msra.mxu0 %v747
      %994 = vmatprep.subr.bf16.mxu0 %v838
      %995 = vmatpush2.bf16.msra.mxu0 %v837
      %996 = vmatprep.subr.bf16.mxu0 %v832
      %997 = vmatpush2.bf16.msra.mxu0 %v831
      %998 = vmatprep.subr.bf16.mxu0 %v826
      %999 = vmatpush2.bf16.msra.mxu0 %v825
      %1000 = vmatprep.subr.bf16.mxu0 %v820
      %1001 = vmatpush2.bf16.msra.mxu0 %v819
      %1002 = vmatprep.subr.bf16.mxu0 %v814
      %1003 = vmatpush2.bf16.msra.mxu0 %v813
      %1004 = vmatprep.subr.bf16.mxu0 %v808
      %1005 = vmatpush2.bf16.msra.mxu0 %v807
      %1006 = vmatprep.subr.bf16.mxu0 %v802
      %1007 = vmatpush2.bf16.msra.mxu0 %v801
      %1008 = vmatprep.subr.bf16.mxu0 %v796
      %1009 = vmatpush2.bf16.msra.mxu0 %v795
      %1010 = vmatprep.mubr.bf16.mxu0 %v454
      %1011 = vmatmul.mubr.bf16.gmra.mxu0 %v453
      %v1012 = vpop.f32.mrf.mxu0
      %v1013 = vadd.f32 %v431, %v1012
      %v1014 = vpop.f32.mrf.mxu0
      %v1015 = vadd.f32 %v435, %v1014
      %v1016 = vpop.f32.mrf.mxu0
      %v1017 = vpop.f32.mrf.mxu0
      %1018 = vdwg.mxu0
      %1019 = vmatprep.subr.bf16.mxu0 %v792
      %1020 = vmatpush1.bf16.msra.mxu0 %v791
      %1021 = vmatprep.subr.bf16.mxu0 %v786
      %1022 = vmatpush1.bf16.msra.mxu0 %v785
      %1023 = vmatprep.subr.bf16.mxu0 %v780
      %1024 = vmatpush1.bf16.msra.mxu0 %v779
      %1025 = vmatprep.subr.bf16.mxu0 %v774
      %1026 = vmatpush1.bf16.msra.mxu0 %v773
      %1027 = vmatprep.subr.bf16.mxu0 %v768
      %1028 = vmatpush1.bf16.msra.mxu0 %v767
      %1029 = vmatprep.subr.bf16.mxu0 %v762
      %1030 = vmatpush1.bf16.msra.mxu0 %v761
      %1031 = vmatprep.subr.bf16.mxu0 %v756
      %1032 = vmatpush1.bf16.msra.mxu0 %v755
      %1033 = vmatprep.subr.bf16.mxu0 %v750
      %1034 = vmatpush1.bf16.msra.mxu0 %v749
      %1035 = vmatprep.subr.bf16.mxu0 %v840
      %1036 = vmatpush2.bf16.msra.mxu0 %v839
      %1037 = vmatprep.subr.bf16.mxu0 %v834
      %1038 = vmatpush2.bf16.msra.mxu0 %v833
      %1039 = vmatprep.subr.bf16.mxu0 %v828
      %1040 = vmatpush2.bf16.msra.mxu0 %v827
      %1041 = vmatprep.subr.bf16.mxu0 %v822
      %1042 = vmatpush2.bf16.msra.mxu0 %v821
      %1043 = vmatprep.subr.bf16.mxu0 %v816
      %1044 = vmatpush2.bf16.msra.mxu0 %v815
      %1045 = vmatprep.subr.bf16.mxu0 %v810
      %1046 = vmatpush2.bf16.msra.mxu0 %v809
      %1047 = vmatprep.subr.bf16.mxu0 %v804
      %1048 = vmatpush2.bf16.msra.mxu0 %v803
      %1049 = vmatprep.subr.bf16.mxu0 %v798
      %1050 = vmatpush2.bf16.msra.mxu0 %v797
      %1051 = vmatprep.mubr.bf16.mxu0 %v454
      %1052 = vmatmul.mubr.bf16.gmra.mxu0 %v453
      %v1053 = vpop.f32.mrf.mxu0
      %v1054 = vadd.f32 %v439, %v1053
      %v1055 = vpop.f32.mrf.mxu0
      %v1056 = vadd.f32 %v443, %v1055
      %v1057 = vpop.f32.mrf.mxu0
      %v1058 = vpop.f32.mrf.mxu0
      %1059 = vdwg.mxu0
      %v1060 = vld [vmem:[%s314] sm:$0x1]
      %v1062 = vlaneseq
      %v1063 = vshrl.u32 %v1062, 7
      %v1064 = vsub.s32 0, %v1063
      %v1065 = vrot.slane %v1060, %v1064
      %v1067 = vpack.c.bf16 %v972, %v972
      %v1068 = vpack.c.bf16 %v1013, %v1013
      %v1069 = vpack.c.bf16 %v1054, %v1054
      %1070 = vmatprep.subr.bf16.mxu0 0
      %1071 = vmatpush1.bf16.xpose.msra.mxu0 0
      %1072 = vmatprep.subr.bf16.mxu0 0
      %1073 = vmatpush1.bf16.xpose.msra.mxu0 0
      %1074 = vmatprep.subr.bf16.mxu0 0
      %1075 = vmatpush1.bf16.xpose.msra.mxu0 0
      %1076 = vmatprep.subr.bf16.mxu0 0
      %1077 = vmatpush1.bf16.xpose.msra.mxu0 0
      %1078 = vmatprep.subr.bf16.mxu0 0
      %1079 = vmatpush1.bf16.xpose.msra.mxu0 0
      %1080 = vmatprep.subr.bf16.mxu0 0
      %1081 = vmatpush1.bf16.xpose.msra.mxu0 0
      %1082 = vmatprep.subr.bf16.mxu0 0
      %1083 = vmatpush1.bf16.xpose.msra.mxu0 0
      %1084 = vmatprep.subr.bf16.mxu0 0
      %1085 = vmatpush1.bf16.xpose.msra.mxu0 %v1068
      %1086 = vmatprep.subr.bf16.mxu0 0
      %1087 = vmatpush2.bf16.xpose.msra.mxu0 0
      %1088 = vmatprep.subr.bf16.mxu0 0
      %1089 = vmatpush2.bf16.xpose.msra.mxu0 0
      %1090 = vmatprep.subr.bf16.mxu0 0
      %1091 = vmatpush2.bf16.xpose.msra.mxu0 0
      %1092 = vmatprep.subr.bf16.mxu0 0
      %1093 = vmatpush2.bf16.xpose.msra.mxu0 0
      %1094 = vmatprep.subr.bf16.mxu0 0
      %1095 = vmatpush2.bf16.xpose.msra.mxu0 0
      %1096 = vmatprep.subr.bf16.mxu0 0
      %1097 = vmatpush2.bf16.xpose.msra.mxu0 0
      %1098 = vmatprep.subr.bf16.mxu0 0
      %1099 = vmatpush2.bf16.xpose.msra.mxu0 0
      %1100 = vmatprep.subr.bf16.mxu0 0
      %1101 = vmatpush2.bf16.xpose.msra.mxu0 0
      %1102 = vmatprep.mubr.bf16.mxu0 0
      %1103 = vmatmul.mubr.bf16.gmra.mxu0 %v1067
      %v1104 = vpop.f32.mrf.mxu0
      %v1105 = vadd.f32 0.0, %v1104
      %v1106 = vpop.f32.mrf.mxu0
      %v1107 = vpop.f32.mrf.mxu0
      %v1108 = vpop.f32.mrf.mxu0
      %1109 = vdwg.mxu0
      %v1110 = vmul.f32 %v1105, 0.088388346
      %v1111 = vadd.f32 %v1110, %v1065
      %vm1112 = vcmask 64512
      %v1113 = vsel %vm1112, %v1111, -inf
      %1114 = vmax.xlane.f32.xlu0 %v1113
      %v1115 = vpop.xlane.xlu0 %1114
      %v1116 = vsub.f32 %v1111, %v1115
      %v1117 = vmul.f32 %v1116, 1.442695
      %v1118 = vpow.pop %v1117
      %v1119 = vsel %vm1112, %v1118, 0.0
      %1120 = vadd.xlane.f32.xlu0 %v1119
      %v1121 = vpop.xlane.xlu0 %1120
      %v1122 = vrcp.pop %v1121
      %v1123 = vmul.f32 %v1118, %v1122
      %v1124 = vpack.c.bf16 %v1123, %v1123
      %v1126 = vsel %vm1112, %v1124, 0
      %vm1128 = vcmask 1043456
      %v1130 = vsel %vm1128, %v1069, 0
      %1132 = vmatprep.subr.bf16.mxu0 0
      %1133 = vmatpush1.bf16.msra.mxu0 0
      %1134 = vmatprep.subr.bf16.mxu0 0
      %1135 = vmatpush1.bf16.msra.mxu0 0
      %1136 = vmatprep.subr.bf16.mxu0 0
      %1137 = vmatpush1.bf16.msra.mxu0 0
      %1138 = vmatprep.subr.bf16.mxu0 0
      %1139 = vmatpush1.bf16.msra.mxu0 0
      %1140 = vmatprep.subr.bf16.mxu0 0
      %1141 = vmatpush1.bf16.msra.mxu0 0
      %1142 = vmatprep.subr.bf16.mxu0 0
      %1143 = vmatpush1.bf16.msra.mxu0 0
      %1144 = vmatprep.subr.bf16.mxu0 0
      %1145 = vmatpush1.bf16.msra.mxu0 0
      %1146 = vmatprep.subr.bf16.mxu0 0
      %1147 = vmatpush1.bf16.msra.mxu0 %v1130
      %1148 = vmatprep.subr.bf16.mxu0 0
      %1149 = vmatpush2.bf16.msra.mxu0 0
      %1150 = vmatprep.subr.bf16.mxu0 0
      %1151 = vmatpush2.bf16.msra.mxu0 0
      %1152 = vmatprep.subr.bf16.mxu0 0
      %1153 = vmatpush2.bf16.msra.mxu0 0
      %1154 = vmatprep.subr.bf16.mxu0 0
      %1155 = vmatpush2.bf16.msra.mxu0 0
      %1156 = vmatprep.subr.bf16.mxu0 0
      %1157 = vmatpush2.bf16.msra.mxu0 0
      %1158 = vmatprep.subr.bf16.mxu0 0
      %1159 = vmatpush2.bf16.msra.mxu0 0
      %1160 = vmatprep.subr.bf16.mxu0 0
      %1161 = vmatpush2.bf16.msra.mxu0 0
      %1162 = vmatprep.subr.bf16.mxu0 0
      %1163 = vmatpush2.bf16.msra.mxu0 0
      %1164 = vmatprep.mubr.bf16.mxu0 0
      %1165 = vmatmul.mubr.bf16.gmra.mxu0 %v1126
      %v1166 = vpop.f32.mrf.mxu0
      %v1167 = vadd.f32 0.0, %v1166
      %v1168 = vpop.f32.mrf.mxu0
      %v1169 = vpop.f32.mrf.mxu0
      %v1170 = vpop.f32.mrf.mxu0
      %1171 = vdwg.mxu0
      %v1172 = vpack.c.bf16 %v1167, %v1167
      %v1173 = vld [vmem:[%s4] sm:$0xff]
      %v1174 = vld [vmem:[%s4 + $0x8] sm:$0xff]
      %v1175 = vld [vmem:[%s4 + $0x10] sm:$0xff]
      %v1176 = vld [vmem:[%s4 + $0x18] sm:$0xff]
      %v1177 = vld [vmem:[%s4 + $0x20] sm:$0xff]
      %v1178 = vld [vmem:[%s4 + $0x28] sm:$0xff]
      %v1179 = vld [vmem:[%s4 + $0x30] sm:$0xff]
      %v1180 = vld [vmem:[%s4 + $0x38] sm:$0xff]
      %v1181 = vld [vmem:[%s4 + $0x40] sm:$0xff]
      %v1182 = vld [vmem:[%s4 + $0x48] sm:$0xff]
      %v1183 = vld [vmem:[%s4 + $0x50] sm:$0xff]
      %v1184 = vld [vmem:[%s4 + $0x58] sm:$0xff]
      %v1185 = vld [vmem:[%s4 + $0x60] sm:$0xff]
      %v1186 = vld [vmem:[%s4 + $0x68] sm:$0xff]
      %v1187 = vld [vmem:[%s4 + $0x70] sm:$0xff]
      %v1188 = vld [vmem:[%s4 + $0x78] sm:$0xff]
      %v1189 = vpack.c.bf16 %v974, %v974
      %v1190 = vpack.c.bf16 %v1015, %v1015
      %v1191 = vpack.c.bf16 %v1056, %v1056
      %1192 = vmatprep.subr.bf16.mxu0 0
      %1193 = vmatpush1.bf16.xpose.msra.mxu0 0
      %1194 = vmatprep.subr.bf16.mxu0 0
      %1195 = vmatpush1.bf16.xpose.msra.mxu0 0
      %1196 = vmatprep.subr.bf16.mxu0 0
      %1197 = vmatpush1.bf16.xpose.msra.mxu0 0
      %1198 = vmatprep.subr.bf16.mxu0 0
      %1199 = vmatpush1.bf16.xpose.msra.mxu0 0
      %1200 = vmatprep.subr.bf16.mxu0 0
      %1201 = vmatpush1.bf16.xpose.msra.mxu0 0
      %1202 = vmatprep.subr.bf16.mxu0 0
      %1203 = vmatpush1.bf16.xpose.msra.mxu0 0
      %1204 = vmatprep.subr.bf16.mxu0 0
      %1205 = vmatpush1.bf16.xpose.msra.mxu0 0
      %1206 = vmatprep.subr.bf16.mxu0 0
      %1207 = vmatpush1.bf16.xpose.msra.mxu0 %v1190
      %1208 = vmatprep.subr.bf16.mxu0 0
      %1209 = vmatpush2.bf16.xpose.msra.mxu0 0
      %1210 = vmatprep.subr.bf16.mxu0 0
      %1211 = vmatpush2.bf16.xpose.msra.mxu0 0
      %1212 = vmatprep.subr.bf16.mxu0 0
      %1213 = vmatpush2.bf16.xpose.msra.mxu0 0
      %1214 = vmatprep.subr.bf16.mxu0 0
      %1215 = vmatpush2.bf16.xpose.msra.mxu0 0
      %1216 = vmatprep.subr.bf16.mxu0 0
      %1217 = vmatpush2.bf16.xpose.msra.mxu0 0
      %1218 = vmatprep.subr.bf16.mxu0 0
      %1219 = vmatpush2.bf16.xpose.msra.mxu0 0
      %1220 = vmatprep.subr.bf16.mxu0 0
      %1221 = vmatpush2.bf16.xpose.msra.mxu0 0
      %1222 = vmatprep.subr.bf16.mxu0 0
      %1223 = vmatpush2.bf16.xpose.msra.mxu0 0
      %1224 = vmatprep.mubr.bf16.mxu0 0
      %1225 = vmatmul.mubr.bf16.gmra.mxu0 %v1189
      %v1226 = vpop.f32.mrf.mxu0
      %v1227 = vadd.f32 0.0, %v1226
      %v1228 = vpop.f32.mrf.mxu0
      %v1229 = vpop.f32.mrf.mxu0
      %v1230 = vpop.f32.mrf.mxu0
      %1231 = vdwg.mxu0
      %v1232 = vmul.f32 %v1227, 0.088388346
      %v1233 = vadd.f32 %v1232, %v1065
      %v1234 = vsel %vm1112, %v1233, -inf
      %1235 = vmax.xlane.f32.xlu0 %v1234
      %v1236 = vpop.xlane.xlu0 %1235
      %v1237 = vsub.f32 %v1233, %v1236
      %v1238 = vmul.f32 %v1237, 1.442695
      %v1239 = vpow.pop %v1238
      %v1240 = vsel %vm1112, %v1239, 0.0
      %1241 = vadd.xlane.f32.xlu0 %v1240
      %v1242 = vpop.xlane.xlu0 %1241
      %v1243 = vrcp.pop %v1242
      %v1244 = vmul.f32 %v1239, %v1243
      %v1245 = vpack.c.bf16 %v1244, %v1244
      %v1247 = vsel %vm1112, %v1245, 0
      %v1250 = vsel %vm1128, %v1191, 0
      %1252 = vmatprep.subr.bf16.mxu0 0
      %1253 = vmatpush1.bf16.msra.mxu0 0
      %1254 = vmatprep.subr.bf16.mxu0 0
      %1255 = vmatpush1.bf16.msra.mxu0 0
      %1256 = vmatprep.subr.bf16.mxu0 0
      %1257 = vmatpush1.bf16.msra.mxu0 0
      %1258 = vmatprep.subr.bf16.mxu0 0
      %1259 = vmatpush1.bf16.msra.mxu0 0
      %1260 = vmatprep.subr.bf16.mxu0 0
      %1261 = vmatpush1.bf16.msra.mxu0 0
      %1262 = vmatprep.subr.bf16.mxu0 0
      %1263 = vmatpush1.bf16.msra.mxu0 0
      %1264 = vmatprep.subr.bf16.mxu0 0
      %1265 = vmatpush1.bf16.msra.mxu0 0
      %1266 = vmatprep.subr.bf16.mxu0 0
      %1267 = vmatpush1.bf16.msra.mxu0 %v1250
      %1268 = vmatprep.subr.bf16.mxu0 0
      %1269 = vmatpush2.bf16.msra.mxu0 0
      %1270 = vmatprep.subr.bf16.mxu0 0
      %1271 = vmatpush2.bf16.msra.mxu0 0
      %1272 = vmatprep.subr.bf16.mxu0 0
      %1273 = vmatpush2.bf16.msra.mxu0 0
      %1274 = vmatprep.subr.bf16.mxu0 0
      %1275 = vmatpush2.bf16.msra.mxu0 0
      %1276 = vmatprep.subr.bf16.mxu0 0
      %1277 = vmatpush2.bf16.msra.mxu0 0
      %1278 = vmatprep.subr.bf16.mxu0 0
      %1279 = vmatpush2.bf16.msra.mxu0 0
      %1280 = vmatprep.subr.bf16.mxu0 0
      %1281 = vmatpush2.bf16.msra.mxu0 0
      %1282 = vmatprep.subr.bf16.mxu0 0
      %1283 = vmatpush2.bf16.msra.mxu0 0
      %1284 = vmatprep.mubr.bf16.mxu0 0
      %1285 = vmatmul.mubr.bf16.gmra.mxu0 %v1247
      %v1286 = vpop.f32.mrf.mxu0
      %v1287 = vadd.f32 0.0, %v1286
      %v1288 = vpop.f32.mrf.mxu0
      %v1289 = vpop.f32.mrf.mxu0
      %v1290 = vpop.f32.mrf.mxu0
      %1291 = vdwg.mxu0
      %v1292 = vpack.c.bf16 %v1287, %v1287
      %v1293 = vld [vmem:[%s4 + $0x80] sm:$0xff]
      %v1294 = vld [vmem:[%s4 + $0x88] sm:$0xff]
      %v1295 = vld [vmem:[%s4 + $0x90] sm:$0xff]
      %v1296 = vld [vmem:[%s4 + $0x98] sm:$0xff]
      %v1297 = vld [vmem:[%s4 + $0xa0] sm:$0xff]
      %v1298 = vld [vmem:[%s4 + $0xa8] sm:$0xff]
      %v1299 = vld [vmem:[%s4 + $0xb0] sm:$0xff]
      %v1300 = vld [vmem:[%s4 + $0xb8] sm:$0xff]
      %v1301 = vld [vmem:[%s4 + $0xc0] sm:$0xff]
      %v1302 = vld [vmem:[%s4 + $0xc8] sm:$0xff]
      %v1303 = vld [vmem:[%s4 + $0xd0] sm:$0xff]
      %v1304 = vld [vmem:[%s4 + $0xd8] sm:$0xff]
      %v1305 = vld [vmem:[%s4 + $0xe0] sm:$0xff]
      %v1306 = vld [vmem:[%s4 + $0xe8] sm:$0xff]
      %v1307 = vld [vmem:[%s4 + $0xf0] sm:$0xff]
      %v1308 = vld [vmem:[%s4 + $0xf8] sm:$0xff]
      %v1325 = vunpack.c.l.b16 %v1293
      %v1326 = vunpack.c.h.b16 %v1293
      %v1327 = vunpack.c.l.b16 %v1294
      %v1328 = vunpack.c.h.b16 %v1294
      %v1329 = vunpack.c.l.b16 %v1295
      %v1330 = vunpack.c.h.b16 %v1295
      %v1331 = vunpack.c.l.b16 %v1296
      %v1332 = vunpack.c.h.b16 %v1296
      %v1333 = vunpack.c.l.b16 %v1297
      %v1334 = vunpack.c.h.b16 %v1297
      %v1335 = vunpack.c.l.b16 %v1298
      %v1336 = vunpack.c.h.b16 %v1298
      %v1337 = vunpack.c.l.b16 %v1299
      %v1338 = vunpack.c.h.b16 %v1299
      %v1339 = vunpack.c.l.b16 %v1300
      %v1340 = vunpack.c.h.b16 %v1300
      %v1341 = vunpack.c.l.b16 %v1301
      %v1342 = vunpack.c.h.b16 %v1301
      %v1343 = vunpack.c.l.b16 %v1302
      %v1344 = vunpack.c.h.b16 %v1302
      %v1345 = vunpack.c.l.b16 %v1303
      %v1346 = vunpack.c.h.b16 %v1303
      %v1347 = vunpack.c.l.b16 %v1304
      %v1348 = vunpack.c.h.b16 %v1304
      %v1349 = vunpack.c.l.b16 %v1305
      %v1350 = vunpack.c.h.b16 %v1305
      %v1351 = vunpack.c.l.b16 %v1306
      %v1352 = vunpack.c.h.b16 %v1306
      %v1353 = vunpack.c.l.b16 %v1307
      %v1354 = vunpack.c.h.b16 %v1307
      %v1355 = vunpack.c.l.b16 %v1308
      %v1356 = vunpack.c.h.b16 %v1308
      %v1357 = vpack.c.b16 %v1327, %v1325
      %v1358 = vpack.c.b16 %v1328, %v1326
      %v1359 = vpack.c.b16 %v1331, %v1329
      %v1360 = vpack.c.b16 %v1332, %v1330
      %v1361 = vpack.c.b16 %v1335, %v1333
      %v1362 = vpack.c.b16 %v1336, %v1334
      %v1363 = vpack.c.b16 %v1339, %v1337
      %v1364 = vpack.c.b16 %v1340, %v1338
      %v1365 = vpack.c.b16 %v1343, %v1341
      %v1366 = vpack.c.b16 %v1344, %v1342
      %v1367 = vpack.c.b16 %v1347, %v1345
      %v1368 = vpack.c.b16 %v1348, %v1346
      %v1369 = vpack.c.b16 %v1351, %v1349
      %v1370 = vpack.c.b16 %v1352, %v1350
      %v1371 = vpack.c.b16 %v1355, %v1353
      %v1372 = vpack.c.b16 %v1356, %v1354
      %1389 = vmatprep.subr.bf16.mxu0 %v1372
      %1390 = vmatpush1.bf16.msra.mxu0 %v1371
      %1391 = vmatprep.subr.bf16.mxu0 %v1370
      %1392 = vmatpush1.bf16.msra.mxu0 %v1369
      %1393 = vmatprep.subr.bf16.mxu0 %v1368
      %1394 = vmatpush1.bf16.msra.mxu0 %v1367
      %1395 = vmatprep.subr.bf16.mxu0 %v1366
      %1396 = vmatpush1.bf16.msra.mxu0 %v1365
      %1397 = vmatprep.subr.bf16.mxu0 %v1364
      %1398 = vmatpush1.bf16.msra.mxu0 %v1363
      %1399 = vmatprep.subr.bf16.mxu0 %v1362
      %1400 = vmatpush1.bf16.msra.mxu0 %v1361
      %1401 = vmatprep.subr.bf16.mxu0 %v1360
      %1402 = vmatpush1.bf16.msra.mxu0 %v1359
      %1403 = vmatprep.subr.bf16.mxu0 %v1358
      %1404 = vmatpush1.bf16.msra.mxu0 %v1357
      %1405 = vmatprep.subr.bf16.mxu0 0
      %1406 = vmatpush2.bf16.msra.mxu0 0
      %1407 = vmatprep.subr.bf16.mxu0 0
      %1408 = vmatpush2.bf16.msra.mxu0 0
      %1409 = vmatprep.subr.bf16.mxu0 0
      %1410 = vmatpush2.bf16.msra.mxu0 0
      %1411 = vmatprep.subr.bf16.mxu0 0
      %1412 = vmatpush2.bf16.msra.mxu0 0
      %1413 = vmatprep.subr.bf16.mxu0 0
      %1414 = vmatpush2.bf16.msra.mxu0 0
      %1415 = vmatprep.subr.bf16.mxu0 0
      %1416 = vmatpush2.bf16.msra.mxu0 0
      %1417 = vmatprep.subr.bf16.mxu0 0
      %1418 = vmatpush2.bf16.msra.mxu0 0
      %1419 = vmatprep.subr.bf16.mxu0 0
      %1420 = vmatpush2.bf16.msra.mxu0 0
      %1421 = vmatprep.mubr.bf16.mxu0 0
      %1422 = vmatmul.mubr.bf16.gmra.mxu0 %v1292
      %v1423 = vpop.f32.mrf.mxu0
      %v1424 = vadd.f32 0.0, %v1423
      %v1425 = vpop.f32.mrf.mxu0
      %v1426 = vadd.f32 0.0, %v1425
      %v1427 = vpop.f32.mrf.mxu0
      %v1428 = vpop.f32.mrf.mxu0
      %1429 = vdwg.mxu0
      %v1446 = vunpack.c.l.b16 %v1173
      %v1447 = vunpack.c.h.b16 %v1173
      %v1448 = vunpack.c.l.b16 %v1174
      %v1449 = vunpack.c.h.b16 %v1174
      %v1450 = vunpack.c.l.b16 %v1175
      %v1451 = vunpack.c.h.b16 %v1175
      %v1452 = vunpack.c.l.b16 %v1176
      %v1453 = vunpack.c.h.b16 %v1176
      %v1454 = vunpack.c.l.b16 %v1177
      %v1455 = vunpack.c.h.b16 %v1177
      %v1456 = vunpack.c.l.b16 %v1178
      %v1457 = vunpack.c.h.b16 %v1178
      %v1458 = vunpack.c.l.b16 %v1179
      %v1459 = vunpack.c.h.b16 %v1179
      %v1460 = vunpack.c.l.b16 %v1180
      %v1461 = vunpack.c.h.b16 %v1180
      %v1462 = vunpack.c.l.b16 %v1181
      %v1463 = vunpack.c.h.b16 %v1181
      %v1464 = vunpack.c.l.b16 %v1182
      %v1465 = vunpack.c.h.b16 %v1182
      %v1466 = vunpack.c.l.b16 %v1183
      %v1467 = vunpack.c.h.b16 %v1183
      %v1468 = vunpack.c.l.b16 %v1184
      %v1469 = vunpack.c.h.b16 %v1184
      %v1470 = vunpack.c.l.b16 %v1185
      %v1471 = vunpack.c.h.b16 %v1185
      %v1472 = vunpack.c.l.b16 %v1186
      %v1473 = vunpack.c.h.b16 %v1186
      %v1474 = vunpack.c.l.b16 %v1187
      %v1475 = vunpack.c.h.b16 %v1187
      %v1476 = vunpack.c.l.b16 %v1188
      %v1477 = vunpack.c.h.b16 %v1188
      %v1478 = vpack.c.b16 %v1448, %v1446
      %v1479 = vpack.c.b16 %v1449, %v1447
      %v1480 = vpack.c.b16 %v1452, %v1450
      %v1481 = vpack.c.b16 %v1453, %v1451
      %v1482 = vpack.c.b16 %v1456, %v1454
      %v1483 = vpack.c.b16 %v1457, %v1455
      %v1484 = vpack.c.b16 %v1460, %v1458
      %v1485 = vpack.c.b16 %v1461, %v1459
      %v1486 = vpack.c.b16 %v1464, %v1462
      %v1487 = vpack.c.b16 %v1465, %v1463
      %v1488 = vpack.c.b16 %v1468, %v1466
      %v1489 = vpack.c.b16 %v1469, %v1467
      %v1490 = vpack.c.b16 %v1472, %v1470
      %v1491 = vpack.c.b16 %v1473, %v1471
      %v1492 = vpack.c.b16 %v1476, %v1474
      %v1493 = vpack.c.b16 %v1477, %v1475
      %1510 = vmatprep.subr.bf16.mxu0 %v1493
      %1511 = vmatpush1.bf16.msra.mxu0 %v1492
      %1512 = vmatprep.subr.bf16.mxu0 %v1491
      %1513 = vmatpush1.bf16.msra.mxu0 %v1490
      %1514 = vmatprep.subr.bf16.mxu0 %v1489
      %1515 = vmatpush1.bf16.msra.mxu0 %v1488
      %1516 = vmatprep.subr.bf16.mxu0 %v1487
      %1517 = vmatpush1.bf16.msra.mxu0 %v1486
      %1518 = vmatprep.subr.bf16.mxu0 %v1485
      %1519 = vmatpush1.bf16.msra.mxu0 %v1484
      %1520 = vmatprep.subr.bf16.mxu0 %v1483
      %1521 = vmatpush1.bf16.msra.mxu0 %v1482
      %1522 = vmatprep.subr.bf16.mxu0 %v1481
      %1523 = vmatpush1.bf16.msra.mxu0 %v1480
      %1524 = vmatprep.subr.bf16.mxu0 %v1479
      %1525 = vmatpush1.bf16.msra.mxu0 %v1478
      %1526 = vmatprep.subr.bf16.mxu0 0
      %1527 = vmatpush2.bf16.msra.mxu0 0
      %1528 = vmatprep.subr.bf16.mxu0 0
      %1529 = vmatpush2.bf16.msra.mxu0 0
      %1530 = vmatprep.subr.bf16.mxu0 0
      %1531 = vmatpush2.bf16.msra.mxu0 0
      %1532 = vmatprep.subr.bf16.mxu0 0
      %1533 = vmatpush2.bf16.msra.mxu0 0
      %1534 = vmatprep.subr.bf16.mxu0 0
      %1535 = vmatpush2.bf16.msra.mxu0 0
      %1536 = vmatprep.subr.bf16.mxu0 0
      %1537 = vmatpush2.bf16.msra.mxu0 0
      %1538 = vmatprep.subr.bf16.mxu0 0
      %1539 = vmatpush2.bf16.msra.mxu0 0
      %1540 = vmatprep.subr.bf16.mxu0 0
      %1541 = vmatpush2.bf16.msra.mxu0 0
      %1542 = vmatprep.mubr.bf16.mxu0 0
      %1543 = vmatmul.mubr.bf16.gmra.mxu0 %v1172
      %v1544 = vpop.f32.mrf.mxu0
      %v1545 = vadd.f32 %v1424, %v1544
      %v1546 = vpop.f32.mrf.mxu0
      %v1547 = vadd.f32 %v1426, %v1546
      %v1548 = vpop.f32.mrf.mxu0
      %v1549 = vpop.f32.mrf.mxu0
      %1550 = vdwg.mxu0
      %v1551 = vld [vmem:[%s5] sm:$0x3]
      %v1553 = vlaneseq
      %v1554 = vshrl.u32 %v1553, 7
      %v1555 = vsub.s32 0, %v1554
      %v1556 = vrot.slane %v1551, %v1555
      %v1557 = vlaneseq
      %v1558 = vshrl.u32 %v1557, 7
      %v1559 = vsub.s32 1, %v1558
      %v1560 = vrot.slane %v1551, %v1559
      %v1563 = vadd.f32 %v1545, %v1556
      %v1564 = vadd.f32 %v1547, %v1560
      %v1565 = vunpack.c.l.bf16 %v321
      %v1566 = vunpack.c.h.bf16 %v321
      %v1567 = vadd.f32 %v1563, %v1565
      %v1568 = vadd.f32 %v1564, %v1566
      %v1569 = vld [vmem:[%s6] sm:$0x3]
      %v1570 = vld [vmem:[%s7] sm:$0x3]
      %v1571 = vadd.f32 %v1567, %v1568
      %1572 = vadd.xlane.f32.xlu0 %v1571
      %v1573 = vpop.xlane.xlu0 %1572
      %v1574 = vrcp.pop 256.0
      %v1575 = vmul.f32 %v1573, %v1574
      %v1576 = vsub.f32 %v1567, %v1575
      %v1577 = vsub.f32 %v1568, %v1575
      %v1578 = vmul.f32 %v1576, %v1576
      %v1579 = vmul.f32 %v1577, %v1577
      %v1580 = vadd.f32 %v1578, %v1579
      %1581 = vadd.xlane.f32.xlu0 %v1580
      %v1582 = vpop.xlane.xlu0 %1581
      %v1583 = vmul.f32 %v1582, %v1574
      %v1584 = vadd.f32 %v1583, 1e-12
      %v1585 = vrsqrt.pop %v1584
      %v1586 = vmul.f32 %v1576, %v1585
      %v1587 = vmul.f32 %v1577, %v1585
      %v1589 = vlaneseq
      %v1590 = vshrl.u32 %v1589, 7
      %v1591 = vsub.s32 0, %v1590
      %v1592 = vrot.slane %v1569, %v1591
      %v1593 = vlaneseq
      %v1594 = vshrl.u32 %v1593, 7
      %v1595 = vsub.s32 1, %v1594
      %v1596 = vrot.slane %v1569, %v1595
      %v1599 = vmul.f32 %v1586, %v1592
      %v1600 = vmul.f32 %v1587, %v1596
      %v1602 = vlaneseq
      %v1603 = vshrl.u32 %v1602, 7
      %v1604 = vsub.s32 0, %v1603
      %v1605 = vrot.slane %v1570, %v1604
      %v1606 = vlaneseq
      %v1607 = vshrl.u32 %v1606, 7
      %v1608 = vsub.s32 1, %v1607
      %v1609 = vrot.slane %v1570, %v1608
      %v1612 = vadd.f32 %v1599, %v1605
      %v1613 = vadd.f32 %v1600, %v1609
      %v1614 = vpack.c.bf16 %v1612, %v1612
      %v1615 = vpack.c.bf16 %v1613, %v1613
      %v1618 = vunpack.c.l.b16 %v1614
      %v1619 = vunpack.c.l.b16 %v1615
      %v1620 = vpack.c.b16 %v1619, %v1618
      %1622 = vst [vmem:[%s319] sm:$0xff] %v1620
      %p1623 = scmp.lt.s32.totalorder %s19, 1
      %s1624 = scalar_select %p1623, %s19, 1
      %s1625 = smul.addr %s1624, 2
      %s1626 = smul.addr %s1625, 4
      %s1627 = scalar_lea.vmem %s8, %s1626
      // Predicated region
      $region53: #{text_encoder_forward.9} parent=51 // pred_check
        %p1628 = pneg %p215
      $region54: #{text_encoder_forward.9} parent=51 // pred_check_branch
        %1630 = sbr.rel (%p1628) target = $region56
      $region55: #{text_encoder_forward.9} parent=51 // pred_region
        _
      $region56: #{text_encoder_forward.9} parent=51 // pred_fallthru
        _
    $region52: #{text_encoder_forward.9} parent=5 // pred_fallthru
      _
    %p1631 = scmp.le.s32.totalorder 2, %s14
    // Predicated region
    $region57: #{text_encoder_forward.9} parent=5 // pred_check
      %p1632 = pneg %p1631
    $region58: #{text_encoder_forward.9} parent=5 // pred_check_branch
      %1634 = sbr.rel (%p1632) target = $region60
    $region59: #{text_encoder_forward.9} parent=5 // pred_region
      %s1635 = ssub.s32 %s14, 2
      // Predicated region
      $region61: #{text_encoder_forward.9} parent=59 // pred_check
        %p1636 = pneg %p221
      $region62: #{text_encoder_forward.9} parent=59 // pred_check_branch
        %1638 = sbr.rel (%p1636) target = $region64
      $region63: #{text_encoder_forward.9} parent=59 // pred_region
        %p1639 = scmp.lt.s32.totalorder %s20, 1
        %s1640 = scalar_select %p1639, %s20, 1
        %s1641 = smul.addr %s1640, 2
        %s1642 = smul.addr %s1641, 4
        %s1643 = scalar_lea.vmem %s8, %s1642
      $region64: #{text_encoder_forward.9} parent=59 // pred_fallthru
        _
    $region60: #{text_encoder_forward.9} parent=5 // pred_fallthru
      _
  $region6: #{text_encoder_forward.9} parent=0 // loop_footer
    %s18 = sadd.s32 1, %s14
  $region7: #{text_encoder_forward.9} parent=0 // loop_footer_branch
    %13 = sbr.rel target = $region3
  $region8: #{text_encoder_forward.9} parent=0 // loop_exit
    _

// kernel: text_encoder_forward.8
$region0: #{text_encoder_forward.8}
  #allocation0 [shape = 'u32[]', space=smem, size = 0x4, offset = 0x4, fixed_abs, tag = 'smem constant byte address 0x4 - core index']
  #allocation1 [shape = 'u32[144,128]{1,0:T(1,128)}', space=vmem, size = 0x12000, scoped, tag = 'internal scratch']
  %s0 = inlined_call_operand.vmem [shape: bf16[16,256], index: 0, kind: input, shape index: {}]
  %s1 = inlined_call_operand.vmem [shape: bf16[256,1024], index: 1, kind: input, shape index: {}]
  %s2 = inlined_call_operand.vmem [shape: f32[1,1024], index: 2, kind: input, shape index: {}]
  %s3 = inlined_call_operand.hbm [shape: bf16[1024,256], index: 3, kind: input, shape index: {}]
  %s4 = inlined_call_operand.vmem [shape: f32[1,256], index: 4, kind: input, shape index: {}]
  %s5 = inlined_call_operand.vmem [shape: f32[1,256], index: 5, kind: input, shape index: {}]
  %s6 = inlined_call_operand.vmem [shape: f32[1,256], index: 6, kind: input, shape index: {}]
  %s7 = inlined_call_operand.vmem [shape: bf16[16,256], index: 7, kind: output, shape index: {}]
  %s8 = sld [smem:[#allocation0]]
  $region42: #{text_encoder_forward.8} parent=0
    _
  %s10 = ssub.s32 1, %s8
  %s11 = scalar_select 0, %s10, %s8
  $region1: #{text_encoder_forward.8} parent=0
    #allocation2 [shape = 'u8[524288]{0}', space=vmem, size = 0x80000, scoped, tag = 'input window, operand 3, single buffered']
    #allocation3 [shape = 's32[1]{0}', space=sflag, size = 0x4, scoped, tag = 'scoped memory for text_encoder_forward.8']
    %12 = vsyncpa [#allocation3], 0
    // Predicated region
    $region2: #{text_encoder_forward.8} parent=1 // pred_check
      _
    $region3: #{text_encoder_forward.8} parent=1 // pred_check_branch
      %14 = sbr.rel (0) target = $region5
    $region4: #{text_encoder_forward.8} parent=1 // pred_region
      _
    $region5: #{text_encoder_forward.8} parent=1 // pred_fallthru
      _
    // Predicated region
    $region6: #{text_encoder_forward.8} parent=1 // pred_check
      _
    $region7: #{text_encoder_forward.8} parent=1 // pred_check_branch
      %16 = sbr.rel (0) target = $region9
    $region8: #{text_encoder_forward.8} parent=1 // pred_region
      _
    $region9: #{text_encoder_forward.8} parent=1 // pred_fallthru
      _
    // Predicated region
    $region10: #{text_encoder_forward.8} parent=1 // pred_check
      _
    $region11: #{text_encoder_forward.8} parent=1 // pred_check_branch
      %18 = sbr.rel (0) target = $region13
    $region12: #{text_encoder_forward.8} parent=1 // pred_region
      _
    $region13: #{text_encoder_forward.8} parent=1 // pred_fallthru
      _
    // Predicated region
    $region14: #{text_encoder_forward.8} parent=1 // pred_check
      _
    $region15: #{text_encoder_forward.8} parent=1 // pred_check_branch
      %20 = sbr.rel (0) target = $region17
    $region16: #{text_encoder_forward.8} parent=1 // pred_region
      %s22 = ssub.s32 16384, 16384
      %23 = vsyncadd [#allocation3], %s22
      %s24 = sshll.u32 [#allocation2], 4
      %s25 = int_to_ptr.vmem [resolvable:$true] %s24
      %30 = dma.hbm_to_vmem [thread:$0]  %s3, 16384, %s25, [#allocation3], 128, 128, 8
    $region17: #{text_encoder_forward.8} parent=1 // pred_fallthru
      _
    // Predicated region
    $region18: #{text_encoder_forward.8} parent=1 // pred_check
      _
    $region19: #{text_encoder_forward.8} parent=1 // pred_check_branch
      %32 = sbr.rel (0) target = $region21
    $region20: #{text_encoder_forward.8} parent=1 // pred_region
      _
    $region21: #{text_encoder_forward.8} parent=1 // pred_fallthru
      _
    // Predicated region
    $region22: #{text_encoder_forward.8} parent=1 // pred_check
      _
    $region23: #{text_encoder_forward.8} parent=1 // pred_check_branch
      %34 = sbr.rel (0) target = $region25
    $region24: #{text_encoder_forward.8} parent=1 // pred_region
      _
    $region25: #{text_encoder_forward.8} parent=1 // pred_fallthru
      _
    // Predicated region
    $region26: #{text_encoder_forward.8} parent=1 // pred_check
      _
    $region27: #{text_encoder_forward.8} parent=1 // pred_check_branch
      %36 = sbr.rel (0) target = $region29
    $region28: #{text_encoder_forward.8} parent=1 // pred_region
      _
    $region29: #{text_encoder_forward.8} parent=1 // pred_fallthru
      _
    // Predicated region
    $region30: #{text_encoder_forward.8} parent=1 // pred_check
      _
    $region31: #{text_encoder_forward.8} parent=1 // pred_check_branch
      %38 = sbr.rel (0) target = $region33
    $region32: #{text_encoder_forward.8} parent=1 // pred_region
      %39 = dma.done [#allocation3], 16384
    $region33: #{text_encoder_forward.8} parent=1 // pred_fallthru
      _
    %v40 = vld [vmem:[%s0] sm:$0xff]
    %v41 = vld [vmem:[%s0 + $0x8] sm:$0xff]
    %v42 = vld [vmem:[%s1] sm:$0xff]
    %v43 = vld [vmem:[%s1 + $0x8] sm:$0xff]
    %v44 = vld [vmem:[%s1 + $0x10] sm:$0xff]
    %v45 = vld [vmem:[%s1 + $0x18] sm:$0xff]
    %v46 = vld [vmem:[%s1 + $0x20] sm:$0xff]
    %v47 = vld [vmem:[%s1 + $0x28] sm:$0xff]
    %v48 = vld [vmem:[%s1 + $0x30] sm:$0xff]
    %v49 = vld [vmem:[%s1 + $0x38] sm:$0xff]
    %v50 = vld [vmem:[%s1 + $0x40] sm:$0xff]
    %v51 = vld [vmem:[%s1 + $0x48] sm:$0xff]
    %v52 = vld [vmem:[%s1 + $0x50] sm:$0xff]
    %v53 = vld [vmem:[%s1 + $0x58] sm:$0xff]
    %v54 = vld [vmem:[%s1 + $0x60] sm:$0xff]
    %v55 = vld [vmem:[%s1 + $0x68] sm:$0xff]
    %v56 = vld [vmem:[%s1 + $0x70] sm:$0xff]
    %v57 = vld [vmem:[%s1 + $0x78] sm:$0xff]
    %v58 = vld [vmem:[%s1 + $0x80] sm:$0xff]
    %v59 = vld [vmem:[%s1 + $0x88] sm:$0xff]
    %v60 = vld [vmem:[%s1 + $0x90] sm:$0xff]
    %v61 = vld [vmem:[%s1 + $0x98] sm:$0xff]
    %v62 = vld [vmem:[%s1 + $0xa0] sm:$0xff]
    %v63 = vld [vmem:[%s1 + $0xa8] sm:$0xff]
    %v64 = vld [vmem:[%s1 + $0xb0] sm:$0xff]
    %v65 = vld [vmem:[%s1 + $0xb8] sm:$0xff]
    %v66 = vld [vmem:[%s1 + $0xc0] sm:$0xff]
    %v67 = vld [vmem:[%s1 + $0xc8] sm:$0xff]
    %v68 = vld [vmem:[%s1 + $0xd0] sm:$0xff]
    %v69 = vld [vmem:[%s1 + $0xd8] sm:$0xff]
    %v70 = vld [vmem:[%s1 + $0xe0] sm:$0xff]
    %v71 = vld [vmem:[%s1 + $0xe8] sm:$0xff]
    %v72 = vld [vmem:[%s1 + $0xf0] sm:$0xff]
    %v73 = vld [vmem:[%s1 + $0xf8] sm:$0xff]
    %v74 = vld [vmem:[%s1 + $0x100] sm:$0xff]
    %v75 = vld [vmem:[%s1 + $0x108] sm:$0xff]
    %v76 = vld [vmem:[%s1 + $0x110] sm:$0xff]
    %v77 = vld [vmem:[%s1 + $0x118] sm:$0xff]
    %v78 = vld [vmem:[%s1 + $0x120] sm:$0xff]
    %v79 = vld [vmem:[%s1 + $0x128] sm:$0xff]
    %v80 = vld [vmem:[%s1 + $0x130] sm:$0xff]
    %v81 = vld [vmem:[%s1 + $0x138] sm:$0xff]
    %v82 = vld [vmem:[%s1 + $0x140] sm:$0xff]
    %v83 = vld [vmem:[%s1 + $0x148] sm:$0xff]
    %v84 = vld [vmem:[%s1 + $0x150] sm:$0xff]
    %v85 = vld [vmem:[%s1 + $0x158] sm:$0xff]
    %v86 = vld [vmem:[%s1 + $0x160] sm:$0xff]
    %v87 = vld [vmem:[%s1 + $0x168] sm:$0xff]
    %v88 = vld [vmem:[%s1 + $0x170] sm:$0xff]
    %v89 = vld [vmem:[%s1 + $0x178] sm:$0xff]
    %v90 = vld [vmem:[%s1 + $0x180] sm:$0xff]
    %v91 = vld [vmem:[%s1 + $0x188] sm:$0xff]
    %v92 = vld [vmem:[%s1 + $0x190] sm:$0xff]
    %v93 = vld [vmem:[%s1 + $0x198] sm:$0xff]
    %v94 = vld [vmem:[%s1 + $0x1a0] sm:$0xff]
    %v95 = vld [vmem:[%s1 + $0x1a8] sm:$0xff]
    %v96 = vld [vmem:[%s1 + $0x1b0] sm:$0xff]
    %v97 = vld [vmem:[%s1 + $0x1b8] sm:$0xff]
    %v98 = vld [vmem:[%s1 + $0x1c0] sm:$0xff]
    %v99 = vld [vmem:[%s1 + $0x1c8] sm:$0xff]
    %v100 = vld [vmem:[%s1 + $0x1d0] sm:$0xff]
    %v101 = vld [vmem:[%s1 + $0x1d8] sm:$0xff]
    %v102 = vld [vmem:[%s1 + $0x1e0] sm:$0xff]
    %v103 = vld [vmem:[%s1 + $0x1e8] sm:$0xff]
    %v104 = vld [vmem:[%s1 + $0x1f0] sm:$0xff]
    %v105 = vld [vmem:[%s1 + $0x1f8] sm:$0xff]
    %v106 = vld [vmem:[%s1 + $0x200] sm:$0xff]
    %v107 = vld [vmem:[%s1 + $0x208] sm:$0xff]
    %v108 = vld [vmem:[%s1 + $0x210] sm:$0xff]
    %v109 = vld [vmem:[%s1 + $0x218] sm:$0xff]
    %v110 = vld [vmem:[%s1 + $0x220] sm:$0xff]
    %v111 = vld [vmem:[%s1 + $0x228] sm:$0xff]
    %v112 = vld [vmem:[%s1 + $0x230] sm:$0xff]
    %v113 = vld [vmem:[%s1 + $0x238] sm:$0xff]
    %v114 = vld [vmem:[%s1 + $0x240] sm:$0xff]
    %v115 = vld [vmem:[%s1 + $0x248] sm:$0xff]
    %v116 = vld [vmem:[%s1 + $0x250] sm:$0xff]
    %v117 = vld [vmem:[%s1 + $0x258] sm:$0xff]
    %v118 = vld [vmem:[%s1 + $0x260] sm:$0xff]
    %v119 = vld [vmem:[%s1 + $0x268] sm:$0xff]
    %v120 = vld [vmem:[%s1 + $0x270] sm:$0xff]
    %v121 = vld [vmem:[%s1 + $0x278] sm:$0xff]
    %v122 = vld [vmem:[%s1 + $0x280] sm:$0xff]
    %v123 = vld [vmem:[%s1 + $0x288] sm:$0xff]
    %v124 = vld [vmem:[%s1 + $0x290] sm:$0xff]
    %v125 = vld [vmem:[%s1 + $0x298] sm:$0xff]
    %v126 = vld [vmem:[%s1 + $0x2a0] sm:$0xff]
    %v127 = vld [vmem:[%s1 + $0x2a8] sm:$0xff]
    %v128 = vld [vmem:[%s1 + $0x2b0] sm:$0xff]
    %v129 = vld [vmem:[%s1 + $0x2b8] sm:$0xff]
    %v130 = vld [vmem:[%s1 + $0x2c0] sm:$0xff]
    %v131 = vld [vmem:[%s1 + $0x2c8] sm:$0xff]
    %v132 = vld [vmem:[%s1 + $0x2d0] sm:$0xff]
    %v133 = vld [vmem:[%s1 + $0x2d8] sm:$0xff]
    %v134 = vld [vmem:[%s1 + $0x2e0] sm:$0xff]
    %v135 = vld [vmem:[%s1 + $0x2e8] sm:$0xff]
    %v136 = vld [vmem:[%s1 + $0x2f0] sm:$0xff]
    %v137 = vld [vmem:[%s1 + $0x2f8] sm:$0xff]
    %v138 = vld [vmem:[%s1 + $0x300] sm:$0xff]
    %v139 = vld [vmem:[%s1 + $0x308] sm:$0xff]
    %v140 = vld [vmem:[%s1 + $0x310] sm:$0xff]
    %v141 = vld [vmem:[%s1 + $0x318] sm:$0xff]
    %v142 = vld [vmem:[%s1 + $0x320] sm:$0xff]
    %v143 = vld [vmem:[%s1 + $0x328] sm:$0xff]
    %v144 = vld [vmem:[%s1 + $0x330] sm:$0xff]
    %v145 = vld [vmem:[%s1 + $0x338] sm:$0xff]
    %v146 = vld [vmem:[%s1 + $0x340] sm:$0xff]
    %v147 = vld [vmem:[%s1 + $0x348] sm:$0xff]
    %v148 = vld [vmem:[%s1 + $0x350] sm:$0xff]
    %v149 = vld [vmem:[%s1 + $0x358] sm:$0xff]
    %v150 = vld [vmem:[%s1 + $0x360] sm:$0xff]
    %v151 = vld [vmem:[%s1 + $0x368] sm:$0xff]
    %v152 = vld [vmem:[%s1 + $0x370] sm:$0xff]
    %v153 = vld [vmem:[%s1 + $0x378] sm:$0xff]
    %v154 = vld [vmem:[%s1 + $0x380] sm:$0xff]
    %v155 = vld [vmem:[%s1 + $0x388] sm:$0xff]
    %v156 = vld [vmem:[%s1 + $0x390] sm:$0xff]
    %v157 = vld [vmem:[%s1 + $0x398] sm:$0xff]
    %v158 = vld [vmem:[%s1 + $0x3a0] sm:$0xff]
    %v159 = vld [vmem:[%s1 + $0x3a8] sm:$0xff]
    %v160 = vld [vmem:[%s1 + $0x3b0] sm:$0xff]
    %v161 = vld [vmem:[%s1 + $0x3b8] sm:$0xff]
    %v162 = vld [vmem:[%s1 + $0x3c0] sm:$0xff]
    %v163 = vld [vmem:[%s1 + $0x3c8] sm:$0xff]
    %v164 = vld [vmem:[%s1 + $0x3d0] sm:$0xff]
    %v165 = vld [vmem:[%s1 + $0x3d8] sm:$0xff]
    %v166 = vld [vmem:[%s1 + $0x3e0] sm:$0xff]
    %v167 = vld [vmem:[%s1 + $0x3e8] sm:$0xff]
    %v168 = vld [vmem:[%s1 + $0x3f0] sm:$0xff]
    %v169 = vld [vmem:[%s1 + $0x3f8] sm:$0xff]
    %v170 = vld [vmem:[%s2] sm:$0xff]
    %v172 = vlaneseq
    %v173 = vshrl.u32 %v172, 7
    %v174 = vsub.s32 0, %v173
    %v175 = vrot.slane %v170, %v174
    %v176 = vlaneseq
    %v177 = vshrl.u32 %v176, 7
    %v178 = vsub.s32 1, %v177
    %v179 = vrot.slane %v170, %v178
    %v180 = vlaneseq
    %v181 = vshrl.u32 %v180, 7
    %v182 = vsub.s32 2, %v181
    %v183 = vrot.slane %v170, %v182
    %v184 = vlaneseq
    %v185 = vshrl.u32 %v184, 7
    %v186 = vsub.s32 3, %v185
    %v187 = vrot.slane %v170, %v186
    %v188 = vlaneseq
    %v189 = vshrl.u32 %v188, 7
    %v190 = vsub.s32 4, %v189
    %v191 = vrot.slane %v170, %v190
    %v192 = vlaneseq
    %v193 = vshrl.u32 %v192, 7
    %v194 = vsub.s32 5, %v193
    %v195 = vrot.slane %v170, %v194
    %v196 = vlaneseq
    %v197 = vshrl.u32 %v196, 7
    %v198 = vsub.s32 6, %v197
    %v199 = vrot.slane %v170, %v198
    %v200 = vlaneseq
    %v201 = vshrl.u32 %v200, 7
    %v202 = vsub.s32 7, %v201
    %v203 = vrot.slane %v170, %v202
    %v214 = vunpack.c.l.b16 %v40
    %v215 = vunpack.c.h.b16 %v40
    %v216 = vunpack.c.l.b16 %v41
    %v217 = vunpack.c.h.b16 %v41
    %v218 = vpack.c.b16 %v216, %v214
    %v219 = vpack.c.b16 %v217, %v215
    %v350 = vunpack.c.l.b16 %v42
    %v351 = vunpack.c.h.b16 %v42
    %v352 = vunpack.c.l.b16 %v43
    %v353 = vunpack.c.h.b16 %v43
    %v354 = vunpack.c.l.b16 %v44
    %v355 = vunpack.c.h.b16 %v44
    %v356 = vunpack.c.l.b16 %v45
    %v357 = vunpack.c.h.b16 %v45
    %v358 = vunpack.c.l.b16 %v46
    %v359 = vunpack.c.h.b16 %v46
    %v360 = vunpack.c.l.b16 %v47
    %v361 = vunpack.c.h.b16 %v47
    %v362 = vunpack.c.l.b16 %v48
    %v363 = vunpack.c.h.b16 %v48
    %v364 = vunpack.c.l.b16 %v49
    %v365 = vunpack.c.h.b16 %v49
    %v366 = vunpack.c.l.b16 %v50
    %v367 = vunpack.c.h.b16 %v50
    %v368 = vunpack.c.l.b16 %v51
    %v369 = vunpack.c.h.b16 %v51
    %v370 = vunpack.c.l.b16 %v52
    %v371 = vunpack.c.h.b16 %v52
    %v372 = vunpack.c.l.b16 %v53
    %v373 = vunpack.c.h.b16 %v53
    %v374 = vunpack.c.l.b16 %v54
    %v375 = vunpack.c.h.b16 %v54
    %v376 = vunpack.c.l.b16 %v55
    %v377 = vunpack.c.h.b16 %v55
    %v378 = vunpack.c.l.b16 %v56
    %v379 = vunpack.c.h.b16 %v56
    %v380 = vunpack.c.l.b16 %v57
    %v381 = vunpack.c.h.b16 %v57
    %v382 = vunpack.c.l.b16 %v58
    %v383 = vunpack.c.h.b16 %v58
    %v384 = vunpack.c.l.b16 %v59
    %v385 = vunpack.c.h.b16 %v59
    %v386 = vunpack.c.l.b16 %v60
    %v387 = vunpack.c.h.b16 %v60
    %v388 = vunpack.c.l.b16 %v61
    %v389 = vunpack.c.h.b16 %v61
    %v390 = vunpack.c.l.b16 %v62
    %v391 = vunpack.c.h.b16 %v62
    %v392 = vunpack.c.l.b16 %v63
    %v393 = vunpack.c.h.b16 %v63
    %v394 = vunpack.c.l.b16 %v64
    %v395 = vunpack.c.h.b16 %v64
    %v396 = vunpack.c.l.b16 %v65
    %v397 = vunpack.c.h.b16 %v65
    %v398 = vunpack.c.l.b16 %v66
    %v399 = vunpack.c.h.b16 %v66
    %v400 = vunpack.c.l.b16 %v67
    %v401 = vunpack.c.h.b16 %v67
    %v402 = vunpack.c.l.b16 %v68
    %v403 = vunpack.c.h.b16 %v68
    %v404 = vunpack.c.l.b16 %v69
    %v405 = vunpack.c.h.b16 %v69
    %v406 = vunpack.c.l.b16 %v70
    %v407 = vunpack.c.h.b16 %v70
    %v408 = vunpack.c.l.b16 %v71
    %v409 = vunpack.c.h.b16 %v71
    %v410 = vunpack.c.l.b16 %v72
    %v411 = vunpack.c.h.b16 %v72
    %v412 = vunpack.c.l.b16 %v73
    %v413 = vunpack.c.h.b16 %v73
    %v414 = vunpack.c.l.b16 %v74
    %v415 = vunpack.c.h.b16 %v74
    %v416 = vunpack.c.l.b16 %v75
    %v417 = vunpack.c.h.b16 %v75
    %v418 = vunpack.c.l.b16 %v76
    %v419 = vunpack.c.h.b16 %v76
    %v420 = vunpack.c.l.b16 %v77
    %v421 = vunpack.c.h.b16 %v77
    %v422 = vunpack.c.l.b16 %v78
    %v423 = vunpack.c.h.b16 %v78
    %v424 = vunpack.c.l.b16 %v79
    %v425 = vunpack.c.h.b16 %v79
    %v426 = vunpack.c.l.b16 %v80
    %v427 = vunpack.c.h.b16 %v80
    %v428 = vunpack.c.l.b16 %v81
    %v429 = vunpack.c.h.b16 %v81
    %v430 = vunpack.c.l.b16 %v82
    %v431 = vunpack.c.h.b16 %v82
    %v432 = vunpack.c.l.b16 %v83
    %v433 = vunpack.c.h.b16 %v83
    %v434 = vunpack.c.l.b16 %v84
    %v435 = vunpack.c.h.b16 %v84
    %v436 = vunpack.c.l.b16 %v85
    %v437 = vunpack.c.h.b16 %v85
    %v438 = vunpack.c.l.b16 %v86
    %v439 = vunpack.c.h.b16 %v86
    %v440 = vunpack.c.l.b16 %v87
    %v441 = vunpack.c.h.b16 %v87
    %v442 = vunpack.c.l.b16 %v88
    %v443 = vunpack.c.h.b16 %v88
    %v444 = vunpack.c.l.b16 %v89
    %v445 = vunpack.c.h.b16 %v89
    %v446 = vunpack.c.l.b16 %v90
    %v447 = vunpack.c.h.b16 %v90
    %v448 = vunpack.c.l.b16 %v91
    %v449 = vunpack.c.h.b16 %v91
    %v450 = vunpack.c.l.b16 %v92
    %v451 = vunpack.c.h.b16 %v92
    %v452 = vunpack.c.l.b16 %v93
    %v453 = vunpack.c.h.b16 %v93
    %v454 = vunpack.c.l.b16 %v94
    %v455 = vunpack.c.h.b16 %v94
    %v456 = vunpack.c.l.b16 %v95
    %v457 = vunpack.c.h.b16 %v95
    %v458 = vunpack.c.l.b16 %v96
    %v459 = vunpack.c.h.b16 %v96
    %v460 = vunpack.c.l.b16 %v97
    %v461 = vunpack.c.h.b16 %v97
    %v462 = vunpack.c.l.b16 %v98
    %v463 = vunpack.c.h.b16 %v98
    %v464 = vunpack.c.l.b16 %v99
    %v465 = vunpack.c.h.b16 %v99
    %v466 = vunpack.c.l.b16 %v100
    %v467 = vunpack.c.h.b16 %v100
    %v468 = vunpack.c.l.b16 %v101
    %v469 = vunpack.c.h.b16 %v101
    %v470 = vunpack.c.l.b16 %v102
    %v471 = vunpack.c.h.b16 %v102
    %v472 = vunpack.c.l.b16 %v103
    %v473 = vunpack.c.h.b16 %v103
    %v474 = vunpack.c.l.b16 %v104
    %v475 = vunpack.c.h.b16 %v104
    %v476 = vunpack.c.l.b16 %v105
    %v477 = vunpack.c.h.b16 %v105
    %v478 = vunpack.c.l.b16 %v106
    %v479 = vunpack.c.h.b16 %v106
    %v480 = vunpack.c.l.b16 %v107
    %v481 = vunpack.c.h.b16 %v107
    %v482 = vunpack.c.l.b16 %v108
    %v483 = vunpack.c.h.b16 %v108
    %v484 = vunpack.c.l.b16 %v109
    %v485 = vunpack.c.h.b16 %v109
    %v486 = vunpack.c.l.b16 %v110
    %v487 = vunpack.c.h.b16 %v110
    %v488 = vunpack.c.l.b16 %v111
    %v489 = vunpack.c.h.b16 %v111
    %v490 = vunpack.c.l.b16 %v112
    %v491 = vunpack.c.h.b16 %v112
    %v492 = vunpack.c.l.b16 %v113
    %v493 = vunpack.c.h.b16 %v113
    %v494 = vunpack.c.l.b16 %v114
    %v495 = vunpack.c.h.b16 %v114
    %v496 = vunpack.c.l.b16 %v115
    %v497 = vunpack.c.h.b16 %v115
    %v498 = vunpack.c.l.b16 %v116
    %v499 = vunpack.c.h.b16 %v116
    %v500 = vunpack.c.l.b16 %v117
    %v501 = vunpack.c.h.b16 %v117
    %v502 = vunpack.c.l.b16 %v118
    %v503 = vunpack.c.h.b16 %v118
    %v504 = vunpack.c.l.b16 %v119
    %v505 = vunpack.c.h.b16 %v119
    %v506 = vunpack.c.l.b16 %v120
    %v507 = vunpack.c.h.b16 %v120
    %v508 = vunpack.c.l.b16 %v121
    %v509 = vunpack.c.h.b16 %v121
    %v510 = vunpack.c.l.b16 %v122
    %v511 = vunpack.c.h.b16 %v122
    %v512 = vunpack.c.l.b16 %v123
    %v513 = vunpack.c.h.b16 %v123
    %v514 = vunpack.c.l.b16 %v124
    %v515 = vunpack.c.h.b16 %v124
    %v516 = vunpack.c.l.b16 %v125
    %v517 = vunpack.c.h.b16 %v125
    %v518 = vunpack.c.l.b16 %v126
    %v519 = vunpack.c.h.b16 %v126
    %v520 = vunpack.c.l.b16 %v127
    %v521 = vunpack.c.h.b16 %v127
    %v522 = vunpack.c.l.b16 %v128
    %v523 = vunpack.c.h.b16 %v128
    %v524 = vunpack.c.l.b16 %v129
    %v525 = vunpack.c.h.b16 %v129
    %v526 = vunpack.c.l.b16 %v130
    %v527 = vunpack.c.h.b16 %v130
    %v528 = vunpack.c.l.b16 %v131
    %v529 = vunpack.c.h.b16 %v131
    %v530 = vunpack.c.l.b16 %v132
    %v531 = vunpack.c.h.b16 %v132
    %v532 = vunpack.c.l.b16 %v133
    %v533 = vunpack.c.h.b16 %v133
    %v534 = vunpack.c.l.b16 %v134
    %v535 = vunpack.c.h.b16 %v134
    %v536 = vunpack.c.l.b16 %v135
    %v537 = vunpack.c.h.b16 %v135
    %v538 = vunpack.c.l.b16 %v136
    %v539 = vunpack.c.h.b16 %v136
    %v540 = vunpack.c.l.b16 %v137
    %v541 = vunpack.c.h.b16 %v137
    %v542 = vunpack.c.l.b16 %v138
    %v543 = vunpack.c.h.b16 %v138
    %v544 = vunpack.c.l.b16 %v139
    %v545 = vunpack.c.h.b16 %v139
    %v546 = vunpack.c.l.b16 %v140
    %v547 = vunpack.c.h.b16 %v140
    %v548 = vunpack.c.l.b16 %v141
    %v549 = vunpack.c.h.b16 %v141
    %v550 = vunpack.c.l.b16 %v142
    %v551 = vunpack.c.h.b16 %v142
    %v552 = vunpack.c.l.b16 %v143
    %v553 = vunpack.c.h.b16 %v143
    %v554 = vunpack.c.l.b16 %v144
    %v555 = vunpack.c.h.b16 %v144
    %v556 = vunpack.c.l.b16 %v145
    %v557 = vunpack.c.h.b16 %v145
    %v558 = vunpack.c.l.b16 %v146
    %v559 = vunpack.c.h.b16 %v146
    %v560 = vunpack.c.l.b16 %v147
    %v561 = vunpack.c.h.b16 %v147
    %v562 = vunpack.c.l.b16 %v148
    %v563 = vunpack.c.h.b16 %v148
    %v564 = vunpack.c.l.b16 %v149
    %v565 = vunpack.c.h.b16 %v149
    %v566 = vunpack.c.l.b16 %v150
    %v567 = vunpack.c.h.b16 %v150
    %v568 = vunpack.c.l.b16 %v151
    %v569 = vunpack.c.h.b16 %v151
    %v570 = vunpack.c.l.b16 %v152
    %v571 = vunpack.c.h.b16 %v152
    %v572 = vunpack.c.l.b16 %v153
    %v573 = vunpack.c.h.b16 %v153
    %v574 = vunpack.c.l.b16 %v154
    %v575 = vunpack.c.h.b16 %v154
    %v576 = vunpack.c.l.b16 %v155
    %v577 = vunpack.c.h.b16 %v155
    %v578 = vunpack.c.l.b16 %v156
    %v579 = vunpack.c.h.b16 %v156
    %v580 = vunpack.c.l.b16 %v157
    %v581 = vunpack.c.h.b16 %v157
    %v582 = vunpack.c.l.b16 %v158
    %v583 = vunpack.c.h.b16 %v158
    %v584 = vunpack.c.l.b16 %v159
    %v585 = vunpack.c.h.b16 %v159
    %v586 = vunpack.c.l.b16 %v160
    %v587 = vunpack.c.h.b16 %v160
    %v588 = vunpack.c.l.b16 %v161
    %v589 = vunpack.c.h.b16 %v161
    %v590 = vunpack.c.l.b16 %v162
    %v591 = vunpack.c.h.b16 %v162
    %v592 = vunpack.c.l.b16 %v163
    %v593 = vunpack.c.h.b16 %v163
    %v594 = vunpack.c.l.b16 %v164
    %v595 = vunpack.c.h.b16 %v164
    %v596 = vunpack.c.l.b16 %v165
    %v597 = vunpack.c.h.b16 %v165
    %v598 = vunpack.c.l.b16 %v166
    %v599 = vunpack.c.h.b16 %v166
    %v600 = vunpack.c.l.b16 %v167
    %v601 = vunpack.c.h.b16 %v167
    %v602 = vunpack.c.l.b16 %v168
    %v603 = vunpack.c.h.b16 %v168
    %v604 = vunpack.c.l.b16 %v169
    %v605 = vunpack.c.h.b16 %v169
    %v606 = vpack.c.b16 %v358, %v350
    %v607 = vpack.c.b16 %v359, %v351
    %v608 = vpack.c.b16 %v360, %v352
    %v609 = vpack.c.b16 %v361, %v353
    %v610 = vpack.c.b16 %v362, %v354
    %v611 = vpack.c.b16 %v363, %v355
    %v612 = vpack.c.b16 %v364, %v356
    %v613 = vpack.c.b16 %v365, %v357
    %v614 = vpack.c.b16 %v374, %v366
    %v615 = vpack.c.b16 %v375, %v367
    %v616 = vpack.c.b16 %v376, %v368
    %v617 = vpack.c.b16 %v377, %v369
    %v618 = vpack.c.b16 %v378, %v370
    %v619 = vpack.c.b16 %v379, %v371
    %v620 = vpack.c.b16 %v380, %v372
    %v621 = vpack.c.b16 %v381, %v373
    %v622 = vpack.c.b16 %v390, %v382
    %v623 = vpack.c.b16 %v391, %v383
    %v624 = vpack.c.b16 %v392, %v384
    %v625 = vpack.c.b16 %v393, %v385
    %v626 = vpack.c.b16 %v394, %v386
    %v627 = vpack.c.b16 %v395, %v387
    %v628 = vpack.c.b16 %v396, %v388
    %v629 = vpack.c.b16 %v397, %v389
    %v630 = vpack.c.b16 %v406, %v398
    %v631 = vpack.c.b16 %v407, %v399
    %v632 = vpack.c.b16 %v408, %v400
    %v633 = vpack.c.b16 %v409, %v401
    %v634 = vpack.c.b16 %v410, %v402
    %v635 = vpack.c.b16 %v411, %v403
    %v636 = vpack.c.b16 %v412, %v404
    %v637 = vpack.c.b16 %v413, %v405
    %v638 = vpack.c.b16 %v422, %v414
    %v639 = vpack.c.b16 %v423, %v415
    %v640 = vpack.c.b16 %v424, %v416
    %v641 = vpack.c.b16 %v425, %v417
    %v642 = vpack.c.b16 %v426, %v418
    %v643 = vpack.c.b16 %v427, %v419
    %v644 = vpack.c.b16 %v428, %v420
    %v645 = vpack.c.b16 %v429, %v421
    %v646 = vpack.c.b16 %v438, %v430
    %v647 = vpack.c.b16 %v439, %v431
    %v648 = vpack.c.b16 %v440, %v432
    %v649 = vpack.c.b16 %v441, %v433
    %v650 = vpack.c.b16 %v442, %v434
    %v651 = vpack.c.b16 %v443, %v435
    %v652 = vpack.c.b16 %v444, %v436
    %v653 = vpack.c.b16 %v445, %v437
    %v654 = vpack.c.b16 %v454, %v446
    %v655 = vpack.c.b16 %v455, %v447
    %v656 = vpack.c.b16 %v456, %v448
    %v657 = vpack.c.b16 %v457, %v449
    %v658 = vpack.c.b16 %v458, %v450
    %v659 = vpack.c.b16 %v459, %v451
    %v660 = vpack.c.b16 %v460, %v452
    %v661 = vpack.c.b16 %v461, %v453
    %v662 = vpack.c.b16 %v470, %v462
    %v663 = vpack.c.b16 %v471, %v463
    %v664 = vpack.c.b16 %v472, %v464
    %v665 = vpack.c.b16 %v473, %v465
    %v666 = vpack.c.b16 %v474, %v466
    %v667 = vpack.c.b16 %v475, %v467
    %v668 = vpack.c.b16 %v476, %v468
    %v669 = vpack.c.b16 %v477, %v469
    %v670 = vpack.c.b16 %v486, %v478
    %v671 = vpack.c.b16 %v487, %v479
    %v672 = vpack.c.b16 %v488, %v480
    %v673 = vpack.c.b16 %v489, %v481
    %v674 = vpack.c.b16 %v490, %v482
    %v675 = vpack.c.b16 %v491, %v483
    %v676 = vpack.c.b16 %v492, %v484
    %v677 = vpack.c.b16 %v493, %v485
    %v678 = vpack.c.b16 %v502, %v494
    %v679 = vpack.c.b16 %v503, %v495
    %v680 = vpack.c.b16 %v504, %v496
    %v681 = vpack.c.b16 %v505, %v497
    %v682 = vpack.c.b16 %v506, %v498
    %v683 = vpack.c.b16 %v507, %v499
    %v684 = vpack.c.b16 %v508, %v500
    %v685 = vpack.c.b16 %v509, %v501
    %v686 = vpack.c.b16 %v518, %v510
    %v687 = vpack.c.b16 %v519, %v511
    %v688 = vpack.c.b16 %v520, %v512
    %v689 = vpack.c.b16 %v521, %v513
    %v690 = vpack.c.b16 %v522, %v514
    %v691 = vpack.c.b16 %v523, %v515
    %v692 = vpack.c.b16 %v524, %v516
    %v693 = vpack.c.b16 %v525, %v517
    %v694 = vpack.c.b16 %v534, %v526
    %v695 = vpack.c.b16 %v535, %v527
    %v696 = vpack.c.b16 %v536, %v528
    %v697 = vpack.c.b16 %v537, %v529
    %v698 = vpack.c.b16 %v538, %v530
    %v699 = vpack.c.b16 %v539, %v531
    %v700 = vpack.c.b16 %v540, %v532
    %v701 = vpack.c.b16 %v541, %v533
    %v702 = vpack.c.b16 %v550, %v542
    %v703 = vpack.c.b16 %v551, %v543
    %v704 = vpack.c.b16 %v552, %v544
    %v705 = vpack.c.b16 %v553, %v545
    %v706 = vpack.c.b16 %v554, %v546
    %v707 = vpack.c.b16 %v555, %v547
    %v708 = vpack.c.b16 %v556, %v548
    %v709 = vpack.c.b16 %v557, %v549
    %v710 = vpack.c.b16 %v566, %v558
    %v711 = vpack.c.b16 %v567, %v559
    %v712 = vpack.c.b16 %v568, %v560
    %v713 = vpack.c.b16 %v569, %v561
    %v714 = vpack.c.b16 %v570, %v562
    %v715 = vpack.c.b16 %v571, %v563
    %v716 = vpack.c.b16 %v572, %v564
    %v717 = vpack.c.b16 %v573, %v565
    %v718 = vpack.c.b16 %v582, %v574
    %v719 = vpack.c.b16 %v583, %v575
    %v720 = vpack.c.b16 %v584, %v576
    %v721 = vpack.c.b16 %v585, %v577
    %v722 = vpack.c.b16 %v586, %v578
    %v723 = vpack.c.b16 %v587, %v579
    %v724 = vpack.c.b16 %v588, %v580
    %v725 = vpack.c.b16 %v589, %v581
    %v726 = vpack.c.b16 %v598, %v590
    %v727 = vpack.c.b16 %v599, %v591
    %v728 = vpack.c.b16 %v600, %v592
    %v729 = vpack.c.b16 %v601, %v593
    %v730 = vpack.c.b16 %v602, %v594
    %v731 = vpack.c.b16 %v603, %v595
    %v732 = vpack.c.b16 %v604, %v596
    %v733 = vpack.c.b16 %v605, %v597
    %862 = vmatprep.subr.bf16.mxu0 %v663
    %863 = vmatpush1.bf16.msra.mxu0 %v662
    %864 = vmatprep.subr.bf16.mxu0 %v655
    %865 = vmatpush1.bf16.msra.mxu0 %v654
    %866 = vmatprep.subr.bf16.mxu0 %v647
    %867 = vmatpush1.bf16.msra.mxu0 %v646
    %868 = vmatprep.subr.bf16.mxu0 %v639
    %869 = vmatpush1.bf16.msra.mxu0 %v638
    %870 = vmatprep.subr.bf16.mxu0 %v631
    %871 = vmatpush1.bf16.msra.mxu0 %v630
    %872 = vmatprep.subr.bf16.mxu0 %v623
    %873 = vmatpush1.bf16.msra.mxu0 %v622
    %874 = vmatprep.subr.bf16.mxu0 %v615
    %875 = vmatpush1.bf16.msra.mxu0 %v614
    %876 = vmatprep.subr.bf16.mxu0 %v607
    %877 = vmatpush1.bf16.msra.mxu0 %v606
    %878 = vmatprep.subr.bf16.mxu0 %v727
    %879 = vmatpush2.bf16.msra.mxu0 %v726
    %880 = vmatprep.subr.bf16.mxu0 %v719
    %881 = vmatpush2.bf16.msra.mxu0 %v718
    %882 = vmatprep.subr.bf16.mxu0 %v711
    %883 = vmatpush2.bf16.msra.mxu0 %v710
    %884 = vmatprep.subr.bf16.mxu0 %v703
    %885 = vmatpush2.bf16.msra.mxu0 %v702
    %886 = vmatprep.subr.bf16.mxu0 %v695
    %887 = vmatpush2.bf16.msra.mxu0 %v694
    %888 = vmatprep.subr.bf16.mxu0 %v687
    %889 = vmatpush2.bf16.msra.mxu0 %v686
    %890 = vmatprep.subr.bf16.mxu0 %v679
    %891 = vmatpush2.bf16.msra.mxu0 %v678
    %892 = vmatprep.subr.bf16.mxu0 %v671
    %893 = vmatpush2.bf16.msra.mxu0 %v670
    %894 = vmatprep.mubr.bf16.mxu0 %v219
    %895 = vmatmul.mubr.bf16.gmra.mxu0 %v218
    %v896 = vpop.f32.mrf.mxu0
    %v897 = vadd.f32 %v175, %v896
    %v898 = vpop.f32.mrf.mxu0
    %v899 = vadd.f32 %v179, %v898
    %v900 = vpop.f32.mrf.mxu0
    %v901 = vadd.f32 %v175, %v900
    %v902 = vpop.f32.mrf.mxu0
    %v903 = vadd.f32 %v179, %v902
    %904 = vdwg.mxu0
    %905 = vmatprep.subr.bf16.mxu0 %v665
    %906 = vmatpush1.bf16.msra.mxu0 %v664
    %907 = vmatprep.subr.bf16.mxu0 %v657
    %908 = vmatpush1.bf16.msra.mxu0 %v656
    %909 = vmatprep.subr.bf16.mxu0 %v649
    %910 = vmatpush1.bf16.msra.mxu0 %v648
    %911 = vmatprep.subr.bf16.mxu0 %v641
    %912 = vmatpush1.bf16.msra.mxu0 %v640
    %913 = vmatprep.subr.bf16.mxu0 %v633
    %914 = vmatpush1.bf16.msra.mxu0 %v632
    %915 = vmatprep.subr.bf16.mxu0 %v625
    %916 = vmatpush1.bf16.msra.mxu0 %v624
    %917 = vmatprep.subr.bf16.mxu0 %v617
    %918 = vmatpush1.bf16.msra.mxu0 %v616
    %919 = vmatprep.subr.bf16.mxu0 %v609
    %920 = vmatpush1.bf16.msra.mxu0 %v608
    %921 = vmatprep.subr.bf16.mxu0 %v729
    %922 = vmatpush2.bf16.msra.mxu0 %v728
    %923 = vmatprep.subr.bf16.mxu0 %v721
    %924 = vmatpush2.bf16.msra.mxu0 %v720
    %925 = vmatprep.subr.bf16.mxu0 %v713
    %926 = vmatpush2.bf16.msra.mxu0 %v712
    %927 = vmatprep.subr.bf16.mxu0 %v705
    %928 = vmatpush2.bf16.msra.mxu0 %v704
    %929 = vmatprep.subr.bf16.mxu0 %v697
    %930 = vmatpush2.bf16.msra.mxu0 %v696
    %931 = vmatprep.subr.bf16.mxu0 %v689
    %932 = vmatpush2.bf16.msra.mxu0 %v688
    %933 = vmatprep.subr.bf16.mxu0 %v681
    %934 = vmatpush2.bf16.msra.mxu0 %v680
    %935 = vmatprep.subr.bf16.mxu0 %v673
    %936 = vmatpush2.bf16.msra.mxu0 %v672
    %937 = vmatprep.mubr.bf16.mxu0 %v219
    %938 = vmatmul.mubr.bf16.gmra.mxu0 %v218
    %v939 = vpop.f32.mrf.mxu0
    %v940 = vadd.f32 %v183, %v939
    %v941 = vpop.f32.mrf.mxu0
    %v942 = vadd.f32 %v187, %v941
    %v943 = vpop.f32.mrf.mxu0
    %v944 = vadd.f32 %v183, %v943
    %v945 = vpop.f32.mrf.mxu0
    %v946 = vadd.f32 %v187, %v945
    %947 = vdwg.mxu0
    %948 = vmatprep.subr.bf16.mxu0 %v667
    %949 = vmatpush1.bf16.msra.mxu0 %v666
    %950 = vmatprep.subr.bf16.mxu0 %v659
    %951 = vmatpush1.bf16.msra.mxu0 %v658
    %952 = vmatprep.subr.bf16.mxu0 %v651
    %953 = vmatpush1.bf16.msra.mxu0 %v650
    %954 = vmatprep.subr.bf16.mxu0 %v643
    %955 = vmatpush1.bf16.msra.mxu0 %v642
    %956 = vmatprep.subr.bf16.mxu0 %v635
    %957 = vmatpush1.bf16.msra.mxu0 %v634
    %958 = vmatprep.subr.bf16.mxu0 %v627
    %959 = vmatpush1.bf16.msra.mxu0 %v626
    %960 = vmatprep.subr.bf16.mxu0 %v619
    %961 = vmatpush1.bf16.msra.mxu0 %v618
    %962 = vmatprep.subr.bf16.mxu0 %v611
    %963 = vmatpush1.bf16.msra.mxu0 %v610
    %964 = vmatprep.subr.bf16.mxu0 %v731
    %965 = vmatpush2.bf16.msra.mxu0 %v730
    %966 = vmatprep.subr.bf16.mxu0 %v723
    %967 = vmatpush2.bf16.msra.mxu0 %v722
    %968 = vmatprep.subr.bf16.mxu0 %v715
    %969 = vmatpush2.bf16.msra.mxu0 %v714
    %970 = vmatprep.subr.bf16.mxu0 %v707
    %971 = vmatpush2.bf16.msra.mxu0 %v706
    %972 = vmatprep.subr.bf16.mxu0 %v699
    %973 = vmatpush2.bf16.msra.mxu0 %v698
    %974 = vmatprep.subr.bf16.mxu0 %v691
    %975 = vmatpush2.bf16.msra.mxu0 %v690
    %976 = vmatprep.subr.bf16.mxu0 %v683
    %977 = vmatpush2.bf16.msra.mxu0 %v682
    %978 = vmatprep.subr.bf16.mxu0 %v675
    %979 = vmatpush2.bf16.msra.mxu0 %v674
    %980 = vmatprep.mubr.bf16.mxu0 %v219
    %981 = vmatmul.mubr.bf16.gmra.mxu0 %v218
    %v982 = vpop.f32.mrf.mxu0
    %v983 = vadd.f32 %v191, %v982
    %v984 = vpop.f32.mrf.mxu0
    %v985 = vadd.f32 %v195, %v984
    %v986 = vpop.f32.mrf.mxu0
    %v987 = vadd.f32 %v191, %v986
    %v988 = vpop.f32.mrf.mxu0
    %v989 = vadd.f32 %v195, %v988
    %990 = vdwg.mxu0
    %991 = vmatprep.subr.bf16.mxu0 %v669
    %992 = vmatpush1.bf16.msra.mxu0 %v668
    %993 = vmatprep.subr.bf16.mxu0 %v661
    %994 = vmatpush1.bf16.msra.mxu0 %v660
    %995 = vmatprep.subr.bf16.mxu0 %v653
    %996 = vmatpush1.bf16.msra.mxu0 %v652
    %997 = vmatprep.subr.bf16.mxu0 %v645
    %998 = vmatpush1.bf16.msra.mxu0 %v644
    %999 = vmatprep.subr.bf16.mxu0 %v637
    %1000 = vmatpush1.bf16.msra.mxu0 %v636
    %1001 = vmatprep.subr.bf16.mxu0 %v629
    %1002 = vmatpush1.bf16.msra.mxu0 %v628
    %1003 = vmatprep.subr.bf16.mxu0 %v621
    %1004 = vmatpush1.bf16.msra.mxu0 %v620
    %1005 = vmatprep.subr.bf16.mxu0 %v613
    %1006 = vmatpush1.bf16.msra.mxu0 %v612
    %1007 = vmatprep.subr.bf16.mxu0 %v733
    %1008 = vmatpush2.bf16.msra.mxu0 %v732
    %1009 = vmatprep.subr.bf16.mxu0 %v725
    %1010 = vmatpush2.bf16.msra.mxu0 %v724
    %1011 = vmatprep.subr.bf16.mxu0 %v717
    %1012 = vmatpush2.bf16.msra.mxu0 %v716
    %1013 = vmatprep.subr.bf16.mxu0 %v709
    %1014 = vmatpush2.bf16.msra.mxu0 %v708
    %1015 = vmatprep.subr.bf16.mxu0 %v701
    %1016 = vmatpush2.bf16.msra.mxu0 %v700
    %1017 = vmatprep.subr.bf16.mxu0 %v693
    %1018 = vmatpush2.bf16.msra.mxu0 %v692
    %1019 = vmatprep.subr.bf16.mxu0 %v685
    %1020 = vmatpush2.bf16.msra.mxu0 %v684
    %1021 = vmatprep.subr.bf16.mxu0 %v677
    %1022 = vmatpush2.bf16.msra.mxu0 %v676
    %1023 = vmatprep.mubr.bf16.mxu0 %v219
    %1024 = vmatmul.mubr.bf16.gmra.mxu0 %v218
    %v1025 = vpop.f32.mrf.mxu0
    %v1026 = vadd.f32 %v199, %v1025
    %v1027 = vpop.f32.mrf.mxu0
    %v1028 = vadd.f32 %v203, %v1027
    %v1029 = vpop.f32.mrf.mxu0
    %v1030 = vadd.f32 %v199, %v1029
    %v1031 = vpop.f32.mrf.mxu0
    %v1032 = vadd.f32 %v203, %v1031
    %1033 = vdwg.mxu0
    %v1034 = vmul.f32 %v897, 0.5
    %v1035 = vmul.f32 %v899, 0.5
    %v1036 = vmul.f32 %v940, 0.5
    %v1037 = vmul.f32 %v942, 0.5
    %v1038 = vmul.f32 %v983, 0.5
    %v1039 = vmul.f32 %v985, 0.5
    %v1040 = vmul.f32 %v1026, 0.5
    %v1041 = vmul.f32 %v1028, 0.5
    %v1042 = vmul.f32 %v901, 0.5
    %v1043 = vmul.f32 %v903, 0.5
    %v1044 = vmul.f32 %v944, 0.5
    %v1045 = vmul.f32 %v946, 0.5
    %v1046 = vmul.f32 %v987, 0.5
    %v1047 = vmul.f32 %v989, 0.5
    %v1048 = vmul.f32 %v1030, 0.5
    %v1049 = vmul.f32 %v1032, 0.5
    %v1050 = vmul.f32 %v897, 0.044715
    %v1051 = vmul.f32 %v899, 0.044715
    %v1052 = vmul.f32 %v940, 0.044715
    %v1053 = vmul.f32 %v942, 0.044715
    %v1054 = vmul.f32 %v983, 0.044715
    %v1055 = vmul.f32 %v985, 0.044715
    %v1056 = vmul.f32 %v1026, 0.044715
    %v1057 = vmul.f32 %v1028, 0.044715
    %v1058 = vmul.f32 %v901, 0.044715
    %v1059 = vmul.f32 %v903, 0.044715
    %v1060 = vmul.f32 %v944, 0.044715
    %v1061 = vmul.f32 %v946, 0.044715
    %v1062 = vmul.f32 %v987, 0.044715
    %v1063 = vmul.f32 %v989, 0.044715
    %v1064 = vmul.f32 %v1030, 0.044715
    %v1065 = vmul.f32 %v1032, 0.044715
    %v1066 = vmul.f32 %v1050, %v897
    %v1067 = vmul.f32 %v1051, %v899
    %v1068 = vmul.f32 %v1052, %v940
    %v1069 = vmul.f32 %v1053, %v942
    %v1070 = vmul.f32 %v1054, %v983
    %v1071 = vmul.f32 %v1055, %v985
    %v1072 = vmul.f32 %v1056, %v1026
    %v1073 = vmul.f32 %v1057, %v1028
    %v1074 = vmul.f32 %v1058, %v901
    %v1075 = vmul.f32 %v1059, %v903
    %v1076 = vmul.f32 %v1060, %v944
    %v1077 = vmul.f32 %v1061, %v946
    %v1078 = vmul.f32 %v1062, %v987
    %v1079 = vmul.f32 %v1063, %v989
    %v1080 = vmul.f32 %v1064, %v1030
    %v1081 = vmul.f32 %v1065, %v1032
    %v1082 = vmul.f32 %v1066, %v897
    %v1083 = vmul.f32 %v1067, %v899
    %v1084 = vmul.f32 %v1068, %v940
    %v1085 = vmul.f32 %v1069, %v942
    %v1086 = vmul.f32 %v1070, %v983
    %v1087 = vmul.f32 %v1071, %v985
    %v1088 = vmul.f32 %v1072, %v1026
    %v1089 = vmul.f32 %v1073, %v1028
    %v1090 = vmul.f32 %v1074, %v901
    %v1091 = vmul.f32 %v1075, %v903
    %v1092 = vmul.f32 %v1076, %v944
    %v1093 = vmul.f32 %v1077, %v946
    %v1094 = vmul.f32 %v1078, %v987
    %v1095 = vmul.f32 %v1079, %v989
    %v1096 = vmul.f32 %v1080, %v1030
    %v1097 = vmul.f32 %v1081, %v1032
    %v1098 = vadd.f32 %v897, %v1082
    %v1099 = vadd.f32 %v899, %v1083
    %v1100 = vadd.f32 %v940, %v1084
    %v1101 = vadd.f32 %v942, %v1085
    %v1102 = vadd.f32 %v983, %v1086
    %v1103 = vadd.f32 %v985, %v1087
    %v1104 = vadd.f32 %v1026, %v1088
    %v1105 = vadd.f32 %v1028, %v1089
    %v1106 = vadd.f32 %v901, %v1090
    %v1107 = vadd.f32 %v903, %v1091
    %v1108 = vadd.f32 %v944, %v1092
    %v1109 = vadd.f32 %v946, %v1093
    %v1110 = vadd.f32 %v987, %v1094
    %v1111 = vadd.f32 %v989, %v1095
    %v1112 = vadd.f32 %v1030, %v1096
    %v1113 = vadd.f32 %v1032, %v1097
    %v1114 = vmul.f32 %v1098, 0.7978846
    %v1115 = vmul.f32 %v1099, 0.7978846
    %v1116 = vmul.f32 %v1100, 0.7978846
    %v1117 = vmul.f32 %v1101, 0.7978846
    %v1118 = vmul.f32 %v1102, 0.7978846
    %v1119 = vmul.f32 %v1103, 0.7978846
    %v1120 = vmul.f32 %v1104, 0.7978846
    %v1121 = vmul.f32 %v1105, 0.7978846
    %v1122 = vmul.f32 %v1106, 0.7978846
    %v1123 = vmul.f32 %v1107, 0.7978846
    %v1124 = vmul.f32 %v1108, 0.7978846
    %v1125 = vmul.f32 %v1109, 0.7978846
    %v1126 = vmul.f32 %v1110, 0.7978846
    %v1127 = vmul.f32 %v1111, 0.7978846
    %v1128 = vmul.f32 %v1112, 0.7978846
    %v1129 = vmul.f32 %v1113, 0.7978846
    %v1130 = vtanh.pop %v1114
    %v1131 = vtanh.pop %v1115
    %v1132 = vtanh.pop %v1116
    %v1133 = vtanh.pop %v1117
    %v1134 = vtanh.pop %v1118
    %v1135 = vtanh.pop %v1119
    %v1136 = vtanh.pop %v1120
    %v1137 = vtanh.pop %v1121
    %v1138 = vtanh.pop %v1122
    %v1139 = vtanh.pop %v1123
    %v1140 = vtanh.pop %v1124
    %v1141 = vtanh.pop %v1125
    %v1142 = vtanh.pop %v1126
    %v1143 = vtanh.pop %v1127
    %v1144 = vtanh.pop %v1128
    %v1145 = vtanh.pop %v1129
    %v1146 = vadd.f32 %v1130, 1.0
    %v1147 = vadd.f32 %v1131, 1.0
    %v1148 = vadd.f32 %v1132, 1.0
    %v1149 = vadd.f32 %v1133, 1.0
    %v1150 = vadd.f32 %v1134, 1.0
    %v1151 = vadd.f32 %v1135, 1.0
    %v1152 = vadd.f32 %v1136, 1.0
    %v1153 = vadd.f32 %v1137, 1.0
    %v1154 = vadd.f32 %v1138, 1.0
    %v1155 = vadd.f32 %v1139, 1.0
    %v1156 = vadd.f32 %v1140, 1.0
    %v1157 = vadd.f32 %v1141, 1.0
    %v1158 = vadd.f32 %v1142, 1.0
    %v1159 = vadd.f32 %v1143, 1.0
    %v1160 = vadd.f32 %v1144, 1.0
    %v1161 = vadd.f32 %v1145, 1.0
    %v1162 = vmul.f32 %v1034, %v1146
    %v1163 = vmul.f32 %v1035, %v1147
    %v1164 = vmul.f32 %v1036, %v1148
    %v1165 = vmul.f32 %v1037, %v1149
    %v1166 = vmul.f32 %v1038, %v1150
    %v1167 = vmul.f32 %v1039, %v1151
    %v1168 = vmul.f32 %v1040, %v1152
    %v1169 = vmul.f32 %v1041, %v1153
    %v1170 = vmul.f32 %v1042, %v1154
    %v1171 = vmul.f32 %v1043, %v1155
    %v1172 = vmul.f32 %v1044, %v1156
    %v1173 = vmul.f32 %v1045, %v1157
    %v1174 = vmul.f32 %v1046, %v1158
    %v1175 = vmul.f32 %v1047, %v1159
    %v1176 = vmul.f32 %v1048, %v1160
    %v1177 = vmul.f32 %v1049, %v1161
    %v1178 = vpack.c.bf16 %v1170, %v1162
    %v1179 = vpack.c.bf16 %v1171, %v1163
    %v1180 = vpack.c.bf16 %v1172, %v1164
    %v1181 = vpack.c.bf16 %v1173, %v1165
    %v1182 = vpack.c.bf16 %v1174, %v1166
    %v1183 = vpack.c.bf16 %v1175, %v1167
    %v1184 = vpack.c.bf16 %v1176, %v1168
    %v1185 = vpack.c.bf16 %v1177, %v1169
    %v1186 = vld [vmem:[#allocation2] sm:$0xff]
    %v1187 = vld [vmem:[#allocation2 + $0x8] sm:$0xff]
    %v1188 = vld [vmem:[#allocation2 + $0x10] sm:$0xff]
    %v1189 = vld [vmem:[#allocation2 + $0x18] sm:$0xff]
    %v1190 = vld [vmem:[#allocation2 + $0x20] sm:$0xff]
    %v1191 = vld [vmem:[#allocation2 + $0x28] sm:$0xff]
    %v1192 = vld [vmem:[#allocation2 + $0x30] sm:$0xff]
    %v1193 = vld [vmem:[#allocation2 + $0x38] sm:$0xff]
    %v1194 = vld [vmem:[#allocation2 + $0x40] sm:$0xff]
    %v1195 = vld [vmem:[#allocation2 + $0x48] sm:$0xff]
    %v1196 = vld [vmem:[#allocation2 + $0x50] sm:$0xff]
    %v1197 = vld [vmem:[#allocation2 + $0x58] sm:$0xff]
    %v1198 = vld [vmem:[#allocation2 + $0x60] sm:$0xff]
    %v1199 = vld [vmem:[#allocation2 + $0x68] sm:$0xff]
    %v1200 = vld [vmem:[#allocation2 + $0x70] sm:$0xff]
    %v1201 = vld [vmem:[#allocation2 + $0x78] sm:$0xff]
    %v1202 = vld [vmem:[#allocation2 + $0x80] sm:$0xff]
    %v1203 = vld [vmem:[#allocation2 + $0x88] sm:$0xff]
    %v1204 = vld [vmem:[#allocation2 + $0x90] sm:$0xff]
    %v1205 = vld [vmem:[#allocation2 + $0x98] sm:$0xff]
    %v1206 = vld [vmem:[#allocation2 + $0xa0] sm:$0xff]
    %v1207 = vld [vmem:[#allocation2 + $0xa8] sm:$0xff]
    %v1208 = vld [vmem:[#allocation2 + $0xb0] sm:$0xff]
    %v1209 = vld [vmem:[#allocation2 + $0xb8] sm:$0xff]
    %v1210 = vld [vmem:[#allocation2 + $0xc0] sm:$0xff]
    %v1211 = vld [vmem:[#allocation2 + $0xc8] sm:$0xff]
    %v1212 = vld [vmem:[#allocation2 + $0xd0] sm:$0xff]
    %v1213 = vld [vmem:[#allocation2 + $0xd8] sm:$0xff]
    %v1214 = vld [vmem:[#allocation2 + $0xe0] sm:$0xff]
    %v1215 = vld [vmem:[#allocation2 + $0xe8] sm:$0xff]
    %v1216 = vld [vmem:[#allocation2 + $0xf0] sm:$0xff]
    %v1217 = vld [vmem:[#allocation2 + $0xf8] sm:$0xff]
    %v1218 = vld [vmem:[#allocation2 + $0x100] sm:$0xff]
    %v1219 = vld [vmem:[#allocation2 + $0x108] sm:$0xff]
    %v1220 = vld [vmem:[#allocation2 + $0x110] sm:$0xff]
    %v1221 = vld [vmem:[#allocation2 + $0x118] sm:$0xff]
    %v1222 = vld [vmem:[#allocation2 + $0x120] sm:$0xff]
    %v1223 = vld [vmem:[#allocation2 + $0x128] sm:$0xff]
    %v1224 = vld [vmem:[#allocation2 + $0x130] sm:$0xff]
    %v1225 = vld [vmem:[#allocation2 + $0x138] sm:$0xff]
    %v1226 = vld [vmem:[#allocation2 + $0x140] sm:$0xff]
    %v1227 = vld [vmem:[#allocation2 + $0x148] sm:$0xff]
    %v1228 = vld [vmem:[#allocation2 + $0x150] sm:$0xff]
    %v1229 = vld [vmem:[#allocation2 + $0x158] sm:$0xff]
    %v1230 = vld [vmem:[#allocation2 + $0x160] sm:$0xff]
    %v1231 = vld [vmem:[#allocation2 + $0x168] sm:$0xff]
    %v1232 = vld [vmem:[#allocation2 + $0x170] sm:$0xff]
    %v1233 = vld [vmem:[#allocation2 + $0x178] sm:$0xff]
    %v1234 = vld [vmem:[#allocation2 + $0x180] sm:$0xff]
    %v1235 = vld [vmem:[#allocation2 + $0x188] sm:$0xff]
    %v1236 = vld [vmem:[#allocation2 + $0x190] sm:$0xff]
    %v1237 = vld [vmem:[#allocation2 + $0x198] sm:$0xff]
    %v1238 = vld [vmem:[#allocation2 + $0x1a0] sm:$0xff]
    %v1239 = vld [vmem:[#allocation2 + $0x1a8] sm:$0xff]
    %v1240 = vld [vmem:[#allocation2 + $0x1b0] sm:$0xff]
    %v1241 = vld [vmem:[#allocation2 + $0x1b8] sm:$0xff]
    %v1242 = vld [vmem:[#allocation2 + $0x1c0] sm:$0xff]
    %v1243 = vld [vmem:[#allocation2 + $0x1c8] sm:$0xff]
    %v1244 = vld [vmem:[#allocation2 + $0x1d0] sm:$0xff]
    %v1245 = vld [vmem:[#allocation2 + $0x1d8] sm:$0xff]
    %v1246 = vld [vmem:[#allocation2 + $0x1e0] sm:$0xff]
    %v1247 = vld [vmem:[#allocation2 + $0x1e8] sm:$0xff]
    %v1248 = vld [vmem:[#allocation2 + $0x1f0] sm:$0xff]
    %v1249 = vld [vmem:[#allocation2 + $0x1f8] sm:$0xff]
    %v1250 = vld [vmem:[#allocation2 + $0x200] sm:$0xff]
    %v1251 = vld [vmem:[#allocation2 + $0x208] sm:$0xff]
    %v1252 = vld [vmem:[#allocation2 + $0x210] sm:$0xff]
    %v1253 = vld [vmem:[#allocation2 + $0x218] sm:$0xff]
    %v1254 = vld [vmem:[#allocation2 + $0x220] sm:$0xff]
    %v1255 = vld [vmem:[#allocation2 + $0x228] sm:$0xff]
    %v1256 = vld [vmem:[#allocation2 + $0x230] sm:$0xff]
    %v1257 = vld [vmem:[#allocation2 + $0x238] sm:$0xff]
    %v1258 = vld [vmem:[#allocation2 + $0x240] sm:$0xff]
    %v1259 = vld [vmem:[#allocation2 + $0x248] sm:$0xff]
    %v1260 = vld [vmem:[#allocation2 + $0x250] sm:$0xff]
    %v1261 = vld [vmem:[#allocation2 + $0x258] sm:$0xff]
    %v1262 = vld [vmem:[#allocation2 + $0x260] sm:$0xff]
    %v1263 = vld [vmem:[#allocation2 + $0x268] sm:$0xff]
    %v1264 = vld [vmem:[#allocation2 + $0x270] sm:$0xff]
    %v1265 = vld [vmem:[#allocation2 + $0x278] sm:$0xff]
    %v1266 = vld [vmem:[#allocation2 + $0x280] sm:$0xff]
    %v1267 = vld [vmem:[#allocation2 + $0x288] sm:$0xff]
    %v1268 = vld [vmem:[#allocation2 + $0x290] sm:$0xff]
    %v1269 = vld [vmem:[#allocation2 + $0x298] sm:$0xff]
    %v1270 = vld [vmem:[#allocation2 + $0x2a0] sm:$0xff]
    %v1271 = vld [vmem:[#allocation2 + $0x2a8] sm:$0xff]
    %v1272 = vld [vmem:[#allocation2 + $0x2b0] sm:$0xff]
    %v1273 = vld [vmem:[#allocation2 + $0x2b8] sm:$0xff]
    %v1274 = vld [vmem:[#allocation2 + $0x2c0] sm:$0xff]
    %v1275 = vld [vmem:[#allocation2 + $0x2c8] sm:$0xff]
    %v1276 = vld [vmem:[#allocation2 + $0x2d0] sm:$0xff]
    %v1277 = vld [vmem:[#allocation2 + $0x2d8] sm:$0xff]
    %v1278 = vld [vmem:[#allocation2 + $0x2e0] sm:$0xff]
    %v1279 = vld [vmem:[#allocation2 + $0x2e8] sm:$0xff]
    %v1280 = vld [vmem:[#allocation2 + $0x2f0] sm:$0xff]
    %v1281 = vld [vmem:[#allocation2 + $0x2f8] sm:$0xff]
    %v1282 = vld [vmem:[#allocation2 + $0x300] sm:$0xff]
    %v1283 = vld [vmem:[#allocation2 + $0x308] sm:$0xff]
    %v1284 = vld [vmem:[#allocation2 + $0x310] sm:$0xff]
    %v1285 = vld [vmem:[#allocation2 + $0x318] sm:$0xff]
    %v1286 = vld [vmem:[#allocation2 + $0x320] sm:$0xff]
    %v1287 = vld [vmem:[#allocation2 + $0x328] sm:$0xff]
    %v1288 = vld [vmem:[#allocation2 + $0x330] sm:$0xff]
    %v1289 = vld [vmem:[#allocation2 + $0x338] sm:$0xff]
    %v1290 = vld [vmem:[#allocation2 + $0x340] sm:$0xff]
    %v1291 = vld [vmem:[#allocation2 + $0x348] sm:$0xff]
    %v1292 = vld [vmem:[#allocation2 + $0x350] sm:$0xff]
    %v1293 = vld [vmem:[#allocation2 + $0x358] sm:$0xff]
    %v1294 = vld [vmem:[#allocation2 + $0x360] sm:$0xff]
    %v1295 = vld [vmem:[#allocation2 + $0x368] sm:$0xff]
    %v1296 = vld [vmem:[#allocation2 + $0x370] sm:$0xff]
    %v1297 = vld [vmem:[#allocation2 + $0x378] sm:$0xff]
    %v1298 = vld [vmem:[#allocation2 + $0x380] sm:$0xff]
    %v1299 = vld [vmem:[#allocation2 + $0x388] sm:$0xff]
    %v1300 = vld [vmem:[#allocation2 + $0x390] sm:$0xff]
    %v1301 = vld [vmem:[#allocation2 + $0x398] sm:$0xff]
    %v1302 = vld [vmem:[#allocation2 + $0x3a0] sm:$0xff]
    %v1303 = vld [vmem:[#allocation2 + $0x3a8] sm:$0xff]
    %v1304 = vld [vmem:[#allocation2 + $0x3b0] sm:$0xff]
    %v1305 = vld [vmem:[#allocation2 + $0x3b8] sm:$0xff]
    %v1306 = vld [vmem:[#allocation2 + $0x3c0] sm:$0xff]
    %v1307 = vld [vmem:[#allocation2 + $0x3c8] sm:$0xff]
    %v1308 = vld [vmem:[#allocation2 + $0x3d0] sm:$0xff]
    %v1309 = vld [vmem:[#allocation2 + $0x3d8] sm:$0xff]
    %v1310 = vld [vmem:[#allocation2 + $0x3e0] sm:$0xff]
    %v1311 = vld [vmem:[#allocation2 + $0x3e8] sm:$0xff]
    %v1312 = vld [vmem:[#allocation2 + $0x3f0] sm:$0xff]
    %v1313 = vld [vmem:[#allocation2 + $0x3f8] sm:$0xff]
    %v1314 = vld [vmem:[%s4] sm:$0x3]
    %v1316 = vlaneseq
    %v1317 = vshrl.u32 %v1316, 7
    %v1318 = vsub.s32 0, %v1317
    %v1319 = vrot.slane %v1314, %v1318
    %v1320 = vlaneseq
    %v1321 = vshrl.u32 %v1320, 7
    %v1322 = vsub.s32 1, %v1321
    %v1323 = vrot.slane %v1314, %v1322
    %v1454 = vunpack.c.l.b16 %v1186
    %v1455 = vunpack.c.h.b16 %v1186
    %v1456 = vunpack.c.l.b16 %v1187
    %v1457 = vunpack.c.h.b16 %v1187
    %v1458 = vunpack.c.l.b16 %v1188
    %v1459 = vunpack.c.h.b16 %v1188
    %v1460 = vunpack.c.l.b16 %v1189
    %v1461 = vunpack.c.h.b16 %v1189
    %v1462 = vunpack.c.l.b16 %v1190
    %v1463 = vunpack.c.h.b16 %v1190
    %v1464 = vunpack.c.l.b16 %v1191
    %v1465 = vunpack.c.h.b16 %v1191
    %v1466 = vunpack.c.l.b16 %v1192
    %v1467 = vunpack.c.h.b16 %v1192
    %v1468 = vunpack.c.l.b16 %v1193
    %v1469 = vunpack.c.h.b16 %v1193
    %v1470 = vunpack.c.l.b16 %v1194
    %v1471 = vunpack.c.h.b16 %v1194
    %v1472 = vunpack.c.l.b16 %v1195
    %v1473 = vunpack.c.h.b16 %v1195
    %v1474 = vunpack.c.l.b16 %v1196
    %v1475 = vunpack.c.h.b16 %v1196
    %v1476 = vunpack.c.l.b16 %v1197
    %v1477 = vunpack.c.h.b16 %v1197
    %v1478 = vunpack.c.l.b16 %v1198
    %v1479 = vunpack.c.h.b16 %v1198
    %v1480 = vunpack.c.l.b16 %v1199
    %v1481 = vunpack.c.h.b16 %v1199
    %v1482 = vunpack.c.l.b16 %v1200
    %v1483 = vunpack.c.h.b16 %v1200
    %v1484 = vunpack.c.l.b16 %v1201
    %v1485 = vunpack.c.h.b16 %v1201
    %v1486 = vunpack.c.l.b16 %v1202
    %v1487 = vunpack.c.h.b16 %v1202
    %v1488 = vunpack.c.l.b16 %v1203
    %v1489 = vunpack.c.h.b16 %v1203
    %v1490 = vunpack.c.l.b16 %v1204
    %v1491 = vunpack.c.h.b16 %v1204
    %v1492 = vunpack.c.l.b16 %v1205
    %v1493 = vunpack.c.h.b16 %v1205
    %v1494 = vunpack.c.l.b16 %v1206
    %v1495 = vunpack.c.h.b16 %v1206
    %v1496 = vunpack.c.l.b16 %v1207
    %v1497 = vunpack.c.h.b16 %v1207
    %v1498 = vunpack.c.l.b16 %v1208
    %v1499 = vunpack.c.h.b16 %v1208
    %v1500 = vunpack.c.l.b16 %v1209
    %v1501 = vunpack.c.h.b16 %v1209
    %v1502 = vunpack.c.l.b16 %v1210
    %v1503 = vunpack.c.h.b16 %v1210
    %v1504 = vunpack.c.l.b16 %v1211
    %v1505 = vunpack.c.h.b16 %v1211
    %v1506 = vunpack.c.l.b16 %v1212
    %v1507 = vunpack.c.h.b16 %v1212
    %v1508 = vunpack.c.l.b16 %v1213
    %v1509 = vunpack.c.h.b16 %v1213
    %v1510 = vunpack.c.l.b16 %v1214
    %v1511 = vunpack.c.h.b16 %v1214
    %v1512 = vunpack.c.l.b16 %v1215
    %v1513 = vunpack.c.h.b16 %v1215
    %v1514 = vunpack.c.l.b16 %v1216
    %v1515 = vunpack.c.h.b16 %v1216
    %v1516 = vunpack.c.l.b16 %v1217
    %v1517 = vunpack.c.h.b16 %v1217
    %v1518 = vunpack.c.l.b16 %v1218
    %v1519 = vunpack.c.h.b16 %v1218
    %v1520 = vunpack.c.l.b16 %v1219
    %v1521 = vunpack.c.h.b16 %v1219
    %v1522 = vunpack.c.l.b16 %v1220
    %v1523 = vunpack.c.h.b16 %v1220
    %v1524 = vunpack.c.l.b16 %v1221
    %v1525 = vunpack.c.h.b16 %v1221
    %v1526 = vunpack.c.l.b16 %v1222
    %v1527 = vunpack.c.h.b16 %v1222
    %v1528 = vunpack.c.l.b16 %v1223
    %v1529 = vunpack.c.h.b16 %v1223
    %v1530 = vunpack.c.l.b16 %v1224
    %v1531 = vunpack.c.h.b16 %v1224
    %v1532 = vunpack.c.l.b16 %v1225
    %v1533 = vunpack.c.h.b16 %v1225
    %v1534 = vunpack.c.l.b16 %v1226
    %v1535 = vunpack.c.h.b16 %v1226
    %v1536 = vunpack.c.l.b16 %v1227
    %v1537 = vunpack.c.h.b16 %v1227
    %v1538 = vunpack.c.l.b16 %v1228
    %v1539 = vunpack.c.h.b16 %v1228
    %v1540 = vunpack.c.l.b16 %v1229
    %v1541 = vunpack.c.h.b16 %v1229
    %v1542 = vunpack.c.l.b16 %v1230
    %v1543 = vunpack.c.h.b16 %v1230
    %v1544 = vunpack.c.l.b16 %v1231
    %v1545 = vunpack.c.h.b16 %v1231
    %v1546 = vunpack.c.l.b16 %v1232
    %v1547 = vunpack.c.h.b16 %v1232
    %v1548 = vunpack.c.l.b16 %v1233
    %v1549 = vunpack.c.h.b16 %v1233
    %v1550 = vunpack.c.l.b16 %v1234
    %v1551 = vunpack.c.h.b16 %v1234
    %v1552 = vunpack.c.l.b16 %v1235
    %v1553 = vunpack.c.h.b16 %v1235
    %v1554 = vunpack.c.l.b16 %v1236
    %v1555 = vunpack.c.h.b16 %v1236
    %v1556 = vunpack.c.l.b16 %v1237
    %v1557 = vunpack.c.h.b16 %v1237
    %v1558 = vunpack.c.l.b16 %v1238
    %v1559 = vunpack.c.h.b16 %v1238
    %v1560 = vunpack.c.l.b16 %v1239
    %v1561 = vunpack.c.h.b16 %v1239
    %v1562 = vunpack.c.l.b16 %v1240
    %v1563 = vunpack.c.h.b16 %v1240
    %v1564 = vunpack.c.l.b16 %v1241
    %v1565 = vunpack.c.h.b16 %v1241
    %v1566 = vunpack.c.l.b16 %v1242
    %v1567 = vunpack.c.h.b16 %v1242
    %v1568 = vunpack.c.l.b16 %v1243
    %v1569 = vunpack.c.h.b16 %v1243
    %v1570 = vunpack.c.l.b16 %v1244
    %v1571 = vunpack.c.h.b16 %v1244
    %v1572 = vunpack.c.l.b16 %v1245
    %v1573 = vunpack.c.h.b16 %v1245
    %v1574 = vunpack.c.l.b16 %v1246
    %v1575 = vunpack.c.h.b16 %v1246
    %v1576 = vunpack.c.l.b16 %v1247
    %v1577 = vunpack.c.h.b16 %v1247
    %v1578 = vunpack.c.l.b16 %v1248
    %v1579 = vunpack.c.h.b16 %v1248
    %v1580 = vunpack.c.l.b16 %v1249
    %v1581 = vunpack.c.h.b16 %v1249
    %v1582 = vunpack.c.l.b16 %v1250
    %v1583 = vunpack.c.h.b16 %v1250
    %v1584 = vunpack.c.l.b16 %v1251
    %v1585 = vunpack.c.h.b16 %v1251
    %v1586 = vunpack.c.l.b16 %v1252
    %v1587 = vunpack.c.h.b16 %v1252
    %v1588 = vunpack.c.l.b16 %v1253
    %v1589 = vunpack.c.h.b16 %v1253
    %v1590 = vunpack.c.l.b16 %v1254
    %v1591 = vunpack.c.h.b16 %v1254
    %v1592 = vunpack.c.l.b16 %v1255
    %v1593 = vunpack.c.h.b16 %v1255
    %v1594 = vunpack.c.l.b16 %v1256
    %v1595 = vunpack.c.h.b16 %v1256
    %v1596 = vunpack.c.l.b16 %v1257
    %v1597 = vunpack.c.h.b16 %v1257
    %v1598 = vunpack.c.l.b16 %v1258
    %v1599 = vunpack.c.h.b16 %v1258
    %v1600 = vunpack.c.l.b16 %v1259
    %v1601 = vunpack.c.h.b16 %v1259
    %v1602 = vunpack.c.l.b16 %v1260
    %v1603 = vunpack.c.h.b16 %v1260
    %v1604 = vunpack.c.l.b16 %v1261
    %v1605 = vunpack.c.h.b16 %v1261
    %v1606 = vunpack.c.l.b16 %v1262
    %v1607 = vunpack.c.h.b16 %v1262
    %v1608 = vunpack.c.l.b16 %v1263
    %v1609 = vunpack.c.h.b16 %v1263
    %v1610 = vunpack.c.l.b16 %v1264
    %v1611 = vunpack.c.h.b16 %v1264
    %v1612 = vunpack.c.l.b16 %v1265
    %v1613 = vunpack.c.h.b16 %v1265
    %v1614 = vunpack.c.l.b16 %v1266
    %v1615 = vunpack.c.h.b16 %v1266
    %v1616 = vunpack.c.l.b16 %v1267
    %v1617 = vunpack.c.h.b16 %v1267
    %v1618 = vunpack.c.l.b16 %v1268
    %v1619 = vunpack.c.h.b16 %v1268
    %v1620 = vunpack.c.l.b16 %v1269
    %v1621 = vunpack.c.h.b16 %v1269
    %v1622 = vunpack.c.l.b16 %v1270
    %v1623 = vunpack.c.h.b16 %v1270
    %v1624 = vunpack.c.l.b16 %v1271
    %v1625 = vunpack.c.h.b16 %v1271
    %v1626 = vunpack.c.l.b16 %v1272
    %v1627 = vunpack.c.h.b16 %v1272
    %v1628 = vunpack.c.l.b16 %v1273
    %v1629 = vunpack.c.h.b16 %v1273
    %v1630 = vunpack.c.l.b16 %v1274
    %v1631 = vunpack.c.h.b16 %v1274
    %v1632 = vunpack.c.l.b16 %v1275
    %v1633 = vunpack.c.h.b16 %v1275
    %v1634 = vunpack.c.l.b16 %v1276
    %v1635 = vunpack.c.h.b16 %v1276
    %v1636 = vunpack.c.l.b16 %v1277
    %v1637 = vunpack.c.h.b16 %v1277
    %v1638 = vunpack.c.l.b16 %v1278
    %v1639 = vunpack.c.h.b16 %v1278
    %v1640 = vunpack.c.l.b16 %v1279
    %v1641 = vunpack.c.h.b16 %v1279
    %v1642 = vunpack.c.l.b16 %v1280
    %v1643 = vunpack.c.h.b16 %v1280
    %v1644 = vunpack.c.l.b16 %v1281
    %v1645 = vunpack.c.h.b16 %v1281
    %v1646 = vunpack.c.l.b16 %v1282
    %v1647 = vunpack.c.h.b16 %v1282
    %v1648 = vunpack.c.l.b16 %v1283
    %v1649 = vunpack.c.h.b16 %v1283
    %v1650 = vunpack.c.l.b16 %v1284
    %v1651 = vunpack.c.h.b16 %v1284
    %v1652 = vunpack.c.l.b16 %v1285
    %v1653 = vunpack.c.h.b16 %v1285
    %v1654 = vunpack.c.l.b16 %v1286
    %v1655 = vunpack.c.h.b16 %v1286
    %v1656 = vunpack.c.l.b16 %v1287
    %v1657 = vunpack.c.h.b16 %v1287
    %v1658 = vunpack.c.l.b16 %v1288
    %v1659 = vunpack.c.h.b16 %v1288
    %v1660 = vunpack.c.l.b16 %v1289
    %v1661 = vunpack.c.h.b16 %v1289
    %v1662 = vunpack.c.l.b16 %v1290
    %v1663 = vunpack.c.h.b16 %v1290
    %v1664 = vunpack.c.l.b16 %v1291
    %v1665 = vunpack.c.h.b16 %v1291
    %v1666 = vunpack.c.l.b16 %v1292
    %v1667 = vunpack.c.h.b16 %v1292
    %v1668 = vunpack.c.l.b16 %v1293
    %v1669 = vunpack.c.h.b16 %v1293
    %v1670 = vunpack.c.l.b16 %v1294
    %v1671 = vunpack.c.h.b16 %v1294
    %v1672 = vunpack.c.l.b16 %v1295
    %v1673 = vunpack.c.h.b16 %v1295
    %v1674 = vunpack.c.l.b16 %v1296
    %v1675 = vunpack.c.h.b16 %v1296
    %v1676 = vunpack.c.l.b16 %v1297
    %v1677 = vunpack.c.h.b16 %v1297
    %v1678 = vunpack.c.l.b16 %v1298
    %v1679 = vunpack.c.h.b16 %v1298
    %v1680 = vunpack.c.l.b16 %v1299
    %v1681 = vunpack.c.h.b16 %v1299
    %v1682 = vunpack.c.l.b16 %v1300
    %v1683 = vunpack.c.h.b16 %v1300
    %v1684 = vunpack.c.l.b16 %v1301
    %v1685 = vunpack.c.h.b16 %v1301
    %v1686 = vunpack.c.l.b16 %v1302
    %v1687 = vunpack.c.h.b16 %v1302
    %v1688 = vunpack.c.l.b16 %v1303
    %v1689 = vunpack.c.h.b16 %v1303
    %v1690 = vunpack.c.l.b16 %v1304
    %v1691 = vunpack.c.h.b16 %v1304
    %v1692 = vunpack.c.l.b16 %v1305
    %v1693 = vunpack.c.h.b16 %v1305
    %v1694 = vunpack.c.l.b16 %v1306
    %v1695 = vunpack.c.h.b16 %v1306
    %v1696 = vunpack.c.l.b16 %v1307
    %v1697 = vunpack.c.h.b16 %v1307
    %v1698 = vunpack.c.l.b16 %v1308
    %v1699 = vunpack.c.h.b16 %v1308
    %v1700 = vunpack.c.l.b16 %v1309
    %v1701 = vunpack.c.h.b16 %v1309
    %v1702 = vunpack.c.l.b16 %v1310
    %v1703 = vunpack.c.h.b16 %v1310
    %v1704 = vunpack.c.l.b16 %v1311
    %v1705 = vunpack.c.h.b16 %v1311
    %v1706 = vunpack.c.l.b16 %v1312
    %v1707 = vunpack.c.h.b16 %v1312
    %v1708 = vunpack.c.l.b16 %v1313
    %v1709 = vunpack.c.h.b16 %v1313
    %v1710 = vpack.c.b16 %v1456, %v1454
    %v1711 = vpack.c.b16 %v1457, %v1455
    %v1712 = vpack.c.b16 %v1460, %v1458
    %v1713 = vpack.c.b16 %v1461, %v1459
    %v1714 = vpack.c.b16 %v1464, %v1462
    %v1715 = vpack.c.b16 %v1465, %v1463
    %v1716 = vpack.c.b16 %v1468, %v1466
    %v1717 = vpack.c.b16 %v1469, %v1467
    %v1718 = vpack.c.b16 %v1472, %v1470
    %v1719 = vpack.c.b16 %v1473, %v1471
    %v1720 = vpack.c.b16 %v1476, %v1474
    %v1721 = vpack.c.b16 %v1477, %v1475
    %v1722 = vpack.c.b16 %v1480, %v1478
    %v1723 = vpack.c.b16 %v1481, %v1479
    %v1724 = vpack.c.b16 %v1484, %v1482
    %v1725 = vpack.c.b16 %v1485, %v1483
    %v1726 = vpack.c.b16 %v1488, %v1486
    %v1727 = vpack.c.b16 %v1489, %v1487
    %v1728 = vpack.c.b16 %v1492, %v1490
    %v1729 = vpack.c.b16 %v1493, %v1491
    %v1730 = vpack.c.b16 %v1496, %v1494
    %v1731 = vpack.c.b16 %v1497, %v1495
    %v1732 = vpack.c.b16 %v1500, %v1498
    %v1733 = vpack.c.b16 %v1501, %v1499
    %v1734 = vpack.c.b16 %v1504, %v1502
    %v1735 = vpack.c.b16 %v1505, %v1503
    %v1736 = vpack.c.b16 %v1508, %v1506
    %v1737 = vpack.c.b16 %v1509, %v1507
    %v1738 = vpack.c.b16 %v1512, %v1510
    %v1739 = vpack.c.b16 %v1513, %v1511
    %v1740 = vpack.c.b16 %v1516, %v1514
    %v1741 = vpack.c.b16 %v1517, %v1515
    %v1742 = vpack.c.b16 %v1520, %v1518
    %v1743 = vpack.c.b16 %v1521, %v1519
    %v1744 = vpack.c.b16 %v1524, %v1522
    %v1745 = vpack.c.b16 %v1525, %v1523
    %v1746 = vpack.c.b16 %v1528, %v1526
    %v1747 = vpack.c.b16 %v1529, %v1527
    %v1748 = vpack.c.b16 %v1532, %v1530
    %v1749 = vpack.c.b16 %v1533, %v1531
    %v1750 = vpack.c.b16 %v1536, %v1534
    %v1751 = vpack.c.b16 %v1537, %v1535
    %v1752 = vpack.c.b16 %v1540, %v1538
    %v1753 = vpack.c.b16 %v1541, %v1539
    %v1754 = vpack.c.b16 %v1544, %v1542
    %v1755 = vpack.c.b16 %v1545, %v1543
    %v1756 = vpack.c.b16 %v1548, %v1546
    %v1757 = vpack.c.b16 %v1549, %v1547
    %v1758 = vpack.c.b16 %v1552, %v1550
    %v1759 = vpack.c.b16 %v1553, %v1551
    %v1760 = vpack.c.b16 %v1556, %v1554
    %v1761 = vpack.c.b16 %v1557, %v1555
    %v1762 = vpack.c.b16 %v1560, %v1558
    %v1763 = vpack.c.b16 %v1561, %v1559
    %v1764 = vpack.c.b16 %v1564, %v1562
    %v1765 = vpack.c.b16 %v1565, %v1563
    %v1766 = vpack.c.b16 %v1568, %v1566
    %v1767 = vpack.c.b16 %v1569, %v1567
    %v1768 = vpack.c.b16 %v1572, %v1570
    %v1769 = vpack.c.b16 %v1573, %v1571
    %v1770 = vpack.c.b16 %v1576, %v1574
    %v1771 = vpack.c.b16 %v1577, %v1575
    %v1772 = vpack.c.b16 %v1580, %v1578
    %v1773 = vpack.c.b16 %v1581, %v1579
    %v1774 = vpack.c.b16 %v1584, %v1582
    %v1775 = vpack.c.b16 %v1585, %v1583
    %v1776 = vpack.c.b16 %v1588, %v1586
    %v1777 = vpack.c.b16 %v1589, %v1587
    %v1778 = vpack.c.b16 %v1592, %v1590
    %v1779 = vpack.c.b16 %v1593, %v1591
    %v1780 = vpack.c.b16 %v1596, %v1594
    %v1781 = vpack.c.b16 %v1597, %v1595
    %v1782 = vpack.c.b16 %v1600, %v1598
    %v1783 = vpack.c.b16 %v1601, %v1599
    %v1784 = vpack.c.b16 %v1604, %v1602
    %v1785 = vpack.c.b16 %v1605, %v1603
    %v1786 = vpack.c.b16 %v1608, %v1606
    %v1787 = vpack.c.b16 %v1609, %v1607
    %v1788 = vpack.c.b16 %v1612, %v1610
    %v1789 = vpack.c.b16 %v1613, %v1611
    %v1790 = vpack.c.b16 %v1616, %v1614
    %v1791 = vpack.c.b16 %v1617, %v1615
    %v1792 = vpack.c.b16 %v1620, %v1618
    %v1793 = vpack.c.b16 %v1621, %v1619
    %v1794 = vpack.c.b16 %v1624, %v1622
    %v1795 = vpack.c.b16 %v1625, %v1623
    %v1796 = vpack.c.b16 %v1628, %v1626
    %v1797 = vpack.c.b16 %v1629, %v1627
    %v1798 = vpack.c.b16 %v1632, %v1630
    %v1799 = vpack.c.b16 %v1633, %v1631
    %v1800 = vpack.c.b16 %v1636, %v1634
    %v1801 = vpack.c.b16 %v1637, %v1635
    %v1802 = vpack.c.b16 %v1640, %v1638
    %v1803 = vpack.c.b16 %v1641, %v1639
    %v1804 = vpack.c.b16 %v1644, %v1642
    %v1805 = vpack.c.b16 %v1645, %v1643
    %v1806 = vpack.c.b16 %v1648, %v1646
    %v1807 = vpack.c.b16 %v1649, %v1647
    %v1808 = vpack.c.b16 %v1652, %v1650
    %v1809 = vpack.c.b16 %v1653, %v1651
    %v1810 = vpack.c.b16 %v1656, %v1654
    %v1811 = vpack.c.b16 %v1657, %v1655
    %v1812 = vpack.c.b16 %v1660, %v1658
    %v1813 = vpack.c.b16 %v1661, %v1659
    %v1814 = vpack.c.b16 %v1664, %v1662
    %v1815 = vpack.c.b16 %v1665, %v1663
    %v1816 = vpack.c.b16 %v1668, %v1666
    %v1817 = vpack.c.b16 %v1669, %v1667
    %v1818 = vpack.c.b16 %v1672, %v1670
    %v1819 = vpack.c.b16 %v1673, %v1671
    %v1820 = vpack.c.b16 %v1676, %v1674
    %v1821 = vpack.c.b16 %v1677, %v1675
    %v1822 = vpack.c.b16 %v1680, %v1678
    %v1823 = vpack.c.b16 %v1681, %v1679
    %v1824 = vpack.c.b16 %v1684, %v1682
    %v1825 = vpack.c.b16 %v1685, %v1683
    %v1826 = vpack.c.b16 %v1688, %v1686
    %v1827 = vpack.c.b16 %v1689, %v1687
    %v1828 = vpack.c.b16 %v1692, %v1690
    %v1829 = vpack.c.b16 %v1693, %v1691
    %v1830 = vpack.c.b16 %v1696, %v1694
    %v1831 = vpack.c.b16 %v1697, %v1695
    %v1832 = vpack.c.b16 %v1700, %v1698
    %v1833 = vpack.c.b16 %v1701, %v1699
    %v1834 = vpack.c.b16 %v1704, %v1702
    %v1835 = vpack.c.b16 %v1705, %v1703
    %v1836 = vpack.c.b16 %v1708, %v1706
    %v1837 = vpack.c.b16 %v1709, %v1707
    %1966 = vmatprep.subr.bf16.mxu0 %v1725
    %1967 = vmatpush1.bf16.msra.mxu0 %v1724
    %1968 = vmatprep.subr.bf16.mxu0 %v1723
    %1969 = vmatpush1.bf16.msra.mxu0 %v1722
    %1970 = vmatprep.subr.bf16.mxu0 %v1721
    %1971 = vmatpush1.bf16.msra.mxu0 %v1720
    %1972 = vmatprep.subr.bf16.mxu0 %v1719
    %1973 = vmatpush1.bf16.msra.mxu0 %v1718
    %1974 = vmatprep.subr.bf16.mxu0 %v1717
    %1975 = vmatpush1.bf16.msra.mxu0 %v1716
    %1976 = vmatprep.subr.bf16.mxu0 %v1715
    %1977 = vmatpush1.bf16.msra.mxu0 %v1714
    %1978 = vmatprep.subr.bf16.mxu0 %v1713
    %1979 = vmatpush1.bf16.msra.mxu0 %v1712
    %1980 = vmatprep.subr.bf16.mxu0 %v1711
    %1981 = vmatpush1.bf16.msra.mxu0 %v1710
    %1982 = vmatprep.subr.bf16.mxu0 %v1741
    %1983 = vmatpush2.bf16.msra.mxu0 %v1740
    %1984 = vmatprep.subr.bf16.mxu0 %v1739
    %1985 = vmatpush2.bf16.msra.mxu0 %v1738
    %1986 = vmatprep.subr.bf16.mxu0 %v1737
    %1987 = vmatpush2.bf16.msra.mxu0 %v1736
    %1988 = vmatprep.subr.bf16.mxu0 %v1735
    %1989 = vmatpush2.bf16.msra.mxu0 %v1734
    %1990 = vmatprep.subr.bf16.mxu0 %v1733
    %1991 = vmatpush2.bf16.msra.mxu0 %v1732
    %1992 = vmatprep.subr.bf16.mxu0 %v1731
    %1993 = vmatpush2.bf16.msra.mxu0 %v1730
    %1994 = vmatprep.subr.bf16.mxu0 %v1729
    %1995 = vmatpush2.bf16.msra.mxu0 %v1728
    %1996 = vmatprep.subr.bf16.mxu0 %v1727
    %1997 = vmatpush2.bf16.msra.mxu0 %v1726
    %1998 = vmatprep.mubr.bf16.mxu0 %v1179
    %1999 = vmatmul.mubr.bf16.gmra.mxu0 %v1178
    %v2000 = vpop.f32.mrf.mxu0
    %v2001 = vadd.f32 %v1319, %v2000
    %v2002 = vpop.f32.mrf.mxu0
    %v2003 = vadd.f32 %v1323, %v2002
    %v2004 = vpop.f32.mrf.mxu0
    %v2005 = vadd.f32 %v1319, %v2004
    %v2006 = vpop.f32.mrf.mxu0
    %v2007 = vadd.f32 %v1323, %v2006
    %2008 = vdwg.mxu0
    %2009 = vmatprep.subr.bf16.mxu0 %v1757
    %2010 = vmatpush1.bf16.msra.mxu0 %v1756
    %2011 = vmatprep.subr.bf16.mxu0 %v1755
    %2012 = vmatpush1.bf16.msra.mxu0 %v1754
    %2013 = vmatprep.subr.bf16.mxu0 %v1753
    %2014 = vmatpush1.bf16.msra.mxu0 %v1752
    %2015 = vmatprep.subr.bf16.mxu0 %v1751
    %2016 = vmatpush1.bf16.msra.mxu0 %v1750
    %2017 = vmatprep.subr.bf16.mxu0 %v1749
    %2018 = vmatpush1.bf16.msra.mxu0 %v1748
    %2019 = vmatprep.subr.bf16.mxu0 %v1747
    %2020 = vmatpush1.bf16.msra.mxu0 %v1746
    %2021 = vmatprep.subr.bf16.mxu0 %v1745
    %2022 = vmatpush1.bf16.msra.mxu0 %v1744
    %2023 = vmatprep.subr.bf16.mxu0 %v1743
    %2024 = vmatpush1.bf16.msra.mxu0 %v1742
    %2025 = vmatprep.subr.bf16.mxu0 %v1773
    %2026 = vmatpush2.bf16.msra.mxu0 %v1772
    %2027 = vmatprep.subr.bf16.mxu0 %v1771
    %2028 = vmatpush2.bf16.msra.mxu0 %v1770
    %2029 = vmatprep.subr.bf16.mxu0 %v1769
    %2030 = vmatpush2.bf16.msra.mxu0 %v1768
    %2031 = vmatprep.subr.bf16.mxu0 %v1767
    %2032 = vmatpush2.bf16.msra.mxu0 %v1766
    %2033 = vmatprep.subr.bf16.mxu0 %v1765
    %2034 = vmatpush2.bf16.msra.mxu0 %v1764
    %2035 = vmatprep.subr.bf16.mxu0 %v1763
    %2036 = vmatpush2.bf16.msra.mxu0 %v1762
    %2037 = vmatprep.subr.bf16.mxu0 %v1761
    %2038 = vmatpush2.bf16.msra.mxu0 %v1760
    %2039 = vmatprep.subr.bf16.mxu0 %v1759
    %2040 = vmatpush2.bf16.msra.mxu0 %v1758
    %2041 = vmatprep.mubr.bf16.mxu0 %v1181
    %2042 = vmatmul.mubr.bf16.gmra.mxu0 %v1180
    %v2043 = vpop.f32.mrf.mxu0
    %v2044 = vadd.f32 %v2001, %v2043
    %v2045 = vpop.f32.mrf.mxu0
    %v2046 = vadd.f32 %v2003, %v2045
    %v2047 = vpop.f32.mrf.mxu0
    %v2048 = vadd.f32 %v2005, %v2047
    %v2049 = vpop.f32.mrf.mxu0
    %v2050 = vadd.f32 %v2007, %v2049
    %2051 = vdwg.mxu0
    %2052 = vmatprep.subr.bf16.mxu0 %v1789
    %2053 = vmatpush1.bf16.msra.mxu0 %v1788
    %2054 = vmatprep.subr.bf16.mxu0 %v1787
    %2055 = vmatpush1.bf16.msra.mxu0 %v1786
    %2056 = vmatprep.subr.bf16.mxu0 %v1785
    %2057 = vmatpush1.bf16.msra.mxu0 %v1784
    %2058 = vmatprep.subr.bf16.mxu0 %v1783
    %2059 = vmatpush1.bf16.msra.mxu0 %v1782
    %2060 = vmatprep.subr.bf16.mxu0 %v1781
    %2061 = vmatpush1.bf16.msra.mxu0 %v1780
    %2062 = vmatprep.subr.bf16.mxu0 %v1779
    %2063 = vmatpush1.bf16.msra.mxu0 %v1778
    %2064 = vmatprep.subr.bf16.mxu0 %v1777
    %2065 = vmatpush1.bf16.msra.mxu0 %v1776
    %2066 = vmatprep.subr.bf16.mxu0 %v1775
    %2067 = vmatpush1.bf16.msra.mxu0 %v1774
    %2068 = vmatprep.subr.bf16.mxu0 %v1805
    %2069 = vmatpush2.bf16.msra.mxu0 %v1804
    %2070 = vmatprep.subr.bf16.mxu0 %v1803
    %2071 = vmatpush2.bf16.msra.mxu0 %v1802
    %2072 = vmatprep.subr.bf16.mxu0 %v1801
    %2073 = vmatpush2.bf16.msra.mxu0 %v1800
    %2074 = vmatprep.subr.bf16.mxu0 %v1799
    %2075 = vmatpush2.bf16.msra.mxu0 %v1798
    %2076 = vmatprep.subr.bf16.mxu0 %v1797
    %2077 = vmatpush2.bf16.msra.mxu0 %v1796
    %2078 = vmatprep.subr.bf16.mxu0 %v1795
    %2079 = vmatpush2.bf16.msra.mxu0 %v1794
    %2080 = vmatprep.subr.bf16.mxu0 %v1793
    %2081 = vmatpush2.bf16.msra.mxu0 %v1792
    %2082 = vmatprep.subr.bf16.mxu0 %v1791
    %2083 = vmatpush2.bf16.msra.mxu0 %v1790
    %2084 = vmatprep.mubr.bf16.mxu0 %v1183
    %2085 = vmatmul.mubr.bf16.gmra.mxu0 %v1182
    %v2086 = vpop.f32.mrf.mxu0
    %v2087 = vadd.f32 %v2044, %v2086
    %v2088 = vpop.f32.mrf.mxu0
    %v2089 = vadd.f32 %v2046, %v2088
    %v2090 = vpop.f32.mrf.mxu0
    %v2091 = vadd.f32 %v2048, %v2090
    %v2092 = vpop.f32.mrf.mxu0
    %v2093 = vadd.f32 %v2050, %v2092
    %2094 = vdwg.mxu0
    %2095 = vmatprep.subr.bf16.mxu0 %v1821
    %2096 = vmatpush1.bf16.msra.mxu0 %v1820
    %2097 = vmatprep.subr.bf16.mxu0 %v1819
    %2098 = vmatpush1.bf16.msra.mxu0 %v1818
    %2099 = vmatprep.subr.bf16.mxu0 %v1817
    %2100 = vmatpush1.bf16.msra.mxu0 %v1816
    %2101 = vmatprep.subr.bf16.mxu0 %v1815
    %2102 = vmatpush1.bf16.msra.mxu0 %v1814
    %2103 = vmatprep.subr.bf16.mxu0 %v1813
    %2104 = vmatpush1.bf16.msra.mxu0 %v1812
    %2105 = vmatprep.subr.bf16.mxu0 %v1811
    %2106 = vmatpush1.bf16.msra.mxu0 %v1810
    %2107 = vmatprep.subr.bf16.mxu0 %v1809
    %2108 = vmatpush1.bf16.msra.mxu0 %v1808
    %2109 = vmatprep.subr.bf16.mxu0 %v1807
    %2110 = vmatpush1.bf16.msra.mxu0 %v1806
    %2111 = vmatprep.subr.bf16.mxu0 %v1837
    %2112 = vmatpush2.bf16.msra.mxu0 %v1836
    %2113 = vmatprep.subr.bf16.mxu0 %v1835
    %2114 = vmatpush2.bf16.msra.mxu0 %v1834
    %2115 = vmatprep.subr.bf16.mxu0 %v1833
    %2116 = vmatpush2.bf16.msra.mxu0 %v1832
    %2117 = vmatprep.subr.bf16.mxu0 %v1831
    %2118 = vmatpush2.bf16.msra.mxu0 %v1830
    %2119 = vmatprep.subr.bf16.mxu0 %v1829
    %2120 = vmatpush2.bf16.msra.mxu0 %v1828
    %2121 = vmatprep.subr.bf16.mxu0 %v1827
    %2122 = vmatpush2.bf16.msra.mxu0 %v1826
    %2123 = vmatprep.subr.bf16.mxu0 %v1825
    %2124 = vmatpush2.bf16.msra.mxu0 %v1824
    %2125 = vmatprep.subr.bf16.mxu0 %v1823
    %2126 = vmatpush2.bf16.msra.mxu0 %v1822
    %2127 = vmatprep.mubr.bf16.mxu0 %v1185
    %2128 = vmatmul.mubr.bf16.gmra.mxu0 %v1184
    %v2129 = vpop.f32.mrf.mxu0
    %v2130 = vadd.f32 %v2087, %v2129
    %v2131 = vpop.f32.mrf.mxu0
    %v2132 = vadd.f32 %v2089, %v2131
    %v2133 = vpop.f32.mrf.mxu0
    %v2134 = vadd.f32 %v2091, %v2133
    %v2135 = vpop.f32.mrf.mxu0
    %v2136 = vadd.f32 %v2093, %v2135
    %2137 = vdwg.mxu0
    %v2138 = vunpack.c.l.bf16 %v40
    %v2139 = vunpack.c.h.bf16 %v40
    %v2140 = vunpack.c.l.bf16 %v41
    %v2141 = vunpack.c.h.bf16 %v41
    %v2142 = vadd.f32 %v2130, %v2138
    %v2143 = vadd.f32 %v2132, %v2139
    %v2144 = vadd.f32 %v2134, %v2140
    %v2145 = vadd.f32 %v2136, %v2141
    %v2146 = vld [vmem:[%s5] sm:$0x3]
    %v2147 = vld [vmem:[%s6] sm:$0x3]
    %v2148 = vadd.f32 %v2142, %v2143
    %2149 = vadd.xlane.f32.xlu0 %v2148
    %v2150 = vpop.xlane.xlu0 %2149
    %v2151 = vadd.f32 %v2144, %v2145
    %2152 = vadd.xlane.f32.xlu0 %v2151
    %v2153 = vpop.xlane.xlu0 %2152
    %v2154 = vrcp.pop 256.0
    %v2155 = vmul.f32 %v2150, %v2154
    %v2156 = vmul.f32 %v2153, %v2154
    %v2157 = vsub.f32 %v2142, %v2155
    %v2158 = vsub.f32 %v2143, %v2155
    %v2159 = vsub.f32 %v2144, %v2156
    %v2160 = vsub.f32 %v2145, %v2156
    %v2161 = vmul.f32 %v2157, %v2157
    %v2162 = vmul.f32 %v2158, %v2158
    %v2163 = vmul.f32 %v2159, %v2159
    %v2164 = vmul.f32 %v2160, %v2160
    %v2165 = vadd.f32 %v2161, %v2162
    %2166 = vadd.xlane.f32.xlu0 %v2165
    %v2167 = vpop.xlane.xlu0 %2166
    %v2168 = vadd.f32 %v2163, %v2164
    %2169 = vadd.xlane.f32.xlu0 %v2168
    %v2170 = vpop.xlane.xlu0 %2169
    %v2171 = vmul.f32 %v2167, %v2154
    %v2172 = vmul.f32 %v2170, %v2154
    %v2173 = vadd.f32 %v2171, 1e-12
    %v2174 = vadd.f32 %v2172, 1e-12
    %v2175 = vrsqrt.pop %v2173
    %v2176 = vrsqrt.pop %v2174
    %v2177 = vmul.f32 %v2157, %v2175
    %v2178 = vmul.f32 %v2158, %v2175
    %v2179 = vmul.f32 %v2159, %v2176
    %v2180 = vmul.f32 %v2160, %v2176
    %v2182 = vlaneseq
    %v2183 = vshrl.u32 %v2182, 7
    %v2184 = vsub.s32 0, %v2183
    %v2185 = vrot.slane %v2146, %v2184
    %v2186 = vlaneseq
    %v2187 = vshrl.u32 %v2186, 7
    %v2188 = vsub.s32 1, %v2187
    %v2189 = vrot.slane %v2146, %v2188
    %v2192 = vmul.f32 %v2177, %v2185
    %v2193 = vmul.f32 %v2178, %v2189
    %v2194 = vmul.f32 %v2179, %v2185
    %v2195 = vmul.f32 %v2180, %v2189
    %v2197 = vlaneseq
    %v2198 = vshrl.u32 %v2197, 7
    %v2199 = vsub.s32 0, %v2198
    %v2200 = vrot.slane %v2147, %v2199
    %v2201 = vlaneseq
    %v2202 = vshrl.u32 %v2201, 7
    %v2203 = vsub.s32 1, %v2202
    %v2204 = vrot.slane %v2147, %v2203
    %v2207 = vadd.f32 %v2192, %v2200
    %v2208 = vadd.f32 %v2193, %v2204
    %v2209 = vadd.f32 %v2194, %v2200
    %v2210 = vadd.f32 %v2195, %v2204
    %v2211 = vpack.c.bf16 %v2209, %v2207
    %v2212 = vpack.c.bf16 %v2210, %v2208
    %v2215 = vunpack.c.l.b16 %v2211
    %v2216 = vunpack.c.l.b16 %v2212
    %v2217 = vunpack.c.h.b16 %v2211
    %v2218 = vunpack.c.h.b16 %v2212
    %v2219 = vpack.c.b16 %v2216, %v2215
    %v2220 = vpack.c.b16 %v2218, %v2217
    %2223 = vst [vmem:[%s7] sm:$0xff] %v2219
    %2224 = vst [vmem:[%s7 + $0x8] sm:$0xff] %v2220
    // Predicated region
    $region34: #{text_encoder_forward.8} parent=1 // pred_check
      _
    $region35: #{text_encoder_forward.8} parent=1 // pred_check_branch
      %2226 = sbr.rel (0) target = $region37
    $region36: #{text_encoder_forward.8} parent=1 // pred_region
      _
    $region37: #{text_encoder_forward.8} parent=1 // pred_fallthru
      _
    // Predicated region
    $region38: #{text_encoder_forward.8} parent=1 // pred_check
      _
    $region39: #{text_encoder_forward.8} parent=1 // pred_check_branch
      %2228 = sbr.rel (0) target = $region41
    $region40: #{text_encoder_forward.8} parent=1 // pred_region
      _
    $region41: #{text_encoder_forward.8} parent=1 // pred_fallthru
      _
    %2229 = vsyncpa [#allocation3], 1

// kernel: text_encoder_forward.7
$region0: #{text_encoder_forward.7}
  #allocation0 [shape = 'u32[]', space=smem, size = 0x4, offset = 0x4, fixed_abs, tag = 'smem constant byte address 0x4 - core index']
  #allocation1 [shape = 'u32[144,128]{1,0:T(1,128)}', space=vmem, size = 0x12000, scoped, tag = 'internal scratch']
  %s0 = inlined_call_operand.vmem [shape: bf16[2,8,256], index: 0, kind: input, shape index: {}]
  %s1 = inlined_call_operand.vmem [shape: f32[2,1,8], index: 1, kind: input, shape index: {}]
  %s2 = inlined_call_operand.hbm [shape: bf16[256,768], index: 2, kind: input, shape index: {}]
  %s3 = inlined_call_operand.vmem [shape: f32[1,768], index: 3, kind: input, shape index: {}]
  %s4 = inlined_call_operand.vmem [shape: bf16[256,256], index: 4, kind: input, shape index: {}]
  %s5 = inlined_call_operand.vmem [shape: f32[1,256], index: 5, kind: input, shape index: {}]
  %s6 = inlined_call_operand.vmem [shape: f32[1,256], index: 6, kind: input, shape index: {}]
  %s7 = inlined_call_operand.vmem [shape: f32[1,256], index: 7, kind: input, shape index: {}]
  %s8 = inlined_call_operand.vmem [shape: bf16[2,8,256], index: 8, kind: output, shape index: {}]
  %s9 = sld [smem:[#allocation0]]
  $region69: #{text_encoder_forward.7} parent=0
    _
  %s11 = ssub.s32 1, %s9
  %s12 = scalar_select 0, %s11, %s9
  $region1: #{text_encoder_forward.7} parent=0
    #allocation2 [shape = 'u8[393216]{0}', space=vmem, size = 0x60000, scoped, tag = 'input window, operand 2, single buffered']
    #allocation3 [shape = 's32[2]{0}', space=sflag, size = 0x8, scoped, tag = 'scoped memory for text_encoder_forward.7']
    %13 = vsyncpa [#allocation3], 0
    loop: start=0, step=1, limit=4
    $region2: #{text_encoder_forward.7} parent=1 // loop_pre_header
      _
    $region3: #{text_encoder_forward.7} parent=1 // loop_header
      %s15 = sphi 0, %s19
      %p16 = scmp.ge.s32.totalorder %s15, 4
      %s25 = sphi 0, %s27
      %s28 = sphi 0, %s25
      %s29 = sphi 0, %s28
      %s45 = sphi 0, %s29
      %s51 = sphi 0, %s53
      %s54 = sphi 0, %s51
      %s55 = sphi 0, %s54
      %s71 = sphi 0, %s55
      %s75 = sphi 0, %s75
      %s77 = sphi 0, %s75
      %s78 = sphi 0, %s77
      %s92 = sphi 0, %s78
      %s96 = sphi 0, %s96
      %s98 = sphi 0, %s96
      %s99 = sphi 0, %s98
      %s113 = sphi 0, %s99
      %s117 = sphi 0, %s117
      %s119 = sphi 0, %s117
      %s120 = sphi 0, %s119
      %s134 = sphi 0, %s120
      %s138 = sphi 0, %s138
      %s140 = sphi 0, %s138
      %s141 = sphi 0, %s140
      %s155 = sphi 0, %s141
      %s159 = sphi 0, %s159
      %s161 = sphi 0, %s159
      %s162 = sphi 0, %s161
      %s176 = sphi 0, %s162
      %s180 = sphi 0, %s180
      %s182 = sphi 0, %s180
      %s183 = sphi 0, %s182
      %s197 = sphi 0, %s183
      %s203 = sphi 0, %s205
      %s206 = sphi 0, %s203
      %s207 = sphi 0, %s206
      %s223 = sphi 0, %s207
    $region4: #{text_encoder_forward.7} parent=1 // loop_header_branch
      %18 = sbr.rel (%p16) target = $region8
    $region5: #{text_encoder_forward.7} parent=1 // loop_body
      %s20 = ssub.s32 %s15, 1
      %s21 = ssub.s32 %s15, 2
      %s22 = sadd.s32 %s15, 1
      %s23 = ssub.s32 %s15, %s22
      %p24 = scmp.eq.s32.totalorder %s23, 0
      %s26 = sadd.s32 %s25, 1
      %s27 = scalar_select %p24, %s25, %s26
      %p30 = pneg %p24
      %p31 = scmp.eq.s32.totalorder %s15, 1
      %p32 = por %p30, %p31
      %p33 = scmp.ne.s32.totalorder %s25, %s28
      %p34 = scmp.eq.s32.totalorder %s15, 0
      %p35 = por %p33, %p34
      %p36 = scmp.ne.s32.totalorder %s25, %s28
      %p37 = scmp.eq.s32.totalorder %s20, 1
      %p38 = por %p36, %p37
      %p39 = scmp.ne.s32.totalorder %s28, %s29
      %p40 = scmp.eq.s32.totalorder %s20, 0
      %p41 = por %p39, %p40
      %p42 = scmp.ne.s32.totalorder %s28, %s29
      %p43 = scmp.eq.s32.totalorder %s21, 1
      %p44 = por %p42, %p43
      %p46 = scmp.ne.s32.totalorder %s29, %s45
      %p47 = scmp.eq.s32.totalorder %s21, 0
      %p48 = por %p46, %p47
      %s49 = ssub.s32 %s15, %s22
      %p50 = scmp.eq.s32.totalorder %s49, 0
      %s52 = sadd.s32 %s51, 1
      %s53 = scalar_select %p50, %s51, %s52
      %p56 = pneg %p50
      %p57 = scmp.eq.s32.totalorder %s15, 1
      %p58 = por %p56, %p57
      %p59 = scmp.ne.s32.totalorder %s51, %s54
      %p60 = scmp.eq.s32.totalorder %s15, 0
      %p61 = por %p59, %p60
      %p62 = scmp.ne.s32.totalorder %s51, %s54
      %p63 = scmp.eq.s32.totalorder %s20, 1
      %p64 = por %p62, %p63
      %p65 = scmp.ne.s32.totalorder %s54, %s55
      %p66 = scmp.eq.s32.totalorder %s20, 0
      %p67 = por %p65, %p66
      %p68 = scmp.ne.s32.totalorder %s54, %s55
      %p69 = scmp.eq.s32.totalorder %s21, 1
      %p70 = por %p68, %p69
      %p72 = scmp.ne.s32.totalorder %s55, %s71
      %p73 = scmp.eq.s32.totalorder %s21, 0
      %p74 = por %p72, %p73
      %s76 = sadd.s32 %s75, 1
      %p79 = scmp.eq.s32.totalorder %s15, 1
      %p80 = scmp.ne.s32.totalorder %s75, %s77
      %p81 = scmp.eq.s32.totalorder %s15, 0
      %p82 = por %p80, %p81
      %p83 = scmp.ne.s32.totalorder %s75, %s77
      %p84 = scmp.eq.s32.totalorder %s20, 1
      %p85 = por %p83, %p84
      %p86 = scmp.ne.s32.totalorder %s77, %s78
      %p87 = scmp.eq.s32.totalorder %s20, 0
      %p88 = por %p86, %p87
      %p89 = scmp.ne.s32.totalorder %s77, %s78
      %p90 = scmp.eq.s32.totalorder %s21, 1
      %p91 = por %p89, %p90
      %p93 = scmp.ne.s32.totalorder %s78, %s92
      %p94 = scmp.eq.s32.totalorder %s21, 0
      %p95 = por %p93, %p94
      %s97 = sadd.s32 %s96, 1
      %p100 = scmp.eq.s32.totalorder %s15, 1
      %p101 = scmp.ne.s32.totalorder %s96, %s98
      %p102 = scmp.eq.s32.totalorder %s15, 0
      %p103 = por %p101, %p102
      %p104 = scmp.ne.s32.totalorder %s96, %s98
      %p105 = scmp.eq.s32.totalorder %s20, 1
      %p106 = por %p104, %p105
      %p107 = scmp.ne.s32.totalorder %s98, %s99
      %p108 = scmp.eq.s32.totalorder %s20, 0
      %p109 = por %p107, %p108
      %p110 = scmp.ne.s32.totalorder %s98, %s99
      %p111 = scmp.eq.s32.totalorder %s21, 1
      %p112 = por %p110, %p111
      %p114 = scmp.ne.s32.totalorder %s99, %s113
      %p115 = scmp.eq.s32.totalorder %s21, 0
      %p116 = por %p114, %p115
      %s118 = sadd.s32 %s117, 1
      %p121 = scmp.eq.s32.totalorder %s15, 1
      %p122 = scmp.ne.s32.totalorder %s117, %s119
      %p123 = scmp.eq.s32.totalorder %s15, 0
      %p124 = por %p122, %p123
      %p125 = scmp.ne.s32.totalorder %s117, %s119
      %p126 = scmp.eq.s32.totalorder %s20, 1
      %p127 = por %p125, %p126
      %p128 = scmp.ne.s32.totalorder %s119, %s120
      %p129 = scmp.eq.s32.totalorder %s20, 0
      %p130 = por %p128, %p129
      %p131 = scmp.ne.s32.totalorder %s119, %s120
      %p132 = scmp.eq.s32.totalorder %s21, 1
      %p133 = por %p131, %p132
      %p135 = scmp.ne.s32.totalorder %s120, %s134
      %p136 = scmp.eq.s32.totalorder %s21, 0
      %p137 = por %p135, %p136
      %s139 = sadd.s32 %s138, 1
      %p142 = scmp.eq.s32.totalorder %s15, 1
      %p143 = scmp.ne.s32.totalorder %s138, %s140
      %p144 = scmp.eq.s32.totalorder %s15, 0
      %p145 = por %p143, %p144
      %p146 = scmp.ne.s32.totalorder %s138, %s140
      %p147 = scmp.eq.s32.totalorder %s20, 1
      %p148 = por %p146, %p147
      %p149 = scmp.ne.s32.totalorder %s140, %s141
      %p150 = scmp.eq.s32.totalorder %s20, 0
      %p151 = por %p149, %p150
      %p152 = scmp.ne.s32.totalorder %s140, %s141
      %p153 = scmp.eq.s32.totalorder %s21, 1
      %p154 = por %p152, %p153
      %p156 = scmp.ne.s32.totalorder %s141, %s155
      %p157 = scmp.eq.s32.totalorder %s21, 0
      %p158 = por %p156, %p157
      %s160 = sadd.s32 %s159, 1
      %p163 = scmp.eq.s32.totalorder %s15, 1
      %p164 = scmp.ne.s32.totalorder %s159, %s161
      %p165 = scmp.eq.s32.totalorder %s15, 0
      %p166 = por %p164, %p165
      %p167 = scmp.ne.s32.totalorder %s159, %s161
      %p168 = scmp.eq.s32.totalorder %s20, 1
      %p169 = por %p167, %p168
      %p170 = scmp.ne.s32.totalorder %s161, %s162
      %p171 = scmp.eq.s32.totalorder %s20, 0
      %p172 = por %p170, %p171
      %p173 = scmp.ne.s32.totalorder %s161, %s162
      %p174 = scmp.eq.s32.totalorder %s21, 1
      %p175 = por %p173, %p174
      %p177 = scmp.ne.s32.totalorder %s162, %s176
      %p178 = scmp.eq.s32.totalorder %s21, 0
      %p179 = por %p177, %p178
      %s181 = sadd.s32 %s180, 1
      %p184 = scmp.eq.s32.totalorder %s15, 1
      %p185 = scmp.ne.s32.totalorder %s180, %s182
      %p186 = scmp.eq.s32.totalorder %s15, 0
      %p187 = por %p185, %p186
      %p188 = scmp.ne.s32.totalorder %s180, %s182
      %p189 = scmp.eq.s32.totalorder %s20, 1
      %p190 = por %p188, %p189
      %p191 = scmp.ne.s32.totalorder %s182, %s183
      %p192 = scmp.eq.s32.totalorder %s20, 0
      %p193 = por %p191, %p192
      %p194 = scmp.ne.s32.totalorder %s182, %s183
      %p195 = scmp.eq.s32.totalorder %s21, 1
      %p196 = por %p194, %p195
      %p198 = scmp.ne.s32.totalorder %s183, %s197
      %p199 = scmp.eq.s32.totalorder %s21, 0
      %p200 = por %p198, %p199
      %s201 = ssub.s32 %s15, %s22
      %p202 = scmp.eq.s32.totalorder %s201, 0
      %s204 = sadd.s32 %s203, 1
      %s205 = scalar_select %p202, %s203, %s204
      %p208 = pneg %p202
      %p209 = scmp.eq.s32.totalorder %s15, 1
      %p210 = por %p208, %p209
      %p211 = scmp.ne.s32.totalorder %s203, %s206
      %p212 = scmp.eq.s32.totalorder %s15, 0
      %p213 = por %p211, %p212
      %p214 = scmp.ne.s32.totalorder %s203, %s206
      %p215 = scmp.eq.s32.totalorder %s20, 1
      %p216 = por %p214, %p215
      %p217 = scmp.ne.s32.totalorder %s206, %s207
      %p218 = scmp.eq.s32.totalorder %s20, 0
      %p219 = por %p217, %p218
      %p220 = scmp.ne.s32.totalorder %s206, %s207
      %p221 = scmp.eq.s32.totalorder %s21, 1
      %p222 = por %p220, %p221
      %p224 = scmp.ne.s32.totalorder %s207, %s223
      %p225 = scmp.eq.s32.totalorder %s21, 0
      %p226 = por %p224, %p225
      %p227 = scmp.le.s32.totalorder 1, %s15
      %p228 = scmp.lt.s32.totalorder %s15, 3
      %p229 = pnand %p227, %p228
      %p230 = pneg %p229
      // Predicated region
      $region9: #{text_encoder_forward.7} parent=5 // pred_check
        _
      $region10: #{text_encoder_forward.7} parent=5 // pred_check_branch
        %232 = sbr.rel (%p229) target = $region12
      $region11: #{text_encoder_forward.7} parent=5 // pred_region
        %s233 = ssub.s32 %s15, 1
        // Predicated region
        $region13: #{text_encoder_forward.7} parent=11 // pred_check
          %p234 = pneg %p88
        $region14: #{text_encoder_forward.7} parent=11 // pred_check_branch
          %236 = sbr.rel (%p234) target = $region16
        $region15: #{text_encoder_forward.7} parent=11 // pred_region
          %s238 = ssub.s32 12288, 12288
          %239 = vsyncadd [#allocation3], %s238
          %s240 = sshll.u32 [#allocation2], 4
          %s241 = int_to_ptr.vmem [resolvable:$true] %s240
          %246 = dma.hbm_to_vmem [thread:$0]  %s2, 12288, %s241, [#allocation3], 384, 384, 24
        $region16: #{text_encoder_forward.7} parent=11 // pred_fallthru
          _
        // Predicated region
        $region17: #{text_encoder_forward.7} parent=11 // pred_check
          %p247 = pneg %p109
        $region18: #{text_encoder_forward.7} parent=11 // pred_check_branch
          %249 = sbr.rel (%p247) target = $region20
        $region19: #{text_encoder_forward.7} parent=11 // pred_region
          _
        $region20: #{text_encoder_forward.7} parent=11 // pred_fallthru
          _
        // Predicated region
        $region21: #{text_encoder_forward.7} parent=11 // pred_check
          %p250 = pneg %p130
        $region22: #{text_encoder_forward.7} parent=11 // pred_check_branch
          %252 = sbr.rel (%p250) target = $region24
        $region23: #{text_encoder_forward.7} parent=11 // pred_region
          _
        $region24: #{text_encoder_forward.7} parent=11 // pred_fallthru
          _
        // Predicated region
        $region25: #{text_encoder_forward.7} parent=11 // pred_check
          %p253 = pneg %p151
        $region26: #{text_encoder_forward.7} parent=11 // pred_check_branch
          %255 = sbr.rel (%p253) target = $region28
        $region27: #{text_encoder_forward.7} parent=11 // pred_region
          _
        $region28: #{text_encoder_forward.7} parent=11 // pred_fallthru
          _
        // Predicated region
        $region29: #{text_encoder_forward.7} parent=11 // pred_check
          %p256 = pneg %p172
        $region30: #{text_encoder_forward.7} parent=11 // pred_check_branch
          %258 = sbr.rel (%p256) target = $region32
        $region31: #{text_encoder_forward.7} parent=11 // pred_region
          _
        $region32: #{text_encoder_forward.7} parent=11 // pred_fallthru
          _
        // Predicated region
        $region33: #{text_encoder_forward.7} parent=11 // pred_check
          %p259 = pneg %p193
        $region34: #{text_encoder_forward.7} parent=11 // pred_check_branch
          %261 = sbr.rel (%p259) target = $region36
        $region35: #{text_encoder_forward.7} parent=11 // pred_region
          _
        $region36: #{text_encoder_forward.7} parent=11 // pred_fallthru
          _
      $region12: #{text_encoder_forward.7} parent=5 // pred_fallthru
        _
      %p262 = scmp.lt.s32.totalorder %s15, 2
      // Predicated region
      $region37: #{text_encoder_forward.7} parent=5 // pred_check
        %p263 = pneg %p262
      $region38: #{text_encoder_forward.7} parent=5 // pred_check_branch
        %265 = sbr.rel (%p263) target = $region40
      $region39: #{text_encoder_forward.7} parent=5 // pred_region
        // Predicated region
        $region41: #{text_encoder_forward.7} parent=39 // pred_check
          %p266 = pneg %p35
        $region42: #{text_encoder_forward.7} parent=39 // pred_check_branch
          %268 = sbr.rel (%p266) target = $region44
        $region43: #{text_encoder_forward.7} parent=39 // pred_region
          %p269 = scmp.lt.s32.totalorder %s15, 1
          %s270 = scalar_select %p269, %s15, 1
          %s271 = smul.addr %s270, 2
          %s272 = smul.addr %s271, 4
          %s273 = scalar_lea.vmem %s0, %s272
        $region44: #{text_encoder_forward.7} parent=39 // pred_fallthru
          _
        // Predicated region
        $region45: #{text_encoder_forward.7} parent=39 // pred_check
          %p274 = pneg %p61
        $region46: #{text_encoder_forward.7} parent=39 // pred_check_branch
          %276 = sbr.rel (%p274) target = $region48
        $region47: #{text_encoder_forward.7} parent=39 // pred_region
          %p277 = scmp.lt.s32.totalorder %s15, 1
          %s278 = scalar_select %p277, %s15, 1
          %s279 = scalar_lea.vmem %s1, %s278
        $region48: #{text_encoder_forward.7} parent=39 // pred_fallthru
          _
      $region40: #{text_encoder_forward.7} parent=5 // pred_fallthru
        _
      %p280 = scmp.le.s32.totalorder 1, %s15
      %p281 = scmp.lt.s32.totalorder %s15, 3
      %p282 = pnand %p280, %p281
      %p283 = pneg %p282
      // Predicated region
      $region49: #{text_encoder_forward.7} parent=5 // pred_check
        _
      $region50: #{text_encoder_forward.7} parent=5 // pred_check_branch
        %285 = sbr.rel (%p282) target = $region52
      $region51: #{text_encoder_forward.7} parent=5 // pred_region
        %s286 = ssub.s32 %s15, 1
        // Predicated region
        $region53: #{text_encoder_forward.7} parent=51 // pred_check
          %p287 = pneg %p88
        $region54: #{text_encoder_forward.7} parent=51 // pred_check_branch
          %289 = sbr.rel (%p287) target = $region56
        $region55: #{text_encoder_forward.7} parent=51 // pred_region
          %290 = dma.done [#allocation3], 12288
        $region56: #{text_encoder_forward.7} parent=51 // pred_fallthru
          _
        %p291 = scmp.lt.s32.totalorder %s20, 1
        %s292 = scalar_select %p291, %s20, 1
        %s293 = smul.addr %s292, 2
        %s294 = smul.addr %s293, 4
        %s295 = scalar_lea.vmem %s0, %s294
        %p296 = pneg %p41
        %p297 = pneg %p38
        %p298 = scmp.lt.s32.totalorder %s20, 1
        %s299 = scalar_select %p298, %s20, 1
        %s300 = scalar_lea.vmem %s1, %s299
        %p301 = pneg %p67
        %p302 = pneg %p64
        %p303 = pneg %p88
        %p304 = pneg %p85
        %p305 = pneg %p109
        %p306 = pneg %p106
        %p307 = pneg %p130
        %p308 = pneg %p127
        %p309 = pneg %p151
        %p310 = pneg %p148
        %p311 = pneg %p172
        %p312 = pneg %p169
        %p313 = pneg %p193
        %p314 = pneg %p190
        %p315 = pneg %p219
        %p316 = pneg %p216
        %p317 = scmp.lt.s32.totalorder %s20, 1
        %s318 = scalar_select %p317, %s20, 1
        %s319 = smul.addr %s318, 2
        %s320 = smul.addr %s319, 4
        %s321 = scalar_lea.vmem %s8, %s320
        %p322 = scmp.lt.s32.totalorder %s20, 1
        %s323 = scalar_select %p322, %s20, 1
        %s324 = smul.addr %s323, 2
        %s325 = smul.addr %s324, 4
        %s326 = scalar_lea.vmem %s0, %s325
        %p327 = scmp.lt.s32.totalorder %s20, 1
        %s328 = scalar_select %p327, %s20, 1
        %s329 = scalar_lea.vmem %s1, %s328
        %p330 = scmp.lt.s32.totalorder %s20, 1
        %s331 = scalar_select %p330, %s20, 1
        %s332 = smul.addr %s331, 2
        %s333 = smul.addr %s332, 4
        %s334 = scalar_lea.vmem %s8, %s333
        %v336 = vld [vmem:[%s326] sm:$0xff]
        %v337 = vld [vmem:[#allocation2] sm:$0xff]
        %v338 = vld [vmem:[#allocation2 + $0x8] sm:$0xff]
        %v339 = vld [vmem:[#allocation2 + $0x10] sm:$0xff]
        %v340 = vld [vmem:[#allocation2 + $0x18] sm:$0xff]
        %v341 = vld [vmem:[#allocation2 + $0x20] sm:$0xff]
        %v342 = vld [vmem:[#allocation2 + $0x28] sm:$0xff]
        %v343 = vld [vmem:[#allocation2 + $0x30] sm:$0xff]
        %v344 = vld [vmem:[#allocation2 + $0x38] sm:$0xff]
        %v345 = vld [vmem:[#allocation2 + $0x40] sm:$0xff]
        %v346 = vld [vmem:[#allocation2 + $0x48] sm:$0xff]
        %v347 = vld [vmem:[#allocation2 + $0x50] sm:$0xff]
        %v348 = vld [vmem:[#allocation2 + $0x58] sm:$0xff]
        %v349 = vld [vmem:[#allocation2 + $0x60] sm:$0xff]
        %v350 = vld [vmem:[#allocation2 + $0x68] sm:$0xff]
        %v351 = vld [vmem:[#allocation2 + $0x70] sm:$0xff]
        %v352 = vld [vmem:[#allocation2 + $0x78] sm:$0xff]
        %v353 = vld [vmem:[#allocation2 + $0x80] sm:$0xff]
        %v354 = vld [vmem:[#allocation2 + $0x88] sm:$0xff]
        %v355 = vld [vmem:[#allocation2 + $0x90] sm:$0xff]
        %v356 = vld [vmem:[#allocation2 + $0x98] sm:$0xff]
        %v357 = vld [vmem:[#allocation2 + $0xa0] sm:$0xff]
        %v358 = vld [vmem:[#allocation2 + $0xa8] sm:$0xff]
        %v359 = vld [vmem:[#allocation2 + $0xb0] sm:$0xff]
        %v360 = vld [vmem:[#allocation2 + $0xb8] sm:$0xff]
        %v361 = vld [vmem:[#allocation2 + $0xc0] sm:$0xff]
        %v362 = vld [vmem:[#allocation2 + $0xc8] sm:$0xff]
        %v363 = vld [vmem:[#allocation2 + $0xd0] sm:$0xff]
        %v364 = vld [vmem:[#allocation2 + $0xd8] sm:$0xff]
        %v365 = vld [vmem:[#allocation2 + $0xe0] sm:$0xff]
        %v366 = vld [vmem:[#allocation2 + $0xe8] sm:$0xff]
        %v367 = vld [vmem:[#allocation2 + $0xf0] sm:$0xff]
        %v368 = vld [vmem:[#allocation2 + $0xf8] sm:$0xff]
        %v369 = vld [vmem:[#allocation2 + $0x100] sm:$0xff]
        %v370 = vld [vmem:[#allocation2 + $0x108] sm:$0xff]
        %v371 = vld [vmem:[#allocation2 + $0x110] sm:$0xff]
        %v372 = vld [vmem:[#allocation2 + $0x118] sm:$0xff]
        %v373 = vld [vmem:[#allocation2 + $0x120] sm:$0xff]
        %v374 = vld [vmem:[#allocation2 + $0x128] sm:$0xff]
        %v375 = vld [vmem:[#allocation2 + $0x130] sm:$0xff]
        %v376 = vld [vmem:[#allocation2 + $0x138] sm:$0xff]
        %v377 = vld [vmem:[#allocation2 + $0x140] sm:$0xff]
        %v378 = vld [vmem:[#allocation2 + $0x148] sm:$0xff]
        %v379 = vld [vmem:[#allocation2 + $0x150] sm:$0xff]
        %v380 = vld [vmem:[#allocation2 + $0x158] sm:$0xff]
        %v381 = vld [vmem:[#allocation2 + $0x160] sm:$0xff]
        %v382 = vld [vmem:[#allocation2 + $0x168] sm:$0xff]
        %v383 = vld [vmem:[#allocation2 + $0x170] sm:$0xff]
        %v384 = vld [vmem:[#allocation2 + $0x178] sm:$0xff]
        %v385 = vld [vmem:[#allocation2 + $0x180] sm:$0xff]
        %v386 = vld [vmem:[#allocation2 + $0x188] sm:$0xff]
        %v387 = vld [vmem:[#allocation2 + $0x190] sm:$0xff]
        %v388 = vld [vmem:[#allocation2 + $0x198] sm:$0xff]
        %v389 = vld [vmem:[#allocation2 + $0x1a0] sm:$0xff]
        %v390 = vld [vmem:[#allocation2 + $0x1a8] sm:$0xff]
        %v391 = vld [vmem:[#allocation2 + $0x1b0] sm:$0xff]
        %v392 = vld [vmem:[#allocation2 + $0x1b8] sm:$0xff]
        %v393 = vld [vmem:[#allocation2 + $0x1c0] sm:$0xff]
        %v394 = vld [vmem:[#allocation2 + $0x1c8] sm:$0xff]
        %v395 = vld [vmem:[#allocation2 + $0x1d0] sm:$0xff]
        %v396 = vld [vmem:[#allocation2 + $0x1d8] sm:$0xff]
        %v397 = vld [vmem:[#allocation2 + $0x1e0] sm:$0xff]
        %v398 = vld [vmem:[#allocation2 + $0x1e8] sm:$0xff]
        %v399 = vld [vmem:[#allocation2 + $0x1f0] sm:$0xff]
        %v400 = vld [vmem:[#allocation2 + $0x1f8] sm:$0xff]
        %v401 = vld [vmem:[#allocation2 + $0x200] sm:$0xff]
        %v402 = vld [vmem:[#allocation2 + $0x208] sm:$0xff]
        %v403 = vld [vmem:[#allocation2 + $0x210] sm:$0xff]
        %v404 = vld [vmem:[#allocation2 + $0x218] sm:$0xff]
        %v405 = vld [vmem:[#allocation2 + $0x220] sm:$0xff]
        %v406 = vld [vmem:[#allocation2 + $0x228] sm:$0xff]
        %v407 = vld [vmem:[#allocation2 + $0x230] sm:$0xff]
        %v408 = vld [vmem:[#allocation2 + $0x238] sm:$0xff]
        %v409 = vld [vmem:[#allocation2 + $0x240] sm:$0xff]
        %v410 = vld [vmem:[#allocation2 + $0x248] sm:$0xff]
        %v411 = vld [vmem:[#allocation2 + $0x250] sm:$0xff]
        %v412 = vld [vmem:[#allocation2 + $0x258] sm:$0xff]
        %v413 = vld [vmem:[#allocation2 + $0x260] sm:$0xff]
        %v414 = vld [vmem:[#allocation2 + $0x268] sm:$0xff]
        %v415 = vld [vmem:[#allocation2 + $0x270] sm:$0xff]
        %v416 = vld [vmem:[#allocation2 + $0x278] sm:$0xff]
        %v417 = vld [vmem:[#allocation2 + $0x280] sm:$0xff]
        %v418 = vld [vmem:[#allocation2 + $0x288] sm:$0xff]
        %v419 = vld [vmem:[#allocation2 + $0x290] sm:$0xff]
        %v420 = vld [vmem:[#allocation2 + $0x298] sm:$0xff]
        %v421 = vld [vmem:[#allocation2 + $0x2a0] sm:$0xff]
        %v422 = vld [vmem:[#allocation2 + $0x2a8] sm:$0xff]
        %v423 = vld [vmem:[#allocation2 + $0x2b0] sm:$0xff]
        %v424 = vld [vmem:[#allocation2 + $0x2b8] sm:$0xff]
        %v425 = vld [vmem:[#allocation2 + $0x2c0] sm:$0xff]
        %v426 = vld [vmem:[#allocation2 + $0x2c8] sm:$0xff]
        %v427 = vld [vmem:[#allocation2 + $0x2d0] sm:$0xff]
        %v428 = vld [vmem:[#allocation2 + $0x2d8] sm:$0xff]
        %v429 = vld [vmem:[#allocation2 + $0x2e0] sm:$0xff]
        %v430 = vld [vmem:[#allocation2 + $0x2e8] sm:$0xff]
        %v431 = vld [vmem:[#allocation2 + $0x2f0] sm:$0xff]
        %v432 = vld [vmem:[#allocation2 + $0x2f8] sm:$0xff]
        %v433 = vld [vmem:[%s3] sm:$0x3f]
        %v435 = vlaneseq
        %v436 = vshrl.u32 %v435, 7
        %v437 = vsub.s32 0, %v436
        %v438 = vrot.slane %v433, %v437
        %v439 = vlaneseq
        %v440 = vshrl.u32 %v439, 7
        %v441 = vsub.s32 1, %v440
        %v442 = vrot.slane %v433, %v441
        %v443 = vlaneseq
        %v444 = vshrl.u32 %v443, 7
        %v445 = vsub.s32 2, %v444
        %v446 = vrot.slane %v433, %v445
        %v447 = vlaneseq
        %v448 = vshrl.u32 %v447, 7
        %v449 = vsub.s32 3, %v448
        %v450 = vrot.slane %v433, %v449
        %v451 = vlaneseq
        %v452 = vshrl.u32 %v451, 7
        %v453 = vsub.s32 4, %v452
        %v454 = vrot.slane %v433, %v453
        %v455 = vlaneseq
        %v456 = vshrl.u32 %v455, 7
        %v457 = vsub.s32 5, %v456
        %v458 = vrot.slane %v433, %v457
        %v466 = vunpack.c.l.b16 %v336
        %v467 = vunpack.c.h.b16 %v336
        %v468 = vpack.c.b16 %v466, %v466
        %v469 = vpack.c.b16 %v467, %v467
        %v568 = vunpack.c.l.b16 %v337
        %v569 = vunpack.c.h.b16 %v337
        %v570 = vunpack.c.l.b16 %v338
        %v571 = vunpack.c.h.b16 %v338
        %v572 = vunpack.c.l.b16 %v339
        %v573 = vunpack.c.h.b16 %v339
        %v574 = vunpack.c.l.b16 %v340
        %v575 = vunpack.c.h.b16 %v340
        %v576 = vunpack.c.l.b16 %v341
        %v577 = vunpack.c.h.b16 %v341
        %v578 = vunpack.c.l.b16 %v342
        %v579 = vunpack.c.h.b16 %v342
        %v580 = vunpack.c.l.b16 %v343
        %v581 = vunpack.c.h.b16 %v343
        %v582 = vunpack.c.l.b16 %v344
        %v583 = vunpack.c.h.b16 %v344
        %v584 = vunpack.c.l.b16 %v345
        %v585 = vunpack.c.h.b16 %v345
        %v586 = vunpack.c.l.b16 %v346
        %v587 = vunpack.c.h.b16 %v346
        %v588 = vunpack.c.l.b16 %v347
        %v589 = vunpack.c.h.b16 %v347
        %v590 = vunpack.c.l.b16 %v348
        %v591 = vunpack.c.h.b16 %v348
        %v592 = vunpack.c.l.b16 %v349
        %v593 = vunpack.c.h.b16 %v349
        %v594 = vunpack.c.l.b16 %v350
        %v595 = vunpack.c.h.b16 %v350
        %v596 = vunpack.c.l.b16 %v351
        %v597 = vunpack.c.h.b16 %v351
        %v598 = vunpack.c.l.b16 %v352
        %v599 = vunpack.c.h.b16 %v352
        %v600 = vunpack.c.l.b16 %v353
        %v601 = vunpack.c.h.b16 %v353
        %v602 = vunpack.c.l.b16 %v354
        %v603 = vunpack.c.h.b16 %v354
        %v604 = vunpack.c.l.b16 %v355
        %v605 = vunpack.c.h.b16 %v355
        %v606 = vunpack.c.l.b16 %v356
        %v607 = vunpack.c.h.b16 %v356
        %v608 = vunpack.c.l.b16 %v357
        %v609 = vunpack.c.h.b16 %v357
        %v610 = vunpack.c.l.b16 %v358
        %v611 = vunpack.c.h.b16 %v358
        %v612 = vunpack.c.l.b16 %v359
        %v613 = vunpack.c.h.b16 %v359
        %v614 = vunpack.c.l.b16 %v360
        %v615 = vunpack.c.h.b16 %v360
        %v616 = vunpack.c.l.b16 %v361
        %v617 = vunpack.c.h.b16 %v361
        %v618 = vunpack.c.l.b16 %v362
        %v619 = vunpack.c.h.b16 %v362
        %v620 = vunpack.c.l.b16 %v363
        %v621 = vunpack.c.h.b16 %v363
        %v622 = vunpack.c.l.b16 %v364
        %v623 = vunpack.c.h.b16 %v364
        %v624 = vunpack.c.l.b16 %v365
        %v625 = vunpack.c.h.b16 %v365
        %v626 = vunpack.c.l.b16 %v366
        %v627 = vunpack.c.h.b16 %v366
        %v628 = vunpack.c.l.b16 %v367
        %v629 = vunpack.c.h.b16 %v367
        %v630 = vunpack.c.l.b16 %v368
        %v631 = vunpack.c.h.b16 %v368
        %v632 = vunpack.c.l.b16 %v369
        %v633 = vunpack.c.h.b16 %v369
        %v634 = vunpack.c.l.b16 %v370
        %v635 = vunpack.c.h.b16 %v370
        %v636 = vunpack.c.l.b16 %v371
        %v637 = vunpack.c.h.b16 %v371
        %v638 = vunpack.c.l.b16 %v372
        %v639 = vunpack.c.h.b16 %v372
        %v640 = vunpack.c.l.b16 %v373
        %v641 = vunpack.c.h.b16 %v373
        %v642 = vunpack.c.l.b16 %v374
        %v643 = vunpack.c.h.b16 %v374
        %v644 = vunpack.c.l.b16 %v375
        %v645 = vunpack.c.h.b16 %v375
        %v646 = vunpack.c.l.b16 %v376
        %v647 = vunpack.c.h.b16 %v376
        %v648 = vunpack.c.l.b16 %v377
        %v649 = vunpack.c.h.b16 %v377
        %v650 = vunpack.c.l.b16 %v378
        %v651 = vunpack.c.h.b16 %v378
        %v652 = vunpack.c.l.b16 %v379
        %v653 = vunpack.c.h.b16 %v379
        %v654 = vunpack.c.l.b16 %v380
        %v655 = vunpack.c.h.b16 %v380
        %v656 = vunpack.c.l.b16 %v381
        %v657 = vunpack.c.h.b16 %v381
        %v658 = vunpack.c.l.b16 %v382
        %v659 = vunpack.c.h.b16 %v382
        %v660 = vunpack.c.l.b16 %v383
        %v661 = vunpack.c.h.b16 %v383
        %v662 = vunpack.c.l.b16 %v384
        %v663 = vunpack.c.h.b16 %v384
        %v664 = vunpack.c.l.b16 %v385
        %v665 = vunpack.c.h.b16 %v385
        %v666 = vunpack.c.l.b16 %v386
        %v667 = vunpack.c.h.b16 %v386
        %v668 = vunpack.c.l.b16 %v387
        %v669 = vunpack.c.h.b16 %v387
        %v670 = vunpack.c.l.b16 %v388
        %v671 = vunpack.c.h.b16 %v388
        %v672 = vunpack.c.l.b16 %v389
        %v673 = vunpack.c.h.b16 %v389
        %v674 = vunpack.c.l.b16 %v390
        %v675 = vunpack.c.h.b16 %v390
        %v676 = vunpack.c.l.b16 %v391
        %v677 = vunpack.c.h.b16 %v391
        %v678 = vunpack.c.l.b16 %v392
        %v679 = vunpack.c.h.b16 %v392
        %v680 = vunpack.c.l.b16 %v393
        %v681 = vunpack.c.h.b16 %v393
        %v682 = vunpack.c.l.b16 %v394
        %v683 = vunpack.c.h.b16 %v394
        %v684 = vunpack.c.l.b16 %v395
        %v685 = vunpack.c.h.b16 %v395
        %v686 = vunpack.c.l.b16 %v396
        %v687 = vunpack.c.h.b16 %v396
        %v688 = vunpack.c.l.b16 %v397
        %v689 = vunpack.c.h.b16 %v397
        %v690 = vunpack.c.l.b16 %v398
        %v691 = vunpack.c.h.b16 %v398
        %v692 = vunpack.c.l.b16 %v399
        %v693 = vunpack.c.h.b16 %v399
        %v694 = vunpack.c.l.b16 %v400
        %v695 = vunpack.c.h.b16 %v400
        %v696 = vunpack.c.l.b16 %v401
        %v697 = vunpack.c.h.b16 %v401
        %v698 = vunpack.c.l.b16 %v402
        %v699 = vunpack.c.h.b16 %v402
        %v700 = vunpack.c.l.b16 %v403
        %v701 = vunpack.c.h.b16 %v403
        %v702 = vunpack.c.l.b16 %v404
        %v703 = vunpack.c.h.b16 %v404
        %v704 = vunpack.c.l.b16 %v405
        %v705 = vunpack.c.h.b16 %v405
        %v706 = vunpack.c.l.b16 %v406
        %v707 = vunpack.c.h.b16 %v406
        %v708 = vunpack.c.l.b16 %v407
        %v709 = vunpack.c.h.b16 %v407
        %v710 = vunpack.c.l.b16 %v408
        %v711 = vunpack.c.h.b16 %v408
        %v712 = vunpack.c.l.b16 %v409
        %v713 = vunpack.c.h.b16 %v409
        %v714 = vunpack.c.l.b16 %v410
        %v715 = vunpack.c.h.b16 %v410
        %v716 = vunpack.c.l.b16 %v411
        %v717 = vunpack.c.h.b16 %v411
        %v718 = vunpack.c.l.b16 %v412
        %v719 = vunpack.c.h.b16 %v412
        %v720 = vunpack.c.l.b16 %v413
        %v721 = vunpack.c.h.b16 %v413
        %v722 = vunpack.c.l.b16 %v414
        %v723 = vunpack.c.h.b16 %v414
        %v724 = vunpack.c.l.b16 %v415
        %v725 = vunpack.c.h.b16 %v415
        %v726 = vunpack.c.l.b16 %v416
        %v727 = vunpack.c.h.b16 %v416
        %v728 = vunpack.c.l.b16 %v417
        %v729 = vunpack.c.h.b16 %v417
        %v730 = vunpack.c.l.b16 %v418
        %v731 = vunpack.c.h.b16 %v418
        %v732 = vunpack.c.l.b16 %v419
        %v733 = vunpack.c.h.b16 %v419
        %v734 = vunpack.c.l.b16 %v420
        %v735 = vunpack.c.h.b16 %v420
        %v736 = vunpack.c.l.b16 %v421
        %v737 = vunpack.c.h.b16 %v421
        %v738 = vunpack.c.l.b16 %v422
        %v739 = vunpack.c.h.b16 %v422
        %v740 = vunpack.c.l.b16 %v423
        %v741 = vunpack.c.h.b16 %v423
        %v742 = vunpack.c.l.b16 %v424
        %v743 = vunpack.c.h.b16 %v424
        %v744 = vunpack.c.l.b16 %v425
        %v745 = vunpack.c.h.b16 %v425
        %v746 = vunpack.c.l.b16 %v426
        %v747 = vunpack.c.h.b16 %v426
        %v748 = vunpack.c.l.b16 %v427
        %v749 = vunpack.c.h.b16 %v427
        %v750 = vunpack.c.l.b16 %v428
        %v751 = vunpack.c.h.b16 %v428
        %v752 = vunpack.c.l.b16 %v429
        %v753 = vunpack.c.h.b16 %v429
        %v754 = vunpack.c.l.b16 %v430
        %v755 = vunpack.c.h.b16 %v430
        %v756 = vunpack.c.l.b16 %v431
        %v757 = vunpack.c.h.b16 %v431
        %v758 = vunpack.c.l.b16 %v432
        %v759 = vunpack.c.h.b16 %v432
        %v760 = vpack.c.b16 %v574, %v568
        %v761 = vpack.c.b16 %v575, %v569
        %v762 = vpack.c.b16 %v576, %v570
        %v763 = vpack.c.b16 %v577, %v571
        %v764 = vpack.c.b16 %v578, %v572
        %v765 = vpack.c.b16 %v579, %v573
        %v766 = vpack.c.b16 %v586, %v580
        %v767 = vpack.c.b16 %v587, %v581
        %v768 = vpack.c.b16 %v588, %v582
        %v769 = vpack.c.b16 %v589, %v583
        %v770 = vpack.c.b16 %v590, %v584
        %v771 = vpack.c.b16 %v591, %v585
        %v772 = vpack.c.b16 %v598, %v592
        %v773 = vpack.c.b16 %v599, %v593
        %v774 = vpack.c.b16 %v600, %v594
        %v775 = vpack.c.b16 %v601, %v595
        %v776 = vpack.c.b16 %v602, %v596
        %v777 = vpack.c.b16 %v603, %v597
        %v778 = vpack.c.b16 %v610, %v604
        %v779 = vpack.c.b16 %v611, %v605
        %v780 = vpack.c.b16 %v612, %v606
        %v781 = vpack.c.b16 %v613, %v607
        %v782 = vpack.c.b16 %v614, %v608
        %v783 = vpack.c.b16 %v615, %v609
        %v784 = vpack.c.b16 %v622, %v616
        %v785 = vpack.c.b16 %v623, %v617
        %v786 = vpack.c.b16 %v624, %v618
        %v787 = vpack.c.b16 %v625, %v619
        %v788 = vpack.c.b16 %v626, %v620
        %v789 = vpack.c.b16 %v627, %v621
        %v790 = vpack.c.b16 %v634, %v628
        %v791 = vpack.c.b16 %v635, %v629
        %v792 = vpack.c.b16 %v636, %v630
        %v793 = vpack.c.b16 %v637, %v631
        %v794 = vpack.c.b16 %v638, %v632
        %v795 = vpack.c.b16 %v639, %v633
        %v796 = vpack.c.b16 %v646, %v640
        %v797 = vpack.c.b16 %v647, %v641
        %v798 = vpack.c.b16 %v648, %v642
        %v799 = vpack.c.b16 %v649, %v643
        %v800 = vpack.c.b16 %v650, %v644
        %v801 = vpack.c.b16 %v651, %v645
        %v802 = vpack.c.b16 %v658, %v652
        %v803 = vpack.c.b16 %v659, %v653
        %v804 = vpack.c.b16 %v660, %v654
        %v805 = vpack.c.b16 %v661, %v655
        %v806 = vpack.c.b16 %v662, %v656
        %v807 = vpack.c.b16 %v663, %v657
        %v808 = vpack.c.b16 %v670, %v664
        %v809 = vpack.c.b16 %v671, %v665
        %v810 = vpack.c.b16 %v672, %v666
        %v811 = vpack.c.b16 %v673, %v667
        %v812 = vpack.c.b16 %v674, %v668
        %v813 = vpack.c.b16 %v675, %v669
        %v814 = vpack.c.b16 %v682, %v676
        %v815 = vpack.c.b16 %v683, %v677
        %v816 = vpack.c.b16 %v684, %v678
        %v817 = vpack.c.b16 %v685, %v679
        %v818 = vpack.c.b16 %v686, %v680
        %v819 = vpack.c.b16 %v687, %v681
        %v820 = vpack.c.b16 %v694, %v688
        %v821 = vpack.c.b16 %v695, %v689
        %v822 = vpack.c.b16 %v696, %v690
        %v823 = vpack.c.b16 %v697, %v691
        %v824 = vpack.c.b16 %v698, %v692
        %v825 = vpack.c.b16 %v699, %v693
        %v826 = vpack.c.b16 %v706, %v700
        %v827 = vpack.c.b16 %v707, %v701
        %v828 = vpack.c.b16 %v708, %v702
        %v829 = vpack.c.b16 %v709, %v703
        %v830 = vpack.c.b16 %v710, %v704
        %v831 = vpack.c.b16 %v711, %v705
        %v832 = vpack.c.b16 %v718, %v712
        %v833 = vpack.c.b16 %v719, %v713
        %v834 = vpack.c.b16 %v720, %v714
        %v835 = vpack.c.b16 %v721, %v715
        %v836 = vpack.c.b16 %v722, %v716
        %v837 = vpack.c.b16 %v723, %v717
        %v838 = vpack.c.b16 %v730, %v724
        %v839 = vpack.c.b16 %v731, %v725
        %v840 = vpack.c.b16 %v732, %v726
        %v841 = vpack.c.b16 %v733, %v727
        %v842 = vpack.c.b16 %v734, %v728
        %v843 = vpack.c.b16 %v735, %v729
        %v844 = vpack.c.b16 %v742, %v736
        %v845 = vpack.c.b16 %v743, %v737
        %v846 = vpack.c.b16 %v744, %v738
        %v847 = vpack.c.b16 %v745, %v739
        %v848 = vpack.c.b16 %v746, %v740
        %v849 = vpack.c.b16 %v747, %v741
        %v850 = vpack.c.b16 %v754, %v748
        %v851 = vpack.c.b16 %v755, %v749
        %v852 = vpack.c.b16 %v756, %v750
        %v853 = vpack.c.b16 %v757, %v751
        %v854 = vpack.c.b16 %v758, %v752
        %v855 = vpack.c.b16 %v759, %v753
        %952 = vmatprep.subr.bf16.mxu0 %v803
        %953 = vmatpush1.bf16.msra.mxu0 %v802
        %954 = vmatprep.subr.bf16.mxu0 %v797
        %955 = vmatpush1.bf16.msra.mxu0 %v796
        %956 = vmatprep.subr.bf16.mxu0 %v791
        %957 = vmatpush1.bf16.msra.mxu0 %v790
        %958 = vmatprep.subr.bf16.mxu0 %v785
        %959 = vmatpush1.bf16.msra.mxu0 %v784
        %960 = vmatprep.subr.bf16.mxu0 %v779
        %961 = vmatpush1.bf16.msra.mxu0 %v778
        %962 = vmatprep.subr.bf16.mxu0 %v773
        %963 = vmatpush1.bf16.msra.mxu0 %v772
        %964 = vmatprep.subr.bf16.mxu0 %v767
        %965 = vmatpush1.bf16.msra.mxu0 %v766
        %966 = vmatprep.subr.bf16.mxu0 %v761
        %967 = vmatpush1.bf16.msra.mxu0 %v760
        %968 = vmatprep.subr.bf16.mxu0 %v851
        %969 = vmatpush2.bf16.msra.mxu0 %v850
        %970 = vmatprep.subr.bf16.mxu0 %v845
        %971 = vmatpush2.bf16.msra.mxu0 %v844
        %972 = vmatprep.subr.bf16.mxu0 %v839
        %973 = vmatpush2.bf16.msra.mxu0 %v838
        %974 = vmatprep.subr.bf16.mxu0 %v833
        %975 = vmatpush2.bf16.msra.mxu0 %v832
        %976 = vmatprep.subr.bf16.mxu0 %v827
        %977 = vmatpush2.bf16.msra.mxu0 %v826
        %978 = vmatprep.subr.bf16.mxu0 %v821
        %979 = vmatpush2.bf16.msra.mxu0 %v820
        %980 = vmatprep.subr.bf16.mxu0 %v815
        %981 = vmatpush2.bf16.msra.mxu0 %v814
        %982 = vmatprep.subr.bf16.mxu0 %v809
        %983 = vmatpush2.bf16.msra.mxu0 %v808
        %984 = vmatprep.mubr.bf16.mxu0 %v469
        %985 = vmatmul.mubr.bf16.gmra.mxu0 %v468
        %v986 = vpop.f32.mrf.mxu0
        %v987 = vadd.f32 %v438, %v986
        %v988 = vpop.f32.mrf.mxu0
        %v989 = vadd.f32 %v442, %v988
        %v990 = vpop.f32.mrf.mxu0
        %v991 = vpop.f32.mrf.mxu0
        %992 = vdwg.mxu0
        %993 = vmatprep.subr.bf16.mxu0 %v805
        %994 = vmatpush1.bf16.msra.mxu0 %v804
        %995 = vmatprep.subr.bf16.mxu0 %v799
        %996 = vmatpush1.bf16.msra.mxu0 %v798
        %997 = vmatprep.subr.bf16.mxu0 %v793
        %998 = vmatpush1.bf16.msra.mxu0 %v792
        %999 = vmatprep.subr.bf16.mxu0 %v787
        %1000 = vmatpush1.bf16.msra.mxu0 %v786
        %1001 = vmatprep.subr.bf16.mxu0 %v781
        %1002 = vmatpush1.bf16.msra.mxu0 %v780
        %1003 = vmatprep.subr.bf16.mxu0 %v775
        %1004 = vmatpush1.bf16.msra.mxu0 %v774
        %1005 = vmatprep.subr.bf16.mxu0 %v769
        %1006 = vmatpush1.bf16.msra.mxu0 %v768
        %1007 = vmatprep.subr.bf16.mxu0 %v763
        %1008 = vmatpush1.bf16.msra.mxu0 %v762
        %1009 = vmatprep.subr.bf16.mxu0 %v853
        %1010 = vmatpush2.bf16.msra.mxu0 %v852
        %1011 = vmatprep.subr.bf16.mxu0 %v847
        %1012 = vmatpush2.bf16.msra.mxu0 %v846
        %1013 = vmatprep.subr.bf16.mxu0 %v841
        %1014 = vmatpush2.bf16.msra.mxu0 %v840
        %1015 = vmatprep.subr.bf16.mxu0 %v835
        %1016 = vmatpush2.bf16.msra.mxu0 %v834
        %1017 = vmatprep.subr.bf16.mxu0 %v829
        %1018 = vmatpush2.bf16.msra.mxu0 %v828
        %1019 = vmatprep.subr.bf16.mxu0 %v823
        %1020 = vmatpush2.bf16.msra.mxu0 %v822
        %1021 = vmatprep.subr.bf16.mxu0 %v817
        %1022 = vmatpush2.bf16.msra.mxu0 %v816
        %1023 = vmatprep.subr.bf16.mxu0 %v811
        %1024 = vmatpush2.bf16.msra.mxu0 %v810
        %1025 = vmatprep.mubr.bf16.mxu0 %v469
        %1026 = vmatmul.mubr.bf16.gmra.mxu0 %v468
        %v1027 = vpop.f32.mrf.mxu0
        %v1028 = vadd.f32 %v446, %v1027
        %v1029 = vpop.f32.mrf.mxu0
        %v1030 = vadd.f32 %v450, %v1029
        %v1031 = vpop.f32.mrf.mxu0
        %v1032 = vpop.f32.mrf.mxu0
        %1033 = vdwg.mxu0
        %1034 = vmatprep.subr.bf16.mxu0 %v807
        %1035 = vmatpush1.bf16.msra.mxu0 %v806
        %1036 = vmatprep.subr.bf16.mxu0 %v801
        %1037 = vmatpush1.bf16.msra.mxu0 %v800
        %1038 = vmatprep.subr.bf16.mxu0 %v795
        %1039 = vmatpush1.bf16.msra.mxu0 %v794
        %1040 = vmatprep.subr.bf16.mxu0 %v789
        %1041 = vmatpush1.bf16.msra.mxu0 %v788
        %1042 = vmatprep.subr.bf16.mxu0 %v783
        %1043 = vmatpush1.bf16.msra.mxu0 %v782
        %1044 = vmatprep.subr.bf16.mxu0 %v777
        %1045 = vmatpush1.bf16.msra.mxu0 %v776
        %1046 = vmatprep.subr.bf16.mxu0 %v771
        %1047 = vmatpush1.bf16.msra.mxu0 %v770
        %1048 = vmatprep.subr.bf16.mxu0 %v765
        %1049 = vmatpush1.bf16.msra.mxu0 %v764
        %1050 = vmatprep.subr.bf16.mxu0 %v855
        %1051 = vmatpush2.bf16.msra.mxu0 %v854
        %1052 = vmatprep.subr.bf16.mxu0 %v849
        %1053 = vmatpush2.bf16.msra.mxu0 %v848
        %1054 = vmatprep.subr.bf16.mxu0 %v843
        %1055 = vmatpush2.bf16.msra.mxu0 %v842
        %1056 = vmatprep.subr.bf16.mxu0 %v837
        %1057 = vmatpush2.bf16.msra.mxu0 %v836
        %1058 = vmatprep.subr.bf16.mxu0 %v831
        %1059 = vmatpush2.bf16.msra.mxu0 %v830
        %1060 = vmatprep.subr.bf16.mxu0 %v825
        %1061 = vmatpush2.bf16.msra.mxu0 %v824
        %1062 = vmatprep.subr.bf16.mxu0 %v819
        %1063 = vmatpush2.bf16.msra.mxu0 %v818
        %1064 = vmatprep.subr.bf16.mxu0 %v813
        %1065 = vmatpush2.bf16.msra.mxu0 %v812
        %1066 = vmatprep.mubr.bf16.mxu0 %v469
        %1067 = vmatmul.mubr.bf16.gmra.mxu0 %v468
        %v1068 = vpop.f32.mrf.mxu0
        %v1069 = vadd.f32 %v454, %v1068
        %v1070 = vpop.f32.mrf.mxu0
        %v1071 = vadd.f32 %v458, %v1070
        %v1072 = vpop.f32.mrf.mxu0
        %v1073 = vpop.f32.mrf.mxu0
        %1074 = vdwg.mxu0
        %v1075 = vld [vmem:[%s329] sm:$0x1]
        %v1077 = vlaneseq
        %v1078 = vshrl.u32 %v1077, 7
        %v1079 = vsub.s32 0, %v1078
        %v1080 = vrot.slane %v1075, %v1079
        %v1082 = vpack.c.bf16 %v987, %v987
        %v1083 = vpack.c.bf16 %v1028, %v1028
        %v1084 = vpack.c.bf16 %v1069, %v1069
        %1085 = vmatprep.subr.bf16.mxu0 0
        %1086 = vmatpush1.bf16.xpose.msra.mxu0 0
        %1087 = vmatprep.subr.bf16.mxu0 0
        %1088 = vmatpush1.bf16.xpose.msra.mxu0 0
        %1089 = vmatprep.subr.bf16.mxu0 0
        %1090 = vmatpush1.bf16.xpose.msra.mxu0 0
        %1091 = vmatprep.subr.bf16.mxu0 0
        %1092 = vmatpush1.bf16.xpose.msra.mxu0 0
        %1093 = vmatprep.subr.bf16.mxu0 0
        %1094 = vmatpush1.bf16.xpose.msra.mxu0 0
        %1095 = vmatprep.subr.bf16.mxu0 0
        %1096 = vmatpush1.bf16.xpose.msra.mxu0 0
        %1097 = vmatprep.subr.bf16.mxu0 0
        %1098 = vmatpush1.bf16.xpose.msra.mxu0 0
        %1099 = vmatprep.subr.bf16.mxu0 0
        %1100 = vmatpush1.bf16.xpose.msra.mxu0 %v1083
        %1101 = vmatprep.subr.bf16.mxu0 0
        %1102 = vmatpush2.bf16.xpose.msra.mxu0 0
        %1103 = vmatprep.subr.bf16.mxu0 0
        %1104 = vmatpush2.bf16.xpose.msra.mxu0 0
        %1105 = vmatprep.subr.bf16.mxu0 0
        %1106 = vmatpush2.bf16.xpose.msra.mxu0 0
        %1107 = vmatprep.subr.bf16.mxu0 0
        %1108 = vmatpush2.bf16.xpose.msra.mxu0 0
        %1109 = vmatprep.subr.bf16.mxu0 0
        %1110 = vmatpush2.bf16.xpose.msra.mxu0 0
        %1111 = vmatprep.subr.bf16.mxu0 0
        %1112 = vmatpush2.bf16.xpose.msra.mxu0 0
        %1113 = vmatprep.subr.bf16.mxu0 0
        %1114 = vmatpush2.bf16.xpose.msra.mxu0 0
        %1115 = vmatprep.subr.bf16.mxu0 0
        %1116 = vmatpush2.bf16.xpose.msra.mxu0 0
        %1117 = vmatprep.mubr.bf16.mxu0 0
        %1118 = vmatmul.mubr.bf16.gmra.mxu0 %v1082
        %v1119 = vpop.f32.mrf.mxu0
        %v1120 = vadd.f32 0.0, %v1119
        %v1121 = vpop.f32.mrf.mxu0
        %v1122 = vpop.f32.mrf.mxu0
        %v1123 = vpop.f32.mrf.mxu0
        %1124 = vdwg.mxu0
        %v1125 = vmul.f32 %v1120, 0.088388346
        %v1126 = vadd.f32 %v1125, %v1080
        %vm1127 = vcmask 64512
        %v1128 = vsel %vm1127, %v1126, -inf
        %1129 = vmax.xlane.f32.xlu0 %v1128
        %v1130 = vpop.xlane.xlu0 %1129
        %v1131 = vsub.f32 %v1126, %v1130
        %v1132 = vmul.f32 %v1131, 1.442695
        %v1133 = vpow.pop %v1132
        %v1134 = vsel %vm1127, %v1133, 0.0
        %1135 = vadd.xlane.f32.xlu0 %v1134
        %v1136 = vpop.xlane.xlu0 %1135
        %v1137 = vrcp.pop %v1136
        %v1138 = vmul.f32 %v1133, %v1137
        %v1139 = vpack.c.bf16 %v1138, %v1138
        %v1141 = vsel %vm1127, %v1139, 0
        %vm1143 = vcmask 1043456
        %v1145 = vsel %vm1143, %v1084, 0
        %1147 = vmatprep.subr.bf16.mxu0 0
        %1148 = vmatpush1.bf16.msra.mxu0 0
        %1149 = vmatprep.subr.bf16.mxu0 0
        %1150 = vmatpush1.bf16.msra.mxu0 0
        %1151 = vmatprep.subr.bf16.mxu0 0
        %1152 = vmatpush1.bf16.msra.mxu0 0
        %1153 = vmatprep.subr.bf16.mxu0 0
        %1154 = vmatpush1.bf16.msra.mxu0 0
        %1155 = vmatprep.subr.bf16.mxu0 0
        %1156 = vmatpush1.bf16.msra.mxu0 0
        %1157 = vmatprep.subr.bf16.mxu0 0
        %1158 = vmatpush1.bf16.msra.mxu0 0
        %1159 = vmatprep.subr.bf16.mxu0 0
        %1160 = vmatpush1.bf16.msra.mxu0 0
        %1161 = vmatprep.subr.bf16.mxu0 0
        %1162 = vmatpush1.bf16.msra.mxu0 %v1145
        %1163 = vmatprep.subr.bf16.mxu0 0
        %1164 = vmatpush2.bf16.msra.mxu0 0
        %1165 = vmatprep.subr.bf16.mxu0 0
        %1166 = vmatpush2.bf16.msra.mxu0 0
        %1167 = vmatprep.subr.bf16.mxu0 0
        %1168 = vmatpush2.bf16.msra.mxu0 0
        %1169 = vmatprep.subr.bf16.mxu0 0
        %1170 = vmatpush2.bf16.msra.mxu0 0
        %1171 = vmatprep.subr.bf16.mxu0 0
        %1172 = vmatpush2.bf16.msra.mxu0 0
        %1173 = vmatprep.subr.bf16.mxu0 0
        %1174 = vmatpush2.bf16.msra.mxu0 0
        %1175 = vmatprep.subr.bf16.mxu0 0
        %1176 = vmatpush2.bf16.msra.mxu0 0
        %1177 = vmatprep.subr.bf16.mxu0 0
        %1178 = vmatpush2.bf16.msra.mxu0 0
        %1179 = vmatprep.mubr.bf16.mxu0 0
        %1180 = vmatmul.mubr.bf16.gmra.mxu0 %v1141
        %v1181 = vpop.f32.mrf.mxu0
        %v1182 = vadd.f32 0.0, %v1181
        %v1183 = vpop.f32.mrf.mxu0
        %v1184 = vpop.f32.mrf.mxu0
        %v1185 = vpop.f32.mrf.mxu0
        %1186 = vdwg.mxu0
        %v1187 = vpack.c.bf16 %v1182, %v1182
        %v1188 = vld [vmem:[%s4] sm:$0xff]
        %v1189 = vld [vmem:[%s4 + $0x8] sm:$0xff]
        %v1190 = vld [vmem:[%s4 + $0x10] sm:$0xff]
        %v1191 = vld [vmem:[%s4 + $0x18] sm:$0xff]
        %v1192 = vld [vmem:[%s4 + $0x20] sm:$0xff]
        %v1193 = vld [vmem:[%s4 + $0x28] sm:$0xff]
        %v1194 = vld [vmem:[%s4 + $0x30] sm:$0xff]
        %v1195 = vld [vmem:[%s4 + $0x38] sm:$0xff]
        %v1196 = vld [vmem:[%s4 + $0x40] sm:$0xff]
        %v1197 = vld [vmem:[%s4 + $0x48] sm:$0xff]
        %v1198 = vld [vmem:[%s4 + $0x50] sm:$0xff]
        %v1199 = vld [vmem:[%s4 + $0x58] sm:$0xff]
        %v1200 = vld [vmem:[%s4 + $0x60] sm:$0xff]
        %v1201 = vld [vmem:[%s4 + $0x68] sm:$0xff]
        %v1202 = vld [vmem:[%s4 + $0x70] sm:$0xff]
        %v1203 = vld [vmem:[%s4 + $0x78] sm:$0xff]
        %v1204 = vpack.c.bf16 %v989, %v989
        %v1205 = vpack.c.bf16 %v1030, %v1030
        %v1206 = vpack.c.bf16 %v1071, %v1071
        %1207 = vmatprep.subr.bf16.mxu0 0
        %1208 = vmatpush1.bf16.xpose.msra.mxu0 0
        %1209 = vmatprep.subr.bf16.mxu0 0
        %1210 = vmatpush1.bf16.xpose.msra.mxu0 0
        %1211 = vmatprep.subr.bf16.mxu0 0
        %1212 = vmatpush1.bf16.xpose.msra.mxu0 0
        %1213 = vmatprep.subr.bf16.mxu0 0
        %1214 = vmatpush1.bf16.xpose.msra.mxu0 0
        %1215 = vmatprep.subr.bf16.mxu0 0
        %1216 = vmatpush1.bf16.xpose.msra.mxu0 0
        %1217 = vmatprep.subr.bf16.mxu0 0
        %1218 = vmatpush1.bf16.xpose.msra.mxu0 0
        %1219 = vmatprep.subr.bf16.mxu0 0
        %1220 = vmatpush1.bf16.xpose.msra.mxu0 0
        %1221 = vmatprep.subr.bf16.mxu0 0
        %1222 = vmatpush1.bf16.xpose.msra.mxu0 %v1205
        %1223 = vmatprep.subr.bf16.mxu0 0
        %1224 = vmatpush2.bf16.xpose.msra.mxu0 0
        %1225 = vmatprep.subr.bf16.mxu0 0
        %1226 = vmatpush2.bf16.xpose.msra.mxu0 0
        %1227 = vmatprep.subr.bf16.mxu0 0
        %1228 = vmatpush2.bf16.xpose.msra.mxu0 0
        %1229 = vmatprep.subr.bf16.mxu0 0
        %1230 = vmatpush2.bf16.xpose.msra.mxu0 0
        %1231 = vmatprep.subr.bf16.mxu0 0
        %1232 = vmatpush2.bf16.xpose.msra.mxu0 0
        %1233 = vmatprep.subr.bf16.mxu0 0
        %1234 = vmatpush2.bf16.xpose.msra.mxu0 0
        %1235 = vmatprep.subr.bf16.mxu0 0
        %1236 = vmatpush2.bf16.xpose.msra.mxu0 0
        %1237 = vmatprep.subr.bf16.mxu0 0
        %1238 = vmatpush2.bf16.xpose.msra.mxu0 0
        %1239 = vmatprep.mubr.bf16.mxu0 0
        %1240 = vmatmul.mubr.bf16.gmra.mxu0 %v1204
        %v1241 = vpop.f32.mrf.mxu0
        %v1242 = vadd.f32 0.0, %v1241
        %v1243 = vpop.f32.mrf.mxu0
        %v1244 = vpop.f32.mrf.mxu0
        %v1245 = vpop.f32.mrf.mxu0
        %1246 = vdwg.mxu0
        %v1247 = vmul.f32 %v1242, 0.088388346
        %v1248 = vadd.f32 %v1247, %v1080
        %v1249 = vsel %vm1127, %v1248, -inf
        %1250 = vmax.xlane.f32.xlu0 %v1249
        %v1251 = vpop.xlane.xlu0 %1250
        %v1252 = vsub.f32 %v1248, %v1251
        %v1253 = vmul.f32 %v1252, 1.442695
        %v1254 = vpow.pop %v1253
        %v1255 = vsel %vm1127, %v1254, 0.0
        %1256 = vadd.xlane.f32.xlu0 %v1255
        %v1257 = vpop.xlane.xlu0 %1256
        %v1258 = vrcp.pop %v1257
        %v1259 = vmul.f32 %v1254, %v1258
        %v1260 = vpack.c.bf16 %v1259, %v1259
        %v1262 = vsel %vm1127, %v1260, 0
        %v1265 = vsel %vm1143, %v1206, 0
        %1267 = vmatprep.subr.bf16.mxu0 0
        %1268 = vmatpush1.bf16.msra.mxu0 0
        %1269 = vmatprep.subr.bf16.mxu0 0
        %1270 = vmatpush1.bf16.msra.mxu0 0
        %1271 = vmatprep.subr.bf16.mxu0 0
        %1272 = vmatpush1.bf16.msra.mxu0 0
        %1273 = vmatprep.subr.bf16.mxu0 0
        %1274 = vmatpush1.bf16.msra.mxu0 0
        %1275 = vmatprep.subr.bf16.mxu0 0
        %1276 = vmatpush1.bf16.msra.mxu0 0
        %1277 = vmatprep.subr.bf16.mxu0 0
        %1278 = vmatpush1.bf16.msra.mxu0 0
        %1279 = vmatprep.subr.bf16.mxu0 0
        %1280 = vmatpush1.bf16.msra.mxu0 0
        %1281 = vmatprep.subr.bf16.mxu0 0
        %1282 = vmatpush1.bf16.msra.mxu0 %v1265
        %1283 = vmatprep.subr.bf16.mxu0 0
        %1284 = vmatpush2.bf16.msra.mxu0 0
        %1285 = vmatprep.subr.bf16.mxu0 0
        %1286 = vmatpush2.bf16.msra.mxu0 0
        %1287 = vmatprep.subr.bf16.mxu0 0
        %1288 = vmatpush2.bf16.msra.mxu0 0
        %1289 = vmatprep.subr.bf16.mxu0 0
        %1290 = vmatpush2.bf16.msra.mxu0 0
        %1291 = vmatprep.subr.bf16.mxu0 0
        %1292 = vmatpush2.bf16.msra.mxu0 0
        %1293 = vmatprep.subr.bf16.mxu0 0
        %1294 = vmatpush2.bf16.msra.mxu0 0
        %1295 = vmatprep.subr.bf16.mxu0 0
        %1296 = vmatpush2.bf16.msra.mxu0 0
        %1297 = vmatprep.subr.bf16.mxu0 0
        %1298 = vmatpush2.bf16.msra.mxu0 0
        %1299 = vmatprep.mubr.bf16.mxu0 0
        %1300 = vmatmul.mubr.bf16.gmra.mxu0 %v1262
        %v1301 = vpop.f32.mrf.mxu0
        %v1302 = vadd.f32 0.0, %v1301
        %v1303 = vpop.f32.mrf.mxu0
        %v1304 = vpop.f32.mrf.mxu0
        %v1305 = vpop.f32.mrf.mxu0
        %1306 = vdwg.mxu0
        %v1307 = vpack.c.bf16 %v1302, %v1302
        %v1308 = vld [vmem:[%s4 + $0x80] sm:$0xff]
        %v1309 = vld [vmem:[%s4 + $0x88] sm:$0xff]
        %v1310 = vld [vmem:[%s4 + $0x90] sm:$0xff]
        %v1311 = vld [vmem:[%s4 + $0x98] sm:$0xff]
        %v1312 = vld [vmem:[%s4 + $0xa0] sm:$0xff]
        %v1313 = vld [vmem:[%s4 + $0xa8] sm:$0xff]
        %v1314 = vld [vmem:[%s4 + $0xb0] sm:$0xff]
        %v1315 = vld [vmem:[%s4 + $0xb8] sm:$0xff]
        %v1316 = vld [vmem:[%s4 + $0xc0] sm:$0xff]
        %v1317 = vld [vmem:[%s4 + $0xc8] sm:$0xff]
        %v1318 = vld [vmem:[%s4 + $0xd0] sm:$0xff]
        %v1319 = vld [vmem:[%s4 + $0xd8] sm:$0xff]
        %v1320 = vld [vmem:[%s4 + $0xe0] sm:$0xff]
        %v1321 = vld [vmem:[%s4 + $0xe8] sm:$0xff]
        %v1322 = vld [vmem:[%s4 + $0xf0] sm:$0xff]
        %v1323 = vld [vmem:[%s4 + $0xf8] sm:$0xff]
        %v1340 = vunpack.c.l.b16 %v1308
        %v1341 = vunpack.c.h.b16 %v1308
        %v1342 = vunpack.c.l.b16 %v1309
        %v1343 = vunpack.c.h.b16 %v1309
        %v1344 = vunpack.c.l.b16 %v1310
        %v1345 = vunpack.c.h.b16 %v1310
        %v1346 = vunpack.c.l.b16 %v1311
        %v1347 = vunpack.c.h.b16 %v1311
        %v1348 = vunpack.c.l.b16 %v1312
        %v1349 = vunpack.c.h.b16 %v1312
        %v1350 = vunpack.c.l.b16 %v1313
        %v1351 = vunpack.c.h.b16 %v1313
        %v1352 = vunpack.c.l.b16 %v1314
        %v1353 = vunpack.c.h.b16 %v1314
        %v1354 = vunpack.c.l.b16 %v1315
        %v1355 = vunpack.c.h.b16 %v1315
        %v1356 = vunpack.c.l.b16 %v1316
        %v1357 = vunpack.c.h.b16 %v1316
        %v1358 = vunpack.c.l.b16 %v1317
        %v1359 = vunpack.c.h.b16 %v1317
        %v1360 = vunpack.c.l.b16 %v1318
        %v1361 = vunpack.c.h.b16 %v1318
        %v1362 = vunpack.c.l.b16 %v1319
        %v1363 = vunpack.c.h.b16 %v1319
        %v1364 = vunpack.c.l.b16 %v1320
        %v1365 = vunpack.c.h.b16 %v1320
        %v1366 = vunpack.c.l.b16 %v1321
        %v1367 = vunpack.c.h.b16 %v1321
        %v1368 = vunpack.c.l.b16 %v1322
        %v1369 = vunpack.c.h.b16 %v1322
        %v1370 = vunpack.c.l.b16 %v1323
        %v1371 = vunpack.c.h.b16 %v1323
        %v1372 = vpack.c.b16 %v1342, %v1340
        %v1373 = vpack.c.b16 %v1343, %v1341
        %v1374 = vpack.c.b16 %v1346, %v1344
        %v1375 = vpack.c.b16 %v1347, %v1345
        %v1376 = vpack.c.b16 %v1350, %v1348
        %v1377 = vpack.c.b16 %v1351, %v1349
        %v1378 = vpack.c.b16 %v1354, %v1352
        %v1379 = vpack.c.b16 %v1355, %v1353
        %v1380 = vpack.c.b16 %v1358, %v1356
        %v1381 = vpack.c.b16 %v1359, %v1357
        %v1382 = vpack.c.b16 %v1362, %v1360
        %v1383 = vpack.c.b16 %v1363, %v1361
        %v1384 = vpack.c.b16 %v1366, %v1364
        %v1385 = vpack.c.b16 %v1367, %v1365
        %v1386 = vpack.c.b16 %v1370, %v1368
        %v1387 = vpack.c.b16 %v1371, %v1369
        %1404 = vmatprep.subr.bf16.mxu0 %v1387
        %1405 = vmatpush1.bf16.msra.mxu0 %v1386
        %1406 = vmatprep.subr.bf16.mxu0 %v1385
        %1407 = vmatpush1.bf16.msra.mxu0 %v1384
        %1408 = vmatprep.subr.bf16.mxu0 %v1383
        %1409 = vmatpush1.bf16.msra.mxu0 %v1382
        %1410 = vmatprep.subr.bf16.mxu0 %v1381
        %1411 = vmatpush1.bf16.msra.mxu0 %v1380
        %1412 = vmatprep.subr.bf16.mxu0 %v1379
        %1413 = vmatpush1.bf16.msra.mxu0 %v1378
        %1414 = vmatprep.subr.bf16.mxu0 %v1377
        %1415 = vmatpush1.bf16.msra.mxu0 %v1376
        %1416 = vmatprep.subr.bf16.mxu0 %v1375
        %1417 = vmatpush1.bf16.msra.mxu0 %v1374
        %1418 = vmatprep.subr.bf16.mxu0 %v1373
        %1419 = vmatpush1.bf16.msra.mxu0 %v1372
        %1420 = vmatprep.subr.bf16.mxu0 0
        %1421 = vmatpush2.bf16.msra.mxu0 0
        %1422 = vmatprep.subr.bf16.mxu0 0
        %1423 = vmatpush2.bf16.msra.mxu0 0
        %1424 = vmatprep.subr.bf16.mxu0 0
        %1425 = vmatpush2.bf16.msra.mxu0 0
        %1426 = vmatprep.subr.bf16.mxu0 0
        %1427 = vmatpush2.bf16.msra.mxu0 0
        %1428 = vmatprep.subr.bf16.mxu0 0
        %1429 = vmatpush2.bf16.msra.mxu0 0
        %1430 = vmatprep.subr.bf16.mxu0 0
        %1431 = vmatpush2.bf16.msra.mxu0 0
        %1432 = vmatprep.subr.bf16.mxu0 0
        %1433 = vmatpush2.bf16.msra.mxu0 0
        %1434 = vmatprep.subr.bf16.mxu0 0
        %1435 = vmatpush2.bf16.msra.mxu0 0
        %1436 = vmatprep.mubr.bf16.mxu0 0
        %1437 = vmatmul.mubr.bf16.gmra.mxu0 %v1307
        %v1438 = vpop.f32.mrf.mxu0
        %v1439 = vadd.f32 0.0, %v1438
        %v1440 = vpop.f32.mrf.mxu0
        %v1441 = vadd.f32 0.0, %v1440
        %v1442 = vpop.f32.mrf.mxu0
        %v1443 = vpop.f32.mrf.mxu0
        %1444 = vdwg.mxu0
        %v1461 = vunpack.c.l.b16 %v1188
        %v1462 = vunpack.c.h.b16 %v1188
        %v1463 = vunpack.c.l.b16 %v1189
        %v1464 = vunpack.c.h.b16 %v1189
        %v1465 = vunpack.c.l.b16 %v1190
        %v1466 = vunpack.c.h.b16 %v1190
        %v1467 = vunpack.c.l.b16 %v1191
        %v1468 = vunpack.c.h.b16 %v1191
        %v1469 = vunpack.c.l.b16 %v1192
        %v1470 = vunpack.c.h.b16 %v1192
        %v1471 = vunpack.c.l.b16 %v1193
        %v1472 = vunpack.c.h.b16 %v1193
        %v1473 = vunpack.c.l.b16 %v1194
        %v1474 = vunpack.c.h.b16 %v1194
        %v1475 = vunpack.c.l.b16 %v1195
        %v1476 = vunpack.c.h.b16 %v1195
        %v1477 = vunpack.c.l.b16 %v1196
        %v1478 = vunpack.c.h.b16 %v1196
        %v1479 = vunpack.c.l.b16 %v1197
        %v1480 = vunpack.c.h.b16 %v1197
        %v1481 = vunpack.c.l.b16 %v1198
        %v1482 = vunpack.c.h.b16 %v1198
        %v1483 = vunpack.c.l.b16 %v1199
        %v1484 = vunpack.c.h.b16 %v1199
        %v1485 = vunpack.c.l.b16 %v1200
        %v1486 = vunpack.c.h.b16 %v1200
        %v1487 = vunpack.c.l.b16 %v1201
        %v1488 = vunpack.c.h.b16 %v1201
        %v1489 = vunpack.c.l.b16 %v1202
        %v1490 = vunpack.c.h.b16 %v1202
        %v1491 = vunpack.c.l.b16 %v1203
        %v1492 = vunpack.c.h.b16 %v1203
        %v1493 = vpack.c.b16 %v1463, %v1461
        %v1494 = vpack.c.b16 %v1464, %v1462
        %v1495 = vpack.c.b16 %v1467, %v1465
        %v1496 = vpack.c.b16 %v1468, %v1466
        %v1497 = vpack.c.b16 %v1471, %v1469
        %v1498 = vpack.c.b16 %v1472, %v1470
        %v1499 = vpack.c.b16 %v1475, %v1473
        %v1500 = vpack.c.b16 %v1476, %v1474
        %v1501 = vpack.c.b16 %v1479, %v1477
        %v1502 = vpack.c.b16 %v1480, %v1478
        %v1503 = vpack.c.b16 %v1483, %v1481
        %v1504 = vpack.c.b16 %v1484, %v1482
        %v1505 = vpack.c.b16 %v1487, %v1485
        %v1506 = vpack.c.b16 %v1488, %v1486
        %v1507 = vpack.c.b16 %v1491, %v1489
        %v1508 = vpack.c.b16 %v1492, %v1490
        %1525 = vmatprep.subr.bf16.mxu0 %v1508
        %1526 = vmatpush1.bf16.msra.mxu0 %v1507
        %1527 = vmatprep.subr.bf16.mxu0 %v1506
        %1528 = vmatpush1.bf16.msra.mxu0 %v1505
        %1529 = vmatprep.subr.bf16.mxu0 %v1504
        %1530 = vmatpush1.bf16.msra.mxu0 %v1503
        %1531 = vmatprep.subr.bf16.mxu0 %v1502
        %1532 = vmatpush1.bf16.msra.mxu0 %v1501
        %1533 = vmatprep.subr.bf16.mxu0 %v1500
        %1534 = vmatpush1.bf16.msra.mxu0 %v1499
        %1535 = vmatprep.subr.bf16.mxu0 %v1498
        %1536 = vmatpush1.bf16.msra.mxu0 %v1497
        %1537 = vmatprep.subr.bf16.mxu0 %v1496
        %1538 = vmatpush1.bf16.msra.mxu0 %v1495
        %1539 = vmatprep.subr.bf16.mxu0 %v1494
        %1540 = vmatpush1.bf16.msra.mxu0 %v1493
        %1541 = vmatprep.subr.bf16.mxu0 0
        %1542 = vmatpush2.bf16.msra.mxu0 0
        %1543 = vmatprep.subr.bf16.mxu0 0
        %1544 = vmatpush2.bf16.msra.mxu0 0
        %1545 = vmatprep.subr.bf16.mxu0 0
        %1546 = vmatpush2.bf16.msra.mxu0 0
        %1547 = vmatprep.subr.bf16.mxu0 0
        %1548 = vmatpush2.bf16.msra.mxu0 0
        %1549 = vmatprep.subr.bf16.mxu0 0
        %1550 = vmatpush2.bf16.msra.mxu0 0
        %1551 = vmatprep.subr.bf16.mxu0 0
        %1552 = vmatpush2.bf16.msra.mxu0 0
        %1553 = vmatprep.subr.bf16.mxu0 0
        %1554 = vmatpush2.bf16.msra.mxu0 0
        %1555 = vmatprep.subr.bf16.mxu0 0
        %1556 = vmatpush2.bf16.msra.mxu0 0
        %1557 = vmatprep.mubr.bf16.mxu0 0
        %1558 = vmatmul.mubr.bf16.gmra.mxu0 %v1187
        %v1559 = vpop.f32.mrf.mxu0
        %v1560 = vadd.f32 %v1439, %v1559
        %v1561 = vpop.f32.mrf.mxu0
        %v1562 = vadd.f32 %v1441, %v1561
        %v1563 = vpop.f32.mrf.mxu0
        %v1564 = vpop.f32.mrf.mxu0
        %1565 = vdwg.mxu0
        %v1566 = vld [vmem:[%s5] sm:$0x3]
        %v1568 = vlaneseq
        %v1569 = vshrl.u32 %v1568, 7
        %v1570 = vsub.s32 0, %v1569
        %v1571 = vrot.slane %v1566, %v1570
        %v1572 = vlaneseq
        %v1573 = vshrl.u32 %v1572, 7
        %v1574 = vsub.s32 1, %v1573
        %v1575 = vrot.slane %v1566, %v1574
        %v1578 = vadd.f32 %v1560, %v1571
        %v1579 = vadd.f32 %v1562, %v1575
        %v1580 = vunpack.c.l.bf16 %v336
        %v1581 = vunpack.c.h.bf16 %v336
        %v1582 = vadd.f32 %v1578, %v1580
        %v1583 = vadd.f32 %v1579, %v1581
        %v1584 = vld [vmem:[%s6] sm:$0x3]
        %v1585 = vld [vmem:[%s7] sm:$0x3]
        %v1586 = vadd.f32 %v1582, %v1583
        %1587 = vadd.xlane.f32.xlu0 %v1586
        %v1588 = vpop.xlane.xlu0 %1587
        %v1589 = vrcp.pop 256.0
        %v1590 = vmul.f32 %v1588, %v1589
        %v1591 = vsub.f32 %v1582, %v1590
        %v1592 = vsub.f32 %v1583, %v1590
        %v1593 = vmul.f32 %v1591, %v1591
        %v1594 = vmul.f32 %v1592, %v1592
        %v1595 = vadd.f32 %v1593, %v1594
        %1596 = vadd.xlane.f32.xlu0 %v1595
        %v1597 = vpop.xlane.xlu0 %1596
        %v1598 = vmul.f32 %v1597, %v1589
        %v1599 = vadd.f32 %v1598, 1e-12
        %v1600 = vrsqrt.pop %v1599
        %v1601 = vmul.f32 %v1591, %v1600
        %v1602 = vmul.f32 %v1592, %v1600
        %v1604 = vlaneseq
        %v1605 = vshrl.u32 %v1604, 7
        %v1606 = vsub.s32 0, %v1605
        %v1607 = vrot.slane %v1584, %v1606
        %v1608 = vlaneseq
        %v1609 = vshrl.u32 %v1608, 7
        %v1610 = vsub.s32 1, %v1609
        %v1611 = vrot.slane %v1584, %v1610
        %v1614 = vmul.f32 %v1601, %v1607
        %v1615 = vmul.f32 %v1602, %v1611
        %v1617 = vlaneseq
        %v1618 = vshrl.u32 %v1617, 7
        %v1619 = vsub.s32 0, %v1618
        %v1620 = vrot.slane %v1585, %v1619
        %v1621 = vlaneseq
        %v1622 = vshrl.u32 %v1621, 7
        %v1623 = vsub.s32 1, %v1622
        %v1624 = vrot.slane %v1585, %v1623
        %v1627 = vadd.f32 %v1614, %v1620
        %v1628 = vadd.f32 %v1615, %v1624
        %v1629 = vpack.c.bf16 %v1627, %v1627
        %v1630 = vpack.c.bf16 %v1628, %v1628
        %v1633 = vunpack.c.l.b16 %v1629
        %v1634 = vunpack.c.l.b16 %v1630
        %v1635 = vpack.c.b16 %v1634, %v1633
        %1637 = vst [vmem:[%s334] sm:$0xff] %v1635
        %p1638 = scmp.lt.s32.totalorder %s20, 1
        %s1639 = scalar_select %p1638, %s20, 1
        %s1640 = smul.addr %s1639, 2
        %s1641 = smul.addr %s1640, 4
        %s1642 = scalar_lea.vmem %s8, %s1641
        // Predicated region
        $region57: #{text_encoder_forward.7} parent=51 // pred_check
          %p1643 = pneg %p216
        $region58: #{text_encoder_forward.7} parent=51 // pred_check_branch
          %1645 = sbr.rel (%p1643) target = $region60
        $region59: #{text_encoder_forward.7} parent=51 // pred_region
          _
        $region60: #{text_encoder_forward.7} parent=51 // pred_fallthru
          _
      $region52: #{text_encoder_forward.7} parent=5 // pred_fallthru
        _
      %p1646 = scmp.le.s32.totalorder 2, %s15
      // Predicated region
      $region61: #{text_encoder_forward.7} parent=5 // pred_check
        %p1647 = pneg %p1646
      $region62: #{text_encoder_forward.7} parent=5 // pred_check_branch
        %1649 = sbr.rel (%p1647) target = $region64
      $region63: #{text_encoder_forward.7} parent=5 // pred_region
        %s1650 = ssub.s32 %s15, 2
        // Predicated region
        $region65: #{text_encoder_forward.7} parent=63 // pred_check
          %p1651 = pneg %p222
        $region66: #{text_encoder_forward.7} parent=63 // pred_check_branch
          %1653 = sbr.rel (%p1651) target = $region68
        $region67: #{text_encoder_forward.7} parent=63 // pred_region
          %p1654 = scmp.lt.s32.totalorder %s21, 1
          %s1655 = scalar_select %p1654, %s21, 1
          %s1656 = smul.addr %s1655, 2
          %s1657 = smul.addr %s1656, 4
          %s1658 = scalar_lea.vmem %s8, %s1657
        $region68: #{text_encoder_forward.7} parent=63 // pred_fallthru
          _
      $region64: #{text_encoder_forward.7} parent=5 // pred_fallthru
        _
    $region6: #{text_encoder_forward.7} parent=1 // loop_footer
      %s19 = sadd.s32 1, %s15
    $region7: #{text_encoder_forward.7} parent=1 // loop_footer_branch
      %14 = sbr.rel target = $region3
    $region8: #{text_encoder_forward.7} parent=1 // loop_exit
      _
    %1659 = vsyncpa [#allocation3], 1
    %s1660 = scalar_lea.sflag [#allocation3], 1
    %1661 = vsyncpa %s1660, 1

// kernel: text_encoder_forward.10
$region0: #{text_encoder_forward.10}
  #allocation0 [shape = 'u32[]', space=smem, size = 0x4, offset = 0x4, fixed_abs, tag = 'smem constant byte address 0x4 - core index']
  #allocation1 [shape = 'u32[144,128]{1,0:T(1,128)}', space=vmem, size = 0x12000, scoped, tag = 'internal scratch']
  %s0 = inlined_call_operand.vmem [shape: bf16[16,256], index: 0, kind: input, shape index: {}]
  %s1 = inlined_call_operand.vmem [shape: bf16[256,1024], index: 1, kind: input, shape index: {}]
  %s2 = inlined_call_operand.vmem [shape: f32[1,1024], index: 2, kind: input, shape index: {}]
  %s3 = inlined_call_operand.vmem [shape: bf16[1024,256], index: 3, kind: input, shape index: {}]
  %s4 = inlined_call_operand.vmem [shape: f32[1,256], index: 4, kind: input, shape index: {}]
  %s5 = inlined_call_operand.vmem [shape: f32[1,256], index: 5, kind: input, shape index: {}]
  %s6 = inlined_call_operand.vmem [shape: f32[1,256], index: 6, kind: input, shape index: {}]
  %s7 = inlined_call_operand.vmem [shape: bf16[16,256], index: 7, kind: output, shape index: {}]
  %s8 = sld [smem:[#allocation0]]
  $region38: #{text_encoder_forward.10} parent=0
    _
  %s10 = ssub.s32 1, %s8
  %s11 = scalar_select 0, %s10, %s8
  // Predicated region
  $region2: #{text_encoder_forward.10} parent=0 // pred_check
    _
  $region3: #{text_encoder_forward.10} parent=0 // pred_check_branch
    %13 = sbr.rel (0) target = $region5
  $region4: #{text_encoder_forward.10} parent=0 // pred_region
    _
  $region5: #{text_encoder_forward.10} parent=0 // pred_fallthru
    _
  // Predicated region
  $region6: #{text_encoder_forward.10} parent=0 // pred_check
    _
  $region7: #{text_encoder_forward.10} parent=0 // pred_check_branch
    %15 = sbr.rel (0) target = $region9
  $region8: #{text_encoder_forward.10} parent=0 // pred_region
    _
  $region9: #{text_encoder_forward.10} parent=0 // pred_fallthru
    _
  // Predicated region
  $region10: #{text_encoder_forward.10} parent=0 // pred_check
    _
  $region11: #{text_encoder_forward.10} parent=0 // pred_check_branch
    %17 = sbr.rel (0) target = $region13
  $region12: #{text_encoder_forward.10} parent=0 // pred_region
    _
  $region13: #{text_encoder_forward.10} parent=0 // pred_fallthru
    _
  // Predicated region
  $region14: #{text_encoder_forward.10} parent=0 // pred_check
    _
  $region15: #{text_encoder_forward.10} parent=0 // pred_check_branch
    %19 = sbr.rel (0) target = $region17
  $region16: #{text_encoder_forward.10} parent=0 // pred_region
    _
  $region17: #{text_encoder_forward.10} parent=0 // pred_fallthru
    _
  // Predicated region
  $region18: #{text_encoder_forward.10} parent=0 // pred_check
    _
  $region19: #{text_encoder_forward.10} parent=0 // pred_check_branch
    %21 = sbr.rel (0) target = $region21
  $region20: #{text_encoder_forward.10} parent=0 // pred_region
    _
  $region21: #{text_encoder_forward.10} parent=0 // pred_fallthru
    _
  // Predicated region
  $region22: #{text_encoder_forward.10} parent=0 // pred_check
    _
  $region23: #{text_encoder_forward.10} parent=0 // pred_check_branch
    %23 = sbr.rel (0) target = $region25
  $region24: #{text_encoder_forward.10} parent=0 // pred_region
    _
  $region25: #{text_encoder_forward.10} parent=0 // pred_fallthru
    _
  // Predicated region
  $region26: #{text_encoder_forward.10} parent=0 // pred_check
    _
  $region27: #{text_encoder_forward.10} parent=0 // pred_check_branch
    %25 = sbr.rel (0) target = $region29
  $region28: #{text_encoder_forward.10} parent=0 // pred_region
    _
  $region29: #{text_encoder_forward.10} parent=0 // pred_fallthru
    _
  %v26 = vld [vmem:[%s0] sm:$0xff]
  %v27 = vld [vmem:[%s0 + $0x8] sm:$0xff]
  %v28 = vld [vmem:[%s1] sm:$0xff]
  %v29 = vld [vmem:[%s1 + $0x8] sm:$0xff]
  %v30 = vld [vmem:[%s1 + $0x10] sm:$0xff]
  %v31 = vld [vmem:[%s1 + $0x18] sm:$0xff]
  %v32 = vld [vmem:[%s1 + $0x20] sm:$0xff]
  %v33 = vld [vmem:[%s1 + $0x28] sm:$0xff]
  %v34 = vld [vmem:[%s1 + $0x30] sm:$0xff]
  %v35 = vld [vmem:[%s1 + $0x38] sm:$0xff]
  %v36 = vld [vmem:[%s1 + $0x40] sm:$0xff]
  %v37 = vld [vmem:[%s1 + $0x48] sm:$0xff]
  %v38 = vld [vmem:[%s1 + $0x50] sm:$0xff]
  %v39 = vld [vmem:[%s1 + $0x58] sm:$0xff]
  %v40 = vld [vmem:[%s1 + $0x60] sm:$0xff]
  %v41 = vld [vmem:[%s1 + $0x68] sm:$0xff]
  %v42 = vld [vmem:[%s1 + $0x70] sm:$0xff]
  %v43 = vld [vmem:[%s1 + $0x78] sm:$0xff]
  %v44 = vld [vmem:[%s1 + $0x80] sm:$0xff]
  %v45 = vld [vmem:[%s1 + $0x88] sm:$0xff]
  %v46 = vld [vmem:[%s1 + $0x90] sm:$0xff]
  %v47 = vld [vmem:[%s1 + $0x98] sm:$0xff]
  %v48 = vld [vmem:[%s1 + $0xa0] sm:$0xff]
  %v49 = vld [vmem:[%s1 + $0xa8] sm:$0xff]
  %v50 = vld [vmem:[%s1 + $0xb0] sm:$0xff]
  %v51 = vld [vmem:[%s1 + $0xb8] sm:$0xff]
  %v52 = vld [vmem:[%s1 + $0xc0] sm:$0xff]
  %v53 = vld [vmem:[%s1 + $0xc8] sm:$0xff]
  %v54 = vld [vmem:[%s1 + $0xd0] sm:$0xff]
  %v55 = vld [vmem:[%s1 + $0xd8] sm:$0xff]
  %v56 = vld [vmem:[%s1 + $0xe0] sm:$0xff]
  %v57 = vld [vmem:[%s1 + $0xe8] sm:$0xff]
  %v58 = vld [vmem:[%s1 + $0xf0] sm:$0xff]
  %v59 = vld [vmem:[%s1 + $0xf8] sm:$0xff]
  %v60 = vld [vmem:[%s1 + $0x100] sm:$0xff]
  %v61 = vld [vmem:[%s1 + $0x108] sm:$0xff]
  %v62 = vld [vmem:[%s1 + $0x110] sm:$0xff]
  %v63 = vld [vmem:[%s1 + $0x118] sm:$0xff]
  %v64 = vld [vmem:[%s1 + $0x120] sm:$0xff]
  %v65 = vld [vmem:[%s1 + $0x128] sm:$0xff]
  %v66 = vld [vmem:[%s1 + $0x130] sm:$0xff]
  %v67 = vld [vmem:[%s1 + $0x138] sm:$0xff]
  %v68 = vld [vmem:[%s1 + $0x140] sm:$0xff]
  %v69 = vld [vmem:[%s1 + $0x148] sm:$0xff]
  %v70 = vld [vmem:[%s1 + $0x150] sm:$0xff]
  %v71 = vld [vmem:[%s1 + $0x158] sm:$0xff]
  %v72 = vld [vmem:[%s1 + $0x160] sm:$0xff]
  %v73 = vld [vmem:[%s1 + $0x168] sm:$0xff]
  %v74 = vld [vmem:[%s1 + $0x170] sm:$0xff]
  %v75 = vld [vmem:[%s1 + $0x178] sm:$0xff]
  %v76 = vld [vmem:[%s1 + $0x180] sm:$0xff]
  %v77 = vld [vmem:[%s1 + $0x188] sm:$0xff]
  %v78 = vld [vmem:[%s1 + $0x190] sm:$0xff]
  %v79 = vld [vmem:[%s1 + $0x198] sm:$0xff]
  %v80 = vld [vmem:[%s1 + $0x1a0] sm:$0xff]
  %v81 = vld [vmem:[%s1 + $0x1a8] sm:$0xff]
  %v82 = vld [vmem:[%s1 + $0x1b0] sm:$0xff]
  %v83 = vld [vmem:[%s1 + $0x1b8] sm:$0xff]
  %v84 = vld [vmem:[%s1 + $0x1c0] sm:$0xff]
  %v85 = vld [vmem:[%s1 + $0x1c8] sm:$0xff]
  %v86 = vld [vmem:[%s1 + $0x1d0] sm:$0xff]
  %v87 = vld [vmem:[%s1 + $0x1d8] sm:$0xff]
  %v88 = vld [vmem:[%s1 + $0x1e0] sm:$0xff]
  %v89 = vld [vmem:[%s1 + $0x1e8] sm:$0xff]
  %v90 = vld [vmem:[%s1 + $0x1f0] sm:$0xff]
  %v91 = vld [vmem:[%s1 + $0x1f8] sm:$0xff]
  %v92 = vld [vmem:[%s1 + $0x200] sm:$0xff]
  %v93 = vld [vmem:[%s1 + $0x208] sm:$0xff]
  %v94 = vld [vmem:[%s1 + $0x210] sm:$0xff]
  %v95 = vld [vmem:[%s1 + $0x218] sm:$0xff]
  %v96 = vld [vmem:[%s1 + $0x220] sm:$0xff]
  %v97 = vld [vmem:[%s1 + $0x228] sm:$0xff]
  %v98 = vld [vmem:[%s1 + $0x230] sm:$0xff]
  %v99 = vld [vmem:[%s1 + $0x238] sm:$0xff]
  %v100 = vld [vmem:[%s1 + $0x240] sm:$0xff]
  %v101 = vld [vmem:[%s1 + $0x248] sm:$0xff]
  %v102 = vld [vmem:[%s1 + $0x250] sm:$0xff]
  %v103 = vld [vmem:[%s1 + $0x258] sm:$0xff]
  %v104 = vld [vmem:[%s1 + $0x260] sm:$0xff]
  %v105 = vld [vmem:[%s1 + $0x268] sm:$0xff]
  %v106 = vld [vmem:[%s1 + $0x270] sm:$0xff]
  %v107 = vld [vmem:[%s1 + $0x278] sm:$0xff]
  %v108 = vld [vmem:[%s1 + $0x280] sm:$0xff]
  %v109 = vld [vmem:[%s1 + $0x288] sm:$0xff]
  %v110 = vld [vmem:[%s1 + $0x290] sm:$0xff]
  %v111 = vld [vmem:[%s1 + $0x298] sm:$0xff]
  %v112 = vld [vmem:[%s1 + $0x2a0] sm:$0xff]
  %v113 = vld [vmem:[%s1 + $0x2a8] sm:$0xff]
  %v114 = vld [vmem:[%s1 + $0x2b0] sm:$0xff]
  %v115 = vld [vmem:[%s1 + $0x2b8] sm:$0xff]
  %v116 = vld [vmem:[%s1 + $0x2c0] sm:$0xff]
  %v117 = vld [vmem:[%s1 + $0x2c8] sm:$0xff]
  %v118 = vld [vmem:[%s1 + $0x2d0] sm:$0xff]
  %v119 = vld [vmem:[%s1 + $0x2d8] sm:$0xff]
  %v120 = vld [vmem:[%s1 + $0x2e0] sm:$0xff]
  %v121 = vld [vmem:[%s1 + $0x2e8] sm:$0xff]
  %v122 = vld [vmem:[%s1 + $0x2f0] sm:$0xff]
  %v123 = vld [vmem:[%s1 + $0x2f8] sm:$0xff]
  %v124 = vld [vmem:[%s1 + $0x300] sm:$0xff]
  %v125 = vld [vmem:[%s1 + $0x308] sm:$0xff]
  %v126 = vld [vmem:[%s1 + $0x310] sm:$0xff]
  %v127 = vld [vmem:[%s1 + $0x318] sm:$0xff]
  %v128 = vld [vmem:[%s1 + $0x320] sm:$0xff]
  %v129 = vld [vmem:[%s1 + $0x328] sm:$0xff]
  %v130 = vld [vmem:[%s1 + $0x330] sm:$0xff]
  %v131 = vld [vmem:[%s1 + $0x338] sm:$0xff]
  %v132 = vld [vmem:[%s1 + $0x340] sm:$0xff]
  %v133 = vld [vmem:[%s1 + $0x348] sm:$0xff]
  %v134 = vld [vmem:[%s1 + $0x350] sm:$0xff]
  %v135 = vld [vmem:[%s1 + $0x358] sm:$0xff]
  %v136 = vld [vmem:[%s1 + $0x360] sm:$0xff]
  %v137 = vld [vmem:[%s1 + $0x368] sm:$0xff]
  %v138 = vld [vmem:[%s1 + $0x370] sm:$0xff]
  %v139 = vld [vmem:[%s1 + $0x378] sm:$0xff]
  %v140 = vld [vmem:[%s1 + $0x380] sm:$0xff]
  %v141 = vld [vmem:[%s1 + $0x388] sm:$0xff]
  %v142 = vld [vmem:[%s1 + $0x390] sm:$0xff]
  %v143 = vld [vmem:[%s1 + $0x398] sm:$0xff]
  %v144 = vld [vmem:[%s1 + $0x3a0] sm:$0xff]
  %v145 = vld [vmem:[%s1 + $0x3a8] sm:$0xff]
  %v146 = vld [vmem:[%s1 + $0x3b0] sm:$0xff]
  %v147 = vld [vmem:[%s1 + $0x3b8] sm:$0xff]
  %v148 = vld [vmem:[%s1 + $0x3c0] sm:$0xff]
  %v149 = vld [vmem:[%s1 + $0x3c8] sm:$0xff]
  %v150 = vld [vmem:[%s1 + $0x3d0] sm:$0xff]
  %v151 = vld [vmem:[%s1 + $0x3d8] sm:$0xff]
  %v152 = vld [vmem:[%s1 + $0x3e0] sm:$0xff]
  %v153 = vld [vmem:[%s1 + $0x3e8] sm:$0xff]
  %v154 = vld [vmem:[%s1 + $0x3f0] sm:$0xff]
  %v155 = vld [vmem:[%s1 + $0x3f8] sm:$0xff]
  %v156 = vld [vmem:[%s2] sm:$0xff]
  %v158 = vlaneseq
  %v159 = vshrl.u32 %v158, 7
  %v160 = vsub.s32 0, %v159
  %v161 = vrot.slane %v156, %v160
  %v162 = vlaneseq
  %v163 = vshrl.u32 %v162, 7
  %v164 = vsub.s32 1, %v163
  %v165 = vrot.slane %v156, %v164
  %v166 = vlaneseq
  %v167 = vshrl.u32 %v166, 7
  %v168 = vsub.s32 2, %v167
  %v169 = vrot.slane %v156, %v168
  %v170 = vlaneseq
  %v171 = vshrl.u32 %v170, 7
  %v172 = vsub.s32 3, %v171
  %v173 = vrot.slane %v156, %v172
  %v174 = vlaneseq
  %v175 = vshrl.u32 %v174, 7
  %v176 = vsub.s32 4, %v175
  %v177 = vrot.slane %v156, %v176
  %v178 = vlaneseq
  %v179 = vshrl.u32 %v178, 7
  %v180 = vsub.s32 5, %v179
  %v181 = vrot.slane %v156, %v180
  %v182 = vlaneseq
  %v183 = vshrl.u32 %v182, 7
  %v184 = vsub.s32 6, %v183
  %v185 = vrot.slane %v156, %v184
  %v186 = vlaneseq
  %v187 = vshrl.u32 %v186, 7
  %v188 = vsub.s32 7, %v187
  %v189 = vrot.slane %v156, %v188
  %v200 = vunpack.c.l.b16 %v26
  %v201 = vunpack.c.h.b16 %v26
  %v202 = vunpack.c.l.b16 %v27
  %v203 = vunpack.c.h.b16 %v27
  %v204 = vpack.c.b16 %v202, %v200
  %v205 = vpack.c.b16 %v203, %v201
  %v336 = vunpack.c.l.b16 %v28
  %v337 = vunpack.c.h.b16 %v28
  %v338 = vunpack.c.l.b16 %v29
  %v339 = vunpack.c.h.b16 %v29
  %v340 = vunpack.c.l.b16 %v30
  %v341 = vunpack.c.h.b16 %v30
  %v342 = vunpack.c.l.b16 %v31
  %v343 = vunpack.c.h.b16 %v31
  %v344 = vunpack.c.l.b16 %v32
  %v345 = vunpack.c.h.b16 %v32
  %v346 = vunpack.c.l.b16 %v33
  %v347 = vunpack.c.h.b16 %v33
  %v348 = vunpack.c.l.b16 %v34
  %v349 = vunpack.c.h.b16 %v34
  %v350 = vunpack.c.l.b16 %v35
  %v351 = vunpack.c.h.b16 %v35
  %v352 = vunpack.c.l.b16 %v36
  %v353 = vunpack.c.h.b16 %v36
  %v354 = vunpack.c.l.b16 %v37
  %v355 = vunpack.c.h.b16 %v37
  %v356 = vunpack.c.l.b16 %v38
  %v357 = vunpack.c.h.b16 %v38
  %v358 = vunpack.c.l.b16 %v39
  %v359 = vunpack.c.h.b16 %v39
  %v360 = vunpack.c.l.b16 %v40
  %v361 = vunpack.c.h.b16 %v40
  %v362 = vunpack.c.l.b16 %v41
  %v363 = vunpack.c.h.b16 %v41
  %v364 = vunpack.c.l.b16 %v42
  %v365 = vunpack.c.h.b16 %v42
  %v366 = vunpack.c.l.b16 %v43
  %v367 = vunpack.c.h.b16 %v43
  %v368 = vunpack.c.l.b16 %v44
  %v369 = vunpack.c.h.b16 %v44
  %v370 = vunpack.c.l.b16 %v45
  %v371 = vunpack.c.h.b16 %v45
  %v372 = vunpack.c.l.b16 %v46
  %v373 = vunpack.c.h.b16 %v46
  %v374 = vunpack.c.l.b16 %v47
  %v375 = vunpack.c.h.b16 %v47
  %v376 = vunpack.c.l.b16 %v48
  %v377 = vunpack.c.h.b16 %v48
  %v378 = vunpack.c.l.b16 %v49
  %v379 = vunpack.c.h.b16 %v49
  %v380 = vunpack.c.l.b16 %v50
  %v381 = vunpack.c.h.b16 %v50
  %v382 = vunpack.c.l.b16 %v51
  %v383 = vunpack.c.h.b16 %v51
  %v384 = vunpack.c.l.b16 %v52
  %v385 = vunpack.c.h.b16 %v52
  %v386 = vunpack.c.l.b16 %v53
  %v387 = vunpack.c.h.b16 %v53
  %v388 = vunpack.c.l.b16 %v54
  %v389 = vunpack.c.h.b16 %v54
  %v390 = vunpack.c.l.b16 %v55
  %v391 = vunpack.c.h.b16 %v55
  %v392 = vunpack.c.l.b16 %v56
  %v393 = vunpack.c.h.b16 %v56
  %v394 = vunpack.c.l.b16 %v57
  %v395 = vunpack.c.h.b16 %v57
  %v396 = vunpack.c.l.b16 %v58
  %v397 = vunpack.c.h.b16 %v58
  %v398 = vunpack.c.l.b16 %v59
  %v399 = vunpack.c.h.b16 %v59
  %v400 = vunpack.c.l.b16 %v60
  %v401 = vunpack.c.h.b16 %v60
  %v402 = vunpack.c.l.b16 %v61
  %v403 = vunpack.c.h.b16 %v61
  %v404 = vunpack.c.l.b16 %v62
  %v405 = vunpack.c.h.b16 %v62
  %v406 = vunpack.c.l.b16 %v63
  %v407 = vunpack.c.h.b16 %v63
  %v408 = vunpack.c.l.b16 %v64
  %v409 = vunpack.c.h.b16 %v64
  %v410 = vunpack.c.l.b16 %v65
  %v411 = vunpack.c.h.b16 %v65
  %v412 = vunpack.c.l.b16 %v66
  %v413 = vunpack.c.h.b16 %v66
  %v414 = vunpack.c.l.b16 %v67
  %v415 = vunpack.c.h.b16 %v67
  %v416 = vunpack.c.l.b16 %v68
  %v417 = vunpack.c.h.b16 %v68
  %v418 = vunpack.c.l.b16 %v69
  %v419 = vunpack.c.h.b16 %v69
  %v420 = vunpack.c.l.b16 %v70
  %v421 = vunpack.c.h.b16 %v70
  %v422 = vunpack.c.l.b16 %v71
  %v423 = vunpack.c.h.b16 %v71
  %v424 = vunpack.c.l.b16 %v72
  %v425 = vunpack.c.h.b16 %v72
  %v426 = vunpack.c.l.b16 %v73
  %v427 = vunpack.c.h.b16 %v73
  %v428 = vunpack.c.l.b16 %v74
  %v429 = vunpack.c.h.b16 %v74
  %v430 = vunpack.c.l.b16 %v75
  %v431 = vunpack.c.h.b16 %v75
  %v432 = vunpack.c.l.b16 %v76
  %v433 = vunpack.c.h.b16 %v76
  %v434 = vunpack.c.l.b16 %v77
  %v435 = vunpack.c.h.b16 %v77
  %v436 = vunpack.c.l.b16 %v78
  %v437 = vunpack.c.h.b16 %v78
  %v438 = vunpack.c.l.b16 %v79
  %v439 = vunpack.c.h.b16 %v79
  %v440 = vunpack.c.l.b16 %v80
  %v441 = vunpack.c.h.b16 %v80
  %v442 = vunpack.c.l.b16 %v81
  %v443 = vunpack.c.h.b16 %v81
  %v444 = vunpack.c.l.b16 %v82
  %v445 = vunpack.c.h.b16 %v82
  %v446 = vunpack.c.l.b16 %v83
  %v447 = vunpack.c.h.b16 %v83
  %v448 = vunpack.c.l.b16 %v84
  %v449 = vunpack.c.h.b16 %v84
  %v450 = vunpack.c.l.b16 %v85
  %v451 = vunpack.c.h.b16 %v85
  %v452 = vunpack.c.l.b16 %v86
  %v453 = vunpack.c.h.b16 %v86
  %v454 = vunpack.c.l.b16 %v87
  %v455 = vunpack.c.h.b16 %v87
  %v456 = vunpack.c.l.b16 %v88
  %v457 = vunpack.c.h.b16 %v88
  %v458 = vunpack.c.l.b16 %v89
  %v459 = vunpack.c.h.b16 %v89
  %v460 = vunpack.c.l.b16 %v90
  %v461 = vunpack.c.h.b16 %v90
  %v462 = vunpack.c.l.b16 %v91
  %v463 = vunpack.c.h.b16 %v91
  %v464 = vunpack.c.l.b16 %v92
  %v465 = vunpack.c.h.b16 %v92
  %v466 = vunpack.c.l.b16 %v93
  %v467 = vunpack.c.h.b16 %v93
  %v468 = vunpack.c.l.b16 %v94
  %v469 = vunpack.c.h.b16 %v94
  %v470 = vunpack.c.l.b16 %v95
  %v471 = vunpack.c.h.b16 %v95
  %v472 = vunpack.c.l.b16 %v96
  %v473 = vunpack.c.h.b16 %v96
  %v474 = vunpack.c.l.b16 %v97
  %v475 = vunpack.c.h.b16 %v97
  %v476 = vunpack.c.l.b16 %v98
  %v477 = vunpack.c.h.b16 %v98
  %v478 = vunpack.c.l.b16 %v99
  %v479 = vunpack.c.h.b16 %v99
  %v480 = vunpack.c.l.b16 %v100
  %v481 = vunpack.c.h.b16 %v100
  %v482 = vunpack.c.l.b16 %v101
  %v483 = vunpack.c.h.b16 %v101
  %v484 = vunpack.c.l.b16 %v102
  %v485 = vunpack.c.h.b16 %v102
  %v486 = vunpack.c.l.b16 %v103
  %v487 = vunpack.c.h.b16 %v103
  %v488 = vunpack.c.l.b16 %v104
  %v489 = vunpack.c.h.b16 %v104
  %v490 = vunpack.c.l.b16 %v105
  %v491 = vunpack.c.h.b16 %v105
  %v492 = vunpack.c.l.b16 %v106
  %v493 = vunpack.c.h.b16 %v106
  %v494 = vunpack.c.l.b16 %v107
  %v495 = vunpack.c.h.b16 %v107
  %v496 = vunpack.c.l.b16 %v108
  %v497 = vunpack.c.h.b16 %v108
  %v498 = vunpack.c.l.b16 %v109
  %v499 = vunpack.c.h.b16 %v109
  %v500 = vunpack.c.l.b16 %v110
  %v501 = vunpack.c.h.b16 %v110
  %v502 = vunpack.c.l.b16 %v111
  %v503 = vunpack.c.h.b16 %v111
  %v504 = vunpack.c.l.b16 %v112
  %v505 = vunpack.c.h.b16 %v112
  %v506 = vunpack.c.l.b16 %v113
  %v507 = vunpack.c.h.b16 %v113
  %v508 = vunpack.c.l.b16 %v114
  %v509 = vunpack.c.h.b16 %v114
  %v510 = vunpack.c.l.b16 %v115
  %v511 = vunpack.c.h.b16 %v115
  %v512 = vunpack.c.l.b16 %v116
  %v513 = vunpack.c.h.b16 %v116
  %v514 = vunpack.c.l.b16 %v117
  %v515 = vunpack.c.h.b16 %v117
  %v516 = vunpack.c.l.b16 %v118
  %v517 = vunpack.c.h.b16 %v118
  %v518 = vunpack.c.l.b16 %v119
  %v519 = vunpack.c.h.b16 %v119
  %v520 = vunpack.c.l.b16 %v120
  %v521 = vunpack.c.h.b16 %v120
  %v522 = vunpack.c.l.b16 %v121
  %v523 = vunpack.c.h.b16 %v121
  %v524 = vunpack.c.l.b16 %v122
  %v525 = vunpack.c.h.b16 %v122
  %v526 = vunpack.c.l.b16 %v123
  %v527 = vunpack.c.h.b16 %v123
  %v528 = vunpack.c.l.b16 %v124
  %v529 = vunpack.c.h.b16 %v124
  %v530 = vunpack.c.l.b16 %v125
  %v531 = vunpack.c.h.b16 %v125
  %v532 = vunpack.c.l.b16 %v126
  %v533 = vunpack.c.h.b16 %v126
  %v534 = vunpack.c.l.b16 %v127
  %v535 = vunpack.c.h.b16 %v127
  %v536 = vunpack.c.l.b16 %v128
  %v537 = vunpack.c.h.b16 %v128
  %v538 = vunpack.c.l.b16 %v129
  %v539 = vunpack.c.h.b16 %v129
  %v540 = vunpack.c.l.b16 %v130
  %v541 = vunpack.c.h.b16 %v130
  %v542 = vunpack.c.l.b16 %v131
  %v543 = vunpack.c.h.b16 %v131
  %v544 = vunpack.c.l.b16 %v132
  %v545 = vunpack.c.h.b16 %v132
  %v546 = vunpack.c.l.b16 %v133
  %v547 = vunpack.c.h.b16 %v133
  %v548 = vunpack.c.l.b16 %v134
  %v549 = vunpack.c.h.b16 %v134
  %v550 = vunpack.c.l.b16 %v135
  %v551 = vunpack.c.h.b16 %v135
  %v552 = vunpack.c.l.b16 %v136
  %v553 = vunpack.c.h.b16 %v136
  %v554 = vunpack.c.l.b16 %v137
  %v555 = vunpack.c.h.b16 %v137
  %v556 = vunpack.c.l.b16 %v138
  %v557 = vunpack.c.h.b16 %v138
  %v558 = vunpack.c.l.b16 %v139
  %v559 = vunpack.c.h.b16 %v139
  %v560 = vunpack.c.l.b16 %v140
  %v561 = vunpack.c.h.b16 %v140
  %v562 = vunpack.c.l.b16 %v141
  %v563 = vunpack.c.h.b16 %v141
  %v564 = vunpack.c.l.b16 %v142
  %v565 = vunpack.c.h.b16 %v142
  %v566 = vunpack.c.l.b16 %v143
  %v567 = vunpack.c.h.b16 %v143
  %v568 = vunpack.c.l.b16 %v144
  %v569 = vunpack.c.h.b16 %v144
  %v570 = vunpack.c.l.b16 %v145
  %v571 = vunpack.c.h.b16 %v145
  %v572 = vunpack.c.l.b16 %v146
  %v573 = vunpack.c.h.b16 %v146
  %v574 = vunpack.c.l.b16 %v147
  %v575 = vunpack.c.h.b16 %v147
  %v576 = vunpack.c.l.b16 %v148
  %v577 = vunpack.c.h.b16 %v148
  %v578 = vunpack.c.l.b16 %v149
  %v579 = vunpack.c.h.b16 %v149
  %v580 = vunpack.c.l.b16 %v150
  %v581 = vunpack.c.h.b16 %v150
  %v582 = vunpack.c.l.b16 %v151
  %v583 = vunpack.c.h.b16 %v151
  %v584 = vunpack.c.l.b16 %v152
  %v585 = vunpack.c.h.b16 %v152
  %v586 = vunpack.c.l.b16 %v153
  %v587 = vunpack.c.h.b16 %v153
  %v588 = vunpack.c.l.b16 %v154
  %v589 = vunpack.c.h.b16 %v154
  %v590 = vunpack.c.l.b16 %v155
  %v591 = vunpack.c.h.b16 %v155
  %v592 = vpack.c.b16 %v344, %v336
  %v593 = vpack.c.b16 %v345, %v337
  %v594 = vpack.c.b16 %v346, %v338
  %v595 = vpack.c.b16 %v347, %v339
  %v596 = vpack.c.b16 %v348, %v340
  %v597 = vpack.c.b16 %v349, %v341
  %v598 = vpack.c.b16 %v350, %v342
  %v599 = vpack.c.b16 %v351, %v343
  %v600 = vpack.c.b16 %v360, %v352
  %v601 = vpack.c.b16 %v361, %v353
  %v602 = vpack.c.b16 %v362, %v354
  %v603 = vpack.c.b16 %v363, %v355
  %v604 = vpack.c.b16 %v364, %v356
  %v605 = vpack.c.b16 %v365, %v357
  %v606 = vpack.c.b16 %v366, %v358
  %v607 = vpack.c.b16 %v367, %v359
  %v608 = vpack.c.b16 %v376, %v368
  %v609 = vpack.c.b16 %v377, %v369
  %v610 = vpack.c.b16 %v378, %v370
  %v611 = vpack.c.b16 %v379, %v371
  %v612 = vpack.c.b16 %v380, %v372
  %v613 = vpack.c.b16 %v381, %v373
  %v614 = vpack.c.b16 %v382, %v374
  %v615 = vpack.c.b16 %v383, %v375
  %v616 = vpack.c.b16 %v392, %v384
  %v617 = vpack.c.b16 %v393, %v385
  %v618 = vpack.c.b16 %v394, %v386
  %v619 = vpack.c.b16 %v395, %v387
  %v620 = vpack.c.b16 %v396, %v388
  %v621 = vpack.c.b16 %v397, %v389
  %v622 = vpack.c.b16 %v398, %v390
  %v623 = vpack.c.b16 %v399, %v391
  %v624 = vpack.c.b16 %v408, %v400
  %v625 = vpack.c.b16 %v409, %v401
  %v626 = vpack.c.b16 %v410, %v402
  %v627 = vpack.c.b16 %v411, %v403
  %v628 = vpack.c.b16 %v412, %v404
  %v629 = vpack.c.b16 %v413, %v405
  %v630 = vpack.c.b16 %v414, %v406
  %v631 = vpack.c.b16 %v415, %v407
  %v632 = vpack.c.b16 %v424, %v416
  %v633 = vpack.c.b16 %v425, %v417
  %v634 = vpack.c.b16 %v426, %v418
  %v635 = vpack.c.b16 %v427, %v419
  %v636 = vpack.c.b16 %v428, %v420
  %v637 = vpack.c.b16 %v429, %v421
  %v638 = vpack.c.b16 %v430, %v422
  %v639 = vpack.c.b16 %v431, %v423
  %v640 = vpack.c.b16 %v440, %v432
  %v641 = vpack.c.b16 %v441, %v433
  %v642 = vpack.c.b16 %v442, %v434
  %v643 = vpack.c.b16 %v443, %v435
  %v644 = vpack.c.b16 %v444, %v436
  %v645 = vpack.c.b16 %v445, %v437
  %v646 = vpack.c.b16 %v446, %v438
  %v647 = vpack.c.b16 %v447, %v439
  %v648 = vpack.c.b16 %v456, %v448
  %v649 = vpack.c.b16 %v457, %v449
  %v650 = vpack.c.b16 %v458, %v450
  %v651 = vpack.c.b16 %v459, %v451
  %v652 = vpack.c.b16 %v460, %v452
  %v653 = vpack.c.b16 %v461, %v453
  %v654 = vpack.c.b16 %v462, %v454
  %v655 = vpack.c.b16 %v463, %v455
  %v656 = vpack.c.b16 %v472, %v464
  %v657 = vpack.c.b16 %v473, %v465
  %v658 = vpack.c.b16 %v474, %v466
  %v659 = vpack.c.b16 %v475, %v467
  %v660 = vpack.c.b16 %v476, %v468
  %v661 = vpack.c.b16 %v477, %v469
  %v662 = vpack.c.b16 %v478, %v470
  %v663 = vpack.c.b16 %v479, %v471
  %v664 = vpack.c.b16 %v488, %v480
  %v665 = vpack.c.b16 %v489, %v481
  %v666 = vpack.c.b16 %v490, %v482
  %v667 = vpack.c.b16 %v491, %v483
  %v668 = vpack.c.b16 %v492, %v484
  %v669 = vpack.c.b16 %v493, %v485
  %v670 = vpack.c.b16 %v494, %v486
  %v671 = vpack.c.b16 %v495, %v487
  %v672 = vpack.c.b16 %v504, %v496
  %v673 = vpack.c.b16 %v505, %v497
  %v674 = vpack.c.b16 %v506, %v498
  %v675 = vpack.c.b16 %v507, %v499
  %v676 = vpack.c.b16 %v508, %v500
  %v677 = vpack.c.b16 %v509, %v501
  %v678 = vpack.c.b16 %v510, %v502
  %v679 = vpack.c.b16 %v511, %v503
  %v680 = vpack.c.b16 %v520, %v512
  %v681 = vpack.c.b16 %v521, %v513
  %v682 = vpack.c.b16 %v522, %v514
  %v683 = vpack.c.b16 %v523, %v515
  %v684 = vpack.c.b16 %v524, %v516
  %v685 = vpack.c.b16 %v525, %v517
  %v686 = vpack.c.b16 %v526, %v518
  %v687 = vpack.c.b16 %v527, %v519
  %v688 = vpack.c.b16 %v536, %v528
  %v689 = vpack.c.b16 %v537, %v529
  %v690 = vpack.c.b16 %v538, %v530
  %v691 = vpack.c.b16 %v539, %v531
  %v692 = vpack.c.b16 %v540, %v532
  %v693 = vpack.c.b16 %v541, %v533
  %v694 = vpack.c.b16 %v542, %v534
  %v695 = vpack.c.b16 %v543, %v535
  %v696 = vpack.c.b16 %v552, %v544
  %v697 = vpack.c.b16 %v553, %v545
  %v698 = vpack.c.b16 %v554, %v546
  %v699 = vpack.c.b16 %v555, %v547
  %v700 = vpack.c.b16 %v556, %v548
  %v701 = vpack.c.b16 %v557, %v549
  %v702 = vpack.c.b16 %v558, %v550
  %v703 = vpack.c.b16 %v559, %v551
  %v704 = vpack.c.b16 %v568, %v560
  %v705 = vpack.c.b16 %v569, %v561
  %v706 = vpack.c.b16 %v570, %v562
  %v707 = vpack.c.b16 %v571, %v563
  %v708 = vpack.c.b16 %v572, %v564
  %v709 = vpack.c.b16 %v573, %v565
  %v710 = vpack.c.b16 %v574, %v566
  %v711 = vpack.c.b16 %v575, %v567
  %v712 = vpack.c.b16 %v584, %v576
  %v713 = vpack.c.b16 %v585, %v577
  %v714 = vpack.c.b16 %v586, %v578
  %v715 = vpack.c.b16 %v587, %v579
  %v716 = vpack.c.b16 %v588, %v580
  %v717 = vpack.c.b16 %v589, %v581
  %v718 = vpack.c.b16 %v590, %v582
  %v719 = vpack.c.b16 %v591, %v583
  %848 = vmatprep.subr.bf16.mxu0 %v649
  %849 = vmatpush1.bf16.msra.mxu0 %v648
  %850 = vmatprep.subr.bf16.mxu0 %v641
  %851 = vmatpush1.bf16.msra.mxu0 %v640
  %852 = vmatprep.subr.bf16.mxu0 %v633
  %853 = vmatpush1.bf16.msra.mxu0 %v632
  %854 = vmatprep.subr.bf16.mxu0 %v625
  %855 = vmatpush1.bf16.msra.mxu0 %v624
  %856 = vmatprep.subr.bf16.mxu0 %v617
  %857 = vmatpush1.bf16.msra.mxu0 %v616
  %858 = vmatprep.subr.bf16.mxu0 %v609
  %859 = vmatpush1.bf16.msra.mxu0 %v608
  %860 = vmatprep.subr.bf16.mxu0 %v601
  %861 = vmatpush1.bf16.msra.mxu0 %v600
  %862 = vmatprep.subr.bf16.mxu0 %v593
  %863 = vmatpush1.bf16.msra.mxu0 %v592
  %864 = vmatprep.subr.bf16.mxu0 %v713
  %865 = vmatpush2.bf16.msra.mxu0 %v712
  %866 = vmatprep.subr.bf16.mxu0 %v705
  %867 = vmatpush2.bf16.msra.mxu0 %v704
  %868 = vmatprep.subr.bf16.mxu0 %v697
  %869 = vmatpush2.bf16.msra.mxu0 %v696
  %870 = vmatprep.subr.bf16.mxu0 %v689
  %871 = vmatpush2.bf16.msra.mxu0 %v688
  %872 = vmatprep.subr.bf16.mxu0 %v681
  %873 = vmatpush2.bf16.msra.mxu0 %v680
  %874 = vmatprep.subr.bf16.mxu0 %v673
  %875 = vmatpush2.bf16.msra.mxu0 %v672
  %876 = vmatprep.subr.bf16.mxu0 %v665
  %877 = vmatpush2.bf16.msra.mxu0 %v664
  %878 = vmatprep.subr.bf16.mxu0 %v657
  %879 = vmatpush2.bf16.msra.mxu0 %v656
  %880 = vmatprep.mubr.bf16.mxu0 %v205
  %881 = vmatmul.mubr.bf16.gmra.mxu0 %v204
  %v882 = vpop.f32.mrf.mxu0
  %v883 = vadd.f32 %v161, %v882
  %v884 = vpop.f32.mrf.mxu0
  %v885 = vadd.f32 %v165, %v884
  %v886 = vpop.f32.mrf.mxu0
  %v887 = vadd.f32 %v161, %v886
  %v888 = vpop.f32.mrf.mxu0
  %v889 = vadd.f32 %v165, %v888
  %890 = vdwg.mxu0
  %891 = vmatprep.subr.bf16.mxu0 %v651
  %892 = vmatpush1.bf16.msra.mxu0 %v650
  %893 = vmatprep.subr.bf16.mxu0 %v643
  %894 = vmatpush1.bf16.msra.mxu0 %v642
  %895 = vmatprep.subr.bf16.mxu0 %v635
  %896 = vmatpush1.bf16.msra.mxu0 %v634
  %897 = vmatprep.subr.bf16.mxu0 %v627
  %898 = vmatpush1.bf16.msra.mxu0 %v626
  %899 = vmatprep.subr.bf16.mxu0 %v619
  %900 = vmatpush1.bf16.msra.mxu0 %v618
  %901 = vmatprep.subr.bf16.mxu0 %v611
  %902 = vmatpush1.bf16.msra.mxu0 %v610
  %903 = vmatprep.subr.bf16.mxu0 %v603
  %904 = vmatpush1.bf16.msra.mxu0 %v602
  %905 = vmatprep.subr.bf16.mxu0 %v595
  %906 = vmatpush1.bf16.msra.mxu0 %v594
  %907 = vmatprep.subr.bf16.mxu0 %v715
  %908 = vmatpush2.bf16.msra.mxu0 %v714
  %909 = vmatprep.subr.bf16.mxu0 %v707
  %910 = vmatpush2.bf16.msra.mxu0 %v706
  %911 = vmatprep.subr.bf16.mxu0 %v699
  %912 = vmatpush2.bf16.msra.mxu0 %v698
  %913 = vmatprep.subr.bf16.mxu0 %v691
  %914 = vmatpush2.bf16.msra.mxu0 %v690
  %915 = vmatprep.subr.bf16.mxu0 %v683
  %916 = vmatpush2.bf16.msra.mxu0 %v682
  %917 = vmatprep.subr.bf16.mxu0 %v675
  %918 = vmatpush2.bf16.msra.mxu0 %v674
  %919 = vmatprep.subr.bf16.mxu0 %v667
  %920 = vmatpush2.bf16.msra.mxu0 %v666
  %921 = vmatprep.subr.bf16.mxu0 %v659
  %922 = vmatpush2.bf16.msra.mxu0 %v658
  %923 = vmatprep.mubr.bf16.mxu0 %v205
  %924 = vmatmul.mubr.bf16.gmra.mxu0 %v204
  %v925 = vpop.f32.mrf.mxu0
  %v926 = vadd.f32 %v169, %v925
  %v927 = vpop.f32.mrf.mxu0
  %v928 = vadd.f32 %v173, %v927
  %v929 = vpop.f32.mrf.mxu0
  %v930 = vadd.f32 %v169, %v929
  %v931 = vpop.f32.mrf.mxu0
  %v932 = vadd.f32 %v173, %v931
  %933 = vdwg.mxu0
  %934 = vmatprep.subr.bf16.mxu0 %v653
  %935 = vmatpush1.bf16.msra.mxu0 %v652
  %936 = vmatprep.subr.bf16.mxu0 %v645
  %937 = vmatpush1.bf16.msra.mxu0 %v644
  %938 = vmatprep.subr.bf16.mxu0 %v637
  %939 = vmatpush1.bf16.msra.mxu0 %v636
  %940 = vmatprep.subr.bf16.mxu0 %v629
  %941 = vmatpush1.bf16.msra.mxu0 %v628
  %942 = vmatprep.subr.bf16.mxu0 %v621
  %943 = vmatpush1.bf16.msra.mxu0 %v620
  %944 = vmatprep.subr.bf16.mxu0 %v613
  %945 = vmatpush1.bf16.msra.mxu0 %v612
  %946 = vmatprep.subr.bf16.mxu0 %v605
  %947 = vmatpush1.bf16.msra.mxu0 %v604
  %948 = vmatprep.subr.bf16.mxu0 %v597
  %949 = vmatpush1.bf16.msra.mxu0 %v596
  %950 = vmatprep.subr.bf16.mxu0 %v717
  %951 = vmatpush2.bf16.msra.mxu0 %v716
  %952 = vmatprep.subr.bf16.mxu0 %v709
  %953 = vmatpush2.bf16.msra.mxu0 %v708
  %954 = vmatprep.subr.bf16.mxu0 %v701
  %955 = vmatpush2.bf16.msra.mxu0 %v700
  %956 = vmatprep.subr.bf16.mxu0 %v693
  %957 = vmatpush2.bf16.msra.mxu0 %v692
  %958 = vmatprep.subr.bf16.mxu0 %v685
  %959 = vmatpush2.bf16.msra.mxu0 %v684
  %960 = vmatprep.subr.bf16.mxu0 %v677
  %961 = vmatpush2.bf16.msra.mxu0 %v676
  %962 = vmatprep.subr.bf16.mxu0 %v669
  %963 = vmatpush2.bf16.msra.mxu0 %v668
  %964 = vmatprep.subr.bf16.mxu0 %v661
  %965 = vmatpush2.bf16.msra.mxu0 %v660
  %966 = vmatprep.mubr.bf16.mxu0 %v205
  %967 = vmatmul.mubr.bf16.gmra.mxu0 %v204
  %v968 = vpop.f32.mrf.mxu0
  %v969 = vadd.f32 %v177, %v968
  %v970 = vpop.f32.mrf.mxu0
  %v971 = vadd.f32 %v181, %v970
  %v972 = vpop.f32.mrf.mxu0
  %v973 = vadd.f32 %v177, %v972
  %v974 = vpop.f32.mrf.mxu0
  %v975 = vadd.f32 %v181, %v974
  %976 = vdwg.mxu0
  %977 = vmatprep.subr.bf16.mxu0 %v655
  %978 = vmatpush1.bf16.msra.mxu0 %v654
  %979 = vmatprep.subr.bf16.mxu0 %v647
  %980 = vmatpush1.bf16.msra.mxu0 %v646
  %981 = vmatprep.subr.bf16.mxu0 %v639
  %982 = vmatpush1.bf16.msra.mxu0 %v638
  %983 = vmatprep.subr.bf16.mxu0 %v631
  %984 = vmatpush1.bf16.msra.mxu0 %v630
  %985 = vmatprep.subr.bf16.mxu0 %v623
  %986 = vmatpush1.bf16.msra.mxu0 %v622
  %987 = vmatprep.subr.bf16.mxu0 %v615
  %988 = vmatpush1.bf16.msra.mxu0 %v614
  %989 = vmatprep.subr.bf16.mxu0 %v607
  %990 = vmatpush1.bf16.msra.mxu0 %v606
  %991 = vmatprep.subr.bf16.mxu0 %v599
  %992 = vmatpush1.bf16.msra.mxu0 %v598
  %993 = vmatprep.subr.bf16.mxu0 %v719
  %994 = vmatpush2.bf16.msra.mxu0 %v718
  %995 = vmatprep.subr.bf16.mxu0 %v711
  %996 = vmatpush2.bf16.msra.mxu0 %v710
  %997 = vmatprep.subr.bf16.mxu0 %v703
  %998 = vmatpush2.bf16.msra.mxu0 %v702
  %999 = vmatprep.subr.bf16.mxu0 %v695
  %1000 = vmatpush2.bf16.msra.mxu0 %v694
  %1001 = vmatprep.subr.bf16.mxu0 %v687
  %1002 = vmatpush2.bf16.msra.mxu0 %v686
  %1003 = vmatprep.subr.bf16.mxu0 %v679
  %1004 = vmatpush2.bf16.msra.mxu0 %v678
  %1005 = vmatprep.subr.bf16.mxu0 %v671
  %1006 = vmatpush2.bf16.msra.mxu0 %v670
  %1007 = vmatprep.subr.bf16.mxu0 %v663
  %1008 = vmatpush2.bf16.msra.mxu0 %v662
  %1009 = vmatprep.mubr.bf16.mxu0 %v205
  %1010 = vmatmul.mubr.bf16.gmra.mxu0 %v204
  %v1011 = vpop.f32.mrf.mxu0
  %v1012 = vadd.f32 %v185, %v1011
  %v1013 = vpop.f32.mrf.mxu0
  %v1014 = vadd.f32 %v189, %v1013
  %v1015 = vpop.f32.mrf.mxu0
  %v1016 = vadd.f32 %v185, %v1015
  %v1017 = vpop.f32.mrf.mxu0
  %v1018 = vadd.f32 %v189, %v1017
  %1019 = vdwg.mxu0
  %v1020 = vmul.f32 %v883, 0.5
  %v1021 = vmul.f32 %v885, 0.5
  %v1022 = vmul.f32 %v926, 0.5
  %v1023 = vmul.f32 %v928, 0.5
  %v1024 = vmul.f32 %v969, 0.5
  %v1025 = vmul.f32 %v971, 0.5
  %v1026 = vmul.f32 %v1012, 0.5
  %v1027 = vmul.f32 %v1014, 0.5
  %v1028 = vmul.f32 %v887, 0.5
  %v1029 = vmul.f32 %v889, 0.5
  %v1030 = vmul.f32 %v930, 0.5
  %v1031 = vmul.f32 %v932, 0.5
  %v1032 = vmul.f32 %v973, 0.5
  %v1033 = vmul.f32 %v975, 0.5
  %v1034 = vmul.f32 %v1016, 0.5
  %v1035 = vmul.f32 %v1018, 0.5
  %v1036 = vmul.f32 %v883, 0.044715
  %v1037 = vmul.f32 %v885, 0.044715
  %v1038 = vmul.f32 %v926, 0.044715
  %v1039 = vmul.f32 %v928, 0.044715
  %v1040 = vmul.f32 %v969, 0.044715
  %v1041 = vmul.f32 %v971, 0.044715
  %v1042 = vmul.f32 %v1012, 0.044715
  %v1043 = vmul.f32 %v1014, 0.044715
  %v1044 = vmul.f32 %v887, 0.044715
  %v1045 = vmul.f32 %v889, 0.044715
  %v1046 = vmul.f32 %v930, 0.044715
  %v1047 = vmul.f32 %v932, 0.044715
  %v1048 = vmul.f32 %v973, 0.044715
  %v1049 = vmul.f32 %v975, 0.044715
  %v1050 = vmul.f32 %v1016, 0.044715
  %v1051 = vmul.f32 %v1018, 0.044715
  %v1052 = vmul.f32 %v1036, %v883
  %v1053 = vmul.f32 %v1037, %v885
  %v1054 = vmul.f32 %v1038, %v926
  %v1055 = vmul.f32 %v1039, %v928
  %v1056 = vmul.f32 %v1040, %v969
  %v1057 = vmul.f32 %v1041, %v971
  %v1058 = vmul.f32 %v1042, %v1012
  %v1059 = vmul.f32 %v1043, %v1014
  %v1060 = vmul.f32 %v1044, %v887
  %v1061 = vmul.f32 %v1045, %v889
  %v1062 = vmul.f32 %v1046, %v930
  %v1063 = vmul.f32 %v1047, %v932
  %v1064 = vmul.f32 %v1048, %v973
  %v1065 = vmul.f32 %v1049, %v975
  %v1066 = vmul.f32 %v1050, %v1016
  %v1067 = vmul.f32 %v1051, %v1018
  %v1068 = vmul.f32 %v1052, %v883
  %v1069 = vmul.f32 %v1053, %v885
  %v1070 = vmul.f32 %v1054, %v926
  %v1071 = vmul.f32 %v1055, %v928
  %v1072 = vmul.f32 %v1056, %v969
  %v1073 = vmul.f32 %v1057, %v971
  %v1074 = vmul.f32 %v1058, %v1012
  %v1075 = vmul.f32 %v1059, %v1014
  %v1076 = vmul.f32 %v1060, %v887
  %v1077 = vmul.f32 %v1061, %v889
  %v1078 = vmul.f32 %v1062, %v930
  %v1079 = vmul.f32 %v1063, %v932
  %v1080 = vmul.f32 %v1064, %v973
  %v1081 = vmul.f32 %v1065, %v975
  %v1082 = vmul.f32 %v1066, %v1016
  %v1083 = vmul.f32 %v1067, %v1018
  %v1084 = vadd.f32 %v883, %v1068
  %v1085 = vadd.f32 %v885, %v1069
  %v1086 = vadd.f32 %v926, %v1070
  %v1087 = vadd.f32 %v928, %v1071
  %v1088 = vadd.f32 %v969, %v1072
  %v1089 = vadd.f32 %v971, %v1073
  %v1090 = vadd.f32 %v1012, %v1074
  %v1091 = vadd.f32 %v1014, %v1075
  %v1092 = vadd.f32 %v887, %v1076
  %v1093 = vadd.f32 %v889, %v1077
  %v1094 = vadd.f32 %v930, %v1078
  %v1095 = vadd.f32 %v932, %v1079
  %v1096 = vadd.f32 %v973, %v1080
  %v1097 = vadd.f32 %v975, %v1081
  %v1098 = vadd.f32 %v1016, %v1082
  %v1099 = vadd.f32 %v1018, %v1083
  %v1100 = vmul.f32 %v1084, 0.7978846
  %v1101 = vmul.f32 %v1085, 0.7978846
  %v1102 = vmul.f32 %v1086, 0.7978846
  %v1103 = vmul.f32 %v1087, 0.7978846
  %v1104 = vmul.f32 %v1088, 0.7978846
  %v1105 = vmul.f32 %v1089, 0.7978846
  %v1106 = vmul.f32 %v1090, 0.7978846
  %v1107 = vmul.f32 %v1091, 0.7978846
  %v1108 = vmul.f32 %v1092, 0.7978846
  %v1109 = vmul.f32 %v1093, 0.7978846
  %v1110 = vmul.f32 %v1094, 0.7978846
  %v1111 = vmul.f32 %v1095, 0.7978846
  %v1112 = vmul.f32 %v1096, 0.7978846
  %v1113 = vmul.f32 %v1097, 0.7978846
  %v1114 = vmul.f32 %v1098, 0.7978846
  %v1115 = vmul.f32 %v1099, 0.7978846
  %v1116 = vtanh.pop %v1100
  %v1117 = vtanh.pop %v1101
  %v1118 = vtanh.pop %v1102
  %v1119 = vtanh.pop %v1103
  %v1120 = vtanh.pop %v1104
  %v1121 = vtanh.pop %v1105
  %v1122 = vtanh.pop %v1106
  %v1123 = vtanh.pop %v1107
  %v1124 = vtanh.pop %v1108
  %v1125 = vtanh.pop %v1109
  %v1126 = vtanh.pop %v1110
  %v1127 = vtanh.pop %v1111
  %v1128 = vtanh.pop %v1112
  %v1129 = vtanh.pop %v1113
  %v1130 = vtanh.pop %v1114
  %v1131 = vtanh.pop %v1115
  %v1132 = vadd.f32 %v1116, 1.0
  %v1133 = vadd.f32 %v1117, 1.0
  %v1134 = vadd.f32 %v1118, 1.0
  %v1135 = vadd.f32 %v1119, 1.0
  %v1136 = vadd.f32 %v1120, 1.0
  %v1137 = vadd.f32 %v1121, 1.0
  %v1138 = vadd.f32 %v1122, 1.0
  %v1139 = vadd.f32 %v1123, 1.0
  %v1140 = vadd.f32 %v1124, 1.0
  %v1141 = vadd.f32 %v1125, 1.0
  %v1142 = vadd.f32 %v1126, 1.0
  %v1143 = vadd.f32 %v1127, 1.0
  %v1144 = vadd.f32 %v1128, 1.0
  %v1145 = vadd.f32 %v1129, 1.0
  %v1146 = vadd.f32 %v1130, 1.0
  %v1147 = vadd.f32 %v1131, 1.0
  %v1148 = vmul.f32 %v1020, %v1132
  %v1149 = vmul.f32 %v1021, %v1133
  %v1150 = vmul.f32 %v1022, %v1134
  %v1151 = vmul.f32 %v1023, %v1135
  %v1152 = vmul.f32 %v1024, %v1136
  %v1153 = vmul.f32 %v1025, %v1137
  %v1154 = vmul.f32 %v1026, %v1138
  %v1155 = vmul.f32 %v1027, %v1139
  %v1156 = vmul.f32 %v1028, %v1140
  %v1157 = vmul.f32 %v1029, %v1141
  %v1158 = vmul.f32 %v1030, %v1142
  %v1159 = vmul.f32 %v1031, %v1143
  %v1160 = vmul.f32 %v1032, %v1144
  %v1161 = vmul.f32 %v1033, %v1145
  %v1162 = vmul.f32 %v1034, %v1146
  %v1163 = vmul.f32 %v1035, %v1147
  %v1164 = vpack.c.bf16 %v1156, %v1148
  %v1165 = vpack.c.bf16 %v1157, %v1149
  %v1166 = vpack.c.bf16 %v1158, %v1150
  %v1167 = vpack.c.bf16 %v1159, %v1151
  %v1168 = vpack.c.bf16 %v1160, %v1152
  %v1169 = vpack.c.bf16 %v1161, %v1153
  %v1170 = vpack.c.bf16 %v1162, %v1154
  %v1171 = vpack.c.bf16 %v1163, %v1155
  %v1172 = vld [vmem:[%s3] sm:$0xff]
  %v1173 = vld [vmem:[%s3 + $0x8] sm:$0xff]
  %v1174 = vld [vmem:[%s3 + $0x10] sm:$0xff]
  %v1175 = vld [vmem:[%s3 + $0x18] sm:$0xff]
  %v1176 = vld [vmem:[%s3 + $0x20] sm:$0xff]
  %v1177 = vld [vmem:[%s3 + $0x28] sm:$0xff]
  %v1178 = vld [vmem:[%s3 + $0x30] sm:$0xff]
  %v1179 = vld [vmem:[%s3 + $0x38] sm:$0xff]
  %v1180 = vld [vmem:[%s3 + $0x40] sm:$0xff]
  %v1181 = vld [vmem:[%s3 + $0x48] sm:$0xff]
  %v1182 = vld [vmem:[%s3 + $0x50] sm:$0xff]
  %v1183 = vld [vmem:[%s3 + $0x58] sm:$0xff]
  %v1184 = vld [vmem:[%s3 + $0x60] sm:$0xff]
  %v1185 = vld [vmem:[%s3 + $0x68] sm:$0xff]
  %v1186 = vld [vmem:[%s3 + $0x70] sm:$0xff]
  %v1187 = vld [vmem:[%s3 + $0x78] sm:$0xff]
  %v1188 = vld [vmem:[%s3 + $0x80] sm:$0xff]
  %v1189 = vld [vmem:[%s3 + $0x88] sm:$0xff]
  %v1190 = vld [vmem:[%s3 + $0x90] sm:$0xff]
  %v1191 = vld [vmem:[%s3 + $0x98] sm:$0xff]
  %v1192 = vld [vmem:[%s3 + $0xa0] sm:$0xff]
  %v1193 = vld [vmem:[%s3 + $0xa8] sm:$0xff]
  %v1194 = vld [vmem:[%s3 + $0xb0] sm:$0xff]
  %v1195 = vld [vmem:[%s3 + $0xb8] sm:$0xff]
  %v1196 = vld [vmem:[%s3 + $0xc0] sm:$0xff]
  %v1197 = vld [vmem:[%s3 + $0xc8] sm:$0xff]
  %v1198 = vld [vmem:[%s3 + $0xd0] sm:$0xff]
  %v1199 = vld [vmem:[%s3 + $0xd8] sm:$0xff]
  %v1200 = vld [vmem:[%s3 + $0xe0] sm:$0xff]
  %v1201 = vld [vmem:[%s3 + $0xe8] sm:$0xff]
  %v1202 = vld [vmem:[%s3 + $0xf0] sm:$0xff]
  %v1203 = vld [vmem:[%s3 + $0xf8] sm:$0xff]
  %v1204 = vld [vmem:[%s3 + $0x100] sm:$0xff]
  %v1205 = vld [vmem:[%s3 + $0x108] sm:$0xff]
  %v1206 = vld [vmem:[%s3 + $0x110] sm:$0xff]
  %v1207 = vld [vmem:[%s3 + $0x118] sm:$0xff]
  %v1208 = vld [vmem:[%s3 + $0x120] sm:$0xff]
  %v1209 = vld [vmem:[%s3 + $0x128] sm:$0xff]
  %v1210 = vld [vmem:[%s3 + $0x130] sm:$0xff]
  %v1211 = vld [vmem:[%s3 + $0x138] sm:$0xff]
  %v1212 = vld [vmem:[%s3 + $0x140] sm:$0xff]
  %v1213 = vld [vmem:[%s3 + $0x148] sm:$0xff]
  %v1214 = vld [vmem:[%s3 + $0x150] sm:$0xff]
  %v1215 = vld [vmem:[%s3 + $0x158] sm:$0xff]
  %v1216 = vld [vmem:[%s3 + $0x160] sm:$0xff]
  %v1217 = vld [vmem:[%s3 + $0x168] sm:$0xff]
  %v1218 = vld [vmem:[%s3 + $0x170] sm:$0xff]
  %v1219 = vld [vmem:[%s3 + $0x178] sm:$0xff]
  %v1220 = vld [vmem:[%s3 + $0x180] sm:$0xff]
  %v1221 = vld [vmem:[%s3 + $0x188] sm:$0xff]
  %v1222 = vld [vmem:[%s3 + $0x190] sm:$0xff]
  %v1223 = vld [vmem:[%s3 + $0x198] sm:$0xff]
  %v1224 = vld [vmem:[%s3 + $0x1a0] sm:$0xff]
  %v1225 = vld [vmem:[%s3 + $0x1a8] sm:$0xff]
  %v1226 = vld [vmem:[%s3 + $0x1b0] sm:$0xff]
  %v1227 = vld [vmem:[%s3 + $0x1b8] sm:$0xff]
  %v1228 = vld [vmem:[%s3 + $0x1c0] sm:$0xff]
  %v1229 = vld [vmem:[%s3 + $0x1c8] sm:$0xff]
  %v1230 = vld [vmem:[%s3 + $0x1d0] sm:$0xff]
  %v1231 = vld [vmem:[%s3 + $0x1d8] sm:$0xff]
  %v1232 = vld [vmem:[%s3 + $0x1e0] sm:$0xff]
  %v1233 = vld [vmem:[%s3 + $0x1e8] sm:$0xff]
  %v1234 = vld [vmem:[%s3 + $0x1f0] sm:$0xff]
  %v1235 = vld [vmem:[%s3 + $0x1f8] sm:$0xff]
  %v1236 = vld [vmem:[%s3 + $0x200] sm:$0xff]
  %v1237 = vld [vmem:[%s3 + $0x208] sm:$0xff]
  %v1238 = vld [vmem:[%s3 + $0x210] sm:$0xff]
  %v1239 = vld [vmem:[%s3 + $0x218] sm:$0xff]
  %v1240 = vld [vmem:[%s3 + $0x220] sm:$0xff]
  %v1241 = vld [vmem:[%s3 + $0x228] sm:$0xff]
  %v1242 = vld [vmem:[%s3 + $0x230] sm:$0xff]
  %v1243 = vld [vmem:[%s3 + $0x238] sm:$0xff]
  %v1244 = vld [vmem:[%s3 + $0x240] sm:$0xff]
  %v1245 = vld [vmem:[%s3 + $0x248] sm:$0xff]
  %v1246 = vld [vmem:[%s3 + $0x250] sm:$0xff]
  %v1247 = vld [vmem:[%s3 + $0x258] sm:$0xff]
  %v1248 = vld [vmem:[%s3 + $0x260] sm:$0xff]
  %v1249 = vld [vmem:[%s3 + $0x268] sm:$0xff]
  %v1250 = vld [vmem:[%s3 + $0x270] sm:$0xff]
  %v1251 = vld [vmem:[%s3 + $0x278] sm:$0xff]
  %v1252 = vld [vmem:[%s3 + $0x280] sm:$0xff]
  %v1253 = vld [vmem:[%s3 + $0x288] sm:$0xff]
  %v1254 = vld [vmem:[%s3 + $0x290] sm:$0xff]
  %v1255 = vld [vmem:[%s3 + $0x298] sm:$0xff]
  %v1256 = vld [vmem:[%s3 + $0x2a0] sm:$0xff]
  %v1257 = vld [vmem:[%s3 + $0x2a8] sm:$0xff]
  %v1258 = vld [vmem:[%s3 + $0x2b0] sm:$0xff]
  %v1259 = vld [vmem:[%s3 + $0x2b8] sm:$0xff]
  %v1260 = vld [vmem:[%s3 + $0x2c0] sm:$0xff]
  %v1261 = vld [vmem:[%s3 + $0x2c8] sm:$0xff]
  %v1262 = vld [vmem:[%s3 + $0x2d0] sm:$0xff]
  %v1263 = vld [vmem:[%s3 + $0x2d8] sm:$0xff]
  %v1264 = vld [vmem:[%s3 + $0x2e0] sm:$0xff]
  %v1265 = vld [vmem:[%s3 + $0x2e8] sm:$0xff]
  %v1266 = vld [vmem:[%s3 + $0x2f0] sm:$0xff]
  %v1267 = vld [vmem:[%s3 + $0x2f8] sm:$0xff]
  %v1268 = vld [vmem:[%s3 + $0x300] sm:$0xff]
  %v1269 = vld [vmem:[%s3 + $0x308] sm:$0xff]
  %v1270 = vld [vmem:[%s3 + $0x310] sm:$0xff]
  %v1271 = vld [vmem:[%s3 + $0x318] sm:$0xff]
  %v1272 = vld [vmem:[%s3 + $0x320] sm:$0xff]
  %v1273 = vld [vmem:[%s3 + $0x328] sm:$0xff]
  %v1274 = vld [vmem:[%s3 + $0x330] sm:$0xff]
  %v1275 = vld [vmem:[%s3 + $0x338] sm:$0xff]
  %v1276 = vld [vmem:[%s3 + $0x340] sm:$0xff]
  %v1277 = vld [vmem:[%s3 + $0x348] sm:$0xff]
  %v1278 = vld [vmem:[%s3 + $0x350] sm:$0xff]
  %v1279 = vld [vmem:[%s3 + $0x358] sm:$0xff]
  %v1280 = vld [vmem:[%s3 + $0x360] sm:$0xff]
  %v1281 = vld [vmem:[%s3 + $0x368] sm:$0xff]
  %v1282 = vld [vmem:[%s3 + $0x370] sm:$0xff]
  %v1283 = vld [vmem:[%s3 + $0x378] sm:$0xff]
  %v1284 = vld [vmem:[%s3 + $0x380] sm:$0xff]
  %v1285 = vld [vmem:[%s3 + $0x388] sm:$0xff]
  %v1286 = vld [vmem:[%s3 + $0x390] sm:$0xff]
  %v1287 = vld [vmem:[%s3 + $0x398] sm:$0xff]
  %v1288 = vld [vmem:[%s3 + $0x3a0] sm:$0xff]
  %v1289 = vld [vmem:[%s3 + $0x3a8] sm:$0xff]
  %v1290 = vld [vmem:[%s3 + $0x3b0] sm:$0xff]
  %v1291 = vld [vmem:[%s3 + $0x3b8] sm:$0xff]
  %v1292 = vld [vmem:[%s3 + $0x3c0] sm:$0xff]
  %v1293 = vld [vmem:[%s3 + $0x3c8] sm:$0xff]
  %v1294 = vld [vmem:[%s3 + $0x3d0] sm:$0xff]
  %v1295 = vld [vmem:[%s3 + $0x3d8] sm:$0xff]
  %v1296 = vld [vmem:[%s3 + $0x3e0] sm:$0xff]
  %v1297 = vld [vmem:[%s3 + $0x3e8] sm:$0xff]
  %v1298 = vld [vmem:[%s3 + $0x3f0] sm:$0xff]
  %v1299 = vld [vmem:[%s3 + $0x3f8] sm:$0xff]
  %v1300 = vld [vmem:[%s4] sm:$0x3]
  %v1302 = vlaneseq
  %v1303 = vshrl.u32 %v1302, 7
  %v1304 = vsub.s32 0, %v1303
  %v1305 = vrot.slane %v1300, %v1304
  %v1306 = vlaneseq
  %v1307 = vshrl.u32 %v1306, 7
  %v1308 = vsub.s32 1, %v1307
  %v1309 = vrot.slane %v1300, %v1308
  %v1440 = vunpack.c.l.b16 %v1172
  %v1441 = vunpack.c.h.b16 %v1172
  %v1442 = vunpack.c.l.b16 %v1173
  %v1443 = vunpack.c.h.b16 %v1173
  %v1444 = vunpack.c.l.b16 %v1174
  %v1445 = vunpack.c.h.b16 %v1174
  %v1446 = vunpack.c.l.b16 %v1175
  %v1447 = vunpack.c.h.b16 %v1175
  %v1448 = vunpack.c.l.b16 %v1176
  %v1449 = vunpack.c.h.b16 %v1176
  %v1450 = vunpack.c.l.b16 %v1177
  %v1451 = vunpack.c.h.b16 %v1177
  %v1452 = vunpack.c.l.b16 %v1178
  %v1453 = vunpack.c.h.b16 %v1178
  %v1454 = vunpack.c.l.b16 %v1179
  %v1455 = vunpack.c.h.b16 %v1179
  %v1456 = vunpack.c.l.b16 %v1180
  %v1457 = vunpack.c.h.b16 %v1180
  %v1458 = vunpack.c.l.b16 %v1181
  %v1459 = vunpack.c.h.b16 %v1181
  %v1460 = vunpack.c.l.b16 %v1182
  %v1461 = vunpack.c.h.b16 %v1182
  %v1462 = vunpack.c.l.b16 %v1183
  %v1463 = vunpack.c.h.b16 %v1183
  %v1464 = vunpack.c.l.b16 %v1184
  %v1465 = vunpack.c.h.b16 %v1184
  %v1466 = vunpack.c.l.b16 %v1185
  %v1467 = vunpack.c.h.b16 %v1185
  %v1468 = vunpack.c.l.b16 %v1186
  %v1469 = vunpack.c.h.b16 %v1186
  %v1470 = vunpack.c.l.b16 %v1187
  %v1471 = vunpack.c.h.b16 %v1187
  %v1472 = vunpack.c.l.b16 %v1188
  %v1473 = vunpack.c.h.b16 %v1188
  %v1474 = vunpack.c.l.b16 %v1189
  %v1475 = vunpack.c.h.b16 %v1189
  %v1476 = vunpack.c.l.b16 %v1190
  %v1477 = vunpack.c.h.b16 %v1190
  %v1478 = vunpack.c.l.b16 %v1191
  %v1479 = vunpack.c.h.b16 %v1191
  %v1480 = vunpack.c.l.b16 %v1192
  %v1481 = vunpack.c.h.b16 %v1192
  %v1482 = vunpack.c.l.b16 %v1193
  %v1483 = vunpack.c.h.b16 %v1193
  %v1484 = vunpack.c.l.b16 %v1194
  %v1485 = vunpack.c.h.b16 %v1194
  %v1486 = vunpack.c.l.b16 %v1195
  %v1487 = vunpack.c.h.b16 %v1195
  %v1488 = vunpack.c.l.b16 %v1196
  %v1489 = vunpack.c.h.b16 %v1196
  %v1490 = vunpack.c.l.b16 %v1197
  %v1491 = vunpack.c.h.b16 %v1197
  %v1492 = vunpack.c.l.b16 %v1198
  %v1493 = vunpack.c.h.b16 %v1198
  %v1494 = vunpack.c.l.b16 %v1199
  %v1495 = vunpack.c.h.b16 %v1199
  %v1496 = vunpack.c.l.b16 %v1200
  %v1497 = vunpack.c.h.b16 %v1200
  %v1498 = vunpack.c.l.b16 %v1201
  %v1499 = vunpack.c.h.b16 %v1201
  %v1500 = vunpack.c.l.b16 %v1202
  %v1501 = vunpack.c.h.b16 %v1202
  %v1502 = vunpack.c.l.b16 %v1203
  %v1503 = vunpack.c.h.b16 %v1203
  %v1504 = vunpack.c.l.b16 %v1204
  %v1505 = vunpack.c.h.b16 %v1204
  %v1506 = vunpack.c.l.b16 %v1205
  %v1507 = vunpack.c.h.b16 %v1205
  %v1508 = vunpack.c.l.b16 %v1206
  %v1509 = vunpack.c.h.b16 %v1206
  %v1510 = vunpack.c.l.b16 %v1207
  %v1511 = vunpack.c.h.b16 %v1207
  %v1512 = vunpack.c.l.b16 %v1208
  %v1513 = vunpack.c.h.b16 %v1208
  %v1514 = vunpack.c.l.b16 %v1209
  %v1515 = vunpack.c.h.b16 %v1209
  %v1516 = vunpack.c.l.b16 %v1210
  %v1517 = vunpack.c.h.b16 %v1210
  %v1518 = vunpack.c.l.b16 %v1211
  %v1519 = vunpack.c.h.b16 %v1211
  %v1520 = vunpack.c.l.b16 %v1212
  %v1521 = vunpack.c.h.b16 %v1212
  %v1522 = vunpack.c.l.b16 %v1213
  %v1523 = vunpack.c.h.b16 %v1213
  %v1524 = vunpack.c.l.b16 %v1214
  %v1525 = vunpack.c.h.b16 %v1214
  %v1526 = vunpack.c.l.b16 %v1215
  %v1527 = vunpack.c.h.b16 %v1215
  %v1528 = vunpack.c.l.b16 %v1216
  %v1529 = vunpack.c.h.b16 %v1216
  %v1530 = vunpack.c.l.b16 %v1217
  %v1531 = vunpack.c.h.b16 %v1217
  %v1532 = vunpack.c.l.b16 %v1218
  %v1533 = vunpack.c.h.b16 %v1218
  %v1534 = vunpack.c.l.b16 %v1219
  %v1535 = vunpack.c.h.b16 %v1219
  %v1536 = vunpack.c.l.b16 %v1220
  %v1537 = vunpack.c.h.b16 %v1220
  %v1538 = vunpack.c.l.b16 %v1221
  %v1539 = vunpack.c.h.b16 %v1221
  %v1540 = vunpack.c.l.b16 %v1222
  %v1541 = vunpack.c.h.b16 %v1222
  %v1542 = vunpack.c.l.b16 %v1223
  %v1543 = vunpack.c.h.b16 %v1223
  %v1544 = vunpack.c.l.b16 %v1224
  %v1545 = vunpack.c.h.b16 %v1224
  %v1546 = vunpack.c.l.b16 %v1225
  %v1547 = vunpack.c.h.b16 %v1225
  %v1548 = vunpack.c.l.b16 %v1226
  %v1549 = vunpack.c.h.b16 %v1226
  %v1550 = vunpack.c.l.b16 %v1227
  %v1551 = vunpack.c.h.b16 %v1227
  %v1552 = vunpack.c.l.b16 %v1228
  %v1553 = vunpack.c.h.b16 %v1228
  %v1554 = vunpack.c.l.b16 %v1229
  %v1555 = vunpack.c.h.b16 %v1229
  %v1556 = vunpack.c.l.b16 %v1230
  %v1557 = vunpack.c.h.b16 %v1230
  %v1558 = vunpack.c.l.b16 %v1231
  %v1559 = vunpack.c.h.b16 %v1231
  %v1560 = vunpack.c.l.b16 %v1232
  %v1561 = vunpack.c.h.b16 %v1232
  %v1562 = vunpack.c.l.b16 %v1233
  %v1563 = vunpack.c.h.b16 %v1233
  %v1564 = vunpack.c.l.b16 %v1234
  %v1565 = vunpack.c.h.b16 %v1234
  %v1566 = vunpack.c.l.b16 %v1235
  %v1567 = vunpack.c.h.b16 %v1235
  %v1568 = vunpack.c.l.b16 %v1236
  %v1569 = vunpack.c.h.b16 %v1236
  %v1570 = vunpack.c.l.b16 %v1237
  %v1571 = vunpack.c.h.b16 %v1237
  %v1572 = vunpack.c.l.b16 %v1238
  %v1573 = vunpack.c.h.b16 %v1238
  %v1574 = vunpack.c.l.b16 %v1239
  %v1575 = vunpack.c.h.b16 %v1239
  %v1576 = vunpack.c.l.b16 %v1240
  %v1577 = vunpack.c.h.b16 %v1240
  %v1578 = vunpack.c.l.b16 %v1241
  %v1579 = vunpack.c.h.b16 %v1241
  %v1580 = vunpack.c.l.b16 %v1242
  %v1581 = vunpack.c.h.b16 %v1242
  %v1582 = vunpack.c.l.b16 %v1243
  %v1583 = vunpack.c.h.b16 %v1243
  %v1584 = vunpack.c.l.b16 %v1244
  %v1585 = vunpack.c.h.b16 %v1244
  %v1586 = vunpack.c.l.b16 %v1245
  %v1587 = vunpack.c.h.b16 %v1245
  %v1588 = vunpack.c.l.b16 %v1246
  %v1589 = vunpack.c.h.b16 %v1246
  %v1590 = vunpack.c.l.b16 %v1247
  %v1591 = vunpack.c.h.b16 %v1247
  %v1592 = vunpack.c.l.b16 %v1248
  %v1593 = vunpack.c.h.b16 %v1248
  %v1594 = vunpack.c.l.b16 %v1249
  %v1595 = vunpack.c.h.b16 %v1249
  %v1596 = vunpack.c.l.b16 %v1250
  %v1597 = vunpack.c.h.b16 %v1250
  %v1598 = vunpack.c.l.b16 %v1251
  %v1599 = vunpack.c.h.b16 %v1251
  %v1600 = vunpack.c.l.b16 %v1252
  %v1601 = vunpack.c.h.b16 %v1252
  %v1602 = vunpack.c.l.b16 %v1253
  %v1603 = vunpack.c.h.b16 %v1253
  %v1604 = vunpack.c.l.b16 %v1254
  %v1605 = vunpack.c.h.b16 %v1254
  %v1606 = vunpack.c.l.b16 %v1255
  %v1607 = vunpack.c.h.b16 %v1255
  %v1608 = vunpack.c.l.b16 %v1256
  %v1609 = vunpack.c.h.b16 %v1256
  %v1610 = vunpack.c.l.b16 %v1257
  %v1611 = vunpack.c.h.b16 %v1257
  %v1612 = vunpack.c.l.b16 %v1258
  %v1613 = vunpack.c.h.b16 %v1258
  %v1614 = vunpack.c.l.b16 %v1259
  %v1615 = vunpack.c.h.b16 %v1259
  %v1616 = vunpack.c.l.b16 %v1260
  %v1617 = vunpack.c.h.b16 %v1260
  %v1618 = vunpack.c.l.b16 %v1261
  %v1619 = vunpack.c.h.b16 %v1261
  %v1620 = vunpack.c.l.b16 %v1262
  %v1621 = vunpack.c.h.b16 %v1262
  %v1622 = vunpack.c.l.b16 %v1263
  %v1623 = vunpack.c.h.b16 %v1263
  %v1624 = vunpack.c.l.b16 %v1264
  %v1625 = vunpack.c.h.b16 %v1264
  %v1626 = vunpack.c.l.b16 %v1265
  %v1627 = vunpack.c.h.b16 %v1265
  %v1628 = vunpack.c.l.b16 %v1266
  %v1629 = vunpack.c.h.b16 %v1266
  %v1630 = vunpack.c.l.b16 %v1267
  %v1631 = vunpack.c.h.b16 %v1267
  %v1632 = vunpack.c.l.b16 %v1268
  %v1633 = vunpack.c.h.b16 %v1268
  %v1634 = vunpack.c.l.b16 %v1269
  %v1635 = vunpack.c.h.b16 %v1269
  %v1636 = vunpack.c.l.b16 %v1270
  %v1637 = vunpack.c.h.b16 %v1270
  %v1638 = vunpack.c.l.b16 %v1271
  %v1639 = vunpack.c.h.b16 %v1271
  %v1640 = vunpack.c.l.b16 %v1272
  %v1641 = vunpack.c.h.b16 %v1272
  %v1642 = vunpack.c.l.b16 %v1273
  %v1643 = vunpack.c.h.b16 %v1273
  %v1644 = vunpack.c.l.b16 %v1274
  %v1645 = vunpack.c.h.b16 %v1274
  %v1646 = vunpack.c.l.b16 %v1275
  %v1647 = vunpack.c.h.b16 %v1275
  %v1648 = vunpack.c.l.b16 %v1276
  %v1649 = vunpack.c.h.b16 %v1276
  %v1650 = vunpack.c.l.b16 %v1277
  %v1651 = vunpack.c.h.b16 %v1277
  %v1652 = vunpack.c.l.b16 %v1278
  %v1653 = vunpack.c.h.b16 %v1278
  %v1654 = vunpack.c.l.b16 %v1279
  %v1655 = vunpack.c.h.b16 %v1279
  %v1656 = vunpack.c.l.b16 %v1280
  %v1657 = vunpack.c.h.b16 %v1280
  %v1658 = vunpack.c.l.b16 %v1281
  %v1659 = vunpack.c.h.b16 %v1281
  %v1660 = vunpack.c.l.b16 %v1282
  %v1661 = vunpack.c.h.b16 %v1282
  %v1662 = vunpack.c.l.b16 %v1283
  %v1663 = vunpack.c.h.b16 %v1283
  %v1664 = vunpack.c.l.b16 %v1284
  %v1665 = vunpack.c.h.b16 %v1284
  %v1666 = vunpack.c.l.b16 %v1285
  %v1667 = vunpack.c.h.b16 %v1285
  %v1668 = vunpack.c.l.b16 %v1286
  %v1669 = vunpack.c.h.b16 %v1286
  %v1670 = vunpack.c.l.b16 %v1287
  %v1671 = vunpack.c.h.b16 %v1287
  %v1672 = vunpack.c.l.b16 %v1288
  %v1673 = vunpack.c.h.b16 %v1288
  %v1674 = vunpack.c.l.b16 %v1289
  %v1675 = vunpack.c.h.b16 %v1289
  %v1676 = vunpack.c.l.b16 %v1290
  %v1677 = vunpack.c.h.b16 %v1290
  %v1678 = vunpack.c.l.b16 %v1291
  %v1679 = vunpack.c.h.b16 %v1291
  %v1680 = vunpack.c.l.b16 %v1292
  %v1681 = vunpack.c.h.b16 %v1292
  %v1682 = vunpack.c.l.b16 %v1293
  %v1683 = vunpack.c.h.b16 %v1293
  %v1684 = vunpack.c.l.b16 %v1294
  %v1685 = vunpack.c.h.b16 %v1294
  %v1686 = vunpack.c.l.b16 %v1295
  %v1687 = vunpack.c.h.b16 %v1295
  %v1688 = vunpack.c.l.b16 %v1296
  %v1689 = vunpack.c.h.b16 %v1296
  %v1690 = vunpack.c.l.b16 %v1297
  %v1691 = vunpack.c.h.b16 %v1297
  %v1692 = vunpack.c.l.b16 %v1298
  %v1693 = vunpack.c.h.b16 %v1298
  %v1694 = vunpack.c.l.b16 %v1299
  %v1695 = vunpack.c.h.b16 %v1299
  %v1696 = vpack.c.b16 %v1442, %v1440
  %v1697 = vpack.c.b16 %v1443, %v1441
  %v1698 = vpack.c.b16 %v1446, %v1444
  %v1699 = vpack.c.b16 %v1447, %v1445
  %v1700 = vpack.c.b16 %v1450, %v1448
  %v1701 = vpack.c.b16 %v1451, %v1449
  %v1702 = vpack.c.b16 %v1454, %v1452
  %v1703 = vpack.c.b16 %v1455, %v1453
  %v1704 = vpack.c.b16 %v1458, %v1456
  %v1705 = vpack.c.b16 %v1459, %v1457
  %v1706 = vpack.c.b16 %v1462, %v1460
  %v1707 = vpack.c.b16 %v1463, %v1461
  %v1708 = vpack.c.b16 %v1466, %v1464
  %v1709 = vpack.c.b16 %v1467, %v1465
  %v1710 = vpack.c.b16 %v1470, %v1468
  %v1711 = vpack.c.b16 %v1471, %v1469
  %v1712 = vpack.c.b16 %v1474, %v1472
  %v1713 = vpack.c.b16 %v1475, %v1473
  %v1714 = vpack.c.b16 %v1478, %v1476
  %v1715 = vpack.c.b16 %v1479, %v1477
  %v1716 = vpack.c.b16 %v1482, %v1480
  %v1717 = vpack.c.b16 %v1483, %v1481
  %v1718 = vpack.c.b16 %v1486, %v1484
  %v1719 = vpack.c.b16 %v1487, %v1485
  %v1720 = vpack.c.b16 %v1490, %v1488
  %v1721 = vpack.c.b16 %v1491, %v1489
  %v1722 = vpack.c.b16 %v1494, %v1492
  %v1723 = vpack.c.b16 %v1495, %v1493
  %v1724 = vpack.c.b16 %v1498, %v1496
  %v1725 = vpack.c.b16 %v1499, %v1497
  %v1726 = vpack.c.b16 %v1502, %v1500
  %v1727 = vpack.c.b16 %v1503, %v1501
  %v1728 = vpack.c.b16 %v1506, %v1504
  %v1729 = vpack.c.b16 %v1507, %v1505
  %v1730 = vpack.c.b16 %v1510, %v1508
  %v1731 = vpack.c.b16 %v1511, %v1509
  %v1732 = vpack.c.b16 %v1514, %v1512
  %v1733 = vpack.c.b16 %v1515, %v1513
  %v1734 = vpack.c.b16 %v1518, %v1516
  %v1735 = vpack.c.b16 %v1519, %v1517
  %v1736 = vpack.c.b16 %v1522, %v1520
  %v1737 = vpack.c.b16 %v1523, %v1521
  %v1738 = vpack.c.b16 %v1526, %v1524
  %v1739 = vpack.c.b16 %v1527, %v1525
  %v1740 = vpack.c.b16 %v1530, %v1528
  %v1741 = vpack.c.b16 %v1531, %v1529
  %v1742 = vpack.c.b16 %v1534, %v1532
  %v1743 = vpack.c.b16 %v1535, %v1533
  %v1744 = vpack.c.b16 %v1538, %v1536
  %v1745 = vpack.c.b16 %v1539, %v1537
  %v1746 = vpack.c.b16 %v1542, %v1540
  %v1747 = vpack.c.b16 %v1543, %v1541
  %v1748 = vpack.c.b16 %v1546, %v1544
  %v1749 = vpack.c.b16 %v1547, %v1545
  %v1750 = vpack.c.b16 %v1550, %v1548
  %v1751 = vpack.c.b16 %v1551, %v1549
  %v1752 = vpack.c.b16 %v1554, %v1552
  %v1753 = vpack.c.b16 %v1555, %v1553
  %v1754 = vpack.c.b16 %v1558, %v1556
  %v1755 = vpack.c.b16 %v1559, %v1557
  %v1756 = vpack.c.b16 %v1562, %v1560
  %v1757 = vpack.c.b16 %v1563, %v1561
  %v1758 = vpack.c.b16 %v1566, %v1564
  %v1759 = vpack.c.b16 %v1567, %v1565
  %v1760 = vpack.c.b16 %v1570, %v1568
  %v1761 = vpack.c.b16 %v1571, %v1569
  %v1762 = vpack.c.b16 %v1574, %v1572
  %v1763 = vpack.c.b16 %v1575, %v1573
  %v1764 = vpack.c.b16 %v1578, %v1576
  %v1765 = vpack.c.b16 %v1579, %v1577
  %v1766 = vpack.c.b16 %v1582, %v1580
  %v1767 = vpack.c.b16 %v1583, %v1581
  %v1768 = vpack.c.b16 %v1586, %v1584
  %v1769 = vpack.c.b16 %v1587, %v1585
  %v1770 = vpack.c.b16 %v1590, %v1588
  %v1771 = vpack.c.b16 %v1591, %v1589
  %v1772 = vpack.c.b16 %v1594, %v1592
  %v1773 = vpack.c.b16 %v1595, %v1593
  %v1774 = vpack.c.b16 %v1598, %v1596
  %v1775 = vpack.c.b16 %v1599, %v1597
  %v1776 = vpack.c.b16 %v1602, %v1600
  %v1777 = vpack.c.b16 %v1603, %v1601
  %v1778 = vpack.c.b16 %v1606, %v1604
  %v1779 = vpack.c.b16 %v1607, %v1605
  %v1780 = vpack.c.b16 %v1610, %v1608
  %v1781 = vpack.c.b16 %v1611, %v1609
  %v1782 = vpack.c.b16 %v1614, %v1612
  %v1783 = vpack.c.b16 %v1615, %v1613
  %v1784 = vpack.c.b16 %v1618, %v1616
  %v1785 = vpack.c.b16 %v1619, %v1617
  %v1786 = vpack.c.b16 %v1622, %v1620
  %v1787 = vpack.c.b16 %v1623, %v1621
  %v1788 = vpack.c.b16 %v1626, %v1624
  %v1789 = vpack.c.b16 %v1627, %v1625
  %v1790 = vpack.c.b16 %v1630, %v1628
  %v1791 = vpack.c.b16 %v1631, %v1629
  %v1792 = vpack.c.b16 %v1634, %v1632
  %v1793 = vpack.c.b16 %v1635, %v1633
  %v1794 = vpack.c.b16 %v1638, %v1636
  %v1795 = vpack.c.b16 %v1639, %v1637
  %v1796 = vpack.c.b16 %v1642, %v1640
  %v1797 = vpack.c.b16 %v1643, %v1641
  %v1798 = vpack.c.b16 %v1646, %v1644
  %v1799 = vpack.c.b16 %v1647, %v1645
  %v1800 = vpack.c.b16 %v1650, %v1648
  %v1801 = vpack.c.b16 %v1651, %v1649
  %v1802 = vpack.c.b16 %v1654, %v1652
  %v1803 = vpack.c.b16 %v1655, %v1653
  %v1804 = vpack.c.b16 %v1658, %v1656
  %v1805 = vpack.c.b16 %v1659, %v1657
  %v1806 = vpack.c.b16 %v1662, %v1660
  %v1807 = vpack.c.b16 %v1663, %v1661
  %v1808 = vpack.c.b16 %v1666, %v1664
  %v1809 = vpack.c.b16 %v1667, %v1665
  %v1810 = vpack.c.b16 %v1670, %v1668
  %v1811 = vpack.c.b16 %v1671, %v1669
  %v1812 = vpack.c.b16 %v1674, %v1672
  %v1813 = vpack.c.b16 %v1675, %v1673
  %v1814 = vpack.c.b16 %v1678, %v1676
  %v1815 = vpack.c.b16 %v1679, %v1677
  %v1816 = vpack.c.b16 %v1682, %v1680
  %v1817 = vpack.c.b16 %v1683, %v1681
  %v1818 = vpack.c.b16 %v1686, %v1684
  %v1819 = vpack.c.b16 %v1687, %v1685
  %v1820 = vpack.c.b16 %v1690, %v1688
  %v1821 = vpack.c.b16 %v1691, %v1689
  %v1822 = vpack.c.b16 %v1694, %v1692
  %v1823 = vpack.c.b16 %v1695, %v1693
  %1952 = vmatprep.subr.bf16.mxu0 %v1711
  %1953 = vmatpush1.bf16.msra.mxu0 %v1710
  %1954 = vmatprep.subr.bf16.mxu0 %v1709
  %1955 = vmatpush1.bf16.msra.mxu0 %v1708
  %1956 = vmatprep.subr.bf16.mxu0 %v1707
  %1957 = vmatpush1.bf16.msra.mxu0 %v1706
  %1958 = vmatprep.subr.bf16.mxu0 %v1705
  %1959 = vmatpush1.bf16.msra.mxu0 %v1704
  %1960 = vmatprep.subr.bf16.mxu0 %v1703
  %1961 = vmatpush1.bf16.msra.mxu0 %v1702
  %1962 = vmatprep.subr.bf16.mxu0 %v1701
  %1963 = vmatpush1.bf16.msra.mxu0 %v1700
  %1964 = vmatprep.subr.bf16.mxu0 %v1699
  %1965 = vmatpush1.bf16.msra.mxu0 %v1698
  %1966 = vmatprep.subr.bf16.mxu0 %v1697
  %1967 = vmatpush1.bf16.msra.mxu0 %v1696
  %1968 = vmatprep.subr.bf16.mxu0 %v1727
  %1969 = vmatpush2.bf16.msra.mxu0 %v1726
  %1970 = vmatprep.subr.bf16.mxu0 %v1725
  %1971 = vmatpush2.bf16.msra.mxu0 %v1724
  %1972 = vmatprep.subr.bf16.mxu0 %v1723
  %1973 = vmatpush2.bf16.msra.mxu0 %v1722
  %1974 = vmatprep.subr.bf16.mxu0 %v1721
  %1975 = vmatpush2.bf16.msra.mxu0 %v1720
  %1976 = vmatprep.subr.bf16.mxu0 %v1719
  %1977 = vmatpush2.bf16.msra.mxu0 %v1718
  %1978 = vmatprep.subr.bf16.mxu0 %v1717
  %1979 = vmatpush2.bf16.msra.mxu0 %v1716
  %1980 = vmatprep.subr.bf16.mxu0 %v1715
  %1981 = vmatpush2.bf16.msra.mxu0 %v1714
  %1982 = vmatprep.subr.bf16.mxu0 %v1713
  %1983 = vmatpush2.bf16.msra.mxu0 %v1712
  %1984 = vmatprep.mubr.bf16.mxu0 %v1165
  %1985 = vmatmul.mubr.bf16.gmra.mxu0 %v1164
  %v1986 = vpop.f32.mrf.mxu0
  %v1987 = vadd.f32 %v1305, %v1986
  %v1988 = vpop.f32.mrf.mxu0
  %v1989 = vadd.f32 %v1309, %v1988
  %v1990 = vpop.f32.mrf.mxu0
  %v1991 = vadd.f32 %v1305, %v1990
  %v1992 = vpop.f32.mrf.mxu0
  %v1993 = vadd.f32 %v1309, %v1992
  %1994 = vdwg.mxu0
  %1995 = vmatprep.subr.bf16.mxu0 %v1743
  %1996 = vmatpush1.bf16.msra.mxu0 %v1742
  %1997 = vmatprep.subr.bf16.mxu0 %v1741
  %1998 = vmatpush1.bf16.msra.mxu0 %v1740
  %1999 = vmatprep.subr.bf16.mxu0 %v1739
  %2000 = vmatpush1.bf16.msra.mxu0 %v1738
  %2001 = vmatprep.subr.bf16.mxu0 %v1737
  %2002 = vmatpush1.bf16.msra.mxu0 %v1736
  %2003 = vmatprep.subr.bf16.mxu0 %v1735
  %2004 = vmatpush1.bf16.msra.mxu0 %v1734
  %2005 = vmatprep.subr.bf16.mxu0 %v1733
  %2006 = vmatpush1.bf16.msra.mxu0 %v1732
  %2007 = vmatprep.subr.bf16.mxu0 %v1731
  %2008 = vmatpush1.bf16.msra.mxu0 %v1730
  %2009 = vmatprep.subr.bf16.mxu0 %v1729
  %2010 = vmatpush1.bf16.msra.mxu0 %v1728
  %2011 = vmatprep.subr.bf16.mxu0 %v1759
  %2012 = vmatpush2.bf16.msra.mxu0 %v1758
  %2013 = vmatprep.subr.bf16.mxu0 %v1757
  %2014 = vmatpush2.bf16.msra.mxu0 %v1756
  %2015 = vmatprep.subr.bf16.mxu0 %v1755
  %2016 = vmatpush2.bf16.msra.mxu0 %v1754
  %2017 = vmatprep.subr.bf16.mxu0 %v1753
  %2018 = vmatpush2.bf16.msra.mxu0 %v1752
  %2019 = vmatprep.subr.bf16.mxu0 %v1751
  %2020 = vmatpush2.bf16.msra.mxu0 %v1750
  %2021 = vmatprep.subr.bf16.mxu0 %v1749
  %2022 = vmatpush2.bf16.msra.mxu0 %v1748
  %2023 = vmatprep.subr.bf16.mxu0 %v1747
  %2024 = vmatpush2.bf16.msra.mxu0 %v1746
  %2025 = vmatprep.subr.bf16.mxu0 %v1745
  %2026 = vmatpush2.bf16.msra.mxu0 %v1744
  %2027 = vmatprep.mubr.bf16.mxu0 %v1167
  %2028 = vmatmul.mubr.bf16.gmra.mxu0 %v1166
  %v2029 = vpop.f32.mrf.mxu0
  %v2030 = vadd.f32 %v1987, %v2029
  %v2031 = vpop.f32.mrf.mxu0
  %v2032 = vadd.f32 %v1989, %v2031
  %v2033 = vpop.f32.mrf.mxu0
  %v2034 = vadd.f32 %v1991, %v2033
  %v2035 = vpop.f32.mrf.mxu0
  %v2036 = vadd.f32 %v1993, %v2035
  %2037 = vdwg.mxu0
  %2038 = vmatprep.subr.bf16.mxu0 %v1775
  %2039 = vmatpush1.bf16.msra.mxu0 %v1774
  %2040 = vmatprep.subr.bf16.mxu0 %v1773
  %2041 = vmatpush1.bf16.msra.mxu0 %v1772
  %2042 = vmatprep.subr.bf16.mxu0 %v1771
  %2043 = vmatpush1.bf16.msra.mxu0 %v1770
  %2044 = vmatprep.subr.bf16.mxu0 %v1769
  %2045 = vmatpush1.bf16.msra.mxu0 %v1768
  %2046 = vmatprep.subr.bf16.mxu0 %v1767
  %2047 = vmatpush1.bf16.msra.mxu0 %v1766
  %2048 = vmatprep.subr.bf16.mxu0 %v1765
  %2049 = vmatpush1.bf16.msra.mxu0 %v1764
  %2050 = vmatprep.subr.bf16.mxu0 %v1763
  %2051 = vmatpush1.bf16.msra.mxu0 %v1762
  %2052 = vmatprep.subr.bf16.mxu0 %v1761
  %2053 = vmatpush1.bf16.msra.mxu0 %v1760
  %2054 = vmatprep.subr.bf16.mxu0 %v1791
  %2055 = vmatpush2.bf16.msra.mxu0 %v1790
  %2056 = vmatprep.subr.bf16.mxu0 %v1789
  %2057 = vmatpush2.bf16.msra.mxu0 %v1788
  %2058 = vmatprep.subr.bf16.mxu0 %v1787
  %2059 = vmatpush2.bf16.msra.mxu0 %v1786
  %2060 = vmatprep.subr.bf16.mxu0 %v1785
  %2061 = vmatpush2.bf16.msra.mxu0 %v1784
  %2062 = vmatprep.subr.bf16.mxu0 %v1783
  %2063 = vmatpush2.bf16.msra.mxu0 %v1782
  %2064 = vmatprep.subr.bf16.mxu0 %v1781
  %2065 = vmatpush2.bf16.msra.mxu0 %v1780
  %2066 = vmatprep.subr.bf16.mxu0 %v1779
  %2067 = vmatpush2.bf16.msra.mxu0 %v1778
  %2068 = vmatprep.subr.bf16.mxu0 %v1777
  %2069 = vmatpush2.bf16.msra.mxu0 %v1776
  %2070 = vmatprep.mubr.bf16.mxu0 %v1169
  %2071 = vmatmul.mubr.bf16.gmra.mxu0 %v1168
  %v2072 = vpop.f32.mrf.mxu0
  %v2073 = vadd.f32 %v2030, %v2072
  %v2074 = vpop.f32.mrf.mxu0
  %v2075 = vadd.f32 %v2032, %v2074
  %v2076 = vpop.f32.mrf.mxu0
  %v2077 = vadd.f32 %v2034, %v2076
  %v2078 = vpop.f32.mrf.mxu0
  %v2079 = vadd.f32 %v2036, %v2078
  %2080 = vdwg.mxu0
  %2081 = vmatprep.subr.bf16.mxu0 %v1807
  %2082 = vmatpush1.bf16.msra.mxu0 %v1806
  %2083 = vmatprep.subr.bf16.mxu0 %v1805
  %2084 = vmatpush1.bf16.msra.mxu0 %v1804
  %2085 = vmatprep.subr.bf16.mxu0 %v1803
  %2086 = vmatpush1.bf16.msra.mxu0 %v1802
  %2087 = vmatprep.subr.bf16.mxu0 %v1801
  %2088 = vmatpush1.bf16.msra.mxu0 %v1800
  %2089 = vmatprep.subr.bf16.mxu0 %v1799
  %2090 = vmatpush1.bf16.msra.mxu0 %v1798
  %2091 = vmatprep.subr.bf16.mxu0 %v1797
  %2092 = vmatpush1.bf16.msra.mxu0 %v1796
  %2093 = vmatprep.subr.bf16.mxu0 %v1795
  %2094 = vmatpush1.bf16.msra.mxu0 %v1794
  %2095 = vmatprep.subr.bf16.mxu0 %v1793
  %2096 = vmatpush1.bf16.msra.mxu0 %v1792
  %2097 = vmatprep.subr.bf16.mxu0 %v1823
  %2098 = vmatpush2.bf16.msra.mxu0 %v1822
  %2099 = vmatprep.subr.bf16.mxu0 %v1821
  %2100 = vmatpush2.bf16.msra.mxu0 %v1820
  %2101 = vmatprep.subr.bf16.mxu0 %v1819
  %2102 = vmatpush2.bf16.msra.mxu0 %v1818
  %2103 = vmatprep.subr.bf16.mxu0 %v1817
  %2104 = vmatpush2.bf16.msra.mxu0 %v1816
  %2105 = vmatprep.subr.bf16.mxu0 %v1815
  %2106 = vmatpush2.bf16.msra.mxu0 %v1814
  %2107 = vmatprep.subr.bf16.mxu0 %v1813
  %2108 = vmatpush2.bf16.msra.mxu0 %v1812
  %2109 = vmatprep.subr.bf16.mxu0 %v1811
  %2110 = vmatpush2.bf16.msra.mxu0 %v1810
  %2111 = vmatprep.subr.bf16.mxu0 %v1809
  %2112 = vmatpush2.bf16.msra.mxu0 %v1808
  %2113 = vmatprep.mubr.bf16.mxu0 %v1171
  %2114 = vmatmul.mubr.bf16.gmra.mxu0 %v1170
  %v2115 = vpop.f32.mrf.mxu0
  %v2116 = vadd.f32 %v2073, %v2115
  %v2117 = vpop.f32.mrf.mxu0
  %v2118 = vadd.f32 %v2075, %v2117
  %v2119 = vpop.f32.mrf.mxu0
  %v2120 = vadd.f32 %v2077, %v2119
  %v2121 = vpop.f32.mrf.mxu0
  %v2122 = vadd.f32 %v2079, %v2121
  %2123 = vdwg.mxu0
  %v2124 = vunpack.c.l.bf16 %v26
  %v2125 = vunpack.c.h.bf16 %v26
  %v2126 = vunpack.c.l.bf16 %v27
  %v2127 = vunpack.c.h.bf16 %v27
  %v2128 = vadd.f32 %v2116, %v2124
  %v2129 = vadd.f32 %v2118, %v2125
  %v2130 = vadd.f32 %v2120, %v2126
  %v2131 = vadd.f32 %v2122, %v2127
  %v2132 = vld [vmem:[%s5] sm:$0x3]
  %v2133 = vld [vmem:[%s6] sm:$0x3]
  %v2134 = vadd.f32 %v2128, %v2129
  %2135 = vadd.xlane.f32.xlu0 %v2134
  %v2136 = vpop.xlane.xlu0 %2135
  %v2137 = vadd.f32 %v2130, %v2131
  %2138 = vadd.xlane.f32.xlu0 %v2137
  %v2139 = vpop.xlane.xlu0 %2138
  %v2140 = vrcp.pop 256.0
  %v2141 = vmul.f32 %v2136, %v2140
  %v2142 = vmul.f32 %v2139, %v2140
  %v2143 = vsub.f32 %v2128, %v2141
  %v2144 = vsub.f32 %v2129, %v2141
  %v2145 = vsub.f32 %v2130, %v2142
  %v2146 = vsub.f32 %v2131, %v2142
  %v2147 = vmul.f32 %v2143, %v2143
  %v2148 = vmul.f32 %v2144, %v2144
  %v2149 = vmul.f32 %v2145, %v2145
  %v2150 = vmul.f32 %v2146, %v2146
  %v2151 = vadd.f32 %v2147, %v2148
  %2152 = vadd.xlane.f32.xlu0 %v2151
  %v2153 = vpop.xlane.xlu0 %2152
  %v2154 = vadd.f32 %v2149, %v2150
  %2155 = vadd.xlane.f32.xlu0 %v2154
  %v2156 = vpop.xlane.xlu0 %2155
  %v2157 = vmul.f32 %v2153, %v2140
  %v2158 = vmul.f32 %v2156, %v2140
  %v2159 = vadd.f32 %v2157, 1e-12
  %v2160 = vadd.f32 %v2158, 1e-12
  %v2161 = vrsqrt.pop %v2159
  %v2162 = vrsqrt.pop %v2160
  %v2163 = vmul.f32 %v2143, %v2161
  %v2164 = vmul.f32 %v2144, %v2161
  %v2165 = vmul.f32 %v2145, %v2162
  %v2166 = vmul.f32 %v2146, %v2162
  %v2168 = vlaneseq
  %v2169 = vshrl.u32 %v2168, 7
  %v2170 = vsub.s32 0, %v2169
  %v2171 = vrot.slane %v2132, %v2170
  %v2172 = vlaneseq
  %v2173 = vshrl.u32 %v2172, 7
  %v2174 = vsub.s32 1, %v2173
  %v2175 = vrot.slane %v2132, %v2174
  %v2178 = vmul.f32 %v2163, %v2171
  %v2179 = vmul.f32 %v2164, %v2175
  %v2180 = vmul.f32 %v2165, %v2171
  %v2181 = vmul.f32 %v2166, %v2175
  %v2183 = vlaneseq
  %v2184 = vshrl.u32 %v2183, 7
  %v2185 = vsub.s32 0, %v2184
  %v2186 = vrot.slane %v2133, %v2185
  %v2187 = vlaneseq
  %v2188 = vshrl.u32 %v2187, 7
  %v2189 = vsub.s32 1, %v2188
  %v2190 = vrot.slane %v2133, %v2189
  %v2193 = vadd.f32 %v2178, %v2186
  %v2194 = vadd.f32 %v2179, %v2190
  %v2195 = vadd.f32 %v2180, %v2186
  %v2196 = vadd.f32 %v2181, %v2190
  %v2197 = vpack.c.bf16 %v2195, %v2193
  %v2198 = vpack.c.bf16 %v2196, %v2194
  %v2201 = vunpack.c.l.b16 %v2197
  %v2202 = vunpack.c.l.b16 %v2198
  %v2203 = vunpack.c.h.b16 %v2197
  %v2204 = vunpack.c.h.b16 %v2198
  %v2205 = vpack.c.b16 %v2202, %v2201
  %v2206 = vpack.c.b16 %v2204, %v2203
  %2209 = vst [vmem:[%s7] sm:$0xff] %v2205
  %2210 = vst [vmem:[%s7 + $0x8] sm:$0xff] %v2206
  // Predicated region
  $region30: #{text_encoder_forward.10} parent=0 // pred_check
    _
  $region31: #{text_encoder_forward.10} parent=0 // pred_check_branch
    %2212 = sbr.rel (0) target = $region33
  $region32: #{text_encoder_forward.10} parent=0 // pred_region
    _
  $region33: #{text_encoder_forward.10} parent=0 // pred_fallthru
    _
  // Predicated region
  $region34: #{text_encoder_forward.10} parent=0 // pred_check
    _
  $region35: #{text_encoder_forward.10} parent=0 // pred_check_branch
    %2214 = sbr.rel (0) target = $region37
  $region36: #{text_encoder_forward.10} parent=0 // pred_region
    _
  $region37: #{text_encoder_forward.10} parent=0 // pred_fallthru
    _

// kernel: text_encoder_forward.11
$region0: #{text_encoder_forward.11}
  #allocation0 [shape = 'u32[]', space=smem, size = 0x4, offset = 0x4, fixed_abs, tag = 'smem constant byte address 0x4 - core index']
  #allocation1 [shape = 'u32[144,128]{1,0:T(1,128)}', space=vmem, size = 0x12000, scoped, tag = 'internal scratch']
  %s0 = inlined_call_operand.vmem [shape: bf16[2,256], index: 0, kind: input, shape index: {}]
  %s1 = inlined_call_operand.vmem [shape: bf16[256,256], index: 1, kind: input, shape index: {}]
  %s2 = inlined_call_operand.vmem [shape: f32[1,256], index: 2, kind: input, shape index: {}]
  %s3 = inlined_call_operand.vmem [shape: bf16[256,128], index: 3, kind: input, shape index: {}]
  %s4 = inlined_call_operand.hbm [shape: f32[2,256], index: 4, kind: output, shape index: {0}]
  %s5 = inlined_call_operand.hbm [shape: f32[2,128], index: 5, kind: output, shape index: {1}]
  %6 = xla_tuple %s4, %s5
  %s7 = sld [smem:[#allocation0]]
  $region34: #{text_encoder_forward.11} parent=0
    _
  %s9 = ssub.s32 1, %s7
  %s10 = scalar_select 0, %s9, %s7
  $region1: #{text_encoder_forward.11} parent=0
    #allocation2 [shape = 'u8[2048]{0}', space=vmem, size = 0x800, scoped, tag = 'output window, operand 0, single buffered']
    #allocation3 [shape = 's32[1]{0}', space=sflag, size = 0x4, scoped, tag = 'scoped memory for text_encoder_forward.11']
    #allocation4 [shape = 'u8[1024]{0}', space=vmem, size = 0x400, scoped, tag = 'output window, operand 1, single buffered']
    #allocation5 [shape = 's32[1]{0}', space=sflag, size = 0x4, scoped, tag = 'scoped memory for text_encoder_forward.11']
    %11 = vsyncpa [#allocation3], 0
    %12 = vsyncpa [#allocation5], 0
    // Predicated region
    $region2: #{text_encoder_forward.11} parent=1 // pred_check
      _
    $region3: #{text_encoder_forward.11} parent=1 // pred_check_branch
      %14 = sbr.rel (0) target = $region5
    $region4: #{text_encoder_forward.11} parent=1 // pred_region
      _
    $region5: #{text_encoder_forward.11} parent=1 // pred_fallthru
      _
    // Predicated region
    $region6: #{text_encoder_forward.11} parent=1 // pred_check
      _
    $region7: #{text_encoder_forward.11} parent=1 // pred_check_branch
      %16 = sbr.rel (0) target = $region9
    $region8: #{text_encoder_forward.11} parent=1 // pred_region
      _
    $region9: #{text_encoder_forward.11} parent=1 // pred_fallthru
      _
    // Predicated region
    $region10: #{text_encoder_forward.11} parent=1 // pred_check
      _
    $region11: #{text_encoder_forward.11} parent=1 // pred_check_branch
      %18 = sbr.rel (0) target = $region13
    $region12: #{text_encoder_forward.11} parent=1 // pred_region
      _
    $region13: #{text_encoder_forward.11} parent=1 // pred_fallthru
      _
    // Predicated region
    $region14: #{text_encoder_forward.11} parent=1 // pred_check
      _
    $region15: #{text_encoder_forward.11} parent=1 // pred_check_branch
      %20 = sbr.rel (0) target = $region17
    $region16: #{text_encoder_forward.11} parent=1 // pred_region
      _
    $region17: #{text_encoder_forward.11} parent=1 // pred_fallthru
      _
    %v22 = vld [vmem:[%s0] sm:$0x3]
    %v23 = vld [vmem:[%s1] sm:$0xff]
    %v24 = vld [vmem:[%s1 + $0x8] sm:$0xff]
    %v25 = vld [vmem:[%s1 + $0x10] sm:$0xff]
    %v26 = vld [vmem:[%s1 + $0x18] sm:$0xff]
    %v27 = vld [vmem:[%s1 + $0x20] sm:$0xff]
    %v28 = vld [vmem:[%s1 + $0x28] sm:$0xff]
    %v29 = vld [vmem:[%s1 + $0x30] sm:$0xff]
    %v30 = vld [vmem:[%s1 + $0x38] sm:$0xff]
    %v31 = vld [vmem:[%s1 + $0x40] sm:$0xff]
    %v32 = vld [vmem:[%s1 + $0x48] sm:$0xff]
    %v33 = vld [vmem:[%s1 + $0x50] sm:$0xff]
    %v34 = vld [vmem:[%s1 + $0x58] sm:$0xff]
    %v35 = vld [vmem:[%s1 + $0x60] sm:$0xff]
    %v36 = vld [vmem:[%s1 + $0x68] sm:$0xff]
    %v37 = vld [vmem:[%s1 + $0x70] sm:$0xff]
    %v38 = vld [vmem:[%s1 + $0x78] sm:$0xff]
    %v39 = vld [vmem:[%s1 + $0x80] sm:$0xff]
    %v40 = vld [vmem:[%s1 + $0x88] sm:$0xff]
    %v41 = vld [vmem:[%s1 + $0x90] sm:$0xff]
    %v42 = vld [vmem:[%s1 + $0x98] sm:$0xff]
    %v43 = vld [vmem:[%s1 + $0xa0] sm:$0xff]
    %v44 = vld [vmem:[%s1 + $0xa8] sm:$0xff]
    %v45 = vld [vmem:[%s1 + $0xb0] sm:$0xff]
    %v46 = vld [vmem:[%s1 + $0xb8] sm:$0xff]
    %v47 = vld [vmem:[%s1 + $0xc0] sm:$0xff]
    %v48 = vld [vmem:[%s1 + $0xc8] sm:$0xff]
    %v49 = vld [vmem:[%s1 + $0xd0] sm:$0xff]
    %v50 = vld [vmem:[%s1 + $0xd8] sm:$0xff]
    %v51 = vld [vmem:[%s1 + $0xe0] sm:$0xff]
    %v52 = vld [vmem:[%s1 + $0xe8] sm:$0xff]
    %v53 = vld [vmem:[%s1 + $0xf0] sm:$0xff]
    %v54 = vld [vmem:[%s1 + $0xf8] sm:$0xff]
    %v55 = vld [vmem:[%s2] sm:$0x3]
    %v57 = vlaneseq
    %v58 = vshrl.u32 %v57, 7
    %v59 = vsub.s32 0, %v58
    %v60 = vrot.slane %v55, %v59
    %v61 = vlaneseq
    %v62 = vshrl.u32 %v61, 7
    %v63 = vsub.s32 1, %v62
    %v64 = vrot.slane %v55, %v63
    %v69 = vunpack.c.l.s4 1966171168
    %v70 = vunpack.c.0.s8 %v69
    %v71 = vlaneseq
    %v72 = vshrl.u32 %v71, 7
    %v73 = vsub.s32 %v70, %v72
    %v74 = vrot.slane %v22, %v73
    %v75 = vcombine.high %v74, %v74
    %v77 = vunpack.c.l.s4 1966171168
    %v78 = vunpack.c.0.s8 %v77
    %v79 = vlaneseq
    %v80 = vshrl.u32 %v79, 7
    %v81 = vsub.s32 %v78, %v80
    %v82 = vrot.slane %v74, %v81
    %v84 = vunpack.c.l.s4 1966171168
    %v85 = vunpack.c.0.s8 %v84
    %v86 = vlaneseq
    %v87 = vshrl.u32 %v86, 7
    %v88 = vsub.s32 %v85, %v87
    %v89 = vrot.slane %v75, %v88
    %v124 = vunpack.c.l.b16 %v23
    %v125 = vunpack.c.h.b16 %v23
    %v126 = vunpack.c.l.b16 %v24
    %v127 = vunpack.c.h.b16 %v24
    %v128 = vunpack.c.l.b16 %v25
    %v129 = vunpack.c.h.b16 %v25
    %v130 = vunpack.c.l.b16 %v26
    %v131 = vunpack.c.h.b16 %v26
    %v132 = vunpack.c.l.b16 %v27
    %v133 = vunpack.c.h.b16 %v27
    %v134 = vunpack.c.l.b16 %v28
    %v135 = vunpack.c.h.b16 %v28
    %v136 = vunpack.c.l.b16 %v29
    %v137 = vunpack.c.h.b16 %v29
    %v138 = vunpack.c.l.b16 %v30
    %v139 = vunpack.c.h.b16 %v30
    %v140 = vunpack.c.l.b16 %v31
    %v141 = vunpack.c.h.b16 %v31
    %v142 = vunpack.c.l.b16 %v32
    %v143 = vunpack.c.h.b16 %v32
    %v144 = vunpack.c.l.b16 %v33
    %v145 = vunpack.c.h.b16 %v33
    %v146 = vunpack.c.l.b16 %v34
    %v147 = vunpack.c.h.b16 %v34
    %v148 = vunpack.c.l.b16 %v35
    %v149 = vunpack.c.h.b16 %v35
    %v150 = vunpack.c.l.b16 %v36
    %v151 = vunpack.c.h.b16 %v36
    %v152 = vunpack.c.l.b16 %v37
    %v153 = vunpack.c.h.b16 %v37
    %v154 = vunpack.c.l.b16 %v38
    %v155 = vunpack.c.h.b16 %v38
    %v156 = vunpack.c.l.b16 %v39
    %v157 = vunpack.c.h.b16 %v39
    %v158 = vunpack.c.l.b16 %v40
    %v159 = vunpack.c.h.b16 %v40
    %v160 = vunpack.c.l.b16 %v41
    %v161 = vunpack.c.h.b16 %v41
    %v162 = vunpack.c.l.b16 %v42
    %v163 = vunpack.c.h.b16 %v42
    %v164 = vunpack.c.l.b16 %v43
    %v165 = vunpack.c.h.b16 %v43
    %v166 = vunpack.c.l.b16 %v44
    %v167 = vunpack.c.h.b16 %v44
    %v168 = vunpack.c.l.b16 %v45
    %v169 = vunpack.c.h.b16 %v45
    %v170 = vunpack.c.l.b16 %v46
    %v171 = vunpack.c.h.b16 %v46
    %v172 = vunpack.c.l.b16 %v47
    %v173 = vunpack.c.h.b16 %v47
    %v174 = vunpack.c.l.b16 %v48
    %v175 = vunpack.c.h.b16 %v48
    %v176 = vunpack.c.l.b16 %v49
    %v177 = vunpack.c.h.b16 %v49
    %v178 = vunpack.c.l.b16 %v50
    %v179 = vunpack.c.h.b16 %v50
    %v180 = vunpack.c.l.b16 %v51
    %v181 = vunpack.c.h.b16 %v51
    %v182 = vunpack.c.l.b16 %v52
    %v183 = vunpack.c.h.b16 %v52
    %v184 = vunpack.c.l.b16 %v53
    %v185 = vunpack.c.h.b16 %v53
    %v186 = vunpack.c.l.b16 %v54
    %v187 = vunpack.c.h.b16 %v54
    %v188 = vpack.c.b16 %v126, %v124
    %v189 = vpack.c.b16 %v127, %v125
    %v190 = vpack.c.b16 %v130, %v128
    %v191 = vpack.c.b16 %v131, %v129
    %v192 = vpack.c.b16 %v134, %v132
    %v193 = vpack.c.b16 %v135, %v133
    %v194 = vpack.c.b16 %v138, %v136
    %v195 = vpack.c.b16 %v139, %v137
    %v196 = vpack.c.b16 %v142, %v140
    %v197 = vpack.c.b16 %v143, %v141
    %v198 = vpack.c.b16 %v146, %v144
    %v199 = vpack.c.b16 %v147, %v145
    %v200 = vpack.c.b16 %v150, %v148
    %v201 = vpack.c.b16 %v151, %v149
    %v202 = vpack.c.b16 %v154, %v152
    %v203 = vpack.c.b16 %v155, %v153
    %v204 = vpack.c.b16 %v158, %v156
    %v205 = vpack.c.b16 %v159, %v157
    %v206 = vpack.c.b16 %v162, %v160
    %v207 = vpack.c.b16 %v163, %v161
    %v208 = vpack.c.b16 %v166, %v164
    %v209 = vpack.c.b16 %v167, %v165
    %v210 = vpack.c.b16 %v170, %v168
    %v211 = vpack.c.b16 %v171, %v169
    %v212 = vpack.c.b16 %v174, %v172
    %v213 = vpack.c.b16 %v175, %v173
    %v214 = vpack.c.b16 %v178, %v176
    %v215 = vpack.c.b16 %v179, %v177
    %v216 = vpack.c.b16 %v182, %v180
    %v217 = vpack.c.b16 %v183, %v181
    %v218 = vpack.c.b16 %v186, %v184
    %v219 = vpack.c.b16 %v187, %v185
    %252 = vmatprep.subr.bf16.mxu0 %v203
    %253 = vmatpush1.bf16.msra.mxu0 %v202
    %254 = vmatprep.subr.bf16.mxu0 %v201
    %255 = vmatpush1.bf16.msra.mxu0 %v200
    %256 = vmatprep.subr.bf16.mxu0 %v199
    %257 = vmatpush1.bf16.msra.mxu0 %v198
    %258 = vmatprep.subr.bf16.mxu0 %v197
    %259 = vmatpush1.bf16.msra.mxu0 %v196
    %260 = vmatprep.subr.bf16.mxu0 %v195
    %261 = vmatpush1.bf16.msra.mxu0 %v194
    %262 = vmatprep.subr.bf16.mxu0 %v193
    %263 = vmatpush1.bf16.msra.mxu0 %v192
    %264 = vmatprep.subr.bf16.mxu0 %v191
    %265 = vmatpush1.bf16.msra.mxu0 %v190
    %266 = vmatprep.subr.bf16.mxu0 %v189
    %267 = vmatpush1.bf16.msra.mxu0 %v188
    %268 = vmatprep.subr.bf16.mxu0 %v219
    %269 = vmatpush2.bf16.msra.mxu0 %v218
    %270 = vmatprep.subr.bf16.mxu0 %v217
    %271 = vmatpush2.bf16.msra.mxu0 %v216
    %272 = vmatprep.subr.bf16.mxu0 %v215
    %273 = vmatpush2.bf16.msra.mxu0 %v214
    %274 = vmatprep.subr.bf16.mxu0 %v213
    %275 = vmatpush2.bf16.msra.mxu0 %v212
    %276 = vmatprep.subr.bf16.mxu0 %v211
    %277 = vmatpush2.bf16.msra.mxu0 %v210
    %278 = vmatprep.subr.bf16.mxu0 %v209
    %279 = vmatpush2.bf16.msra.mxu0 %v208
    %280 = vmatprep.subr.bf16.mxu0 %v207
    %281 = vmatpush2.bf16.msra.mxu0 %v206
    %282 = vmatprep.subr.bf16.mxu0 %v205
    %283 = vmatpush2.bf16.msra.mxu0 %v204
    %284 = vmatprep.mubr.bf16.mxu0 %v89
    %285 = vmatmul.mubr.bf16.gmra.mxu0 %v82
    %v286 = vpop.f32.mrf.mxu0
    %v287 = vadd.f32 %v60, %v286
    %v288 = vpop.f32.mrf.mxu0
    %v289 = vadd.f32 %v64, %v288
    %v290 = vpop.f32.mrf.mxu0
    %v291 = vpop.f32.mrf.mxu0
    %292 = vdwg.mxu0
    %v293 = vtanh.pop %v287
    %v294 = vtanh.pop %v289
    %v297 = vcombine.low %v293, %v294
    %v299 = vunpack.c.l.s4 1983009808
    %v300 = vunpack.c.0.s8 %v299
    %v301 = vlaneseq
    %v302 = vshrl.u32 %v301, 7
    %v303 = vsub.s32 %v300, %v302
    %v304 = vrot.slane %v297, %v303
    %306 = vst [vmem:[#allocation2] sm:$0xf] %v304
    %v307 = vpack.c.bf16 %v293, %v293
    %v308 = vpack.c.bf16 %v294, %v294
    %v309 = vld [vmem:[%s3] sm:$0xf]
    %v310 = vld [vmem:[%s3 + $0x4] sm:$0xf]
    %v311 = vld [vmem:[%s3 + $0x8] sm:$0xf]
    %v312 = vld [vmem:[%s3 + $0xc] sm:$0xf]
    %v313 = vld [vmem:[%s3 + $0x10] sm:$0xf]
    %v314 = vld [vmem:[%s3 + $0x14] sm:$0xf]
    %v315 = vld [vmem:[%s3 + $0x18] sm:$0xf]
    %v316 = vld [vmem:[%s3 + $0x1c] sm:$0xf]
    %v317 = vld [vmem:[%s3 + $0x20] sm:$0xf]
    %v318 = vld [vmem:[%s3 + $0x24] sm:$0xf]
    %v319 = vld [vmem:[%s3 + $0x28] sm:$0xf]
    %v320 = vld [vmem:[%s3 + $0x2c] sm:$0xf]
    %v321 = vld [vmem:[%s3 + $0x30] sm:$0xf]
    %v322 = vld [vmem:[%s3 + $0x34] sm:$0xf]
    %v323 = vld [vmem:[%s3 + $0x38] sm:$0xf]
    %v324 = vld [vmem:[%s3 + $0x3c] sm:$0xf]
    %v325 = vld [vmem:[%s3 + $0x40] sm:$0xf]
    %v326 = vld [vmem:[%s3 + $0x44] sm:$0xf]
    %v327 = vld [vmem:[%s3 + $0x48] sm:$0xf]
    %v328 = vld [vmem:[%s3 + $0x4c] sm:$0xf]
    %v329 = vld [vmem:[%s3 + $0x50] sm:$0xf]
    %v330 = vld [vmem:[%s3 + $0x54] sm:$0xf]
    %v331 = vld [vmem:[%s3 + $0x58] sm:$0xf]
    %v332 = vld [vmem:[%s3 + $0x5c] sm:$0xf]
    %v333 = vld [vmem:[%s3 + $0x60] sm:$0xf]
    %v334 = vld [vmem:[%s3 + $0x64] sm:$0xf]
    %v335 = vld [vmem:[%s3 + $0x68] sm:$0xf]
    %v336 = vld [vmem:[%s3 + $0x6c] sm:$0xf]
    %v337 = vld [vmem:[%s3 + $0x70] sm:$0xf]
    %v338 = vld [vmem:[%s3 + $0x74] sm:$0xf]
    %v339 = vld [vmem:[%s3 + $0x78] sm:$0xf]
    %v340 = vld [vmem:[%s3 + $0x7c] sm:$0xf]
    %v373 = vunpack.c.l.b16 %v309
    %v374 = vunpack.c.l.b16 %v310
    %v375 = vunpack.c.l.b16 %v311
    %v376 = vunpack.c.l.b16 %v312
    %v377 = vunpack.c.l.b16 %v313
    %v378 = vunpack.c.l.b16 %v314
    %v379 = vunpack.c.l.b16 %v315
    %v380 = vunpack.c.l.b16 %v316
    %v381 = vunpack.c.l.b16 %v317
    %v382 = vunpack.c.l.b16 %v318
    %v383 = vunpack.c.l.b16 %v319
    %v384 = vunpack.c.l.b16 %v320
    %v385 = vunpack.c.l.b16 %v321
    %v386 = vunpack.c.l.b16 %v322
    %v387 = vunpack.c.l.b16 %v323
    %v388 = vunpack.c.l.b16 %v324
    %v389 = vunpack.c.l.b16 %v325
    %v390 = vunpack.c.l.b16 %v326
    %v391 = vunpack.c.l.b16 %v327
    %v392 = vunpack.c.l.b16 %v328
    %v393 = vunpack.c.l.b16 %v329
    %v394 = vunpack.c.l.b16 %v330
    %v395 = vunpack.c.l.b16 %v331
    %v396 = vunpack.c.l.b16 %v332
    %v397 = vunpack.c.l.b16 %v333
    %v398 = vunpack.c.l.b16 %v334
    %v399 = vunpack.c.l.b16 %v335
    %v400 = vunpack.c.l.b16 %v336
    %v401 = vunpack.c.l.b16 %v337
    %v402 = vunpack.c.l.b16 %v338
    %v403 = vunpack.c.l.b16 %v339
    %v404 = vunpack.c.l.b16 %v340
    %v405 = vpack.c.b16 %v374, %v373
    %v406 = vpack.c.b16 %v376, %v375
    %v407 = vpack.c.b16 %v378, %v377
    %v408 = vpack.c.b16 %v380, %v379
    %v409 = vpack.c.b16 %v382, %v381
    %v410 = vpack.c.b16 %v384, %v383
    %v411 = vpack.c.b16 %v386, %v385
    %v412 = vpack.c.b16 %v388, %v387
    %v413 = vpack.c.b16 %v390, %v389
    %v414 = vpack.c.b16 %v392, %v391
    %v415 = vpack.c.b16 %v394, %v393
    %v416 = vpack.c.b16 %v396, %v395
    %v417 = vpack.c.b16 %v398, %v397
    %v418 = vpack.c.b16 %v400, %v399
    %v419 = vpack.c.b16 %v402, %v401
    %v420 = vpack.c.b16 %v404, %v403
    %437 = vmatprep.subr.bf16.mxu0 0
    %438 = vmatpush1.bf16.msra.mxu0 %v412
    %439 = vmatprep.subr.bf16.mxu0 0
    %440 = vmatpush1.bf16.msra.mxu0 %v411
    %441 = vmatprep.subr.bf16.mxu0 0
    %442 = vmatpush1.bf16.msra.mxu0 %v410
    %443 = vmatprep.subr.bf16.mxu0 0
    %444 = vmatpush1.bf16.msra.mxu0 %v409
    %445 = vmatprep.subr.bf16.mxu0 0
    %446 = vmatpush1.bf16.msra.mxu0 %v408
    %447 = vmatprep.subr.bf16.mxu0 0
    %448 = vmatpush1.bf16.msra.mxu0 %v407
    %449 = vmatprep.subr.bf16.mxu0 0
    %450 = vmatpush1.bf16.msra.mxu0 %v406
    %451 = vmatprep.subr.bf16.mxu0 0
    %452 = vmatpush1.bf16.msra.mxu0 %v405
    %453 = vmatprep.subr.bf16.mxu0 0
    %454 = vmatpush2.bf16.msra.mxu0 %v420
    %455 = vmatprep.subr.bf16.mxu0 0
    %456 = vmatpush2.bf16.msra.mxu0 %v419
    %457 = vmatprep.subr.bf16.mxu0 0
    %458 = vmatpush2.bf16.msra.mxu0 %v418
    %459 = vmatprep.subr.bf16.mxu0 0
    %460 = vmatpush2.bf16.msra.mxu0 %v417
    %461 = vmatprep.subr.bf16.mxu0 0
    %462 = vmatpush2.bf16.msra.mxu0 %v416
    %463 = vmatprep.subr.bf16.mxu0 0
    %464 = vmatpush2.bf16.msra.mxu0 %v415
    %465 = vmatprep.subr.bf16.mxu0 0
    %466 = vmatpush2.bf16.msra.mxu0 %v414
    %467 = vmatprep.subr.bf16.mxu0 0
    %468 = vmatpush2.bf16.msra.mxu0 %v413
    %469 = vmatprep.mubr.bf16.mxu0 %v308
    %470 = vmatmul.mubr.bf16.gmra.mxu0 %v307
    %v471 = vpop.f32.mrf.mxu0
    %v472 = vadd.f32 0.0, %v471
    %v473 = vpop.f32.mrf.mxu0
    %v474 = vpop.f32.mrf.mxu0
    %v475 = vpop.f32.mrf.mxu0
    %476 = vdwg.mxu0
    %477 = vst [vmem:[#allocation4] sm:$0x3] %v472
    // Predicated region
    $region18: #{text_encoder_forward.11} parent=1 // pred_check
      _
    $region19: #{text_encoder_forward.11} parent=1 // pred_check_branch
      %479 = sbr.rel (0) target = $region21
    $region20: #{text_encoder_forward.11} parent=1 // pred_region
      %s481 = ssub.s32 64, 64
      %482 = vsyncadd [#allocation3], %s481
      %s484 = sshll.u32 [#allocation2], 4
      %s485 = int_to_ptr.vmem [resolvable:$true] %s484
      %487 = dma.vmem_to_hbm [thread:$0]  %s485, 64, %s4, [#allocation3]
    $region21: #{text_encoder_forward.11} parent=1 // pred_fallthru
      _
    // Predicated region
    $region22: #{text_encoder_forward.11} parent=1 // pred_check
      _
    $region23: #{text_encoder_forward.11} parent=1 // pred_check_branch
      %489 = sbr.rel (0) target = $region25
    $region24: #{text_encoder_forward.11} parent=1 // pred_region
      %s491 = ssub.s32 32, 32
      %492 = vsyncadd [#allocation5], %s491
      %s494 = sshll.u32 [#allocation4], 4
      %s495 = int_to_ptr.vmem [resolvable:$true] %s494
      %497 = dma.vmem_to_hbm [thread:$0]  %s495, 32, %s5, [#allocation5]
    $region25: #{text_encoder_forward.11} parent=1 // pred_fallthru
      _
    // Predicated region
    $region26: #{text_encoder_forward.11} parent=1 // pred_check
      _
    $region27: #{text_encoder_forward.11} parent=1 // pred_check_branch
      %499 = sbr.rel (0) target = $region29
    $region28: #{text_encoder_forward.11} parent=1 // pred_region
      %500 = dma.done [#allocation3], 64
    $region29: #{text_encoder_forward.11} parent=1 // pred_fallthru
      _
    // Predicated region
    $region30: #{text_encoder_forward.11} parent=1 // pred_check
      _
    $region31: #{text_encoder_forward.11} parent=1 // pred_check_branch
      %502 = sbr.rel (0) target = $region33
    $region32: #{text_encoder_forward.11} parent=1 // pred_region
      %503 = dma.done [#allocation5], 32
    $region33: #{text_encoder_forward.11} parent=1 // pred_fallthru
      _
    %504 = vsyncpa [#allocation3], 1
    %505 = vsyncpa [#allocation5], 1

</llo_original>
